<compile_context>
chip_gen: v7x
topology: tpu7x:2x2x1
jax: 0.10.0
libtpu: 0.0.40
codegen_flags: <defaults>
</compile_context>

<pallas_src>
import functools

import jax
import jax.numpy as jnp
from jax import lax
from jax.experimental import pallas as pl
from jax.experimental.pallas import tpu as pltpu

LANE = 128


def _round_up(x, m):
    return (x + m - 1) // m * m


def _pick_group_block(g, cap=8):
    """Largest divisor of g that is <= cap (groups handled per grid step)."""
    for b in range(min(cap, g), 0, -1):
        if g % b == 0:
            return b
    return 1


# ---------------------------------------------------------------------------
# Trilinear upsample (scale_factor=2, align_corners=True), separable form
# ---------------------------------------------------------------------------
def upsample_matrix(s):
    """1D linear-interp matrix (2s, s) for scale_factor=2, align_corners=True."""
    out = 2 * s
    o = jnp.arange(out, dtype=jnp.float32)
    src = o * (s - 1) / (out - 1) if s > 1 else jnp.zeros_like(o)
    i0 = jnp.clip(jnp.floor(src).astype(jnp.int32), 0, s - 1)
    i1 = jnp.clip(i0 + 1, 0, s - 1)
    frac = src - i0.astype(jnp.float32)
    m = jnp.zeros((out, s), jnp.float32)
    m = m.at[jnp.arange(out), i0].add(1.0 - frac)
    m = m.at[jnp.arange(out), i1].add(frac)
    return m


def _interp_axis_kernel(m_ref, x_ref, o_ref):
    # o[b] = M @ x[b] for each group in the block (B is static -> unrolled).
    for b in range(x_ref.shape[0]):
        o_ref[b] = jnp.dot(m_ref[...], x_ref[b],
                           preferred_element_type=jnp.float32)


def interp_axis(x3, m):
    """x3: (G, S, T) -> (G, 2S, T) with out[g] = m @ x3[g]."""
    G, S, T = x3.shape
    S2 = m.shape[0]
    B = _pick_group_block(G)
    return pl.pallas_call(
        _interp_axis_kernel,
        out_shape=jax.ShapeDtypeStruct((G, S2, T), jnp.float32),
        grid=(G // B,),
        in_specs=[pl.BlockSpec((S2, S), lambda g: (0, 0)),
                  pl.BlockSpec((B, S, T), lambda g: (g, 0, 0))],
        out_specs=pl.BlockSpec((B, S2, T), lambda g: (g, 0, 0)),
        compiler_params=pltpu.CompilerParams(
            dimension_semantics=("parallel",)),
    )(m, x3)


def _interp_plane_kernel(mh_ref, mwt_ref, x_ref, o_ref):
    # o[b] = Mh @ x[b] @ Mw^T  (bilinear interpolation of one H x W plane)
    for b in range(x_ref.shape[0]):
        t = jnp.dot(mh_ref[...], x_ref[b], preferred_element_type=jnp.float32)
        o_ref[b] = jnp.dot(t, mwt_ref[...], preferred_element_type=jnp.float32)


def interp_plane(x3, mh, mw):
    """x3: (G, H, W) -> (G, 2H, 2W) with out[g] = mh @ x3[g] @ mw.T."""
    G, H, W = x3.shape
    H2, W2 = mh.shape[0], mw.shape[0]
    B = _pick_group_block(G)
    return pl.pallas_call(
        _interp_plane_kernel,
        out_shape=jax.ShapeDtypeStruct((G, H2, W2), jnp.float32),
        grid=(G // B,),
        in_specs=[pl.BlockSpec((H2, H), lambda g: (0, 0)),
                  pl.BlockSpec((W, W2), lambda g: (0, 0)),
                  pl.BlockSpec((B, H, W), lambda g: (g, 0, 0))],
        out_specs=pl.BlockSpec((B, H2, W2), lambda g: (g, 0, 0)),
        compiler_params=pltpu.CompilerParams(
            dimension_semantics=("parallel",)),
    )(mh, mw.T, x3)


def trilinear_upsample_2x(x):
    """x: (N, C, D, H, W) f32 -> (N, C, 2D, 2H, 2W) f32 (Pallas, separable)."""
    N, C, D, H, W = x.shape
    md, mh, mw = upsample_matrix(D), upsample_matrix(H), upsample_matrix(W)
    t = interp_axis(x.reshape(N * C, D, H * W), md)            # (NC, 2D, HW)
    u = interp_plane(t.reshape(N * C * 2 * D, H, W), mh, mw)   # (NC*2D, 2H, 2W)
    return u.reshape(N, C, 2 * D, 2 * H, 2 * W)


# ---------------------------------------------------------------------------
# Fused 3x3x3 conv (+ BatchNorm batch-statistics accumulation) and BN+ReLU
# ---------------------------------------------------------------------------
def _conv_stats_kernel(x0_ref, x1_ref, x2_ref, w_ref, y_ref, st_ref, *, H, W):
    """One (batch, output-depth) plane of a padded 3x3x3 conv, plus BN stats.

    x{0,1,2}_ref : (1, H+2, W+2, Cin_p) bf16 -- the three padded depth slices
    w_ref        : (27, Cin_p, Cout_p)  bf16 -- tap-major weight matrices
    y_ref        : (1, H*W, Cout_p)     f32  -- pre-BN conv output
    st_ref       : (1, 2, Cout_p)       f32  -- per-batch (sum, sumsq) accum
    """
    planes = (x0_ref[0], x1_ref[0], x2_ref[0])
    acc = None
    k = 0
    for kd in range(3):
        p = planes[kd]
        for kh in range(3):
            for kw in range(3):
                win = p[kh:kh + H, kw:kw + W, :]              # (H, W, Cin_p)
                a = win.reshape(H * W, win.shape[-1])
                part = jnp.dot(a, w_ref[k],
                               preferred_element_type=jnp.float32)
                acc = part if acc is None else acc + part
                k += 1
    y_ref[0] = acc

    s1 = jnp.sum(acc, axis=0, keepdims=True)          # (1, Cout_p)
    s2 = jnp.sum(acc * acc, axis=0, keepdims=True)    # (1, Cout_p)

    @pl.when(pl.program_id(1) == 0)                   # first depth step / batch
    def _():
        st_ref[...] = jnp.zeros_like(st_ref)

    st_ref[...] += jnp.concatenate([s1, s2], axis=0)[None]


def _bn_relu_kernel(y_ref, sc_ref, sh_ref, o_ref):
    y = y_ref[...]
    o_ref[...] = jnp.maximum(y * sc_ref[...] + sh_ref[...], 0.0
                             ).astype(o_ref.dtype)


def conv3x3x3_bn_relu(xpad, w_mat, gamma_p, beta_p, *, eps=1e-5,
                      out_dtype=jnp.float32):
    """Conv3d(k=3, s=1, p=1) + BatchNorm(batch stats) + ReLU.

    xpad  : (N, D+2, H+2, W+2, Cin_p) bf16, zero-padded spatially + channels.
    w_mat : (27, Cin_p, Cout_p) bf16.
    Returns (N, D, H, W, Cout_p) `out_dtype`.
    """
    N, Dp2, Hp2, Wp2, cin_p = xpad.shape
    D, H, W = Dp2 - 2, Hp2 - 2, Wp2 - 2
    cout_p = w_mat.shape[-1]
    HW = H * W

    # Flatten (batch, padded-depth) so depth offsets are plain block indices.
    x_rows = xpad.reshape(N * Dp2, Hp2, Wp2, cin_p)

    def x_map(kd):
        return lambda n, d: (n * Dp2 + d + kd, 0, 0, 0)

    flops = 2 * 27 * N * D * HW * cin_p * cout_p
    bytes_accessed = (3 * x_rows.size * x_rows.dtype.itemsize
                      + w_mat.size * 2 + N * D * HW * cout_p * 4)

    y, stats = pl.pallas_call(
        functools.partial(_conv_stats_kernel, H=H, W=W),
        out_shape=(jax.ShapeDtypeStruct((N * D, HW, cout_p), jnp.float32),
                   jax.ShapeDtypeStruct((N, 2, cout_p), jnp.float32)),
        grid=(N, D),
        in_specs=[
            pl.BlockSpec((1, Hp2, Wp2, cin_p), x_map(0)),
            pl.BlockSpec((1, Hp2, Wp2, cin_p), x_map(1)),
            pl.BlockSpec((1, Hp2, Wp2, cin_p), x_map(2)),
            pl.BlockSpec((27, cin_p, cout_p), lambda n, d: (0, 0, 0)),
        ],
        out_specs=(
            pl.BlockSpec((1, HW, cout_p), lambda n, d: (n * D + d, 0, 0)),
            pl.BlockSpec((1, 2, cout_p), lambda n, d: (n, 0, 0)),
        ),
        compiler_params=pltpu.CompilerParams(
            dimension_semantics=("parallel", "arbitrary"),
            vmem_limit_bytes=48 * 1024 * 1024),
        cost_estimate=pl.CostEstimate(flops=flops, transcendentals=0,
                                      bytes_accessed=bytes_accessed),
    )(x_rows, x_rows, x_rows, w_mat)

    # Finalize BatchNorm statistics (tiny per-channel vectors, plain XLA).
    m_count = float(N * D * HW)
    tot = jnp.sum(stats, axis=0)                       # (2, Cout_p)
    mean = tot[0] / m_count
    # NOTE: single-pass sum/sumsq stats.  The conv bias is dropped (absorbed by
    # the batch mean), so |mean| stays O(std) and E[y^2]-mean^2 cancellation is
    # benign; the clamp guards against tiny negative round-off.
    var = jnp.maximum(tot[1] / m_count - mean * mean, 0.0)
    inv = lax.rsqrt(var + eps)
    scale = (gamma_p * inv).reshape(1, cout_p).astype(jnp.float32)
    shift = (beta_p - mean * gamma_p * inv).reshape(1, cout_p).astype(jnp.float32)

    out = pl.pallas_call(
        _bn_relu_kernel,
        out_shape=jax.ShapeDtypeStruct((N * D, HW, cout_p), out_dtype),
        grid=(N * D,),
        in_specs=[pl.BlockSpec((1, HW, cout_p), lambda i: (i, 0, 0)),
                  pl.BlockSpec((1, cout_p), lambda i: (0, 0)),
                  pl.BlockSpec((1, cout_p), lambda i: (0, 0))],
        out_specs=pl.BlockSpec((1, HW, cout_p), lambda i: (i, 0, 0)),
        compiler_params=pltpu.CompilerParams(
            dimension_semantics=("parallel",)),
    )(y, scale, shift)
    return out.reshape(N, D, H, W, cout_p)


def _prep_conv_params(w, gamma, beta, cin_p, cout_p):
    """(Cout, Cin, 3, 3, 3) torch weights -> (27, Cin_p, Cout_p) bf16 matrices
    plus lane-padded gamma/beta.  The conv bias is intentionally dropped: with
    training-mode BatchNorm the batch mean absorbs it exactly."""
    cout, cin = w.shape[0], w.shape[1]
    wk = jnp.transpose(w, (2, 3, 4, 1, 0)).reshape(27, cin, cout)
    wk = jnp.pad(wk, ((0, 0), (0, cin_p - cin), (0, cout_p - cout)))
    g = jnp.pad(gamma, (0, cout_p - cout))
    b = jnp.pad(beta, (0, cout_p - cout))
    return wk.astype(jnp.bfloat16), g, b


# ---------------------------------------------------------------------------
# UpConv forward
# ---------------------------------------------------------------------------
def upconv_apply(x1, x2, params, eps=1e-5):
    """UpConv.forward(x1, x2): trilinear 2x upsample, concat, DoubleConv."""
    N, C1, _, _, _ = x1.shape
    C2 = x2.shape[1]
    ccat = C1 + C2
    mid = params['w1'].shape[0]
    cout = params['w2'].shape[0]

    cin_p = _round_up(ccat, LANE)
    cmid_p = _round_up(mid, LANE)
    cout_p = _round_up(cout, LANE)

    # 1) trilinear upsample (Pallas, separable: no dense kron map)
    x1_up = trilinear_upsample_2x(x1)

    # 2) channel concat + channels-last + lane/spatial zero padding + bf16 cast
    x = jnp.concatenate([x1_up, x2], axis=1)           # (N, ccat, 2D, 2H, 2W)
    x = jnp.transpose(x, (0, 2, 3, 4, 1))              # channels-last (lanes)
    x = jnp.pad(x.astype(jnp.bfloat16),
                ((0, 0), (1, 1), (1, 1), (1, 1), (0, cin_p - ccat)))

    # 3) DoubleConv = 2 x (conv3x3x3 + BatchNorm(batch stats) + ReLU)
    w1k, g1, b1 = _prep_conv_params(params['w1'], params['g1'],
                                    params['beta1'], cin_p, cmid_p)
    w2k, g2, b2 = _prep_conv_params(params['w2'], params['g2'],
                                    params['beta2'], cmid_p, cout_p)

    y1 = conv3x3x3_bn_relu(x, w1k, g1, b1, eps=eps, out_dtype=jnp.bfloat16)
    y1 = jnp.pad(y1, ((0, 0), (1, 1), (1, 1), (1, 1), (0, 0)))   # stays lane-padded
    y2 = conv3x3x3_bn_relu(y1, w2k, g2, b2, eps=eps, out_dtype=jnp.float32)

    out = y2[..., :cout]                                # drop lane padding
    return jnp.transpose(out, (0, 4, 1, 2, 3))          # back to NCDHW


# ---------------------------------------------------------------------------
# Pure-JAX reference (numerical sanity check, faithful to the PyTorch module)
# ---------------------------------------------------------------------------
def reference(x1, x2, params, eps=1e-5):
    N, C1, D, H, W = x1.shape
    Md, Mh, Mw = upsample_matrix(D), upsample_matrix(H), upsample_matrix(W)
    x1_up = jnp.einsum('ncdhw,Dd,Hh,Ww->ncDHW', x1, Md, Mh, Mw,
                       precision=lax.Precision.HIGHEST)
    x = jnp.concatenate([x1_up, x2], axis=1)

    def block(x, w, b, g, beta):
        y = lax.conv_general_dilated(
            x, w, (1, 1, 1), 'SAME',
            dimension_numbers=('NCDHW', 'OIDHW', 'NCDHW'),
            precision=lax.Precision.HIGHEST)
        y = y + b.reshape(1, -1, 1, 1, 1)
        mean = jnp.mean(y, axis=(0, 2, 3, 4), keepdims=True)
        var = jnp.mean((y - mean) ** 2, axis=(0, 2, 3, 4), keepdims=True)
        y = (y - mean) * lax.rsqrt(var + eps)
        y = y * g.reshape(1, -1, 1, 1, 1) + beta.reshape(1, -1, 1, 1, 1)
        return jnp.maximum(y, 0.0)

    y = block(x, params['w1'], params['b1'], params['g1'], params['beta1'])
    return block(y, params['w2'], params['b2'], params['g2'], params['beta2'])


# ---------------------------------------------------------------------------
if __name__ == "__main__":
    key = jax.random.PRNGKey(0)
    N, Cin, Cout = 2, 8, 8          # UpConv(in_channels=8, out_channels=8)
    D = H = W = 4
    Cskip = Cin // 2                # skip connection channels (x2)
    Ccat = Cin + Cskip              # DoubleConv input channels = 12
    mid = Cout // 2 if Ccat < Cout else Ccat // 2   # = 6

    ks = jax.random.split(key, 10)
    x1 = jax.random.normal(ks[0], (N, Cin, D, H, W), jnp.float32)
    x2 = jax.random.normal(ks[1], (N, Cskip, 2 * D, 2 * H, 2 * W), jnp.float32)

    params = dict(
        w1=0.1 * jax.random.normal(ks[2], (mid, Ccat, 3, 3, 3), jnp.float32),
        b1=0.05 * jax.random.normal(ks[3], (mid,), jnp.float32),
        g1=1.0 + 0.1 * jax.random.normal(ks[4], (mid,), jnp.float32),
        beta1=0.1 * jax.random.normal(ks[5], (mid,), jnp.float32),
        w2=0.1 * jax.random.normal(ks[6], (Cout, mid, 3, 3, 3), jnp.float32),
        b2=0.05 * jax.random.normal(ks[7], (Cout,), jnp.float32),
        g2=1.0 + 0.1 * jax.random.normal(ks[8], (Cout,), jnp.float32),
        beta2=0.1 * jax.random.normal(ks[9], (Cout,), jnp.float32),
    )
    # TODO(synk): BatchNorm running-stat buffers (running_mean/var, momentum)
    # are not updated (stateless forward); training-mode batch statistics are
    # used, matching PyTorch's default forward output.  The conv biases b1/b2
    # are therefore absorbed by the batch mean and never used in the kernels.

    out = jax.jit(upconv_apply)(x1, x2, params)
    out = jax.block_until_ready(out)
    assert out.shape == (N, Cout, 2 * D, 2 * H, 2 * W)

    ref = reference(x1, x2, params)
    # bf16 MXU inputs with f32 accumulation -> scale-aware error metric.
    err = float(jnp.max(jnp.abs(out - ref) / (1.0 + jnp.abs(ref))))
    if not (err < 5e-2):
        raise AssertionError(f"mismatch vs reference: max scaled err {err}")

    print("KERNEL_OK")
</pallas_src>

<mosaic_0001>
module attributes {stable_mosaic.version = 11 : i64} {
  func.func @_interp_axis_kernel(%arg0: i32, %arg1: memref<8x4xf32, #tpu.memory_space<vmem>>, %arg2: memref<8x4x16xf32, #tpu.memory_space<vmem>>, %arg3: memref<8x8x16xf32, #tpu.memory_space<vmem>>) attributes {dimension_semantics = [#tpu.dimension_semantics<parallel>], iteration_bounds = array<i64: 2>, scalar_prefetch = 0 : i64, scratch_operands = 0 : i64, tpu.core_type = #tpu.core_type<tc>, window_params = [{pipeline_mode = #tpu.pipeline_mode<synchronous>, transform_indices = @transform_0, window_bounds = array<i64: 8, 4>}, {transform_indices = @transform_1, window_bounds = array<i64: 8, 4, 16>}, {transform_indices = @transform_2, window_bounds = array<i64: 8, 8, 16>}]} {
    %c0 = arith.constant 0 : index
    %c0_0 = arith.constant 0 : index
    %0 = vector.load %arg1[%c0, %c0_0] : memref<8x4xf32, #tpu.memory_space<vmem>>, vector<8x4xf32>
    %c0_1 = arith.constant 0 : index
    %c0_2 = arith.constant 0 : index
    %c0_3 = arith.constant 0 : index
    %1 = vector.load %arg2[%c0_1, %c0_2, %c0_3] : memref<8x4x16xf32, #tpu.memory_space<vmem>>, vector<1x4x16xf32>
    %2 = vector.shape_cast %1 : vector<1x4x16xf32> to vector<4x16xf32>
    %cst = arith.constant dense<0.000000e+00> : vector<8x16xf32>
    %3 = tpu.matmul %0, %2, %cst {dimension_numbers = #tpu.dot_dimension_numbers<[1], [0], [0], [1], [0, 0, 1, 1], [], []>} : vector<8x4xf32>, vector<4x16xf32>, vector<8x16xf32> -> vector<8x16xf32>
    %c0_4 = arith.constant 0 : index
    %c0_5 = arith.constant 0 : index
    %c0_6 = arith.constant 0 : index
    %4 = vector.load %arg3[%c0_4, %c0_5, %c0_6] : memref<8x8x16xf32, #tpu.memory_space<vmem>>, vector<1x8x16xf32>
    %5 = vector.shape_cast %4 : vector<1x8x16xf32> to vector<8x16xf32>
    %6 = vector.shape_cast %3 : vector<8x16xf32> to vector<1x8x16xf32>
    tpu.vector_store %arg3[%c0_4, %c0_5, %c0_6], %6 {strides = array<i32>} : memref<8x8x16xf32, #tpu.memory_space<vmem>>, vector<1x8x16xf32>,
    %c0_7 = arith.constant 0 : index
    %c0_8 = arith.constant 0 : index
    %7 = vector.load %arg1[%c0_7, %c0_8] : memref<8x4xf32, #tpu.memory_space<vmem>>, vector<8x4xf32>
    %c1 = arith.constant 1 : index
    %c0_9 = arith.constant 0 : index
    %c0_10 = arith.constant 0 : index
    %8 = vector.load %arg2[%c1, %c0_9, %c0_10] : memref<8x4x16xf32, #tpu.memory_space<vmem>>, vector<1x4x16xf32>
    %9 = vector.shape_cast %8 : vector<1x4x16xf32> to vector<4x16xf32>
    %cst_11 = arith.constant dense<0.000000e+00> : vector<8x16xf32>
    %10 = tpu.matmul %7, %9, %cst_11 {dimension_numbers = #tpu.dot_dimension_numbers<[1], [0], [0], [1], [0, 0, 1, 1], [], []>} : vector<8x4xf32>, vector<4x16xf32>, vector<8x16xf32> -> vector<8x16xf32>
    %c1_12 = arith.constant 1 : index
    %c0_13 = arith.constant 0 : index
    %c0_14 = arith.constant 0 : index
    %11 = vector.load %arg3[%c1_12, %c0_13, %c0_14] : memref<8x8x16xf32, #tpu.memory_space<vmem>>, vector<1x8x16xf32>
    %12 = vector.shape_cast %11 : vector<1x8x16xf32> to vector<8x16xf32>
    %13 = vector.shape_cast %10 : vector<8x16xf32> to vector<1x8x16xf32>
    tpu.vector_store %arg3[%c1_12, %c0_13, %c0_14], %13 {strides = array<i32>} : memref<8x8x16xf32, #tpu.memory_space<vmem>>, vector<1x8x16xf32>,
    %c0_15 = arith.constant 0 : index
    %c0_16 = arith.constant 0 : index
    %14 = vector.load %arg1[%c0_15, %c0_16] : memref<8x4xf32, #tpu.memory_space<vmem>>, vector<8x4xf32>
    %c2 = arith.constant 2 : index
    %c0_17 = arith.constant 0 : index
    %c0_18 = arith.constant 0 : index
    %15 = vector.load %arg2[%c2, %c0_17, %c0_18] : memref<8x4x16xf32, #tpu.memory_space<vmem>>, vector<1x4x16xf32>
    %16 = vector.shape_cast %15 : vector<1x4x16xf32> to vector<4x16xf32>
    %cst_19 = arith.constant dense<0.000000e+00> : vector<8x16xf32>
    %17 = tpu.matmul %14, %16, %cst_19 {dimension_numbers = #tpu.dot_dimension_numbers<[1], [0], [0], [1], [0, 0, 1, 1], [], []>} : vector<8x4xf32>, vector<4x16xf32>, vector<8x16xf32> -> vector<8x16xf32>
    %c2_20 = arith.constant 2 : index
    %c0_21 = arith.constant 0 : index
    %c0_22 = arith.constant 0 : index
    %18 = vector.load %arg3[%c2_20, %c0_21, %c0_22] : memref<8x8x16xf32, #tpu.memory_space<vmem>>, vector<1x8x16xf32>
    %19 = vector.shape_cast %18 : vector<1x8x16xf32> to vector<8x16xf32>
    %20 = vector.shape_cast %17 : vector<8x16xf32> to vector<1x8x16xf32>
    tpu.vector_store %arg3[%c2_20, %c0_21, %c0_22], %20 {strides = array<i32>} : memref<8x8x16xf32, #tpu.memory_space<vmem>>, vector<1x8x16xf32>,
    %c0_23 = arith.constant 0 : index
    %c0_24 = arith.constant 0 : index
    %21 = vector.load %arg1[%c0_23, %c0_24] : memref<8x4xf32, #tpu.memory_space<vmem>>, vector<8x4xf32>
    %c3 = arith.constant 3 : index
    %c0_25 = arith.constant 0 : index
    %c0_26 = arith.constant 0 : index
    %22 = vector.load %arg2[%c3, %c0_25, %c0_26] : memref<8x4x16xf32, #tpu.memory_space<vmem>>, vector<1x4x16xf32>
    %23 = vector.shape_cast %22 : vector<1x4x16xf32> to vector<4x16xf32>
    %cst_27 = arith.constant dense<0.000000e+00> : vector<8x16xf32>
    %24 = tpu.matmul %21, %23, %cst_27 {dimension_numbers = #tpu.dot_dimension_numbers<[1], [0], [0], [1], [0, 0, 1, 1], [], []>} : vector<8x4xf32>, vector<4x16xf32>, vector<8x16xf32> -> vector<8x16xf32>
    %c3_28 = arith.constant 3 : index
    %c0_29 = arith.constant 0 : index
    %c0_30 = arith.constant 0 : index
    %25 = vector.load %arg3[%c3_28, %c0_29, %c0_30] : memref<8x8x16xf32, #tpu.memory_space<vmem>>, vector<1x8x16xf32>
    %26 = vector.shape_cast %25 : vector<1x8x16xf32> to vector<8x16xf32>
    %27 = vector.shape_cast %24 : vector<8x16xf32> to vector<1x8x16xf32>
    tpu.vector_store %arg3[%c3_28, %c0_29, %c0_30], %27 {strides = array<i32>} : memref<8x8x16xf32, #tpu.memory_space<vmem>>, vector<1x8x16xf32>,
    %c0_31 = arith.constant 0 : index
    %c0_32 = arith.constant 0 : index
    %28 = vector.load %arg1[%c0_31, %c0_32] : memref<8x4xf32, #tpu.memory_space<vmem>>, vector<8x4xf32>
    %c4 = arith.constant 4 : index
    %c0_33 = arith.constant 0 : index
    %c0_34 = arith.constant 0 : index
    %29 = vector.load %arg2[%c4, %c0_33, %c0_34] : memref<8x4x16xf32, #tpu.memory_space<vmem>>, vector<1x4x16xf32>
    %30 = vector.shape_cast %29 : vector<1x4x16xf32> to vector<4x16xf32>
    %cst_35 = arith.constant dense<0.000000e+00> : vector<8x16xf32>
    %31 = tpu.matmul %28, %30, %cst_35 {dimension_numbers = #tpu.dot_dimension_numbers<[1], [0], [0], [1], [0, 0, 1, 1], [], []>} : vector<8x4xf32>, vector<4x16xf32>, vector<8x16xf32> -> vector<8x16xf32>
    %c4_36 = arith.constant 4 : index
    %c0_37 = arith.constant 0 : index
    %c0_38 = arith.constant 0 : index
    %32 = vector.load %arg3[%c4_36, %c0_37, %c0_38] : memref<8x8x16xf32, #tpu.memory_space<vmem>>, vector<1x8x16xf32>
    %33 = vector.shape_cast %32 : vector<1x8x16xf32> to vector<8x16xf32>
    %34 = vector.shape_cast %31 : vector<8x16xf32> to vector<1x8x16xf32>
    tpu.vector_store %arg3[%c4_36, %c0_37, %c0_38], %34 {strides = array<i32>} : memref<8x8x16xf32, #tpu.memory_space<vmem>>, vector<1x8x16xf32>,
    %c0_39 = arith.constant 0 : index
    %c0_40 = arith.constant 0 : index
    %35 = vector.load %arg1[%c0_39, %c0_40] : memref<8x4xf32, #tpu.memory_space<vmem>>, vector<8x4xf32>
    %c5 = arith.constant 5 : index
    %c0_41 = arith.constant 0 : index
    %c0_42 = arith.constant 0 : index
    %36 = vector.load %arg2[%c5, %c0_41, %c0_42] : memref<8x4x16xf32, #tpu.memory_space<vmem>>, vector<1x4x16xf32>
    %37 = vector.shape_cast %36 : vector<1x4x16xf32> to vector<4x16xf32>
    %cst_43 = arith.constant dense<0.000000e+00> : vector<8x16xf32>
    %38 = tpu.matmul %35, %37, %cst_43 {dimension_numbers = #tpu.dot_dimension_numbers<[1], [0], [0], [1], [0, 0, 1, 1], [], []>} : vector<8x4xf32>, vector<4x16xf32>, vector<8x16xf32> -> vector<8x16xf32>
    %c5_44 = arith.constant 5 : index
    %c0_45 = arith.constant 0 : index
    %c0_46 = arith.constant 0 : index
    %39 = vector.load %arg3[%c5_44, %c0_45, %c0_46] : memref<8x8x16xf32, #tpu.memory_space<vmem>>, vector<1x8x16xf32>
    %40 = vector.shape_cast %39 : vector<1x8x16xf32> to vector<8x16xf32>
    %41 = vector.shape_cast %38 : vector<8x16xf32> to vector<1x8x16xf32>
    tpu.vector_store %arg3[%c5_44, %c0_45, %c0_46], %41 {strides = array<i32>} : memref<8x8x16xf32, #tpu.memory_space<vmem>>, vector<1x8x16xf32>,
    %c0_47 = arith.constant 0 : index
    %c0_48 = arith.constant 0 : index
    %42 = vector.load %arg1[%c0_47, %c0_48] : memref<8x4xf32, #tpu.memory_space<vmem>>, vector<8x4xf32>
    %c6 = arith.constant 6 : index
    %c0_49 = arith.constant 0 : index
    %c0_50 = arith.constant 0 : index
    %43 = vector.load %arg2[%c6, %c0_49, %c0_50] : memref<8x4x16xf32, #tpu.memory_space<vmem>>, vector<1x4x16xf32>
    %44 = vector.shape_cast %43 : vector<1x4x16xf32> to vector<4x16xf32>
    %cst_51 = arith.constant dense<0.000000e+00> : vector<8x16xf32>
    %45 = tpu.matmul %42, %44, %cst_51 {dimension_numbers = #tpu.dot_dimension_numbers<[1], [0], [0], [1], [0, 0, 1, 1], [], []>} : vector<8x4xf32>, vector<4x16xf32>, vector<8x16xf32> -> vector<8x16xf32>
    %c6_52 = arith.constant 6 : index
    %c0_53 = arith.constant 0 : index
    %c0_54 = arith.constant 0 : index
    %46 = vector.load %arg3[%c6_52, %c0_53, %c0_54] : memref<8x8x16xf32, #tpu.memory_space<vmem>>, vector<1x8x16xf32>
    %47 = vector.shape_cast %46 : vector<1x8x16xf32> to vector<8x16xf32>
    %48 = vector.shape_cast %45 : vector<8x16xf32> to vector<1x8x16xf32>
    tpu.vector_store %arg3[%c6_52, %c0_53, %c0_54], %48 {strides = array<i32>} : memref<8x8x16xf32, #tpu.memory_space<vmem>>, vector<1x8x16xf32>,
    %c0_55 = arith.constant 0 : index
    %c0_56 = arith.constant 0 : index
    %49 = vector.load %arg1[%c0_55, %c0_56] : memref<8x4xf32, #tpu.memory_space<vmem>>, vector<8x4xf32>
    %c7 = arith.constant 7 : index
    %c0_57 = arith.constant 0 : index
    %c0_58 = arith.constant 0 : index
    %50 = vector.load %arg2[%c7, %c0_57, %c0_58] : memref<8x4x16xf32, #tpu.memory_space<vmem>>, vector<1x4x16xf32>
    %51 = vector.shape_cast %50 : vector<1x4x16xf32> to vector<4x16xf32>
    %cst_59 = arith.constant dense<0.000000e+00> : vector<8x16xf32>
    %52 = tpu.matmul %49, %51, %cst_59 {dimension_numbers = #tpu.dot_dimension_numbers<[1], [0], [0], [1], [0, 0, 1, 1], [], []>} : vector<8x4xf32>, vector<4x16xf32>, vector<8x16xf32> -> vector<8x16xf32>
    %c7_60 = arith.constant 7 : index
    %c0_61 = arith.constant 0 : index
    %c0_62 = arith.constant 0 : index
    %53 = vector.load %arg3[%c7_60, %c0_61, %c0_62] : memref<8x8x16xf32, #tpu.memory_space<vmem>>, vector<1x8x16xf32>
    %54 = vector.shape_cast %53 : vector<1x8x16xf32> to vector<8x16xf32>
    %55 = vector.shape_cast %52 : vector<8x16xf32> to vector<1x8x16xf32>
    tpu.vector_store %arg3[%c7_60, %c0_61, %c0_62], %55 {strides = array<i32>} : memref<8x8x16xf32, #tpu.memory_space<vmem>>, vector<1x8x16xf32>,
    return
  }
  func.func @transform_0(%arg0: i32) -> (i32, i32) {
    %c0_i32 = arith.constant 0 : i32
    %c0_i32_0 = arith.constant 0 : i32
    %c0_i32_1 = arith.constant 0 : i32
    return %c0_i32, %c0_i32_0 : i32, i32
  }
  func.func @transform_1(%arg0: i32) -> (i32, i32, i32) {
    %c0_i32 = arith.constant 0 : i32
    %c0_i32_0 = arith.constant 0 : i32
    %c0_i32_1 = arith.constant 0 : i32
    return %arg0, %c0_i32, %c0_i32_0 : i32, i32, i32
  }
  func.func @transform_2(%arg0: i32) -> (i32, i32, i32) {
    %c0_i32 = arith.constant 0 : i32
    %c0_i32_0 = arith.constant 0 : i32
    %c0_i32_1 = arith.constant 0 : i32
    return %arg0, %c0_i32, %c0_i32_0 : i32, i32, i32
  }
}

module attributes {stable_mosaic.version = 11 : i64} {
  func.func @_interp_plane_kernel(%arg0: i32, %arg1: memref<8x4xf32, #tpu.memory_space<vmem>>, %arg2: memref<4x8xf32, #tpu.memory_space<vmem>>, %arg3: memref<8x4x4xf32, #tpu.memory_space<vmem>>, %arg4: memref<8x8x8xf32, #tpu.memory_space<vmem>>) attributes {dimension_semantics = [#tpu.dimension_semantics<parallel>], iteration_bounds = array<i64: 16>, scalar_prefetch = 0 : i64, scratch_operands = 0 : i64, tpu.core_type = #tpu.core_type<tc>, window_params = [{pipeline_mode = #tpu.pipeline_mode<synchronous>, transform_indices = @transform_0, window_bounds = array<i64: 8, 4>}, {pipeline_mode = #tpu.pipeline_mode<synchronous>, transform_indices = @transform_1, window_bounds = array<i64: 4, 8>}, {transform_indices = @transform_2, window_bounds = array<i64: 8, 4, 4>}, {transform_indices = @transform_3, window_bounds = array<i64: 8, 8, 8>}]} {
    %c0 = arith.constant 0 : index
    %c0_0 = arith.constant 0 : index
    %0 = vector.load %arg1[%c0, %c0_0] : memref<8x4xf32, #tpu.memory_space<vmem>>, vector<8x4xf32>
    %c0_1 = arith.constant 0 : index
    %c0_2 = arith.constant 0 : index
    %c0_3 = arith.constant 0 : index
    %1 = vector.load %arg3[%c0_1, %c0_2, %c0_3] : memref<8x4x4xf32, #tpu.memory_space<vmem>>, vector<1x4x4xf32>
    %2 = vector.shape_cast %1 : vector<1x4x4xf32> to vector<4x4xf32>
    %cst = arith.constant dense<0.000000e+00> : vector<8x4xf32>
    %3 = tpu.matmul %0, %2, %cst {dimension_numbers = #tpu.dot_dimension_numbers<[1], [0], [0], [1], [0, 0, 1, 1], [], []>} : vector<8x4xf32>, vector<4x4xf32>, vector<8x4xf32> -> vector<8x4xf32>
    %c0_4 = arith.constant 0 : index
    %c0_5 = arith.constant 0 : index
    %4 = vector.load %arg2[%c0_4, %c0_5] : memref<4x8xf32, #tpu.memory_space<vmem>>, vector<4x8xf32>
    %cst_6 = arith.constant dense<0.000000e+00> : vector<8x8xf32>
    %5 = tpu.matmul %3, %4, %cst_6 {dimension_numbers = #tpu.dot_dimension_numbers<[1], [0], [0], [1], [0, 0, 1, 1], [], []>} : vector<8x4xf32>, vector<4x8xf32>, vector<8x8xf32> -> vector<8x8xf32>
    %c0_7 = arith.constant 0 : index
    %c0_8 = arith.constant 0 : index
    %c0_9 = arith.constant 0 : index
    %6 = vector.load %arg4[%c0_7, %c0_8, %c0_9] : memref<8x8x8xf32, #tpu.memory_space<vmem>>, vector<1x8x8xf32>
    %7 = vector.shape_cast %6 : vector<1x8x8xf32> to vector<8x8xf32>
    %8 = vector.shape_cast %5 : vector<8x8xf32> to vector<1x8x8xf32>
    tpu.vector_store %arg4[%c0_7, %c0_8, %c0_9], %8 {strides = array<i32>} : memref<8x8x8xf32, #tpu.memory_space<vmem>>, vector<1x8x8xf32>,
    %c0_10 = arith.constant 0 : index
    %c0_11 = arith.constant 0 : index
    %9 = vector.load %arg1[%c0_10, %c0_11] : memref<8x4xf32, #tpu.memory_space<vmem>>, vector<8x4xf32>
    %c1 = arith.constant 1 : index
    %c0_12 = arith.constant 0 : index
    %c0_13 = arith.constant 0 : index
    %10 = vector.load %arg3[%c1, %c0_12, %c0_13] : memref<8x4x4xf32, #tpu.memory_space<vmem>>, vector<1x4x4xf32>
    %11 = vector.shape_cast %10 : vector<1x4x4xf32> to vector<4x4xf32>
    %cst_14 = arith.constant dense<0.000000e+00> : vector<8x4xf32>
    %12 = tpu.matmul %9, %11, %cst_14 {dimension_numbers = #tpu.dot_dimension_numbers<[1], [0], [0], [1], [0, 0, 1, 1], [], []>} : vector<8x4xf32>, vector<4x4xf32>, vector<8x4xf32> -> vector<8x4xf32>
    %c0_15 = arith.constant 0 : index
    %c0_16 = arith.constant 0 : index
    %13 = vector.load %arg2[%c0_15, %c0_16] : memref<4x8xf32, #tpu.memory_space<vmem>>, vector<4x8xf32>
    %cst_17 = arith.constant dense<0.000000e+00> : vector<8x8xf32>
    %14 = tpu.matmul %12, %13, %cst_17 {dimension_numbers = #tpu.dot_dimension_numbers<[1], [0], [0], [1], [0, 0, 1, 1], [], []>} : vector<8x4xf32>, vector<4x8xf32>, vector<8x8xf32> -> vector<8x8xf32>
    %c1_18 = arith.constant 1 : index
    %c0_19 = arith.constant 0 : index
    %c0_20 = arith.constant 0 : index
    %15 = vector.load %arg4[%c1_18, %c0_19, %c0_20] : memref<8x8x8xf32, #tpu.memory_space<vmem>>, vector<1x8x8xf32>
    %16 = vector.shape_cast %15 : vector<1x8x8xf32> to vector<8x8xf32>
    %17 = vector.shape_cast %14 : vector<8x8xf32> to vector<1x8x8xf32>
    tpu.vector_store %arg4[%c1_18, %c0_19, %c0_20], %17 {strides = array<i32>} : memref<8x8x8xf32, #tpu.memory_space<vmem>>, vector<1x8x8xf32>,
    %c0_21 = arith.constant 0 : index
    %c0_22 = arith.constant 0 : index
    %18 = vector.load %arg1[%c0_21, %c0_22] : memref<8x4xf32, #tpu.memory_space<vmem>>, vector<8x4xf32>
    %c2 = arith.constant 2 : index
    %c0_23 = arith.constant 0 : index
    %c0_24 = arith.constant 0 : index
    %19 = vector.load %arg3[%c2, %c0_23, %c0_24] : memref<8x4x4xf32, #tpu.memory_space<vmem>>, vector<1x4x4xf32>
    %20 = vector.shape_cast %19 : vector<1x4x4xf32> to vector<4x4xf32>
    %cst_25 = arith.constant dense<0.000000e+00> : vector<8x4xf32>
    %21 = tpu.matmul %18, %20, %cst_25 {dimension_numbers = #tpu.dot_dimension_numbers<[1], [0], [0], [1], [0, 0, 1, 1], [], []>} : vector<8x4xf32>, vector<4x4xf32>, vector<8x4xf32> -> vector<8x4xf32>
    %c0_26 = arith.constant 0 : index
    %c0_27 = arith.constant 0 : index
    %22 = vector.load %arg2[%c0_26, %c0_27] : memref<4x8xf32, #tpu.memory_space<vmem>>, vector<4x8xf32>
    %cst_28 = arith.constant dense<0.000000e+00> : vector<8x8xf32>
    %23 = tpu.matmul %21, %22, %cst_28 {dimension_numbers = #tpu.dot_dimension_numbers<[1], [0], [0], [1], [0, 0, 1, 1], [], []>} : vector<8x4xf32>, vector<4x8xf32>, vector<8x8xf32> -> vector<8x8xf32>
    %c2_29 = arith.constant 2 : index
    %c0_30 = arith.constant 0 : index
    %c0_31 = arith.constant 0 : index
    %24 = vector.load %arg4[%c2_29, %c0_30, %c0_31] : memref<8x8x8xf32, #tpu.memory_space<vmem>>, vector<1x8x8xf32>
    %25 = vector.shape_cast %24 : vector<1x8x8xf32> to vector<8x8xf32>
    %26 = vector.shape_cast %23 : vector<8x8xf32> to vector<1x8x8xf32>
    tpu.vector_store %arg4[%c2_29, %c0_30, %c0_31], %26 {strides = array<i32>} : memref<8x8x8xf32, #tpu.memory_space<vmem>>, vector<1x8x8xf32>,
    %c0_32 = arith.constant 0 : index
    %c0_33 = arith.constant 0 : index
    %27 = vector.load %arg1[%c0_32, %c0_33] : memref<8x4xf32, #tpu.memory_space<vmem>>, vector<8x4xf32>
    %c3 = arith.constant 3 : index
    %c0_34 = arith.constant 0 : index
    %c0_35 = arith.constant 0 : index
    %28 = vector.load %arg3[%c3, %c0_34, %c0_35] : memref<8x4x4xf32, #tpu.memory_space<vmem>>, vector<1x4x4xf32>
    %29 = vector.shape_cast %28 : vector<1x4x4xf32> to vector<4x4xf32>
    %cst_36 = arith.constant dense<0.000000e+00> : vector<8x4xf32>
    %30 = tpu.matmul %27, %29, %cst_36 {dimension_numbers = #tpu.dot_dimension_numbers<[1], [0], [0], [1], [0, 0, 1, 1], [], []>} : vector<8x4xf32>, vector<4x4xf32>, vector<8x4xf32> -> vector<8x4xf32>
    %c0_37 = arith.constant 0 : index
    %c0_38 = arith.constant 0 : index
    %31 = vector.load %arg2[%c0_37, %c0_38] : memref<4x8xf32, #tpu.memory_space<vmem>>, vector<4x8xf32>
    %cst_39 = arith.constant dense<0.000000e+00> : vector<8x8xf32>
    %32 = tpu.matmul %30, %31, %cst_39 {dimension_numbers = #tpu.dot_dimension_numbers<[1], [0], [0], [1], [0, 0, 1, 1], [], []>} : vector<8x4xf32>, vector<4x8xf32>, vector<8x8xf32> -> vector<8x8xf32>
    %c3_40 = arith.constant 3 : index
    %c0_41 = arith.constant 0 : index
    %c0_42 = arith.constant 0 : index
    %33 = vector.load %arg4[%c3_40, %c0_41, %c0_42] : memref<8x8x8xf32, #tpu.memory_space<vmem>>, vector<1x8x8xf32>
    %34 = vector.shape_cast %33 : vector<1x8x8xf32> to vector<8x8xf32>
    %35 = vector.shape_cast %32 : vector<8x8xf32> to vector<1x8x8xf32>
    tpu.vector_store %arg4[%c3_40, %c0_41, %c0_42], %35 {strides = array<i32>} : memref<8x8x8xf32, #tpu.memory_space<vmem>>, vector<1x8x8xf32>,
    %c0_43 = arith.constant 0 : index
    %c0_44 = arith.constant 0 : index
    %36 = vector.load %arg1[%c0_43, %c0_44] : memref<8x4xf32, #tpu.memory_space<vmem>>, vector<8x4xf32>
    %c4 = arith.constant 4 : index
    %c0_45 = arith.constant 0 : index
    %c0_46 = arith.constant 0 : index
    %37 = vector.load %arg3[%c4, %c0_45, %c0_46] : memref<8x4x4xf32, #tpu.memory_space<vmem>>, vector<1x4x4xf32>
    %38 = vector.shape_cast %37 : vector<1x4x4xf32> to vector<4x4xf32>
    %cst_47 = arith.constant dense<0.000000e+00> : vector<8x4xf32>
    %39 = tpu.matmul %36, %38, %cst_47 {dimension_numbers = #tpu.dot_dimension_numbers<[1], [0], [0], [1], [0, 0, 1, 1], [], []>} : vector<8x4xf32>, vector<4x4xf32>, vector<8x4xf32> -> vector<8x4xf32>
    %c0_48 = arith.constant 0 : index
    %c0_49 = arith.constant 0 : index
    %40 = vector.load %arg2[%c0_48, %c0_49] : memref<4x8xf32, #tpu.memory_space<vmem>>, vector<4x8xf32>
    %cst_50 = arith.constant dense<0.000000e+00> : vector<8x8xf32>
    %41 = tpu.matmul %39, %40, %cst_50 {dimension_numbers = #tpu.dot_dimension_numbers<[1], [0], [0], [1], [0, 0, 1, 1], [], []>} : vector<8x4xf32>, vector<4x8xf32>, vector<8x8xf32> -> vector<8x8xf32>
    %c4_51 = arith.constant 4 : index
    %c0_52 = arith.constant 0 : index
    %c0_53 = arith.constant 0 : index
    %42 = vector.load %arg4[%c4_51, %c0_52, %c0_53] : memref<8x8x8xf32, #tpu.memory_space<vmem>>, vector<1x8x8xf32>
    %43 = vector.shape_cast %42 : vector<1x8x8xf32> to vector<8x8xf32>
    %44 = vector.shape_cast %41 : vector<8x8xf32> to vector<1x8x8xf32>
    tpu.vector_store %arg4[%c4_51, %c0_52, %c0_53], %44 {strides = array<i32>} : memref<8x8x8xf32, #tpu.memory_space<vmem>>, vector<1x8x8xf32>,
    %c0_54 = arith.constant 0 : index
    %c0_55 = arith.constant 0 : index
    %45 = vector.load %arg1[%c0_54, %c0_55] : memref<8x4xf32, #tpu.memory_space<vmem>>, vector<8x4xf32>
    %c5 = arith.constant 5 : index
    %c0_56 = arith.constant 0 : index
    %c0_57 = arith.constant 0 : index
    %46 = vector.load %arg3[%c5, %c0_56, %c0_57] : memref<8x4x4xf32, #tpu.memory_space<vmem>>, vector<1x4x4xf32>
    %47 = vector.shape_cast %46 : vector<1x4x4xf32> to vector<4x4xf32>
    %cst_58 = arith.constant dense<0.000000e+00> : vector<8x4xf32>
    %48 = tpu.matmul %45, %47, %cst_58 {dimension_numbers = #tpu.dot_dimension_numbers<[1], [0], [0], [1], [0, 0, 1, 1], [], []>} : vector<8x4xf32>, vector<4x4xf32>, vector<8x4xf32> -> vector<8x4xf32>
    %c0_59 = arith.constant 0 : index
    %c0_60 = arith.constant 0 : index
    %49 = vector.load %arg2[%c0_59, %c0_60] : memref<4x8xf32, #tpu.memory_space<vmem>>, vector<4x8xf32>
    %cst_61 = arith.constant dense<0.000000e+00> : vector<8x8xf32>
    %50 = tpu.matmul %48, %49, %cst_61 {dimension_numbers = #tpu.dot_dimension_numbers<[1], [0], [0], [1], [0, 0, 1, 1], [], []>} : vector<8x4xf32>, vector<4x8xf32>, vector<8x8xf32> -> vector<8x8xf32>
    %c5_62 = arith.constant 5 : index
    %c0_63 = arith.constant 0 : index
    %c0_64 = arith.constant 0 : index
    %51 = vector.load %arg4[%c5_62, %c0_63, %c0_64] : memref<8x8x8xf32, #tpu.memory_space<vmem>>, vector<1x8x8xf32>
    %52 = vector.shape_cast %51 : vector<1x8x8xf32> to vector<8x8xf32>
    %53 = vector.shape_cast %50 : vector<8x8xf32> to vector<1x8x8xf32>
    tpu.vector_store %arg4[%c5_62, %c0_63, %c0_64], %53 {strides = array<i32>} : memref<8x8x8xf32, #tpu.memory_space<vmem>>, vector<1x8x8xf32>,
    %c0_65 = arith.constant 0 : index
    %c0_66 = arith.constant 0 : index
    %54 = vector.load %arg1[%c0_65, %c0_66] : memref<8x4xf32, #tpu.memory_space<vmem>>, vector<8x4xf32>
    %c6 = arith.constant 6 : index
    %c0_67 = arith.constant 0 : index
    %c0_68 = arith.constant 0 : index
    %55 = vector.load %arg3[%c6, %c0_67, %c0_68] : memref<8x4x4xf32, #tpu.memory_space<vmem>>, vector<1x4x4xf32>
    %56 = vector.shape_cast %55 : vector<1x4x4xf32> to vector<4x4xf32>
    %cst_69 = arith.constant dense<0.000000e+00> : vector<8x4xf32>
    %57 = tpu.matmul %54, %56, %cst_69 {dimension_numbers = #tpu.dot_dimension_numbers<[1], [0], [0], [1], [0, 0, 1, 1], [], []>} : vector<8x4xf32>, vector<4x4xf32>, vector<8x4xf32> -> vector<8x4xf32>
    %c0_70 = arith.constant 0 : index
    %c0_71 = arith.constant 0 : index
    %58 = vector.load %arg2[%c0_70, %c0_71] : memref<4x8xf32, #tpu.memory_space<vmem>>, vector<4x8xf32>
    %cst_72 = arith.constant dense<0.000000e+00> : vector<8x8xf32>
    %59 = tpu.matmul %57, %58, %cst_72 {dimension_numbers = #tpu.dot_dimension_numbers<[1], [0], [0], [1], [0, 0, 1, 1], [], []>} : vector<8x4xf32>, vector<4x8xf32>, vector<8x8xf32> -> vector<8x8xf32>
    %c6_73 = arith.constant 6 : index
    %c0_74 = arith.constant 0 : index
    %c0_75 = arith.constant 0 : index
    %60 = vector.load %arg4[%c6_73, %c0_74, %c0_75] : memref<8x8x8xf32, #tpu.memory_space<vmem>>, vector<1x8x8xf32>
    %61 = vector.shape_cast %60 : vector<1x8x8xf32> to vector<8x8xf32>
    %62 = vector.shape_cast %59 : vector<8x8xf32> to vector<1x8x8xf32>
    tpu.vector_store %arg4[%c6_73, %c0_74, %c0_75], %62 {strides = array<i32>} : memref<8x8x8xf32, #tpu.memory_space<vmem>>, vector<1x8x8xf32>,
    %c0_76 = arith.constant 0 : index
    %c0_77 = arith.constant 0 : index
    %63 = vector.load %arg1[%c0_76, %c0_77] : memref<8x4xf32, #tpu.memory_space<vmem>>, vector<8x4xf32>
    %c7 = arith.constant 7 : index
    %c0_78 = arith.constant 0 : index
    %c0_79 = arith.constant 0 : index
    %64 = vector.load %arg3[%c7, %c0_78, %c0_79] : memref<8x4x4xf32, #tpu.memory_space<vmem>>, vector<1x4x4xf32>
    %65 = vector.shape_cast %64 : vector<1x4x4xf32> to vector<4x4xf32>
    %cst_80 = arith.constant dense<0.000000e+00> : vector<8x4xf32>
    %66 = tpu.matmul %63, %65, %cst_80 {dimension_numbers = #tpu.dot_dimension_numbers<[1], [0], [0], [1], [0, 0, 1, 1], [], []>} : vector<8x4xf32>, vector<4x4xf32>, vector<8x4xf32> -> vector<8x4xf32>
    %c0_81 = arith.constant 0 : index
    %c0_82 = arith.constant 0 : index
    %67 = vector.load %arg2[%c0_81, %c0_82] : memref<4x8xf32, #tpu.memory_space<vmem>>, vector<4x8xf32>
    %cst_83 = arith.constant dense<0.000000e+00> : vector<8x8xf32>
    %68 = tpu.matmul %66, %67, %cst_83 {dimension_numbers = #tpu.dot_dimension_numbers<[1], [0], [0], [1], [0, 0, 1, 1], [], []>} : vector<8x4xf32>, vector<4x8xf32>, vector<8x8xf32> -> vector<8x8xf32>
    %c7_84 = arith.constant 7 : index
    %c0_85 = arith.constant 0 : index
    %c0_86 = arith.constant 0 : index
    %69 = vector.load %arg4[%c7_84, %c0_85, %c0_86] : memref<8x8x8xf32, #tpu.memory_space<vmem>>, vector<1x8x8xf32>
    %70 = vector.shape_cast %69 : vector<1x8x8xf32> to vector<8x8xf32>
    %71 = vector.shape_cast %68 : vector<8x8xf32> to vector<1x8x8xf32>
    tpu.vector_store %arg4[%c7_84, %c0_85, %c0_86], %71 {strides = array<i32>} : memref<8x8x8xf32, #tpu.memory_space<vmem>>, vector<1x8x8xf32>,
    return
  }
  func.func @transform_0(%arg0: i32) -> (i32, i32) {
    %c0_i32 = arith.constant 0 : i32
    %c0_i32_0 = arith.constant 0 : i32
    %c0_i32_1 = arith.constant 0 : i32
    return %c0_i32, %c0_i32_0 : i32, i32
  }
  func.func @transform_1(%arg0: i32) -> (i32, i32) {
    %c0_i32 = arith.constant 0 : i32
    %c0_i32_0 = arith.constant 0 : i32
    %c0_i32_1 = arith.constant 0 : i32
    return %c0_i32, %c0_i32_0 : i32, i32
  }
  func.func @transform_2(%arg0: i32) -> (i32, i32, i32) {
    %c0_i32 = arith.constant 0 : i32
    %c0_i32_0 = arith.constant 0 : i32
    %c0_i32_1 = arith.constant 0 : i32
    return %arg0, %c0_i32, %c0_i32_0 : i32, i32, i32
  }
  func.func @transform_3(%arg0: i32) -> (i32, i32, i32) {
    %c0_i32 = arith.constant 0 : i32
    %c0_i32_0 = arith.constant 0 : i32
    %c0_i32_1 = arith.constant 0 : i32
    return %arg0, %c0_i32, %c0_i32_0 : i32, i32, i32
  }
}

module attributes {stable_mosaic.version = 11 : i64} {
  func.func @_conv_stats_kernel(%arg0: i32, %arg1: i32, %arg2: memref<1x10x10x128xbf16, #tpu.memory_space<vmem>>, %arg3: memref<1x10x10x128xbf16, #tpu.memory_space<vmem>>, %arg4: memref<1x10x10x128xbf16, #tpu.memory_space<vmem>>, %arg5: memref<27x128x128xbf16, #tpu.memory_space<vmem>>, %arg6: memref<1x64x128xf32, #tpu.memory_space<vmem>>, %arg7: memref<1x2x128xf32, #tpu.memory_space<vmem>>) attributes {dimension_semantics = [#tpu.dimension_semantics<parallel>, #tpu.dimension_semantics<arbitrary>], iteration_bounds = array<i64: 2, 8>, scalar_prefetch = 0 : i64, scratch_operands = 0 : i64, tpu.core_type = #tpu.core_type<tc>, window_params = [{transform_indices = @transform_0, window_bounds = array<i64: 1, 10, 10, 128>}, {transform_indices = @transform_1, window_bounds = array<i64: 1, 10, 10, 128>}, {transform_indices = @transform_2, window_bounds = array<i64: 1, 10, 10, 128>}, {pipeline_mode = #tpu.pipeline_mode<synchronous>, transform_indices = @transform_3, window_bounds = array<i64: 27, 128, 128>}, {transform_indices = @transform_4, window_bounds = array<i64: 1, 64, 128>}, {transform_indices = @transform_5, window_bounds = array<i64: 1, 2, 128>}]} {
    %c0 = arith.constant 0 : index
    %c0_0 = arith.constant 0 : index
    %c0_1 = arith.constant 0 : index
    %c0_2 = arith.constant 0 : index
    %0 = vector.load %arg2[%c0, %c0_0, %c0_1, %c0_2] : memref<1x10x10x128xbf16, #tpu.memory_space<vmem>>, vector<1x10x10x128xbf16>
    %1 = vector.shape_cast %0 : vector<1x10x10x128xbf16> to vector<10x10x128xbf16>
    %c0_3 = arith.constant 0 : index
    %c0_4 = arith.constant 0 : index
    %c0_5 = arith.constant 0 : index
    %c0_6 = arith.constant 0 : index
    %2 = vector.load %arg3[%c0_3, %c0_4, %c0_5, %c0_6] : memref<1x10x10x128xbf16, #tpu.memory_space<vmem>>, vector<1x10x10x128xbf16>
    %3 = vector.shape_cast %2 : vector<1x10x10x128xbf16> to vector<10x10x128xbf16>
    %c0_7 = arith.constant 0 : index
    %c0_8 = arith.constant 0 : index
    %c0_9 = arith.constant 0 : index
    %c0_10 = arith.constant 0 : index
    %4 = vector.load %arg4[%c0_7, %c0_8, %c0_9, %c0_10] : memref<1x10x10x128xbf16, #tpu.memory_space<vmem>>, vector<1x10x10x128xbf16>
    %5 = vector.shape_cast %4 : vector<1x10x10x128xbf16> to vector<10x10x128xbf16>
    %6 = vector.extract_strided_slice %1 {offsets = [0, 0, 0], sizes = [8, 8, 128], strides = [1, 1, 1]} : vector<10x10x128xbf16> to vector<8x8x128xbf16>
    %7 = vector.shape_cast %6 : vector<8x8x128xbf16> to vector<64x128xbf16>
    %c0_11 = arith.constant 0 : index
    %c0_12 = arith.constant 0 : index
    %c0_13 = arith.constant 0 : index
    %8 = vector.load %arg5[%c0_11, %c0_12, %c0_13] : memref<27x128x128xbf16, #tpu.memory_space<vmem>>, vector<1x128x128xbf16>
    %9 = vector.shape_cast %8 : vector<1x128x128xbf16> to vector<128x128xbf16>
    %cst = arith.constant dense<0.000000e+00> : vector<64x128xf32>
    %10 = tpu.matmul %7, %9, %cst {dimension_numbers = #tpu.dot_dimension_numbers<[1], [0], [0], [1], [0, 0, 1, 1], [], []>} : vector<64x128xbf16>, vector<128x128xbf16>, vector<64x128xf32> -> vector<64x128xf32>
    %11 = vector.extract_strided_slice %1 {offsets = [0, 1, 0], sizes = [8, 8, 128], strides = [1, 1, 1]} : vector<10x10x128xbf16> to vector<8x8x128xbf16>
    %12 = vector.shape_cast %11 : vector<8x8x128xbf16> to vector<64x128xbf16>
    %c1 = arith.constant 1 : index
    %c0_14 = arith.constant 0 : index
    %c0_15 = arith.constant 0 : index
    %13 = vector.load %arg5[%c1, %c0_14, %c0_15] : memref<27x128x128xbf16, #tpu.memory_space<vmem>>, vector<1x128x128xbf16>
    %14 = vector.shape_cast %13 : vector<1x128x128xbf16> to vector<128x128xbf16>
    %cst_16 = arith.constant dense<0.000000e+00> : vector<64x128xf32>
    %15 = tpu.matmul %12, %14, %cst_16 {dimension_numbers = #tpu.dot_dimension_numbers<[1], [0], [0], [1], [0, 0, 1, 1], [], []>} : vector<64x128xbf16>, vector<128x128xbf16>, vector<64x128xf32> -> vector<64x128xf32>
    %16 = arith.addf %10, %15 : vector<64x128xf32>
    %17 = vector.extract_strided_slice %1 {offsets = [0, 2, 0], sizes = [8, 8, 128], strides = [1, 1, 1]} : vector<10x10x128xbf16> to vector<8x8x128xbf16>
    %18 = vector.shape_cast %17 : vector<8x8x128xbf16> to vector<64x128xbf16>
    %c2 = arith.constant 2 : index
    %c0_17 = arith.constant 0 : index
    %c0_18 = arith.constant 0 : index
    %19 = vector.load %arg5[%c2, %c0_17, %c0_18] : memref<27x128x128xbf16, #tpu.memory_space<vmem>>, vector<1x128x128xbf16>
    %20 = vector.shape_cast %19 : vector<1x128x128xbf16> to vector<128x128xbf16>
    %cst_19 = arith.constant dense<0.000000e+00> : vector<64x128xf32>
    %21 = tpu.matmul %18, %20, %cst_19 {dimension_numbers = #tpu.dot_dimension_numbers<[1], [0], [0], [1], [0, 0, 1, 1], [], []>} : vector<64x128xbf16>, vector<128x128xbf16>, vector<64x128xf32> -> vector<64x128xf32>
    %22 = arith.addf %16, %21 : vector<64x128xf32>
    %23 = vector.extract_strided_slice %1 {offsets = [1, 0, 0], sizes = [8, 8, 128], strides = [1, 1, 1]} : vector<10x10x128xbf16> to vector<8x8x128xbf16>
    %24 = vector.shape_cast %23 : vector<8x8x128xbf16> to vector<64x128xbf16>
    %c3 = arith.constant 3 : index
    %c0_20 = arith.constant 0 : index
    %c0_21 = arith.constant 0 : index
    %25 = vector.load %arg5[%c3, %c0_20, %c0_21] : memref<27x128x128xbf16, #tpu.memory_space<vmem>>, vector<1x128x128xbf16>
    %26 = vector.shape_cast %25 : vector<1x128x128xbf16> to vector<128x128xbf16>
    %cst_22 = arith.constant dense<0.000000e+00> : vector<64x128xf32>
    %27 = tpu.matmul %24, %26, %cst_22 {dimension_numbers = #tpu.dot_dimension_numbers<[1], [0], [0], [1], [0, 0, 1, 1], [], []>} : vector<64x128xbf16>, vector<128x128xbf16>, vector<64x128xf32> -> vector<64x128xf32>
    %28 = arith.addf %22, %27 : vector<64x128xf32>
    %29 = vector.extract_strided_slice %1 {offsets = [1, 1, 0], sizes = [8, 8, 128], strides = [1, 1, 1]} : vector<10x10x128xbf16> to vector<8x8x128xbf16>
    %30 = vector.shape_cast %29 : vector<8x8x128xbf16> to vector<64x128xbf16>
    %c4 = arith.constant 4 : index
    %c0_23 = arith.constant 0 : index
    %c0_24 = arith.constant 0 : index
    %31 = vector.load %arg5[%c4, %c0_23, %c0_24] : memref<27x128x128xbf16, #tpu.memory_space<vmem>>, vector<1x128x128xbf16>
    %32 = vector.shape_cast %31 : vector<1x128x128xbf16> to vector<128x128xbf16>
    %cst_25 = arith.constant dense<0.000000e+00> : vector<64x128xf32>
    %33 = tpu.matmul %30, %32, %cst_25 {dimension_numbers = #tpu.dot_dimension_numbers<[1], [0], [0], [1], [0, 0, 1, 1], [], []>} : vector<64x128xbf16>, vector<128x128xbf16>, vector<64x128xf32> -> vector<64x128xf32>
    %34 = arith.addf %28, %33 : vector<64x128xf32>
    %35 = vector.extract_strided_slice %1 {offsets = [1, 2, 0], sizes = [8, 8, 128], strides = [1, 1, 1]} : vector<10x10x128xbf16> to vector<8x8x128xbf16>
    %36 = vector.shape_cast %35 : vector<8x8x128xbf16> to vector<64x128xbf16>
    %c5 = arith.constant 5 : index
    %c0_26 = arith.constant 0 : index
    %c0_27 = arith.constant 0 : index
    %37 = vector.load %arg5[%c5, %c0_26, %c0_27] : memref<27x128x128xbf16, #tpu.memory_space<vmem>>, vector<1x128x128xbf16>
    %38 = vector.shape_cast %37 : vector<1x128x128xbf16> to vector<128x128xbf16>
    %cst_28 = arith.constant dense<0.000000e+00> : vector<64x128xf32>
    %39 = tpu.matmul %36, %38, %cst_28 {dimension_numbers = #tpu.dot_dimension_numbers<[1], [0], [0], [1], [0, 0, 1, 1], [], []>} : vector<64x128xbf16>, vector<128x128xbf16>, vector<64x128xf32> -> vector<64x128xf32>
    %40 = arith.addf %34, %39 : vector<64x128xf32>
    %41 = vector.extract_strided_slice %1 {offsets = [2, 0, 0], sizes = [8, 8, 128], strides = [1, 1, 1]} : vector<10x10x128xbf16> to vector<8x8x128xbf16>
    %42 = vector.shape_cast %41 : vector<8x8x128xbf16> to vector<64x128xbf16>
    %c6 = arith.constant 6 : index
    %c0_29 = arith.constant 0 : index
    %c0_30 = arith.constant 0 : index
    %43 = vector.load %arg5[%c6, %c0_29, %c0_30] : memref<27x128x128xbf16, #tpu.memory_space<vmem>>, vector<1x128x128xbf16>
    %44 = vector.shape_cast %43 : vector<1x128x128xbf16> to vector<128x128xbf16>
    %cst_31 = arith.constant dense<0.000000e+00> : vector<64x128xf32>
    %45 = tpu.matmul %42, %44, %cst_31 {dimension_numbers = #tpu.dot_dimension_numbers<[1], [0], [0], [1], [0, 0, 1, 1], [], []>} : vector<64x128xbf16>, vector<128x128xbf16>, vector<64x128xf32> -> vector<64x128xf32>
    %46 = arith.addf %40, %45 : vector<64x128xf32>
    %47 = vector.extract_strided_slice %1 {offsets = [2, 1, 0], sizes = [8, 8, 128], strides = [1, 1, 1]} : vector<10x10x128xbf16> to vector<8x8x128xbf16>
    %48 = vector.shape_cast %47 : vector<8x8x128xbf16> to vector<64x128xbf16>
    %c7 = arith.constant 7 : index
    %c0_32 = arith.constant 0 : index
    %c0_33 = arith.constant 0 : index
    %49 = vector.load %arg5[%c7, %c0_32, %c0_33] : memref<27x128x128xbf16, #tpu.memory_space<vmem>>, vector<1x128x128xbf16>
    %50 = vector.shape_cast %49 : vector<1x128x128xbf16> to vector<128x128xbf16>
    %cst_34 = arith.constant dense<0.000000e+00> : vector<64x128xf32>
    %51 = tpu.matmul %48, %50, %cst_34 {dimension_numbers = #tpu.dot_dimension_numbers<[1], [0], [0], [1], [0, 0, 1, 1], [], []>} : vector<64x128xbf16>, vector<128x128xbf16>, vector<64x128xf32> -> vector<64x128xf32>
    %52 = arith.addf %46, %51 : vector<64x128xf32>
    %53 = vector.extract_strided_slice %1 {offsets = [2, 2, 0], sizes = [8, 8, 128], strides = [1, 1, 1]} : vector<10x10x128xbf16> to vector<8x8x128xbf16>
    %54 = vector.shape_cast %53 : vector<8x8x128xbf16> to vector<64x128xbf16>
    %c8 = arith.constant 8 : index
    %c0_35 = arith.constant 0 : index
    %c0_36 = arith.constant 0 : index
    %55 = vector.load %arg5[%c8, %c0_35, %c0_36] : memref<27x128x128xbf16, #tpu.memory_space<vmem>>, vector<1x128x128xbf16>
    %56 = vector.shape_cast %55 : vector<1x128x128xbf16> to vector<128x128xbf16>
    %cst_37 = arith.constant dense<0.000000e+00> : vector<64x128xf32>
    %57 = tpu.matmul %54, %56, %cst_37 {dimension_numbers = #tpu.dot_dimension_numbers<[1], [0], [0], [1], [0, 0, 1, 1], [], []>} : vector<64x128xbf16>, vector<128x128xbf16>, vector<64x128xf32> -> vector<64x128xf32>
    %58 = arith.addf %52, %57 : vector<64x128xf32>
    %59 = vector.extract_strided_slice %3 {offsets = [0, 0, 0], sizes = [8, 8, 128], strides = [1, 1, 1]} : vector<10x10x128xbf16> to vector<8x8x128xbf16>
    %60 = vector.shape_cast %59 : vector<8x8x128xbf16> to vector<64x128xbf16>
    %c9 = arith.constant 9 : index
    %c0_38 = arith.constant 0 : index
    %c0_39 = arith.constant 0 : index
    %61 = vector.load %arg5[%c9, %c0_38, %c0_39] : memref<27x128x128xbf16, #tpu.memory_space<vmem>>, vector<1x128x128xbf16>
    %62 = vector.shape_cast %61 : vector<1x128x128xbf16> to vector<128x128xbf16>
    %cst_40 = arith.constant dense<0.000000e+00> : vector<64x128xf32>
    %63 = tpu.matmul %60, %62, %cst_40 {dimension_numbers = #tpu.dot_dimension_numbers<[1], [0], [0], [1], [0, 0, 1, 1], [], []>} : vector<64x128xbf16>, vector<128x128xbf16>, vector<64x128xf32> -> vector<64x128xf32>
    %64 = arith.addf %58, %63 : vector<64x128xf32>
    %65 = vector.extract_strided_slice %3 {offsets = [0, 1, 0], sizes = [8, 8, 128], strides = [1, 1, 1]} : vector<10x10x128xbf16> to vector<8x8x128xbf16>
    %66 = vector.shape_cast %65 : vector<8x8x128xbf16> to vector<64x128xbf16>
    %c10 = arith.constant 10 : index
    %c0_41 = arith.constant 0 : index
    %c0_42 = arith.constant 0 : index
    %67 = vector.load %arg5[%c10, %c0_41, %c0_42] : memref<27x128x128xbf16, #tpu.memory_space<vmem>>, vector<1x128x128xbf16>
    %68 = vector.shape_cast %67 : vector<1x128x128xbf16> to vector<128x128xbf16>
    %cst_43 = arith.constant dense<0.000000e+00> : vector<64x128xf32>
    %69 = tpu.matmul %66, %68, %cst_43 {dimension_numbers = #tpu.dot_dimension_numbers<[1], [0], [0], [1], [0, 0, 1, 1], [], []>} : vector<64x128xbf16>, vector<128x128xbf16>, vector<64x128xf32> -> vector<64x128xf32>
    %70 = arith.addf %64, %69 : vector<64x128xf32>
    %71 = vector.extract_strided_slice %3 {offsets = [0, 2, 0], sizes = [8, 8, 128], strides = [1, 1, 1]} : vector<10x10x128xbf16> to vector<8x8x128xbf16>
    %72 = vector.shape_cast %71 : vector<8x8x128xbf16> to vector<64x128xbf16>
    %c11 = arith.constant 11 : index
    %c0_44 = arith.constant 0 : index
    %c0_45 = arith.constant 0 : index
    %73 = vector.load %arg5[%c11, %c0_44, %c0_45] : memref<27x128x128xbf16, #tpu.memory_space<vmem>>, vector<1x128x128xbf16>
    %74 = vector.shape_cast %73 : vector<1x128x128xbf16> to vector<128x128xbf16>
    %cst_46 = arith.constant dense<0.000000e+00> : vector<64x128xf32>
    %75 = tpu.matmul %72, %74, %cst_46 {dimension_numbers = #tpu.dot_dimension_numbers<[1], [0], [0], [1], [0, 0, 1, 1], [], []>} : vector<64x128xbf16>, vector<128x128xbf16>, vector<64x128xf32> -> vector<64x128xf32>
    %76 = arith.addf %70, %75 : vector<64x128xf32>
    %77 = vector.extract_strided_slice %3 {offsets = [1, 0, 0], sizes = [8, 8, 128], strides = [1, 1, 1]} : vector<10x10x128xbf16> to vector<8x8x128xbf16>
    %78 = vector.shape_cast %77 : vector<8x8x128xbf16> to vector<64x128xbf16>
    %c12 = arith.constant 12 : index
    %c0_47 = arith.constant 0 : index
    %c0_48 = arith.constant 0 : index
    %79 = vector.load %arg5[%c12, %c0_47, %c0_48] : memref<27x128x128xbf16, #tpu.memory_space<vmem>>, vector<1x128x128xbf16>
    %80 = vector.shape_cast %79 : vector<1x128x128xbf16> to vector<128x128xbf16>
    %cst_49 = arith.constant dense<0.000000e+00> : vector<64x128xf32>
    %81 = tpu.matmul %78, %80, %cst_49 {dimension_numbers = #tpu.dot_dimension_numbers<[1], [0], [0], [1], [0, 0, 1, 1], [], []>} : vector<64x128xbf16>, vector<128x128xbf16>, vector<64x128xf32> -> vector<64x128xf32>
    %82 = arith.addf %76, %81 : vector<64x128xf32>
    %83 = vector.extract_strided_slice %3 {offsets = [1, 1, 0], sizes = [8, 8, 128], strides = [1, 1, 1]} : vector<10x10x128xbf16> to vector<8x8x128xbf16>
    %84 = vector.shape_cast %83 : vector<8x8x128xbf16> to vector<64x128xbf16>
    %c13 = arith.constant 13 : index
    %c0_50 = arith.constant 0 : index
    %c0_51 = arith.constant 0 : index
    %85 = vector.load %arg5[%c13, %c0_50, %c0_51] : memref<27x128x128xbf16, #tpu.memory_space<vmem>>, vector<1x128x128xbf16>
    %86 = vector.shape_cast %85 : vector<1x128x128xbf16> to vector<128x128xbf16>
    %cst_52 = arith.constant dense<0.000000e+00> : vector<64x128xf32>
    %87 = tpu.matmul %84, %86, %cst_52 {dimension_numbers = #tpu.dot_dimension_numbers<[1], [0], [0], [1], [0, 0, 1, 1], [], []>} : vector<64x128xbf16>, vector<128x128xbf16>, vector<64x128xf32> -> vector<64x128xf32>
    %88 = arith.addf %82, %87 : vector<64x128xf32>
    %89 = vector.extract_strided_slice %3 {offsets = [1, 2, 0], sizes = [8, 8, 128], strides = [1, 1, 1]} : vector<10x10x128xbf16> to vector<8x8x128xbf16>
    %90 = vector.shape_cast %89 : vector<8x8x128xbf16> to vector<64x128xbf16>
    %c14 = arith.constant 14 : index
    %c0_53 = arith.constant 0 : index
    %c0_54 = arith.constant 0 : index
    %91 = vector.load %arg5[%c14, %c0_53, %c0_54] : memref<27x128x128xbf16, #tpu.memory_space<vmem>>, vector<1x128x128xbf16>
    %92 = vector.shape_cast %91 : vector<1x128x128xbf16> to vector<128x128xbf16>
    %cst_55 = arith.constant dense<0.000000e+00> : vector<64x128xf32>
    %93 = tpu.matmul %90, %92, %cst_55 {dimension_numbers = #tpu.dot_dimension_numbers<[1], [0], [0], [1], [0, 0, 1, 1], [], []>} : vector<64x128xbf16>, vector<128x128xbf16>, vector<64x128xf32> -> vector<64x128xf32>
    %94 = arith.addf %88, %93 : vector<64x128xf32>
    %95 = vector.extract_strided_slice %3 {offsets = [2, 0, 0], sizes = [8, 8, 128], strides = [1, 1, 1]} : vector<10x10x128xbf16> to vector<8x8x128xbf16>
    %96 = vector.shape_cast %95 : vector<8x8x128xbf16> to vector<64x128xbf16>
    %c15 = arith.constant 15 : index
    %c0_56 = arith.constant 0 : index
    %c0_57 = arith.constant 0 : index
    %97 = vector.load %arg5[%c15, %c0_56, %c0_57] : memref<27x128x128xbf16, #tpu.memory_space<vmem>>, vector<1x128x128xbf16>
    %98 = vector.shape_cast %97 : vector<1x128x128xbf16> to vector<128x128xbf16>
    %cst_58 = arith.constant dense<0.000000e+00> : vector<64x128xf32>
    %99 = tpu.matmul %96, %98, %cst_58 {dimension_numbers = #tpu.dot_dimension_numbers<[1], [0], [0], [1], [0, 0, 1, 1], [], []>} : vector<64x128xbf16>, vector<128x128xbf16>, vector<64x128xf32> -> vector<64x128xf32>
    %100 = arith.addf %94, %99 : vector<64x128xf32>
    %101 = vector.extract_strided_slice %3 {offsets = [2, 1, 0], sizes = [8, 8, 128], strides = [1, 1, 1]} : vector<10x10x128xbf16> to vector<8x8x128xbf16>
    %102 = vector.shape_cast %101 : vector<8x8x128xbf16> to vector<64x128xbf16>
    %c16 = arith.constant 16 : index
    %c0_59 = arith.constant 0 : index
    %c0_60 = arith.constant 0 : index
    %103 = vector.load %arg5[%c16, %c0_59, %c0_60] : memref<27x128x128xbf16, #tpu.memory_space<vmem>>, vector<1x128x128xbf16>
    %104 = vector.shape_cast %103 : vector<1x128x128xbf16> to vector<128x128xbf16>
    %cst_61 = arith.constant dense<0.000000e+00> : vector<64x128xf32>
    %105 = tpu.matmul %102, %104, %cst_61 {dimension_numbers = #tpu.dot_dimension_numbers<[1], [0], [0], [1], [0, 0, 1, 1], [], []>} : vector<64x128xbf16>, vector<128x128xbf16>, vector<64x128xf32> -> vector<64x128xf32>
    %106 = arith.addf %100, %105 : vector<64x128xf32>
    %107 = vector.extract_strided_slice %3 {offsets = [2, 2, 0], sizes = [8, 8, 128], strides = [1, 1, 1]} : vector<10x10x128xbf16> to vector<8x8x128xbf16>
    %108 = vector.shape_cast %107 : vector<8x8x128xbf16> to vector<64x128xbf16>
    %c17 = arith.constant 17 : index
    %c0_62 = arith.constant 0 : index
    %c0_63 = arith.constant 0 : index
    %109 = vector.load %arg5[%c17, %c0_62, %c0_63] : memref<27x128x128xbf16, #tpu.memory_space<vmem>>, vector<1x128x128xbf16>
    %110 = vector.shape_cast %109 : vector<1x128x128xbf16> to vector<128x128xbf16>
    %cst_64 = arith.constant dense<0.000000e+00> : vector<64x128xf32>
    %111 = tpu.matmul %108, %110, %cst_64 {dimension_numbers = #tpu.dot_dimension_numbers<[1], [0], [0], [1], [0, 0, 1, 1], [], []>} : vector<64x128xbf16>, vector<128x128xbf16>, vector<64x128xf32> -> vector<64x128xf32>
    %112 = arith.addf %106, %111 : vector<64x128xf32>
    %113 = vector.extract_strided_slice %5 {offsets = [0, 0, 0], sizes = [8, 8, 128], strides = [1, 1, 1]} : vector<10x10x128xbf16> to vector<8x8x128xbf16>
    %114 = vector.shape_cast %113 : vector<8x8x128xbf16> to vector<64x128xbf16>
    %c18 = arith.constant 18 : index
    %c0_65 = arith.constant 0 : index
    %c0_66 = arith.constant 0 : index
    %115 = vector.load %arg5[%c18, %c0_65, %c0_66] : memref<27x128x128xbf16, #tpu.memory_space<vmem>>, vector<1x128x128xbf16>
    %116 = vector.shape_cast %115 : vector<1x128x128xbf16> to vector<128x128xbf16>
    %cst_67 = arith.constant dense<0.000000e+00> : vector<64x128xf32>
    %117 = tpu.matmul %114, %116, %cst_67 {dimension_numbers = #tpu.dot_dimension_numbers<[1], [0], [0], [1], [0, 0, 1, 1], [], []>} : vector<64x128xbf16>, vector<128x128xbf16>, vector<64x128xf32> -> vector<64x128xf32>
    %118 = arith.addf %112, %117 : vector<64x128xf32>
    %119 = vector.extract_strided_slice %5 {offsets = [0, 1, 0], sizes = [8, 8, 128], strides = [1, 1, 1]} : vector<10x10x128xbf16> to vector<8x8x128xbf16>
    %120 = vector.shape_cast %119 : vector<8x8x128xbf16> to vector<64x128xbf16>
    %c19 = arith.constant 19 : index
    %c0_68 = arith.constant 0 : index
    %c0_69 = arith.constant 0 : index
    %121 = vector.load %arg5[%c19, %c0_68, %c0_69] : memref<27x128x128xbf16, #tpu.memory_space<vmem>>, vector<1x128x128xbf16>
    %122 = vector.shape_cast %121 : vector<1x128x128xbf16> to vector<128x128xbf16>
    %cst_70 = arith.constant dense<0.000000e+00> : vector<64x128xf32>
    %123 = tpu.matmul %120, %122, %cst_70 {dimension_numbers = #tpu.dot_dimension_numbers<[1], [0], [0], [1], [0, 0, 1, 1], [], []>} : vector<64x128xbf16>, vector<128x128xbf16>, vector<64x128xf32> -> vector<64x128xf32>
    %124 = arith.addf %118, %123 : vector<64x128xf32>
    %125 = vector.extract_strided_slice %5 {offsets = [0, 2, 0], sizes = [8, 8, 128], strides = [1, 1, 1]} : vector<10x10x128xbf16> to vector<8x8x128xbf16>
    %126 = vector.shape_cast %125 : vector<8x8x128xbf16> to vector<64x128xbf16>
    %c20 = arith.constant 20 : index
    %c0_71 = arith.constant 0 : index
    %c0_72 = arith.constant 0 : index
    %127 = vector.load %arg5[%c20, %c0_71, %c0_72] : memref<27x128x128xbf16, #tpu.memory_space<vmem>>, vector<1x128x128xbf16>
    %128 = vector.shape_cast %127 : vector<1x128x128xbf16> to vector<128x128xbf16>
    %cst_73 = arith.constant dense<0.000000e+00> : vector<64x128xf32>
    %129 = tpu.matmul %126, %128, %cst_73 {dimension_numbers = #tpu.dot_dimension_numbers<[1], [0], [0], [1], [0, 0, 1, 1], [], []>} : vector<64x128xbf16>, vector<128x128xbf16>, vector<64x128xf32> -> vector<64x128xf32>
    %130 = arith.addf %124, %129 : vector<64x128xf32>
    %131 = vector.extract_strided_slice %5 {offsets = [1, 0, 0], sizes = [8, 8, 128], strides = [1, 1, 1]} : vector<10x10x128xbf16> to vector<8x8x128xbf16>
    %132 = vector.shape_cast %131 : vector<8x8x128xbf16> to vector<64x128xbf16>
    %c21 = arith.constant 21 : index
    %c0_74 = arith.constant 0 : index
    %c0_75 = arith.constant 0 : index
    %133 = vector.load %arg5[%c21, %c0_74, %c0_75] : memref<27x128x128xbf16, #tpu.memory_space<vmem>>, vector<1x128x128xbf16>
    %134 = vector.shape_cast %133 : vector<1x128x128xbf16> to vector<128x128xbf16>
    %cst_76 = arith.constant dense<0.000000e+00> : vector<64x128xf32>
    %135 = tpu.matmul %132, %134, %cst_76 {dimension_numbers = #tpu.dot_dimension_numbers<[1], [0], [0], [1], [0, 0, 1, 1], [], []>} : vector<64x128xbf16>, vector<128x128xbf16>, vector<64x128xf32> -> vector<64x128xf32>
    %136 = arith.addf %130, %135 : vector<64x128xf32>
    %137 = vector.extract_strided_slice %5 {offsets = [1, 1, 0], sizes = [8, 8, 128], strides = [1, 1, 1]} : vector<10x10x128xbf16> to vector<8x8x128xbf16>
    %138 = vector.shape_cast %137 : vector<8x8x128xbf16> to vector<64x128xbf16>
    %c22 = arith.constant 22 : index
    %c0_77 = arith.constant 0 : index
    %c0_78 = arith.constant 0 : index
    %139 = vector.load %arg5[%c22, %c0_77, %c0_78] : memref<27x128x128xbf16, #tpu.memory_space<vmem>>, vector<1x128x128xbf16>
    %140 = vector.shape_cast %139 : vector<1x128x128xbf16> to vector<128x128xbf16>
    %cst_79 = arith.constant dense<0.000000e+00> : vector<64x128xf32>
    %141 = tpu.matmul %138, %140, %cst_79 {dimension_numbers = #tpu.dot_dimension_numbers<[1], [0], [0], [1], [0, 0, 1, 1], [], []>} : vector<64x128xbf16>, vector<128x128xbf16>, vector<64x128xf32> -> vector<64x128xf32>
    %142 = arith.addf %136, %141 : vector<64x128xf32>
    %143 = vector.extract_strided_slice %5 {offsets = [1, 2, 0], sizes = [8, 8, 128], strides = [1, 1, 1]} : vector<10x10x128xbf16> to vector<8x8x128xbf16>
    %144 = vector.shape_cast %143 : vector<8x8x128xbf16> to vector<64x128xbf16>
    %c23 = arith.constant 23 : index
    %c0_80 = arith.constant 0 : index
    %c0_81 = arith.constant 0 : index
    %145 = vector.load %arg5[%c23, %c0_80, %c0_81] : memref<27x128x128xbf16, #tpu.memory_space<vmem>>, vector<1x128x128xbf16>
    %146 = vector.shape_cast %145 : vector<1x128x128xbf16> to vector<128x128xbf16>
    %cst_82 = arith.constant dense<0.000000e+00> : vector<64x128xf32>
    %147 = tpu.matmul %144, %146, %cst_82 {dimension_numbers = #tpu.dot_dimension_numbers<[1], [0], [0], [1], [0, 0, 1, 1], [], []>} : vector<64x128xbf16>, vector<128x128xbf16>, vector<64x128xf32> -> vector<64x128xf32>
    %148 = arith.addf %142, %147 : vector<64x128xf32>
    %149 = vector.extract_strided_slice %5 {offsets = [2, 0, 0], sizes = [8, 8, 128], strides = [1, 1, 1]} : vector<10x10x128xbf16> to vector<8x8x128xbf16>
    %150 = vector.shape_cast %149 : vector<8x8x128xbf16> to vector<64x128xbf16>
    %c24 = arith.constant 24 : index
    %c0_83 = arith.constant 0 : index
    %c0_84 = arith.constant 0 : index
    %151 = vector.load %arg5[%c24, %c0_83, %c0_84] : memref<27x128x128xbf16, #tpu.memory_space<vmem>>, vector<1x128x128xbf16>
    %152 = vector.shape_cast %151 : vector<1x128x128xbf16> to vector<128x128xbf16>
    %cst_85 = arith.constant dense<0.000000e+00> : vector<64x128xf32>
    %153 = tpu.matmul %150, %152, %cst_85 {dimension_numbers = #tpu.dot_dimension_numbers<[1], [0], [0], [1], [0, 0, 1, 1], [], []>} : vector<64x128xbf16>, vector<128x128xbf16>, vector<64x128xf32> -> vector<64x128xf32>
    %154 = arith.addf %148, %153 : vector<64x128xf32>
    %155 = vector.extract_strided_slice %5 {offsets = [2, 1, 0], sizes = [8, 8, 128], strides = [1, 1, 1]} : vector<10x10x128xbf16> to vector<8x8x128xbf16>
    %156 = vector.shape_cast %155 : vector<8x8x128xbf16> to vector<64x128xbf16>
    %c25 = arith.constant 25 : index
    %c0_86 = arith.constant 0 : index
    %c0_87 = arith.constant 0 : index
    %157 = vector.load %arg5[%c25, %c0_86, %c0_87] : memref<27x128x128xbf16, #tpu.memory_space<vmem>>, vector<1x128x128xbf16>
    %158 = vector.shape_cast %157 : vector<1x128x128xbf16> to vector<128x128xbf16>
    %cst_88 = arith.constant dense<0.000000e+00> : vector<64x128xf32>
    %159 = tpu.matmul %156, %158, %cst_88 {dimension_numbers = #tpu.dot_dimension_numbers<[1], [0], [0], [1], [0, 0, 1, 1], [], []>} : vector<64x128xbf16>, vector<128x128xbf16>, vector<64x128xf32> -> vector<64x128xf32>
    %160 = arith.addf %154, %159 : vector<64x128xf32>
    %161 = vector.extract_strided_slice %5 {offsets = [2, 2, 0], sizes = [8, 8, 128], strides = [1, 1, 1]} : vector<10x10x128xbf16> to vector<8x8x128xbf16>
    %162 = vector.shape_cast %161 : vector<8x8x128xbf16> to vector<64x128xbf16>
    %c26 = arith.constant 26 : index
    %c0_89 = arith.constant 0 : index
    %c0_90 = arith.constant 0 : index
    %163 = vector.load %arg5[%c26, %c0_89, %c0_90] : memref<27x128x128xbf16, #tpu.memory_space<vmem>>, vector<1x128x128xbf16>
    %164 = vector.shape_cast %163 : vector<1x128x128xbf16> to vector<128x128xbf16>
    %cst_91 = arith.constant dense<0.000000e+00> : vector<64x128xf32>
    %165 = tpu.matmul %162, %164, %cst_91 {dimension_numbers = #tpu.dot_dimension_numbers<[1], [0], [0], [1], [0, 0, 1, 1], [], []>} : vector<64x128xbf16>, vector<128x128xbf16>, vector<64x128xf32> -> vector<64x128xf32>
    %166 = arith.addf %160, %165 : vector<64x128xf32>
    %c0_92 = arith.constant 0 : index
    %c0_93 = arith.constant 0 : index
    %c0_94 = arith.constant 0 : index
    %167 = vector.load %arg6[%c0_92, %c0_93, %c0_94] : memref<1x64x128xf32, #tpu.memory_space<vmem>>, vector<1x64x128xf32>
    %168 = vector.shape_cast %167 : vector<1x64x128xf32> to vector<64x128xf32>
    %169 = vector.shape_cast %166 : vector<64x128xf32> to vector<1x64x128xf32>
    tpu.vector_store %arg6[%c0_92, %c0_93, %c0_94], %169 {strides = array<i32>} : memref<1x64x128xf32, #tpu.memory_space<vmem>>, vector<1x64x128xf32>,
    %cst_95 = arith.constant dense<0.000000e+00> : vector<128xf32>
    %170 = vector.multi_reduction <add>, %166, %cst_95 [0] : vector<64x128xf32> to vector<128xf32>
    %171 = vector.shape_cast %170 : vector<128xf32> to vector<1x128xf32>
    %172 = arith.mulf %166, %166 : vector<64x128xf32>
    %cst_96 = arith.constant dense<0.000000e+00> : vector<128xf32>
    %173 = vector.multi_reduction <add>, %172, %cst_96 [0] : vector<64x128xf32> to vector<128xf32>
    %174 = vector.shape_cast %173 : vector<128xf32> to vector<1x128xf32>
    %c0_i32 = arith.constant 0 : i32
    %175 = arith.cmpi eq, %arg1, %c0_i32 : i32
    %176 = arith.extui %175 : i1 to i32
    %c0_i32_97 = arith.constant 0 : i32
    %177 = arith.cmpi ne, %176, %c0_i32_97 : i32
    scf.if %177 {
      %cst_104 = arith.constant 0.000000e+00 : f32
      %183 = vector.broadcast %cst_104 : f32 to vector<1x2x128xf32>
      %c0_105 = arith.constant 0 : index
      %c0_106 = arith.constant 0 : index
      %c0_107 = arith.constant 0 : index
      %184 = vector.load %arg7[%c0_105, %c0_106, %c0_107] : memref<1x2x128xf32, #tpu.memory_space<vmem>>, vector<1x2x128xf32>
      tpu.vector_store %arg7[%c0_105, %c0_106, %c0_107], %183 {strides = array<i32>} : memref<1x2x128xf32, #tpu.memory_space<vmem>>, vector<1x2x128xf32>,
    } else {
    }
    %c0_98 = arith.constant 0 : index
    %c0_99 = arith.constant 0 : index
    %c0_100 = arith.constant 0 : index
    %178 = vector.load %arg7[%c0_98, %c0_99, %c0_100] : memref<1x2x128xf32, #tpu.memory_space<vmem>>, vector<1x2x128xf32>
    %179 = tpu.concatenate %171, %174 in 0 : vector<1x128xf32>, vector<1x128xf32> -> vector<2x128xf32>
    %180 = vector.shape_cast %179 : vector<2x128xf32> to vector<1x2x128xf32>
    %181 = arith.addf %178, %180 : vector<1x2x128xf32>
    %c0_101 = arith.constant 0 : index
    %c0_102 = arith.constant 0 : index
    %c0_103 = arith.constant 0 : index
    %182 = vector.load %arg7[%c0_101, %c0_102, %c0_103] : memref<1x2x128xf32, #tpu.memory_space<vmem>>, vector<1x2x128xf32>
    tpu.vector_store %arg7[%c0_101, %c0_102, %c0_103], %181 {strides = array<i32>} : memref<1x2x128xf32, #tpu.memory_space<vmem>>, vector<1x2x128xf32>,
    return
  }
  func.func @transform_0(%arg0: i32, %arg1: i32) -> (i32, i32, i32, i32) {
    %c10_i32 = arith.constant 10 : i32
    %0 = arith.muli %arg0, %c10_i32 : i32
    %1 = arith.addi %0, %arg1 : i32
    %c0_i32 = arith.constant 0 : i32
    %2 = arith.addi %1, %c0_i32 : i32
    %c0_i32_0 = arith.constant 0 : i32
    %c0_i32_1 = arith.constant 0 : i32
    %c0_i32_2 = arith.constant 0 : i32
    %c0_i32_3 = arith.constant 0 : i32
    return %2, %c0_i32_0, %c0_i32_1, %c0_i32_2 : i32, i32, i32, i32
  }
  func.func @transform_1(%arg0: i32, %arg1: i32) -> (i32, i32, i32, i32) {
    %c10_i32 = arith.constant 10 : i32
    %0 = arith.muli %arg0, %c10_i32 : i32
    %1 = arith.addi %0, %arg1 : i32
    %c1_i32 = arith.constant 1 : i32
    %2 = arith.addi %1, %c1_i32 : i32
    %c0_i32 = arith.constant 0 : i32
    %c0_i32_0 = arith.constant 0 : i32
    %c0_i32_1 = arith.constant 0 : i32
    %c0_i32_2 = arith.constant 0 : i32
    return %2, %c0_i32, %c0_i32_0, %c0_i32_1 : i32, i32, i32, i32
  }
  func.func @transform_2(%arg0: i32, %arg1: i32) -> (i32, i32, i32, i32) {
    %c10_i32 = arith.constant 10 : i32
    %0 = arith.muli %arg0, %c10_i32 : i32
    %1 = arith.addi %0, %arg1 : i32
    %c2_i32 = arith.constant 2 : i32
    %2 = arith.addi %1, %c2_i32 : i32
    %c0_i32 = arith.constant 0 : i32
    %c0_i32_0 = arith.constant 0 : i32
    %c0_i32_1 = arith.constant 0 : i32
    %c0_i32_2 = arith.constant 0 : i32
    return %2, %c0_i32, %c0_i32_0, %c0_i32_1 : i32, i32, i32, i32
  }
  func.func @transform_3(%arg0: i32, %arg1: i32) -> (i32, i32, i32) {
    %c0_i32 = arith.constant 0 : i32
    %c0_i32_0 = arith.constant 0 : i32
    %c0_i32_1 = arith.constant 0 : i32
    %c0_i32_2 = arith.constant 0 : i32
    return %c0_i32, %c0_i32_0, %c0_i32_1 : i32, i32, i32
  }
  func.func @transform_4(%arg0: i32, %arg1: i32) -> (i32, i32, i32) {
    %c8_i32 = arith.constant 8 : i32
    %0 = arith.muli %arg0, %c8_i32 : i32
    %1 = arith.addi %0, %arg1 : i32
    %c0_i32 = arith.constant 0 : i32
    %c0_i32_0 = arith.constant 0 : i32
    %c0_i32_1 = arith.constant 0 : i32
    return %1, %c0_i32, %c0_i32_0 : i32, i32, i32
  }
  func.func @transform_5(%arg0: i32, %arg1: i32) -> (i32, i32, i32) {
    %c0_i32 = arith.constant 0 : i32
    %c0_i32_0 = arith.constant 0 : i32
    %c0_i32_1 = arith.constant 0 : i32
    return %arg0, %c0_i32, %c0_i32_0 : i32, i32, i32
  }
}

module attributes {stable_mosaic.version = 11 : i64} {
  func.func @_bn_relu_kernel(%arg0: i32, %arg1: memref<1x64x128xf32, #tpu.memory_space<vmem>>, %arg2: memref<1x128xf32, #tpu.memory_space<vmem>>, %arg3: memref<1x128xf32, #tpu.memory_space<vmem>>, %arg4: memref<1x64x128xbf16, #tpu.memory_space<vmem>>) attributes {dimension_semantics = [#tpu.dimension_semantics<parallel>], iteration_bounds = array<i64: 16>, scalar_prefetch = 0 : i64, scratch_operands = 0 : i64, tpu.core_type = #tpu.core_type<tc>, window_params = [{transform_indices = @transform_0, window_bounds = array<i64: 1, 64, 128>}, {pipeline_mode = #tpu.pipeline_mode<synchronous>, transform_indices = @transform_1, window_bounds = array<i64: 1, 128>}, {pipeline_mode = #tpu.pipeline_mode<synchronous>, transform_indices = @transform_2, window_bounds = array<i64: 1, 128>}, {transform_indices = @transform_3, window_bounds = array<i64: 1, 64, 128>}]} {
    %c0 = arith.constant 0 : index
    %c0_0 = arith.constant 0 : index
    %c0_1 = arith.constant 0 : index
    %0 = vector.load %arg1[%c0, %c0_0, %c0_1] : memref<1x64x128xf32, #tpu.memory_space<vmem>>, vector<1x64x128xf32>
    %c0_2 = arith.constant 0 : index
    %c0_3 = arith.constant 0 : index
    %1 = vector.load %arg2[%c0_2, %c0_3] : memref<1x128xf32, #tpu.memory_space<vmem>>, vector<1x128xf32>
    %2 = vector.shape_cast %1 : vector<1x128xf32> to vector<1x1x128xf32>
    %3 = vector.broadcast %2 : vector<1x1x128xf32> to vector<1x64x128xf32>
    %4 = arith.mulf %0, %3 : vector<1x64x128xf32>
    %c0_4 = arith.constant 0 : index
    %c0_5 = arith.constant 0 : index
    %5 = vector.load %arg3[%c0_4, %c0_5] : memref<1x128xf32, #tpu.memory_space<vmem>>, vector<1x128xf32>
    %6 = vector.shape_cast %5 : vector<1x128xf32> to vector<1x1x128xf32>
    %7 = vector.broadcast %6 : vector<1x1x128xf32> to vector<1x64x128xf32>
    %8 = arith.addf %4, %7 : vector<1x64x128xf32>
    %cst = arith.constant 0.000000e+00 : f32
    %9 = vector.broadcast %cst : f32 to vector<1x64x128xf32>
    %10 = arith.maximumf %8, %9 : vector<1x64x128xf32>
    %11 = arith.truncf %10 : vector<1x64x128xf32> to vector<1x64x128xbf16>
    %c0_6 = arith.constant 0 : index
    %c0_7 = arith.constant 0 : index
    %c0_8 = arith.constant 0 : index
    %12 = vector.load %arg4[%c0_6, %c0_7, %c0_8] : memref<1x64x128xbf16, #tpu.memory_space<vmem>>, vector<1x64x128xbf16>
    tpu.vector_store %arg4[%c0_6, %c0_7, %c0_8], %11 {strides = array<i32>} : memref<1x64x128xbf16, #tpu.memory_space<vmem>>, vector<1x64x128xbf16>,
    return
  }
  func.func @transform_0(%arg0: i32) -> (i32, i32, i32) {
    %c0_i32 = arith.constant 0 : i32
    %c0_i32_0 = arith.constant 0 : i32
    %c0_i32_1 = arith.constant 0 : i32
    return %arg0, %c0_i32, %c0_i32_0 : i32, i32, i32
  }
  func.func @transform_1(%arg0: i32) -> (i32, i32) {
    %c0_i32 = arith.constant 0 : i32
    %c0_i32_0 = arith.constant 0 : i32
    %c0_i32_1 = arith.constant 0 : i32
    return %c0_i32, %c0_i32_0 : i32, i32
  }
  func.func @transform_2(%arg0: i32) -> (i32, i32) {
    %c0_i32 = arith.constant 0 : i32
    %c0_i32_0 = arith.constant 0 : i32
    %c0_i32_1 = arith.constant 0 : i32
    return %c0_i32, %c0_i32_0 : i32, i32
  }
  func.func @transform_3(%arg0: i32) -> (i32, i32, i32) {
    %c0_i32 = arith.constant 0 : i32
    %c0_i32_0 = arith.constant 0 : i32
    %c0_i32_1 = arith.constant 0 : i32
    return %arg0, %c0_i32, %c0_i32_0 : i32, i32, i32
  }
}

module attributes {stable_mosaic.version = 11 : i64} {
  func.func @_bn_relu_kernel(%arg0: i32, %arg1: memref<1x64x128xf32, #tpu.memory_space<vmem>>, %arg2: memref<1x128xf32, #tpu.memory_space<vmem>>, %arg3: memref<1x128xf32, #tpu.memory_space<vmem>>, %arg4: memref<1x64x128xf32, #tpu.memory_space<vmem>>) attributes {dimension_semantics = [#tpu.dimension_semantics<parallel>], iteration_bounds = array<i64: 16>, scalar_prefetch = 0 : i64, scratch_operands = 0 : i64, tpu.core_type = #tpu.core_type<tc>, window_params = [{transform_indices = @transform_0, window_bounds = array<i64: 1, 64, 128>}, {pipeline_mode = #tpu.pipeline_mode<synchronous>, transform_indices = @transform_1, window_bounds = array<i64: 1, 128>}, {pipeline_mode = #tpu.pipeline_mode<synchronous>, transform_indices = @transform_2, window_bounds = array<i64: 1, 128>}, {transform_indices = @transform_3, window_bounds = array<i64: 1, 64, 128>}]} {
    %c0 = arith.constant 0 : index
    %c0_0 = arith.constant 0 : index
    %c0_1 = arith.constant 0 : index
    %0 = vector.load %arg1[%c0, %c0_0, %c0_1] : memref<1x64x128xf32, #tpu.memory_space<vmem>>, vector<1x64x128xf32>
    %c0_2 = arith.constant 0 : index
    %c0_3 = arith.constant 0 : index
    %1 = vector.load %arg2[%c0_2, %c0_3] : memref<1x128xf32, #tpu.memory_space<vmem>>, vector<1x128xf32>
    %2 = vector.shape_cast %1 : vector<1x128xf32> to vector<1x1x128xf32>
    %3 = vector.broadcast %2 : vector<1x1x128xf32> to vector<1x64x128xf32>
    %4 = arith.mulf %0, %3 : vector<1x64x128xf32>
    %c0_4 = arith.constant 0 : index
    %c0_5 = arith.constant 0 : index
    %5 = vector.load %arg3[%c0_4, %c0_5] : memref<1x128xf32, #tpu.memory_space<vmem>>, vector<1x128xf32>
    %6 = vector.shape_cast %5 : vector<1x128xf32> to vector<1x1x128xf32>
    %7 = vector.broadcast %6 : vector<1x1x128xf32> to vector<1x64x128xf32>
    %8 = arith.addf %4, %7 : vector<1x64x128xf32>
    %cst = arith.constant 0.000000e+00 : f32
    %9 = vector.broadcast %cst : f32 to vector<1x64x128xf32>
    %10 = arith.maximumf %8, %9 : vector<1x64x128xf32>
    %c0_6 = arith.constant 0 : index
    %c0_7 = arith.constant 0 : index
    %c0_8 = arith.constant 0 : index
    %11 = vector.load %arg4[%c0_6, %c0_7, %c0_8] : memref<1x64x128xf32, #tpu.memory_space<vmem>>, vector<1x64x128xf32>
    tpu.vector_store %arg4[%c0_6, %c0_7, %c0_8], %10 {strides = array<i32>} : memref<1x64x128xf32, #tpu.memory_space<vmem>>, vector<1x64x128xf32>,
    return
  }
  func.func @transform_0(%arg0: i32) -> (i32, i32, i32) {
    %c0_i32 = arith.constant 0 : i32
    %c0_i32_0 = arith.constant 0 : i32
    %c0_i32_1 = arith.constant 0 : i32
    return %arg0, %c0_i32, %c0_i32_0 : i32, i32, i32
  }
  func.func @transform_1(%arg0: i32) -> (i32, i32) {
    %c0_i32 = arith.constant 0 : i32
    %c0_i32_0 = arith.constant 0 : i32
    %c0_i32_1 = arith.constant 0 : i32
    return %c0_i32, %c0_i32_0 : i32, i32
  }
  func.func @transform_2(%arg0: i32) -> (i32, i32) {
    %c0_i32 = arith.constant 0 : i32
    %c0_i32_0 = arith.constant 0 : i32
    %c0_i32_1 = arith.constant 0 : i32
    return %c0_i32, %c0_i32_0 : i32, i32
  }
  func.func @transform_3(%arg0: i32) -> (i32, i32, i32) {
    %c0_i32 = arith.constant 0 : i32
    %c0_i32_0 = arith.constant 0 : i32
    %c0_i32_1 = arith.constant 0 : i32
    return %arg0, %c0_i32, %c0_i32_0 : i32, i32, i32
  }
}

</mosaic_0001>

<llo_original>
// kernel: upconv_apply.6
$region0: #{upconv_apply.6}
  #allocation0 [shape = 'u32[]', space=smem, size = 0x4, offset = 0x4, fixed_abs, tag = 'smem constant byte address 0x4 - core index']
  #allocation1 [shape = 'u32[144,128]{1,0:T(1,128)}', space=vmem, size = 0x12000, scoped, tag = 'internal scratch']
  %s0 = inlined_call_operand.vmem [shape: f32[8,4], index: 0, kind: input, shape index: {}]
  %s1 = inlined_call_operand.vmem [shape: f32[16,4,16], index: 1, kind: input, shape index: {}]
  %s2 = inlined_call_operand.vmem [shape: f32[16,8,16], index: 2, kind: output, shape index: {}]
  %s3 = sld [smem:[#allocation0]]
  $region41: #{upconv_apply.6} parent=0
    _
  %s5 = ssub.s32 1, %s3
  %s6 = scalar_select 0, %s5, %s3
  loop: start=0, step=1, limit=4
  $region2: #{upconv_apply.6} parent=0 // loop_pre_header
    _
  $region3: #{upconv_apply.6} parent=0 // loop_header
    %s8 = sphi 0, %s12
    %p9 = scmp.ge.s32.totalorder %s8, 4
    %s16 = sphi 0, %s16
    %s18 = sphi 0, %s16
    %s19 = sphi 0, %s18
    %s33 = sphi 0, %s19
    %s39 = sphi 0, %s41
    %s42 = sphi 0, %s39
    %s43 = sphi 0, %s42
    %s59 = sphi 0, %s43
    %s65 = sphi 0, %s67
    %s68 = sphi 0, %s65
    %s69 = sphi 0, %s68
    %s85 = sphi 0, %s69
  $region4: #{upconv_apply.6} parent=0 // loop_header_branch
    %11 = sbr.rel (%p9) target = $region8
  $region5: #{upconv_apply.6} parent=0 // loop_body
    %s13 = ssub.s32 %s8, 1
    %s14 = ssub.s32 %s8, 2
    %s15 = sadd.s32 %s8, 1
    %s17 = sadd.s32 %s16, 1
    %p20 = scmp.eq.s32.totalorder %s8, 1
    %p21 = scmp.ne.s32.totalorder %s16, %s18
    %p22 = scmp.eq.s32.totalorder %s8, 0
    %p23 = por %p21, %p22
    %p24 = scmp.ne.s32.totalorder %s16, %s18
    %p25 = scmp.eq.s32.totalorder %s13, 1
    %p26 = por %p24, %p25
    %p27 = scmp.ne.s32.totalorder %s18, %s19
    %p28 = scmp.eq.s32.totalorder %s13, 0
    %p29 = por %p27, %p28
    %p30 = scmp.ne.s32.totalorder %s18, %s19
    %p31 = scmp.eq.s32.totalorder %s14, 1
    %p32 = por %p30, %p31
    %p34 = scmp.ne.s32.totalorder %s19, %s33
    %p35 = scmp.eq.s32.totalorder %s14, 0
    %p36 = por %p34, %p35
    %s37 = ssub.s32 %s8, %s15
    %p38 = scmp.eq.s32.totalorder %s37, 0
    %s40 = sadd.s32 %s39, 1
    %s41 = scalar_select %p38, %s39, %s40
    %p44 = pneg %p38
    %p45 = scmp.eq.s32.totalorder %s8, 1
    %p46 = por %p44, %p45
    %p47 = scmp.ne.s32.totalorder %s39, %s42
    %p48 = scmp.eq.s32.totalorder %s8, 0
    %p49 = por %p47, %p48
    %p50 = scmp.ne.s32.totalorder %s39, %s42
    %p51 = scmp.eq.s32.totalorder %s13, 1
    %p52 = por %p50, %p51
    %p53 = scmp.ne.s32.totalorder %s42, %s43
    %p54 = scmp.eq.s32.totalorder %s13, 0
    %p55 = por %p53, %p54
    %p56 = scmp.ne.s32.totalorder %s42, %s43
    %p57 = scmp.eq.s32.totalorder %s14, 1
    %p58 = por %p56, %p57
    %p60 = scmp.ne.s32.totalorder %s43, %s59
    %p61 = scmp.eq.s32.totalorder %s14, 0
    %p62 = por %p60, %p61
    %s63 = ssub.s32 %s8, %s15
    %p64 = scmp.eq.s32.totalorder %s63, 0
    %s66 = sadd.s32 %s65, 1
    %s67 = scalar_select %p64, %s65, %s66
    %p70 = pneg %p64
    %p71 = scmp.eq.s32.totalorder %s8, 1
    %p72 = por %p70, %p71
    %p73 = scmp.ne.s32.totalorder %s65, %s68
    %p74 = scmp.eq.s32.totalorder %s8, 0
    %p75 = por %p73, %p74
    %p76 = scmp.ne.s32.totalorder %s65, %s68
    %p77 = scmp.eq.s32.totalorder %s13, 1
    %p78 = por %p76, %p77
    %p79 = scmp.ne.s32.totalorder %s68, %s69
    %p80 = scmp.eq.s32.totalorder %s13, 0
    %p81 = por %p79, %p80
    %p82 = scmp.ne.s32.totalorder %s68, %s69
    %p83 = scmp.eq.s32.totalorder %s14, 1
    %p84 = por %p82, %p83
    %p86 = scmp.ne.s32.totalorder %s69, %s85
    %p87 = scmp.eq.s32.totalorder %s14, 0
    %p88 = por %p86, %p87
    %p89 = scmp.le.s32.totalorder 1, %s8
    %p90 = scmp.lt.s32.totalorder %s8, 3
    %p91 = pnand %p89, %p90
    %p92 = pneg %p91
    // Predicated region
    $region9: #{upconv_apply.6} parent=5 // pred_check
      _
    $region10: #{upconv_apply.6} parent=5 // pred_check_branch
      %94 = sbr.rel (%p91) target = $region12
    $region11: #{upconv_apply.6} parent=5 // pred_region
      %s95 = ssub.s32 %s8, 1
      // Predicated region
      $region13: #{upconv_apply.6} parent=11 // pred_check
        %p96 = pneg %p29
      $region14: #{upconv_apply.6} parent=11 // pred_check_branch
        %98 = sbr.rel (%p96) target = $region16
      $region15: #{upconv_apply.6} parent=11 // pred_region
        _
      $region16: #{upconv_apply.6} parent=11 // pred_fallthru
        _
    $region12: #{upconv_apply.6} parent=5 // pred_fallthru
      _
    %p99 = scmp.lt.s32.totalorder %s8, 2
    // Predicated region
    $region17: #{upconv_apply.6} parent=5 // pred_check
      %p100 = pneg %p99
    $region18: #{upconv_apply.6} parent=5 // pred_check_branch
      %102 = sbr.rel (%p100) target = $region20
    $region19: #{upconv_apply.6} parent=5 // pred_region
      // Predicated region
      $region21: #{upconv_apply.6} parent=19 // pred_check
        %p103 = pneg %p49
      $region22: #{upconv_apply.6} parent=19 // pred_check_branch
        %105 = sbr.rel (%p103) target = $region24
      $region23: #{upconv_apply.6} parent=19 // pred_region
        %s106 = smul.u32 8, %s8
        %p107 = scmp.lt.s32.totalorder %s106, 15
        %s108 = scalar_select %p107, %s106, 15
        %s109 = smul.addr %s108, 4
        %s110 = scalar_lea.vmem %s1, %s109
        %s111 = smul.u32 8, %s8
      $region24: #{upconv_apply.6} parent=19 // pred_fallthru
        _
    $region20: #{upconv_apply.6} parent=5 // pred_fallthru
      _
    %p112 = scmp.le.s32.totalorder 1, %s8
    %p113 = scmp.lt.s32.totalorder %s8, 3
    %p114 = pnand %p112, %p113
    %p115 = pneg %p114
    // Predicated region
    $region25: #{upconv_apply.6} parent=5 // pred_check
      _
    $region26: #{upconv_apply.6} parent=5 // pred_check_branch
      %117 = sbr.rel (%p114) target = $region28
    $region27: #{upconv_apply.6} parent=5 // pred_region
      %s118 = ssub.s32 %s8, 1
      %p119 = pneg %p29
      %p120 = pneg %p26
      %s121 = smul.u32 8, %s13
      %p122 = scmp.lt.s32.totalorder %s121, 15
      %s123 = scalar_select %p122, %s121, 15
      %s124 = smul.addr %s123, 4
      %s125 = scalar_lea.vmem %s1, %s124
      %p126 = pneg %p55
      %p127 = pneg %p52
      %p128 = pneg %p81
      %p129 = pneg %p78
      %s130 = smul.u32 8, %s13
      %p131 = scmp.lt.s32.totalorder %s130, 15
      %s132 = scalar_select %p131, %s130, 15
      %s133 = smul.addr %s132, 8
      %s134 = scalar_lea.vmem %s2, %s133
      %s135 = smul.u32 8, %s13
      %p136 = scmp.lt.s32.totalorder %s135, 15
      %s137 = scalar_select %p136, %s135, 15
      %s138 = smul.addr %s137, 4
      %s139 = scalar_lea.vmem %s1, %s138
      %s140 = smul.u32 8, %s13
      %s141 = smul.u32 8, %s13
      %p142 = scmp.lt.s32.totalorder %s141, 15
      %s143 = scalar_select %p142, %s141, 15
      %s144 = smul.addr %s143, 8
      %s145 = scalar_lea.vmem %s2, %s144
      %s146 = smul.u32 8, %s13
      %v147 = vld [vmem:[%s0] sm:$0xff]
      %v148 = vld [vmem:[%s139] sm:$0xf]
      %vm149 = vcmask 31744
      %v151 = vsel %vm149, %v147, 0
      %vm153 = vcmask 1043456
      %v155 = vsel %vm153, %v148, 0
      %157 = vmatprep.subr.mxu0 0.0
      %158 = vmatpush1.msra.mxu0 %v155
      %159 = vmatprep.subr.mxu0 0.0
      %160 = vmatpush1.msra.mxu0 0.0
      %161 = vmatprep.subr.mxu0 0.0
      %162 = vmatpush1.msra.mxu0 0.0
      %163 = vmatprep.subr.mxu0 0.0
      %164 = vmatpush1.msra.mxu0 0.0
      %165 = vmatprep.subr.mxu0 0.0
      %166 = vmatpush1.msra.mxu0 0.0
      %167 = vmatprep.subr.mxu0 0.0
      %168 = vmatpush1.msra.mxu0 0.0
      %169 = vmatprep.subr.mxu0 0.0
      %170 = vmatpush1.msra.mxu0 0.0
      %171 = vmatprep.subr.mxu0 0.0
      %172 = vmatpush1.msra.mxu0 0.0
      %173 = vmatprep.subr.mxu0 0.0
      %174 = vmatpush1.msra.mxu0 0.0
      %175 = vmatprep.subr.mxu0 0.0
      %176 = vmatpush1.msra.mxu0 0.0
      %177 = vmatprep.subr.mxu0 0.0
      %178 = vmatpush1.msra.mxu0 0.0
      %179 = vmatprep.subr.mxu0 0.0
      %180 = vmatpush1.msra.mxu0 0.0
      %181 = vmatprep.subr.mxu0 0.0
      %182 = vmatpush1.msra.mxu0 0.0
      %183 = vmatprep.subr.mxu0 0.0
      %184 = vmatpush1.msra.mxu0 0.0
      %185 = vmatprep.subr.mxu0 0.0
      %186 = vmatpush1.msra.mxu0 0.0
      %187 = vmatprep.subr.mxu0 0.0
      %188 = vmatpush1.msra.mxu0 0.0
      %189 = vmatprep.subr.mxu0 0.0
      %190 = vmatpush1.msra.mxu0 0.0
      %191 = vmatprep.subr.mxu0 0.0
      %192 = vmatpush1.msra.mxu0 0.0
      %193 = vmatprep.subr.mxu0 0.0
      %194 = vmatpush1.msra.mxu0 0.0
      %195 = vmatprep.subr.mxu0 0.0
      %196 = vmatpush1.msra.mxu0 0.0
      %197 = vmatprep.subr.mxu0 0.0
      %198 = vmatpush1.msra.mxu0 0.0
      %199 = vmatprep.subr.mxu0 0.0
      %200 = vmatpush1.msra.mxu0 0.0
      %201 = vmatprep.subr.mxu0 0.0
      %202 = vmatpush1.msra.mxu0 0.0
      %203 = vmatprep.subr.mxu0 0.0
      %204 = vmatpush1.msra.mxu0 0.0
      %205 = vmatprep.subr.mxu0 0.0
      %206 = vmatpush1.msra.mxu0 0.0
      %207 = vmatprep.subr.mxu0 0.0
      %208 = vmatpush1.msra.mxu0 0.0
      %209 = vmatprep.subr.mxu0 0.0
      %210 = vmatpush1.msra.mxu0 0.0
      %211 = vmatprep.subr.mxu0 0.0
      %212 = vmatpush1.msra.mxu0 0.0
      %213 = vmatprep.subr.mxu0 0.0
      %214 = vmatpush1.msra.mxu0 0.0
      %215 = vmatprep.subr.mxu0 0.0
      %216 = vmatpush1.msra.mxu0 0.0
      %217 = vmatprep.subr.mxu0 0.0
      %218 = vmatpush1.msra.mxu0 0.0
      %219 = vmatprep.subr.mxu0 0.0
      %220 = vmatpush1.msra.mxu0 0.0
      %221 = vmatprep.mubr.f32.mxu0 0.0
      %222 = vmatmul.mubr.f32.gmra.mrb[0].mxu0 %v151
      %v223 = vpop.f32.mrb[0].mxu0
      %v224 = vadd.f32 0.0, %v223
      %v225 = vpop.f32.mrb[0].mxu0
      %226 = vdwg.mxu0
      %vm227 = vcmask 130048
      %228 = vst.msk [vmem:[%s145] sm:$0xff] %vm227, %v224
      %v229 = vld [vmem:[%s0] sm:$0xff]
      %s230 = scalar_lea.vmem %s139, 4
      %v231 = vld [vmem:[%s230] sm:$0xf]
      %v233 = vsel %vm149, %v229, 0
      %v236 = vsel %vm153, %v231, 0
      %238 = vmatprep.subr.mxu0 0.0
      %239 = vmatpush1.msra.mxu0 %v236
      %240 = vmatprep.subr.mxu0 0.0
      %241 = vmatpush1.msra.mxu0 0.0
      %242 = vmatprep.subr.mxu0 0.0
      %243 = vmatpush1.msra.mxu0 0.0
      %244 = vmatprep.subr.mxu0 0.0
      %245 = vmatpush1.msra.mxu0 0.0
      %246 = vmatprep.subr.mxu0 0.0
      %247 = vmatpush1.msra.mxu0 0.0
      %248 = vmatprep.subr.mxu0 0.0
      %249 = vmatpush1.msra.mxu0 0.0
      %250 = vmatprep.subr.mxu0 0.0
      %251 = vmatpush1.msra.mxu0 0.0
      %252 = vmatprep.subr.mxu0 0.0
      %253 = vmatpush1.msra.mxu0 0.0
      %254 = vmatprep.subr.mxu0 0.0
      %255 = vmatpush1.msra.mxu0 0.0
      %256 = vmatprep.subr.mxu0 0.0
      %257 = vmatpush1.msra.mxu0 0.0
      %258 = vmatprep.subr.mxu0 0.0
      %259 = vmatpush1.msra.mxu0 0.0
      %260 = vmatprep.subr.mxu0 0.0
      %261 = vmatpush1.msra.mxu0 0.0
      %262 = vmatprep.subr.mxu0 0.0
      %263 = vmatpush1.msra.mxu0 0.0
      %264 = vmatprep.subr.mxu0 0.0
      %265 = vmatpush1.msra.mxu0 0.0
      %266 = vmatprep.subr.mxu0 0.0
      %267 = vmatpush1.msra.mxu0 0.0
      %268 = vmatprep.subr.mxu0 0.0
      %269 = vmatpush1.msra.mxu0 0.0
      %270 = vmatprep.subr.mxu0 0.0
      %271 = vmatpush1.msra.mxu0 0.0
      %272 = vmatprep.subr.mxu0 0.0
      %273 = vmatpush1.msra.mxu0 0.0
      %274 = vmatprep.subr.mxu0 0.0
      %275 = vmatpush1.msra.mxu0 0.0
      %276 = vmatprep.subr.mxu0 0.0
      %277 = vmatpush1.msra.mxu0 0.0
      %278 = vmatprep.subr.mxu0 0.0
      %279 = vmatpush1.msra.mxu0 0.0
      %280 = vmatprep.subr.mxu0 0.0
      %281 = vmatpush1.msra.mxu0 0.0
      %282 = vmatprep.subr.mxu0 0.0
      %283 = vmatpush1.msra.mxu0 0.0
      %284 = vmatprep.subr.mxu0 0.0
      %285 = vmatpush1.msra.mxu0 0.0
      %286 = vmatprep.subr.mxu0 0.0
      %287 = vmatpush1.msra.mxu0 0.0
      %288 = vmatprep.subr.mxu0 0.0
      %289 = vmatpush1.msra.mxu0 0.0
      %290 = vmatprep.subr.mxu0 0.0
      %291 = vmatpush1.msra.mxu0 0.0
      %292 = vmatprep.subr.mxu0 0.0
      %293 = vmatpush1.msra.mxu0 0.0
      %294 = vmatprep.subr.mxu0 0.0
      %295 = vmatpush1.msra.mxu0 0.0
      %296 = vmatprep.subr.mxu0 0.0
      %297 = vmatpush1.msra.mxu0 0.0
      %298 = vmatprep.subr.mxu0 0.0
      %299 = vmatpush1.msra.mxu0 0.0
      %300 = vmatprep.subr.mxu0 0.0
      %301 = vmatpush1.msra.mxu0 0.0
      %302 = vmatprep.mubr.f32.mxu0 0.0
      %303 = vmatmul.mubr.f32.gmra.mrb[0].mxu0 %v233
      %v304 = vpop.f32.mrb[0].mxu0
      %v305 = vadd.f32 0.0, %v304
      %v306 = vpop.f32.mrb[0].mxu0
      %307 = vdwg.mxu0
      %s308 = scalar_lea.vmem %s145, 8
      %309 = vst.msk [vmem:[%s308] sm:$0xff] %vm227, %v305
      %v310 = vld [vmem:[%s0] sm:$0xff]
      %s311 = scalar_lea.vmem %s139, 8
      %v312 = vld [vmem:[%s311] sm:$0xf]
      %v314 = vsel %vm149, %v310, 0
      %v317 = vsel %vm153, %v312, 0
      %319 = vmatprep.subr.mxu0 0.0
      %320 = vmatpush1.msra.mxu0 %v317
      %321 = vmatprep.subr.mxu0 0.0
      %322 = vmatpush1.msra.mxu0 0.0
      %323 = vmatprep.subr.mxu0 0.0
      %324 = vmatpush1.msra.mxu0 0.0
      %325 = vmatprep.subr.mxu0 0.0
      %326 = vmatpush1.msra.mxu0 0.0
      %327 = vmatprep.subr.mxu0 0.0
      %328 = vmatpush1.msra.mxu0 0.0
      %329 = vmatprep.subr.mxu0 0.0
      %330 = vmatpush1.msra.mxu0 0.0
      %331 = vmatprep.subr.mxu0 0.0
      %332 = vmatpush1.msra.mxu0 0.0
      %333 = vmatprep.subr.mxu0 0.0
      %334 = vmatpush1.msra.mxu0 0.0
      %335 = vmatprep.subr.mxu0 0.0
      %336 = vmatpush1.msra.mxu0 0.0
      %337 = vmatprep.subr.mxu0 0.0
      %338 = vmatpush1.msra.mxu0 0.0
      %339 = vmatprep.subr.mxu0 0.0
      %340 = vmatpush1.msra.mxu0 0.0
      %341 = vmatprep.subr.mxu0 0.0
      %342 = vmatpush1.msra.mxu0 0.0
      %343 = vmatprep.subr.mxu0 0.0
      %344 = vmatpush1.msra.mxu0 0.0
      %345 = vmatprep.subr.mxu0 0.0
      %346 = vmatpush1.msra.mxu0 0.0
      %347 = vmatprep.subr.mxu0 0.0
      %348 = vmatpush1.msra.mxu0 0.0
      %349 = vmatprep.subr.mxu0 0.0
      %350 = vmatpush1.msra.mxu0 0.0
      %351 = vmatprep.subr.mxu0 0.0
      %352 = vmatpush1.msra.mxu0 0.0
      %353 = vmatprep.subr.mxu0 0.0
      %354 = vmatpush1.msra.mxu0 0.0
      %355 = vmatprep.subr.mxu0 0.0
      %356 = vmatpush1.msra.mxu0 0.0
      %357 = vmatprep.subr.mxu0 0.0
      %358 = vmatpush1.msra.mxu0 0.0
      %359 = vmatprep.subr.mxu0 0.0
      %360 = vmatpush1.msra.mxu0 0.0
      %361 = vmatprep.subr.mxu0 0.0
      %362 = vmatpush1.msra.mxu0 0.0
      %363 = vmatprep.subr.mxu0 0.0
      %364 = vmatpush1.msra.mxu0 0.0
      %365 = vmatprep.subr.mxu0 0.0
      %366 = vmatpush1.msra.mxu0 0.0
      %367 = vmatprep.subr.mxu0 0.0
      %368 = vmatpush1.msra.mxu0 0.0
      %369 = vmatprep.subr.mxu0 0.0
      %370 = vmatpush1.msra.mxu0 0.0
      %371 = vmatprep.subr.mxu0 0.0
      %372 = vmatpush1.msra.mxu0 0.0
      %373 = vmatprep.subr.mxu0 0.0
      %374 = vmatpush1.msra.mxu0 0.0
      %375 = vmatprep.subr.mxu0 0.0
      %376 = vmatpush1.msra.mxu0 0.0
      %377 = vmatprep.subr.mxu0 0.0
      %378 = vmatpush1.msra.mxu0 0.0
      %379 = vmatprep.subr.mxu0 0.0
      %380 = vmatpush1.msra.mxu0 0.0
      %381 = vmatprep.subr.mxu0 0.0
      %382 = vmatpush1.msra.mxu0 0.0
      %383 = vmatprep.mubr.f32.mxu0 0.0
      %384 = vmatmul.mubr.f32.gmra.mrb[0].mxu0 %v314
      %v385 = vpop.f32.mrb[0].mxu0
      %v386 = vadd.f32 0.0, %v385
      %v387 = vpop.f32.mrb[0].mxu0
      %388 = vdwg.mxu0
      %s389 = scalar_lea.vmem %s145, 16
      %390 = vst.msk [vmem:[%s389] sm:$0xff] %vm227, %v386
      %v391 = vld [vmem:[%s0] sm:$0xff]
      %s392 = scalar_lea.vmem %s139, 12
      %v393 = vld [vmem:[%s392] sm:$0xf]
      %v395 = vsel %vm149, %v391, 0
      %v398 = vsel %vm153, %v393, 0
      %400 = vmatprep.subr.mxu0 0.0
      %401 = vmatpush1.msra.mxu0 %v398
      %402 = vmatprep.subr.mxu0 0.0
      %403 = vmatpush1.msra.mxu0 0.0
      %404 = vmatprep.subr.mxu0 0.0
      %405 = vmatpush1.msra.mxu0 0.0
      %406 = vmatprep.subr.mxu0 0.0
      %407 = vmatpush1.msra.mxu0 0.0
      %408 = vmatprep.subr.mxu0 0.0
      %409 = vmatpush1.msra.mxu0 0.0
      %410 = vmatprep.subr.mxu0 0.0
      %411 = vmatpush1.msra.mxu0 0.0
      %412 = vmatprep.subr.mxu0 0.0
      %413 = vmatpush1.msra.mxu0 0.0
      %414 = vmatprep.subr.mxu0 0.0
      %415 = vmatpush1.msra.mxu0 0.0
      %416 = vmatprep.subr.mxu0 0.0
      %417 = vmatpush1.msra.mxu0 0.0
      %418 = vmatprep.subr.mxu0 0.0
      %419 = vmatpush1.msra.mxu0 0.0
      %420 = vmatprep.subr.mxu0 0.0
      %421 = vmatpush1.msra.mxu0 0.0
      %422 = vmatprep.subr.mxu0 0.0
      %423 = vmatpush1.msra.mxu0 0.0
      %424 = vmatprep.subr.mxu0 0.0
      %425 = vmatpush1.msra.mxu0 0.0
      %426 = vmatprep.subr.mxu0 0.0
      %427 = vmatpush1.msra.mxu0 0.0
      %428 = vmatprep.subr.mxu0 0.0
      %429 = vmatpush1.msra.mxu0 0.0
      %430 = vmatprep.subr.mxu0 0.0
      %431 = vmatpush1.msra.mxu0 0.0
      %432 = vmatprep.subr.mxu0 0.0
      %433 = vmatpush1.msra.mxu0 0.0
      %434 = vmatprep.subr.mxu0 0.0
      %435 = vmatpush1.msra.mxu0 0.0
      %436 = vmatprep.subr.mxu0 0.0
      %437 = vmatpush1.msra.mxu0 0.0
      %438 = vmatprep.subr.mxu0 0.0
      %439 = vmatpush1.msra.mxu0 0.0
      %440 = vmatprep.subr.mxu0 0.0
      %441 = vmatpush1.msra.mxu0 0.0
      %442 = vmatprep.subr.mxu0 0.0
      %443 = vmatpush1.msra.mxu0 0.0
      %444 = vmatprep.subr.mxu0 0.0
      %445 = vmatpush1.msra.mxu0 0.0
      %446 = vmatprep.subr.mxu0 0.0
      %447 = vmatpush1.msra.mxu0 0.0
      %448 = vmatprep.subr.mxu0 0.0
      %449 = vmatpush1.msra.mxu0 0.0
      %450 = vmatprep.subr.mxu0 0.0
      %451 = vmatpush1.msra.mxu0 0.0
      %452 = vmatprep.subr.mxu0 0.0
      %453 = vmatpush1.msra.mxu0 0.0
      %454 = vmatprep.subr.mxu0 0.0
      %455 = vmatpush1.msra.mxu0 0.0
      %456 = vmatprep.subr.mxu0 0.0
      %457 = vmatpush1.msra.mxu0 0.0
      %458 = vmatprep.subr.mxu0 0.0
      %459 = vmatpush1.msra.mxu0 0.0
      %460 = vmatprep.subr.mxu0 0.0
      %461 = vmatpush1.msra.mxu0 0.0
      %462 = vmatprep.subr.mxu0 0.0
      %463 = vmatpush1.msra.mxu0 0.0
      %464 = vmatprep.mubr.f32.mxu0 0.0
      %465 = vmatmul.mubr.f32.gmra.mrb[0].mxu0 %v395
      %v466 = vpop.f32.mrb[0].mxu0
      %v467 = vadd.f32 0.0, %v466
      %v468 = vpop.f32.mrb[0].mxu0
      %469 = vdwg.mxu0
      %s470 = scalar_lea.vmem %s145, 24
      %471 = vst.msk [vmem:[%s470] sm:$0xff] %vm227, %v467
      %v472 = vld [vmem:[%s0] sm:$0xff]
      %s473 = scalar_lea.vmem %s139, 16
      %v474 = vld [vmem:[%s473] sm:$0xf]
      %v476 = vsel %vm149, %v472, 0
      %v479 = vsel %vm153, %v474, 0
      %481 = vmatprep.subr.mxu0 0.0
      %482 = vmatpush1.msra.mxu0 %v479
      %483 = vmatprep.subr.mxu0 0.0
      %484 = vmatpush1.msra.mxu0 0.0
      %485 = vmatprep.subr.mxu0 0.0
      %486 = vmatpush1.msra.mxu0 0.0
      %487 = vmatprep.subr.mxu0 0.0
      %488 = vmatpush1.msra.mxu0 0.0
      %489 = vmatprep.subr.mxu0 0.0
      %490 = vmatpush1.msra.mxu0 0.0
      %491 = vmatprep.subr.mxu0 0.0
      %492 = vmatpush1.msra.mxu0 0.0
      %493 = vmatprep.subr.mxu0 0.0
      %494 = vmatpush1.msra.mxu0 0.0
      %495 = vmatprep.subr.mxu0 0.0
      %496 = vmatpush1.msra.mxu0 0.0
      %497 = vmatprep.subr.mxu0 0.0
      %498 = vmatpush1.msra.mxu0 0.0
      %499 = vmatprep.subr.mxu0 0.0
      %500 = vmatpush1.msra.mxu0 0.0
      %501 = vmatprep.subr.mxu0 0.0
      %502 = vmatpush1.msra.mxu0 0.0
      %503 = vmatprep.subr.mxu0 0.0
      %504 = vmatpush1.msra.mxu0 0.0
      %505 = vmatprep.subr.mxu0 0.0
      %506 = vmatpush1.msra.mxu0 0.0
      %507 = vmatprep.subr.mxu0 0.0
      %508 = vmatpush1.msra.mxu0 0.0
      %509 = vmatprep.subr.mxu0 0.0
      %510 = vmatpush1.msra.mxu0 0.0
      %511 = vmatprep.subr.mxu0 0.0
      %512 = vmatpush1.msra.mxu0 0.0
      %513 = vmatprep.subr.mxu0 0.0
      %514 = vmatpush1.msra.mxu0 0.0
      %515 = vmatprep.subr.mxu0 0.0
      %516 = vmatpush1.msra.mxu0 0.0
      %517 = vmatprep.subr.mxu0 0.0
      %518 = vmatpush1.msra.mxu0 0.0
      %519 = vmatprep.subr.mxu0 0.0
      %520 = vmatpush1.msra.mxu0 0.0
      %521 = vmatprep.subr.mxu0 0.0
      %522 = vmatpush1.msra.mxu0 0.0
      %523 = vmatprep.subr.mxu0 0.0
      %524 = vmatpush1.msra.mxu0 0.0
      %525 = vmatprep.subr.mxu0 0.0
      %526 = vmatpush1.msra.mxu0 0.0
      %527 = vmatprep.subr.mxu0 0.0
      %528 = vmatpush1.msra.mxu0 0.0
      %529 = vmatprep.subr.mxu0 0.0
      %530 = vmatpush1.msra.mxu0 0.0
      %531 = vmatprep.subr.mxu0 0.0
      %532 = vmatpush1.msra.mxu0 0.0
      %533 = vmatprep.subr.mxu0 0.0
      %534 = vmatpush1.msra.mxu0 0.0
      %535 = vmatprep.subr.mxu0 0.0
      %536 = vmatpush1.msra.mxu0 0.0
      %537 = vmatprep.subr.mxu0 0.0
      %538 = vmatpush1.msra.mxu0 0.0
      %539 = vmatprep.subr.mxu0 0.0
      %540 = vmatpush1.msra.mxu0 0.0
      %541 = vmatprep.subr.mxu0 0.0
      %542 = vmatpush1.msra.mxu0 0.0
      %543 = vmatprep.subr.mxu0 0.0
      %544 = vmatpush1.msra.mxu0 0.0
      %545 = vmatprep.mubr.f32.mxu0 0.0
      %546 = vmatmul.mubr.f32.gmra.mrb[0].mxu0 %v476
      %v547 = vpop.f32.mrb[0].mxu0
      %v548 = vadd.f32 0.0, %v547
      %v549 = vpop.f32.mrb[0].mxu0
      %550 = vdwg.mxu0
      %s551 = scalar_lea.vmem %s145, 32
      %552 = vst.msk [vmem:[%s551] sm:$0xff] %vm227, %v548
      %v553 = vld [vmem:[%s0] sm:$0xff]
      %s554 = scalar_lea.vmem %s139, 20
      %v555 = vld [vmem:[%s554] sm:$0xf]
      %v557 = vsel %vm149, %v553, 0
      %v560 = vsel %vm153, %v555, 0
      %562 = vmatprep.subr.mxu0 0.0
      %563 = vmatpush1.msra.mxu0 %v560
      %564 = vmatprep.subr.mxu0 0.0
      %565 = vmatpush1.msra.mxu0 0.0
      %566 = vmatprep.subr.mxu0 0.0
      %567 = vmatpush1.msra.mxu0 0.0
      %568 = vmatprep.subr.mxu0 0.0
      %569 = vmatpush1.msra.mxu0 0.0
      %570 = vmatprep.subr.mxu0 0.0
      %571 = vmatpush1.msra.mxu0 0.0
      %572 = vmatprep.subr.mxu0 0.0
      %573 = vmatpush1.msra.mxu0 0.0
      %574 = vmatprep.subr.mxu0 0.0
      %575 = vmatpush1.msra.mxu0 0.0
      %576 = vmatprep.subr.mxu0 0.0
      %577 = vmatpush1.msra.mxu0 0.0
      %578 = vmatprep.subr.mxu0 0.0
      %579 = vmatpush1.msra.mxu0 0.0
      %580 = vmatprep.subr.mxu0 0.0
      %581 = vmatpush1.msra.mxu0 0.0
      %582 = vmatprep.subr.mxu0 0.0
      %583 = vmatpush1.msra.mxu0 0.0
      %584 = vmatprep.subr.mxu0 0.0
      %585 = vmatpush1.msra.mxu0 0.0
      %586 = vmatprep.subr.mxu0 0.0
      %587 = vmatpush1.msra.mxu0 0.0
      %588 = vmatprep.subr.mxu0 0.0
      %589 = vmatpush1.msra.mxu0 0.0
      %590 = vmatprep.subr.mxu0 0.0
      %591 = vmatpush1.msra.mxu0 0.0
      %592 = vmatprep.subr.mxu0 0.0
      %593 = vmatpush1.msra.mxu0 0.0
      %594 = vmatprep.subr.mxu0 0.0
      %595 = vmatpush1.msra.mxu0 0.0
      %596 = vmatprep.subr.mxu0 0.0
      %597 = vmatpush1.msra.mxu0 0.0
      %598 = vmatprep.subr.mxu0 0.0
      %599 = vmatpush1.msra.mxu0 0.0
      %600 = vmatprep.subr.mxu0 0.0
      %601 = vmatpush1.msra.mxu0 0.0
      %602 = vmatprep.subr.mxu0 0.0
      %603 = vmatpush1.msra.mxu0 0.0
      %604 = vmatprep.subr.mxu0 0.0
      %605 = vmatpush1.msra.mxu0 0.0
      %606 = vmatprep.subr.mxu0 0.0
      %607 = vmatpush1.msra.mxu0 0.0
      %608 = vmatprep.subr.mxu0 0.0
      %609 = vmatpush1.msra.mxu0 0.0
      %610 = vmatprep.subr.mxu0 0.0
      %611 = vmatpush1.msra.mxu0 0.0
      %612 = vmatprep.subr.mxu0 0.0
      %613 = vmatpush1.msra.mxu0 0.0
      %614 = vmatprep.subr.mxu0 0.0
      %615 = vmatpush1.msra.mxu0 0.0
      %616 = vmatprep.subr.mxu0 0.0
      %617 = vmatpush1.msra.mxu0 0.0
      %618 = vmatprep.subr.mxu0 0.0
      %619 = vmatpush1.msra.mxu0 0.0
      %620 = vmatprep.subr.mxu0 0.0
      %621 = vmatpush1.msra.mxu0 0.0
      %622 = vmatprep.subr.mxu0 0.0
      %623 = vmatpush1.msra.mxu0 0.0
      %624 = vmatprep.subr.mxu0 0.0
      %625 = vmatpush1.msra.mxu0 0.0
      %626 = vmatprep.mubr.f32.mxu0 0.0
      %627 = vmatmul.mubr.f32.gmra.mrb[0].mxu0 %v557
      %v628 = vpop.f32.mrb[0].mxu0
      %v629 = vadd.f32 0.0, %v628
      %v630 = vpop.f32.mrb[0].mxu0
      %631 = vdwg.mxu0
      %s632 = scalar_lea.vmem %s145, 40
      %633 = vst.msk [vmem:[%s632] sm:$0xff] %vm227, %v629
      %v634 = vld [vmem:[%s0] sm:$0xff]
      %s635 = scalar_lea.vmem %s139, 24
      %v636 = vld [vmem:[%s635] sm:$0xf]
      %v638 = vsel %vm149, %v634, 0
      %v641 = vsel %vm153, %v636, 0
      %643 = vmatprep.subr.mxu0 0.0
      %644 = vmatpush1.msra.mxu0 %v641
      %645 = vmatprep.subr.mxu0 0.0
      %646 = vmatpush1.msra.mxu0 0.0
      %647 = vmatprep.subr.mxu0 0.0
      %648 = vmatpush1.msra.mxu0 0.0
      %649 = vmatprep.subr.mxu0 0.0
      %650 = vmatpush1.msra.mxu0 0.0
      %651 = vmatprep.subr.mxu0 0.0
      %652 = vmatpush1.msra.mxu0 0.0
      %653 = vmatprep.subr.mxu0 0.0
      %654 = vmatpush1.msra.mxu0 0.0
      %655 = vmatprep.subr.mxu0 0.0
      %656 = vmatpush1.msra.mxu0 0.0
      %657 = vmatprep.subr.mxu0 0.0
      %658 = vmatpush1.msra.mxu0 0.0
      %659 = vmatprep.subr.mxu0 0.0
      %660 = vmatpush1.msra.mxu0 0.0
      %661 = vmatprep.subr.mxu0 0.0
      %662 = vmatpush1.msra.mxu0 0.0
      %663 = vmatprep.subr.mxu0 0.0
      %664 = vmatpush1.msra.mxu0 0.0
      %665 = vmatprep.subr.mxu0 0.0
      %666 = vmatpush1.msra.mxu0 0.0
      %667 = vmatprep.subr.mxu0 0.0
      %668 = vmatpush1.msra.mxu0 0.0
      %669 = vmatprep.subr.mxu0 0.0
      %670 = vmatpush1.msra.mxu0 0.0
      %671 = vmatprep.subr.mxu0 0.0
      %672 = vmatpush1.msra.mxu0 0.0
      %673 = vmatprep.subr.mxu0 0.0
      %674 = vmatpush1.msra.mxu0 0.0
      %675 = vmatprep.subr.mxu0 0.0
      %676 = vmatpush1.msra.mxu0 0.0
      %677 = vmatprep.subr.mxu0 0.0
      %678 = vmatpush1.msra.mxu0 0.0
      %679 = vmatprep.subr.mxu0 0.0
      %680 = vmatpush1.msra.mxu0 0.0
      %681 = vmatprep.subr.mxu0 0.0
      %682 = vmatpush1.msra.mxu0 0.0
      %683 = vmatprep.subr.mxu0 0.0
      %684 = vmatpush1.msra.mxu0 0.0
      %685 = vmatprep.subr.mxu0 0.0
      %686 = vmatpush1.msra.mxu0 0.0
      %687 = vmatprep.subr.mxu0 0.0
      %688 = vmatpush1.msra.mxu0 0.0
      %689 = vmatprep.subr.mxu0 0.0
      %690 = vmatpush1.msra.mxu0 0.0
      %691 = vmatprep.subr.mxu0 0.0
      %692 = vmatpush1.msra.mxu0 0.0
      %693 = vmatprep.subr.mxu0 0.0
      %694 = vmatpush1.msra.mxu0 0.0
      %695 = vmatprep.subr.mxu0 0.0
      %696 = vmatpush1.msra.mxu0 0.0
      %697 = vmatprep.subr.mxu0 0.0
      %698 = vmatpush1.msra.mxu0 0.0
      %699 = vmatprep.subr.mxu0 0.0
      %700 = vmatpush1.msra.mxu0 0.0
      %701 = vmatprep.subr.mxu0 0.0
      %702 = vmatpush1.msra.mxu0 0.0
      %703 = vmatprep.subr.mxu0 0.0
      %704 = vmatpush1.msra.mxu0 0.0
      %705 = vmatprep.subr.mxu0 0.0
      %706 = vmatpush1.msra.mxu0 0.0
      %707 = vmatprep.mubr.f32.mxu0 0.0
      %708 = vmatmul.mubr.f32.gmra.mrb[0].mxu0 %v638
      %v709 = vpop.f32.mrb[0].mxu0
      %v710 = vadd.f32 0.0, %v709
      %v711 = vpop.f32.mrb[0].mxu0
      %712 = vdwg.mxu0
      %s713 = scalar_lea.vmem %s145, 48
      %714 = vst.msk [vmem:[%s713] sm:$0xff] %vm227, %v710
      %v715 = vld [vmem:[%s0] sm:$0xff]
      %s716 = scalar_lea.vmem %s139, 28
      %v717 = vld [vmem:[%s716] sm:$0xf]
      %v719 = vsel %vm149, %v715, 0
      %v722 = vsel %vm153, %v717, 0
      %724 = vmatprep.subr.mxu0 0.0
      %725 = vmatpush1.msra.mxu0 %v722
      %726 = vmatprep.subr.mxu0 0.0
      %727 = vmatpush1.msra.mxu0 0.0
      %728 = vmatprep.subr.mxu0 0.0
      %729 = vmatpush1.msra.mxu0 0.0
      %730 = vmatprep.subr.mxu0 0.0
      %731 = vmatpush1.msra.mxu0 0.0
      %732 = vmatprep.subr.mxu0 0.0
      %733 = vmatpush1.msra.mxu0 0.0
      %734 = vmatprep.subr.mxu0 0.0
      %735 = vmatpush1.msra.mxu0 0.0
      %736 = vmatprep.subr.mxu0 0.0
      %737 = vmatpush1.msra.mxu0 0.0
      %738 = vmatprep.subr.mxu0 0.0
      %739 = vmatpush1.msra.mxu0 0.0
      %740 = vmatprep.subr.mxu0 0.0
      %741 = vmatpush1.msra.mxu0 0.0
      %742 = vmatprep.subr.mxu0 0.0
      %743 = vmatpush1.msra.mxu0 0.0
      %744 = vmatprep.subr.mxu0 0.0
      %745 = vmatpush1.msra.mxu0 0.0
      %746 = vmatprep.subr.mxu0 0.0
      %747 = vmatpush1.msra.mxu0 0.0
      %748 = vmatprep.subr.mxu0 0.0
      %749 = vmatpush1.msra.mxu0 0.0
      %750 = vmatprep.subr.mxu0 0.0
      %751 = vmatpush1.msra.mxu0 0.0
      %752 = vmatprep.subr.mxu0 0.0
      %753 = vmatpush1.msra.mxu0 0.0
      %754 = vmatprep.subr.mxu0 0.0
      %755 = vmatpush1.msra.mxu0 0.0
      %756 = vmatprep.subr.mxu0 0.0
      %757 = vmatpush1.msra.mxu0 0.0
      %758 = vmatprep.subr.mxu0 0.0
      %759 = vmatpush1.msra.mxu0 0.0
      %760 = vmatprep.subr.mxu0 0.0
      %761 = vmatpush1.msra.mxu0 0.0
      %762 = vmatprep.subr.mxu0 0.0
      %763 = vmatpush1.msra.mxu0 0.0
      %764 = vmatprep.subr.mxu0 0.0
      %765 = vmatpush1.msra.mxu0 0.0
      %766 = vmatprep.subr.mxu0 0.0
      %767 = vmatpush1.msra.mxu0 0.0
      %768 = vmatprep.subr.mxu0 0.0
      %769 = vmatpush1.msra.mxu0 0.0
      %770 = vmatprep.subr.mxu0 0.0
      %771 = vmatpush1.msra.mxu0 0.0
      %772 = vmatprep.subr.mxu0 0.0
      %773 = vmatpush1.msra.mxu0 0.0
      %774 = vmatprep.subr.mxu0 0.0
      %775 = vmatpush1.msra.mxu0 0.0
      %776 = vmatprep.subr.mxu0 0.0
      %777 = vmatpush1.msra.mxu0 0.0
      %778 = vmatprep.subr.mxu0 0.0
      %779 = vmatpush1.msra.mxu0 0.0
      %780 = vmatprep.subr.mxu0 0.0
      %781 = vmatpush1.msra.mxu0 0.0
      %782 = vmatprep.subr.mxu0 0.0
      %783 = vmatpush1.msra.mxu0 0.0
      %784 = vmatprep.subr.mxu0 0.0
      %785 = vmatpush1.msra.mxu0 0.0
      %786 = vmatprep.subr.mxu0 0.0
      %787 = vmatpush1.msra.mxu0 0.0
      %788 = vmatprep.mubr.f32.mxu0 0.0
      %789 = vmatmul.mubr.f32.gmra.mrb[0].mxu0 %v719
      %v790 = vpop.f32.mrb[0].mxu0
      %v791 = vadd.f32 0.0, %v790
      %v792 = vpop.f32.mrb[0].mxu0
      %793 = vdwg.mxu0
      %s794 = scalar_lea.vmem %s145, 56
      %795 = vst.msk [vmem:[%s794] sm:$0xff] %vm227, %v791
      %s796 = smul.u32 8, %s13
      %p797 = scmp.lt.s32.totalorder %s796, 15
      %s798 = scalar_select %p797, %s796, 15
      %s799 = smul.addr %s798, 8
      %s800 = scalar_lea.vmem %s2, %s799
      // Predicated region
      $region29: #{upconv_apply.6} parent=27 // pred_check
        %p801 = pneg %p78
      $region30: #{upconv_apply.6} parent=27 // pred_check_branch
        %803 = sbr.rel (%p801) target = $region32
      $region31: #{upconv_apply.6} parent=27 // pred_region
        %s804 = smul.u32 8, %s13
      $region32: #{upconv_apply.6} parent=27 // pred_fallthru
        _
    $region28: #{upconv_apply.6} parent=5 // pred_fallthru
      _
    %p805 = scmp.le.s32.totalorder 2, %s8
    // Predicated region
    $region33: #{upconv_apply.6} parent=5 // pred_check
      %p806 = pneg %p805
    $region34: #{upconv_apply.6} parent=5 // pred_check_branch
      %808 = sbr.rel (%p806) target = $region36
    $region35: #{upconv_apply.6} parent=5 // pred_region
      %s809 = ssub.s32 %s8, 2
      // Predicated region
      $region37: #{upconv_apply.6} parent=35 // pred_check
        %p810 = pneg %p84
      $region38: #{upconv_apply.6} parent=35 // pred_check_branch
        %812 = sbr.rel (%p810) target = $region40
      $region39: #{upconv_apply.6} parent=35 // pred_region
        %s813 = smul.u32 8, %s14
        %p814 = scmp.lt.s32.totalorder %s813, 15
        %s815 = scalar_select %p814, %s813, 15
        %s816 = smul.addr %s815, 8
        %s817 = scalar_lea.vmem %s2, %s816
      $region40: #{upconv_apply.6} parent=35 // pred_fallthru
        _
    $region36: #{upconv_apply.6} parent=5 // pred_fallthru
      _
  $region6: #{upconv_apply.6} parent=0 // loop_footer
    %s12 = sadd.s32 1, %s8
  $region7: #{upconv_apply.6} parent=0 // loop_footer_branch
    %7 = sbr.rel target = $region3
  $region8: #{upconv_apply.6} parent=0 // loop_exit
    _

// kernel: upconv_apply.7
$region0: #{upconv_apply.7}
  #allocation0 [shape = 'u32[]', space=smem, size = 0x4, offset = 0x4, fixed_abs, tag = 'smem constant byte address 0x4 - core index']
  #allocation1 [shape = 'u32[144,128]{1,0:T(1,128)}', space=vmem, size = 0x12000, scoped, tag = 'internal scratch']
  %s0 = inlined_call_operand.vmem [shape: f32[8,4], index: 0, kind: input, shape index: {}]
  %s1 = inlined_call_operand.vmem [shape: f32[4,8], index: 1, kind: input, shape index: {}]
  %s2 = inlined_call_operand.vmem [shape: f32[128,4,4], index: 2, kind: input, shape index: {}]
  %s3 = inlined_call_operand.vmem [shape: f32[128,8,8], index: 3, kind: output, shape index: {}]
  %s4 = sld [smem:[#allocation0]]
  $region45: #{upconv_apply.7} parent=0
    _
  %s6 = ssub.s32 1, %s4
  %s7 = scalar_select 0, %s6, %s4
  loop: start=0, step=1, limit=18
  $region2: #{upconv_apply.7} parent=0 // loop_pre_header
    _
  $region3: #{upconv_apply.7} parent=0 // loop_header
    %s9 = sphi 0, %s13
    %p10 = scmp.ge.s32.totalorder %s9, 18
    %s17 = sphi 0, %s17
    %s19 = sphi 0, %s17
    %s20 = sphi 0, %s19
    %s34 = sphi 0, %s20
    %s38 = sphi 0, %s38
    %s40 = sphi 0, %s38
    %s41 = sphi 0, %s40
    %s55 = sphi 0, %s41
    %s61 = sphi 0, %s63
    %s64 = sphi 0, %s61
    %s65 = sphi 0, %s64
    %s81 = sphi 0, %s65
    %s87 = sphi 0, %s89
    %s90 = sphi 0, %s87
    %s91 = sphi 0, %s90
    %s107 = sphi 0, %s91
  $region4: #{upconv_apply.7} parent=0 // loop_header_branch
    %12 = sbr.rel (%p10) target = $region8
  $region5: #{upconv_apply.7} parent=0 // loop_body
    %s14 = ssub.s32 %s9, 1
    %s15 = ssub.s32 %s9, 2
    %s16 = sadd.s32 %s9, 1
    %s18 = sadd.s32 %s17, 1
    %p21 = scmp.eq.s32.totalorder %s9, 15
    %p22 = scmp.ne.s32.totalorder %s17, %s19
    %p23 = scmp.eq.s32.totalorder %s9, 0
    %p24 = por %p22, %p23
    %p25 = scmp.ne.s32.totalorder %s17, %s19
    %p26 = scmp.eq.s32.totalorder %s14, 15
    %p27 = por %p25, %p26
    %p28 = scmp.ne.s32.totalorder %s19, %s20
    %p29 = scmp.eq.s32.totalorder %s14, 0
    %p30 = por %p28, %p29
    %p31 = scmp.ne.s32.totalorder %s19, %s20
    %p32 = scmp.eq.s32.totalorder %s15, 15
    %p33 = por %p31, %p32
    %p35 = scmp.ne.s32.totalorder %s20, %s34
    %p36 = scmp.eq.s32.totalorder %s15, 0
    %p37 = por %p35, %p36
    %s39 = sadd.s32 %s38, 1
    %p42 = scmp.eq.s32.totalorder %s9, 15
    %p43 = scmp.ne.s32.totalorder %s38, %s40
    %p44 = scmp.eq.s32.totalorder %s9, 0
    %p45 = por %p43, %p44
    %p46 = scmp.ne.s32.totalorder %s38, %s40
    %p47 = scmp.eq.s32.totalorder %s14, 15
    %p48 = por %p46, %p47
    %p49 = scmp.ne.s32.totalorder %s40, %s41
    %p50 = scmp.eq.s32.totalorder %s14, 0
    %p51 = por %p49, %p50
    %p52 = scmp.ne.s32.totalorder %s40, %s41
    %p53 = scmp.eq.s32.totalorder %s15, 15
    %p54 = por %p52, %p53
    %p56 = scmp.ne.s32.totalorder %s41, %s55
    %p57 = scmp.eq.s32.totalorder %s15, 0
    %p58 = por %p56, %p57
    %s59 = ssub.s32 %s9, %s16
    %p60 = scmp.eq.s32.totalorder %s59, 0
    %s62 = sadd.s32 %s61, 1
    %s63 = scalar_select %p60, %s61, %s62
    %p66 = pneg %p60
    %p67 = scmp.eq.s32.totalorder %s9, 15
    %p68 = por %p66, %p67
    %p69 = scmp.ne.s32.totalorder %s61, %s64
    %p70 = scmp.eq.s32.totalorder %s9, 0
    %p71 = por %p69, %p70
    %p72 = scmp.ne.s32.totalorder %s61, %s64
    %p73 = scmp.eq.s32.totalorder %s14, 15
    %p74 = por %p72, %p73
    %p75 = scmp.ne.s32.totalorder %s64, %s65
    %p76 = scmp.eq.s32.totalorder %s14, 0
    %p77 = por %p75, %p76
    %p78 = scmp.ne.s32.totalorder %s64, %s65
    %p79 = scmp.eq.s32.totalorder %s15, 15
    %p80 = por %p78, %p79
    %p82 = scmp.ne.s32.totalorder %s65, %s81
    %p83 = scmp.eq.s32.totalorder %s15, 0
    %p84 = por %p82, %p83
    %s85 = ssub.s32 %s9, %s16
    %p86 = scmp.eq.s32.totalorder %s85, 0
    %s88 = sadd.s32 %s87, 1
    %s89 = scalar_select %p86, %s87, %s88
    %p92 = pneg %p86
    %p93 = scmp.eq.s32.totalorder %s9, 15
    %p94 = por %p92, %p93
    %p95 = scmp.ne.s32.totalorder %s87, %s90
    %p96 = scmp.eq.s32.totalorder %s9, 0
    %p97 = por %p95, %p96
    %p98 = scmp.ne.s32.totalorder %s87, %s90
    %p99 = scmp.eq.s32.totalorder %s14, 15
    %p100 = por %p98, %p99
    %p101 = scmp.ne.s32.totalorder %s90, %s91
    %p102 = scmp.eq.s32.totalorder %s14, 0
    %p103 = por %p101, %p102
    %p104 = scmp.ne.s32.totalorder %s90, %s91
    %p105 = scmp.eq.s32.totalorder %s15, 15
    %p106 = por %p104, %p105
    %p108 = scmp.ne.s32.totalorder %s91, %s107
    %p109 = scmp.eq.s32.totalorder %s15, 0
    %p110 = por %p108, %p109
    %p111 = scmp.le.s32.totalorder 1, %s9
    %p112 = scmp.lt.s32.totalorder %s9, 17
    %p113 = pnand %p111, %p112
    %p114 = pneg %p113
    // Predicated region
    $region9: #{upconv_apply.7} parent=5 // pred_check
      _
    $region10: #{upconv_apply.7} parent=5 // pred_check_branch
      %116 = sbr.rel (%p113) target = $region12
    $region11: #{upconv_apply.7} parent=5 // pred_region
      %s117 = ssub.s32 %s9, 1
      // Predicated region
      $region13: #{upconv_apply.7} parent=11 // pred_check
        %p118 = pneg %p30
      $region14: #{upconv_apply.7} parent=11 // pred_check_branch
        %120 = sbr.rel (%p118) target = $region16
      $region15: #{upconv_apply.7} parent=11 // pred_region
        _
      $region16: #{upconv_apply.7} parent=11 // pred_fallthru
        _
      // Predicated region
      $region17: #{upconv_apply.7} parent=11 // pred_check
        %p121 = pneg %p51
      $region18: #{upconv_apply.7} parent=11 // pred_check_branch
        %123 = sbr.rel (%p121) target = $region20
      $region19: #{upconv_apply.7} parent=11 // pred_region
        _
      $region20: #{upconv_apply.7} parent=11 // pred_fallthru
        _
    $region12: #{upconv_apply.7} parent=5 // pred_fallthru
      _
    %p124 = scmp.lt.s32.totalorder %s9, 16
    // Predicated region
    $region21: #{upconv_apply.7} parent=5 // pred_check
      %p125 = pneg %p124
    $region22: #{upconv_apply.7} parent=5 // pred_check_branch
      %127 = sbr.rel (%p125) target = $region24
    $region23: #{upconv_apply.7} parent=5 // pred_region
      // Predicated region
      $region25: #{upconv_apply.7} parent=23 // pred_check
        %p128 = pneg %p71
      $region26: #{upconv_apply.7} parent=23 // pred_check_branch
        %130 = sbr.rel (%p128) target = $region28
      $region27: #{upconv_apply.7} parent=23 // pred_region
        %s131 = smul.u32 8, %s9
        %p132 = scmp.lt.s32.totalorder %s131, 127
        %s133 = scalar_select %p132, %s131, 127
        %s134 = smul.addr %s133, 4
        %s135 = scalar_lea.vmem %s2, %s134
        %s136 = smul.u32 8, %s9
      $region28: #{upconv_apply.7} parent=23 // pred_fallthru
        _
    $region24: #{upconv_apply.7} parent=5 // pred_fallthru
      _
    %p137 = scmp.le.s32.totalorder 1, %s9
    %p138 = scmp.lt.s32.totalorder %s9, 17
    %p139 = pnand %p137, %p138
    %p140 = pneg %p139
    // Predicated region
    $region29: #{upconv_apply.7} parent=5 // pred_check
      _
    $region30: #{upconv_apply.7} parent=5 // pred_check_branch
      %142 = sbr.rel (%p139) target = $region32
    $region31: #{upconv_apply.7} parent=5 // pred_region
      %s143 = ssub.s32 %s9, 1
      %p144 = pneg %p30
      %p145 = pneg %p27
      %p146 = pneg %p51
      %p147 = pneg %p48
      %s148 = smul.u32 8, %s14
      %p149 = scmp.lt.s32.totalorder %s148, 127
      %s150 = scalar_select %p149, %s148, 127
      %s151 = smul.addr %s150, 4
      %s152 = scalar_lea.vmem %s2, %s151
      %p153 = pneg %p77
      %p154 = pneg %p74
      %p155 = pneg %p103
      %p156 = pneg %p100
      %s157 = smul.u32 8, %s14
      %p158 = scmp.lt.s32.totalorder %s157, 127
      %s159 = scalar_select %p158, %s157, 127
      %s160 = smul.addr %s159, 8
      %s161 = scalar_lea.vmem %s3, %s160
      %s162 = smul.u32 8, %s14
      %p163 = scmp.lt.s32.totalorder %s162, 127
      %s164 = scalar_select %p163, %s162, 127
      %s165 = smul.addr %s164, 4
      %s166 = scalar_lea.vmem %s2, %s165
      %s167 = smul.u32 8, %s14
      %s168 = smul.u32 8, %s14
      %p169 = scmp.lt.s32.totalorder %s168, 127
      %s170 = scalar_select %p169, %s168, 127
      %s171 = smul.addr %s170, 8
      %s172 = scalar_lea.vmem %s3, %s171
      %s173 = smul.u32 8, %s14
      %v174 = vld [vmem:[%s0] sm:$0xff]
      %v175 = vld [vmem:[%s166] sm:$0xf]
      %vm176 = vcmask 31744
      %v178 = vsel %vm176, %v174, 0
      %vm180 = vcmask 1043456
      %v182 = vsel %vm180, %v175, 0
      %184 = vmatprep.subr.mxu0 0.0
      %185 = vmatpush1.msra.mxu0 %v182
      %186 = vmatprep.subr.mxu0 0.0
      %187 = vmatpush1.msra.mxu0 0.0
      %188 = vmatprep.subr.mxu0 0.0
      %189 = vmatpush1.msra.mxu0 0.0
      %190 = vmatprep.subr.mxu0 0.0
      %191 = vmatpush1.msra.mxu0 0.0
      %192 = vmatprep.subr.mxu0 0.0
      %193 = vmatpush1.msra.mxu0 0.0
      %194 = vmatprep.subr.mxu0 0.0
      %195 = vmatpush1.msra.mxu0 0.0
      %196 = vmatprep.subr.mxu0 0.0
      %197 = vmatpush1.msra.mxu0 0.0
      %198 = vmatprep.subr.mxu0 0.0
      %199 = vmatpush1.msra.mxu0 0.0
      %200 = vmatprep.subr.mxu0 0.0
      %201 = vmatpush1.msra.mxu0 0.0
      %202 = vmatprep.subr.mxu0 0.0
      %203 = vmatpush1.msra.mxu0 0.0
      %204 = vmatprep.subr.mxu0 0.0
      %205 = vmatpush1.msra.mxu0 0.0
      %206 = vmatprep.subr.mxu0 0.0
      %207 = vmatpush1.msra.mxu0 0.0
      %208 = vmatprep.subr.mxu0 0.0
      %209 = vmatpush1.msra.mxu0 0.0
      %210 = vmatprep.subr.mxu0 0.0
      %211 = vmatpush1.msra.mxu0 0.0
      %212 = vmatprep.subr.mxu0 0.0
      %213 = vmatpush1.msra.mxu0 0.0
      %214 = vmatprep.subr.mxu0 0.0
      %215 = vmatpush1.msra.mxu0 0.0
      %216 = vmatprep.subr.mxu0 0.0
      %217 = vmatpush1.msra.mxu0 0.0
      %218 = vmatprep.subr.mxu0 0.0
      %219 = vmatpush1.msra.mxu0 0.0
      %220 = vmatprep.subr.mxu0 0.0
      %221 = vmatpush1.msra.mxu0 0.0
      %222 = vmatprep.subr.mxu0 0.0
      %223 = vmatpush1.msra.mxu0 0.0
      %224 = vmatprep.subr.mxu0 0.0
      %225 = vmatpush1.msra.mxu0 0.0
      %226 = vmatprep.subr.mxu0 0.0
      %227 = vmatpush1.msra.mxu0 0.0
      %228 = vmatprep.subr.mxu0 0.0
      %229 = vmatpush1.msra.mxu0 0.0
      %230 = vmatprep.subr.mxu0 0.0
      %231 = vmatpush1.msra.mxu0 0.0
      %232 = vmatprep.subr.mxu0 0.0
      %233 = vmatpush1.msra.mxu0 0.0
      %234 = vmatprep.subr.mxu0 0.0
      %235 = vmatpush1.msra.mxu0 0.0
      %236 = vmatprep.subr.mxu0 0.0
      %237 = vmatpush1.msra.mxu0 0.0
      %238 = vmatprep.subr.mxu0 0.0
      %239 = vmatpush1.msra.mxu0 0.0
      %240 = vmatprep.subr.mxu0 0.0
      %241 = vmatpush1.msra.mxu0 0.0
      %242 = vmatprep.subr.mxu0 0.0
      %243 = vmatpush1.msra.mxu0 0.0
      %244 = vmatprep.subr.mxu0 0.0
      %245 = vmatpush1.msra.mxu0 0.0
      %246 = vmatprep.subr.mxu0 0.0
      %247 = vmatpush1.msra.mxu0 0.0
      %248 = vmatprep.mubr.f32.mxu0 0.0
      %249 = vmatmul.mubr.f32.gmra.mrb[0].mxu0 %v178
      %v250 = vpop.f32.mrb[0].mxu0
      %v251 = vadd.f32 0.0, %v250
      %v252 = vpop.f32.mrb[0].mxu0
      %253 = vdwg.mxu0
      %v254 = vld [vmem:[%s1] sm:$0xf]
      %v256 = vsel %vm176, %v251, 0
      %v259 = vsel %vm180, %v254, 0
      %261 = vmatprep.subr.mxu0 0.0
      %262 = vmatpush1.msra.mxu0 %v259
      %263 = vmatprep.subr.mxu0 0.0
      %264 = vmatpush1.msra.mxu0 0.0
      %265 = vmatprep.subr.mxu0 0.0
      %266 = vmatpush1.msra.mxu0 0.0
      %267 = vmatprep.subr.mxu0 0.0
      %268 = vmatpush1.msra.mxu0 0.0
      %269 = vmatprep.subr.mxu0 0.0
      %270 = vmatpush1.msra.mxu0 0.0
      %271 = vmatprep.subr.mxu0 0.0
      %272 = vmatpush1.msra.mxu0 0.0
      %273 = vmatprep.subr.mxu0 0.0
      %274 = vmatpush1.msra.mxu0 0.0
      %275 = vmatprep.subr.mxu0 0.0
      %276 = vmatpush1.msra.mxu0 0.0
      %277 = vmatprep.subr.mxu0 0.0
      %278 = vmatpush1.msra.mxu0 0.0
      %279 = vmatprep.subr.mxu0 0.0
      %280 = vmatpush1.msra.mxu0 0.0
      %281 = vmatprep.subr.mxu0 0.0
      %282 = vmatpush1.msra.mxu0 0.0
      %283 = vmatprep.subr.mxu0 0.0
      %284 = vmatpush1.msra.mxu0 0.0
      %285 = vmatprep.subr.mxu0 0.0
      %286 = vmatpush1.msra.mxu0 0.0
      %287 = vmatprep.subr.mxu0 0.0
      %288 = vmatpush1.msra.mxu0 0.0
      %289 = vmatprep.subr.mxu0 0.0
      %290 = vmatpush1.msra.mxu0 0.0
      %291 = vmatprep.subr.mxu0 0.0
      %292 = vmatpush1.msra.mxu0 0.0
      %293 = vmatprep.subr.mxu0 0.0
      %294 = vmatpush1.msra.mxu0 0.0
      %295 = vmatprep.subr.mxu0 0.0
      %296 = vmatpush1.msra.mxu0 0.0
      %297 = vmatprep.subr.mxu0 0.0
      %298 = vmatpush1.msra.mxu0 0.0
      %299 = vmatprep.subr.mxu0 0.0
      %300 = vmatpush1.msra.mxu0 0.0
      %301 = vmatprep.subr.mxu0 0.0
      %302 = vmatpush1.msra.mxu0 0.0
      %303 = vmatprep.subr.mxu0 0.0
      %304 = vmatpush1.msra.mxu0 0.0
      %305 = vmatprep.subr.mxu0 0.0
      %306 = vmatpush1.msra.mxu0 0.0
      %307 = vmatprep.subr.mxu0 0.0
      %308 = vmatpush1.msra.mxu0 0.0
      %309 = vmatprep.subr.mxu0 0.0
      %310 = vmatpush1.msra.mxu0 0.0
      %311 = vmatprep.subr.mxu0 0.0
      %312 = vmatpush1.msra.mxu0 0.0
      %313 = vmatprep.subr.mxu0 0.0
      %314 = vmatpush1.msra.mxu0 0.0
      %315 = vmatprep.subr.mxu0 0.0
      %316 = vmatpush1.msra.mxu0 0.0
      %317 = vmatprep.subr.mxu0 0.0
      %318 = vmatpush1.msra.mxu0 0.0
      %319 = vmatprep.subr.mxu0 0.0
      %320 = vmatpush1.msra.mxu0 0.0
      %321 = vmatprep.subr.mxu0 0.0
      %322 = vmatpush1.msra.mxu0 0.0
      %323 = vmatprep.subr.mxu0 0.0
      %324 = vmatpush1.msra.mxu0 0.0
      %325 = vmatprep.mubr.f32.mxu0 0.0
      %326 = vmatmul.mubr.f32.gmra.mrb[0].mxu0 %v256
      %v327 = vpop.f32.mrb[0].mxu0
      %v328 = vadd.f32 0.0, %v327
      %v329 = vpop.f32.mrb[0].mxu0
      %330 = vdwg.mxu0
      %vm331 = vcmask 64512
      %332 = vst.msk [vmem:[%s172] sm:$0xff] %vm331, %v328
      %v333 = vld [vmem:[%s0] sm:$0xff]
      %s334 = scalar_lea.vmem %s166, 4
      %v335 = vld [vmem:[%s334] sm:$0xf]
      %v337 = vsel %vm176, %v333, 0
      %v340 = vsel %vm180, %v335, 0
      %342 = vmatprep.subr.mxu0 0.0
      %343 = vmatpush1.msra.mxu0 %v340
      %344 = vmatprep.subr.mxu0 0.0
      %345 = vmatpush1.msra.mxu0 0.0
      %346 = vmatprep.subr.mxu0 0.0
      %347 = vmatpush1.msra.mxu0 0.0
      %348 = vmatprep.subr.mxu0 0.0
      %349 = vmatpush1.msra.mxu0 0.0
      %350 = vmatprep.subr.mxu0 0.0
      %351 = vmatpush1.msra.mxu0 0.0
      %352 = vmatprep.subr.mxu0 0.0
      %353 = vmatpush1.msra.mxu0 0.0
      %354 = vmatprep.subr.mxu0 0.0
      %355 = vmatpush1.msra.mxu0 0.0
      %356 = vmatprep.subr.mxu0 0.0
      %357 = vmatpush1.msra.mxu0 0.0
      %358 = vmatprep.subr.mxu0 0.0
      %359 = vmatpush1.msra.mxu0 0.0
      %360 = vmatprep.subr.mxu0 0.0
      %361 = vmatpush1.msra.mxu0 0.0
      %362 = vmatprep.subr.mxu0 0.0
      %363 = vmatpush1.msra.mxu0 0.0
      %364 = vmatprep.subr.mxu0 0.0
      %365 = vmatpush1.msra.mxu0 0.0
      %366 = vmatprep.subr.mxu0 0.0
      %367 = vmatpush1.msra.mxu0 0.0
      %368 = vmatprep.subr.mxu0 0.0
      %369 = vmatpush1.msra.mxu0 0.0
      %370 = vmatprep.subr.mxu0 0.0
      %371 = vmatpush1.msra.mxu0 0.0
      %372 = vmatprep.subr.mxu0 0.0
      %373 = vmatpush1.msra.mxu0 0.0
      %374 = vmatprep.subr.mxu0 0.0
      %375 = vmatpush1.msra.mxu0 0.0
      %376 = vmatprep.subr.mxu0 0.0
      %377 = vmatpush1.msra.mxu0 0.0
      %378 = vmatprep.subr.mxu0 0.0
      %379 = vmatpush1.msra.mxu0 0.0
      %380 = vmatprep.subr.mxu0 0.0
      %381 = vmatpush1.msra.mxu0 0.0
      %382 = vmatprep.subr.mxu0 0.0
      %383 = vmatpush1.msra.mxu0 0.0
      %384 = vmatprep.subr.mxu0 0.0
      %385 = vmatpush1.msra.mxu0 0.0
      %386 = vmatprep.subr.mxu0 0.0
      %387 = vmatpush1.msra.mxu0 0.0
      %388 = vmatprep.subr.mxu0 0.0
      %389 = vmatpush1.msra.mxu0 0.0
      %390 = vmatprep.subr.mxu0 0.0
      %391 = vmatpush1.msra.mxu0 0.0
      %392 = vmatprep.subr.mxu0 0.0
      %393 = vmatpush1.msra.mxu0 0.0
      %394 = vmatprep.subr.mxu0 0.0
      %395 = vmatpush1.msra.mxu0 0.0
      %396 = vmatprep.subr.mxu0 0.0
      %397 = vmatpush1.msra.mxu0 0.0
      %398 = vmatprep.subr.mxu0 0.0
      %399 = vmatpush1.msra.mxu0 0.0
      %400 = vmatprep.subr.mxu0 0.0
      %401 = vmatpush1.msra.mxu0 0.0
      %402 = vmatprep.subr.mxu0 0.0
      %403 = vmatpush1.msra.mxu0 0.0
      %404 = vmatprep.subr.mxu0 0.0
      %405 = vmatpush1.msra.mxu0 0.0
      %406 = vmatprep.mubr.f32.mxu0 0.0
      %407 = vmatmul.mubr.f32.gmra.mrb[0].mxu0 %v337
      %v408 = vpop.f32.mrb[0].mxu0
      %v409 = vadd.f32 0.0, %v408
      %v410 = vpop.f32.mrb[0].mxu0
      %411 = vdwg.mxu0
      %v412 = vld [vmem:[%s1] sm:$0xf]
      %v414 = vsel %vm176, %v409, 0
      %v417 = vsel %vm180, %v412, 0
      %419 = vmatprep.subr.mxu0 0.0
      %420 = vmatpush1.msra.mxu0 %v417
      %421 = vmatprep.subr.mxu0 0.0
      %422 = vmatpush1.msra.mxu0 0.0
      %423 = vmatprep.subr.mxu0 0.0
      %424 = vmatpush1.msra.mxu0 0.0
      %425 = vmatprep.subr.mxu0 0.0
      %426 = vmatpush1.msra.mxu0 0.0
      %427 = vmatprep.subr.mxu0 0.0
      %428 = vmatpush1.msra.mxu0 0.0
      %429 = vmatprep.subr.mxu0 0.0
      %430 = vmatpush1.msra.mxu0 0.0
      %431 = vmatprep.subr.mxu0 0.0
      %432 = vmatpush1.msra.mxu0 0.0
      %433 = vmatprep.subr.mxu0 0.0
      %434 = vmatpush1.msra.mxu0 0.0
      %435 = vmatprep.subr.mxu0 0.0
      %436 = vmatpush1.msra.mxu0 0.0
      %437 = vmatprep.subr.mxu0 0.0
      %438 = vmatpush1.msra.mxu0 0.0
      %439 = vmatprep.subr.mxu0 0.0
      %440 = vmatpush1.msra.mxu0 0.0
      %441 = vmatprep.subr.mxu0 0.0
      %442 = vmatpush1.msra.mxu0 0.0
      %443 = vmatprep.subr.mxu0 0.0
      %444 = vmatpush1.msra.mxu0 0.0
      %445 = vmatprep.subr.mxu0 0.0
      %446 = vmatpush1.msra.mxu0 0.0
      %447 = vmatprep.subr.mxu0 0.0
      %448 = vmatpush1.msra.mxu0 0.0
      %449 = vmatprep.subr.mxu0 0.0
      %450 = vmatpush1.msra.mxu0 0.0
      %451 = vmatprep.subr.mxu0 0.0
      %452 = vmatpush1.msra.mxu0 0.0
      %453 = vmatprep.subr.mxu0 0.0
      %454 = vmatpush1.msra.mxu0 0.0
      %455 = vmatprep.subr.mxu0 0.0
      %456 = vmatpush1.msra.mxu0 0.0
      %457 = vmatprep.subr.mxu0 0.0
      %458 = vmatpush1.msra.mxu0 0.0
      %459 = vmatprep.subr.mxu0 0.0
      %460 = vmatpush1.msra.mxu0 0.0
      %461 = vmatprep.subr.mxu0 0.0
      %462 = vmatpush1.msra.mxu0 0.0
      %463 = vmatprep.subr.mxu0 0.0
      %464 = vmatpush1.msra.mxu0 0.0
      %465 = vmatprep.subr.mxu0 0.0
      %466 = vmatpush1.msra.mxu0 0.0
      %467 = vmatprep.subr.mxu0 0.0
      %468 = vmatpush1.msra.mxu0 0.0
      %469 = vmatprep.subr.mxu0 0.0
      %470 = vmatpush1.msra.mxu0 0.0
      %471 = vmatprep.subr.mxu0 0.0
      %472 = vmatpush1.msra.mxu0 0.0
      %473 = vmatprep.subr.mxu0 0.0
      %474 = vmatpush1.msra.mxu0 0.0
      %475 = vmatprep.subr.mxu0 0.0
      %476 = vmatpush1.msra.mxu0 0.0
      %477 = vmatprep.subr.mxu0 0.0
      %478 = vmatpush1.msra.mxu0 0.0
      %479 = vmatprep.subr.mxu0 0.0
      %480 = vmatpush1.msra.mxu0 0.0
      %481 = vmatprep.subr.mxu0 0.0
      %482 = vmatpush1.msra.mxu0 0.0
      %483 = vmatprep.mubr.f32.mxu0 0.0
      %484 = vmatmul.mubr.f32.gmra.mrb[0].mxu0 %v414
      %v485 = vpop.f32.mrb[0].mxu0
      %v486 = vadd.f32 0.0, %v485
      %v487 = vpop.f32.mrb[0].mxu0
      %488 = vdwg.mxu0
      %s489 = scalar_lea.vmem %s172, 8
      %490 = vst.msk [vmem:[%s489] sm:$0xff] %vm331, %v486
      %v491 = vld [vmem:[%s0] sm:$0xff]
      %s492 = scalar_lea.vmem %s166, 8
      %v493 = vld [vmem:[%s492] sm:$0xf]
      %v495 = vsel %vm176, %v491, 0
      %v498 = vsel %vm180, %v493, 0
      %500 = vmatprep.subr.mxu0 0.0
      %501 = vmatpush1.msra.mxu0 %v498
      %502 = vmatprep.subr.mxu0 0.0
      %503 = vmatpush1.msra.mxu0 0.0
      %504 = vmatprep.subr.mxu0 0.0
      %505 = vmatpush1.msra.mxu0 0.0
      %506 = vmatprep.subr.mxu0 0.0
      %507 = vmatpush1.msra.mxu0 0.0
      %508 = vmatprep.subr.mxu0 0.0
      %509 = vmatpush1.msra.mxu0 0.0
      %510 = vmatprep.subr.mxu0 0.0
      %511 = vmatpush1.msra.mxu0 0.0
      %512 = vmatprep.subr.mxu0 0.0
      %513 = vmatpush1.msra.mxu0 0.0
      %514 = vmatprep.subr.mxu0 0.0
      %515 = vmatpush1.msra.mxu0 0.0
      %516 = vmatprep.subr.mxu0 0.0
      %517 = vmatpush1.msra.mxu0 0.0
      %518 = vmatprep.subr.mxu0 0.0
      %519 = vmatpush1.msra.mxu0 0.0
      %520 = vmatprep.subr.mxu0 0.0
      %521 = vmatpush1.msra.mxu0 0.0
      %522 = vmatprep.subr.mxu0 0.0
      %523 = vmatpush1.msra.mxu0 0.0
      %524 = vmatprep.subr.mxu0 0.0
      %525 = vmatpush1.msra.mxu0 0.0
      %526 = vmatprep.subr.mxu0 0.0
      %527 = vmatpush1.msra.mxu0 0.0
      %528 = vmatprep.subr.mxu0 0.0
      %529 = vmatpush1.msra.mxu0 0.0
      %530 = vmatprep.subr.mxu0 0.0
      %531 = vmatpush1.msra.mxu0 0.0
      %532 = vmatprep.subr.mxu0 0.0
      %533 = vmatpush1.msra.mxu0 0.0
      %534 = vmatprep.subr.mxu0 0.0
      %535 = vmatpush1.msra.mxu0 0.0
      %536 = vmatprep.subr.mxu0 0.0
      %537 = vmatpush1.msra.mxu0 0.0
      %538 = vmatprep.subr.mxu0 0.0
      %539 = vmatpush1.msra.mxu0 0.0
      %540 = vmatprep.subr.mxu0 0.0
      %541 = vmatpush1.msra.mxu0 0.0
      %542 = vmatprep.subr.mxu0 0.0
      %543 = vmatpush1.msra.mxu0 0.0
      %544 = vmatprep.subr.mxu0 0.0
      %545 = vmatpush1.msra.mxu0 0.0
      %546 = vmatprep.subr.mxu0 0.0
      %547 = vmatpush1.msra.mxu0 0.0
      %548 = vmatprep.subr.mxu0 0.0
      %549 = vmatpush1.msra.mxu0 0.0
      %550 = vmatprep.subr.mxu0 0.0
      %551 = vmatpush1.msra.mxu0 0.0
      %552 = vmatprep.subr.mxu0 0.0
      %553 = vmatpush1.msra.mxu0 0.0
      %554 = vmatprep.subr.mxu0 0.0
      %555 = vmatpush1.msra.mxu0 0.0
      %556 = vmatprep.subr.mxu0 0.0
      %557 = vmatpush1.msra.mxu0 0.0
      %558 = vmatprep.subr.mxu0 0.0
      %559 = vmatpush1.msra.mxu0 0.0
      %560 = vmatprep.subr.mxu0 0.0
      %561 = vmatpush1.msra.mxu0 0.0
      %562 = vmatprep.subr.mxu0 0.0
      %563 = vmatpush1.msra.mxu0 0.0
      %564 = vmatprep.mubr.f32.mxu0 0.0
      %565 = vmatmul.mubr.f32.gmra.mrb[0].mxu0 %v495
      %v566 = vpop.f32.mrb[0].mxu0
      %v567 = vadd.f32 0.0, %v566
      %v568 = vpop.f32.mrb[0].mxu0
      %569 = vdwg.mxu0
      %v570 = vld [vmem:[%s1] sm:$0xf]
      %v572 = vsel %vm176, %v567, 0
      %v575 = vsel %vm180, %v570, 0
      %577 = vmatprep.subr.mxu0 0.0
      %578 = vmatpush1.msra.mxu0 %v575
      %579 = vmatprep.subr.mxu0 0.0
      %580 = vmatpush1.msra.mxu0 0.0
      %581 = vmatprep.subr.mxu0 0.0
      %582 = vmatpush1.msra.mxu0 0.0
      %583 = vmatprep.subr.mxu0 0.0
      %584 = vmatpush1.msra.mxu0 0.0
      %585 = vmatprep.subr.mxu0 0.0
      %586 = vmatpush1.msra.mxu0 0.0
      %587 = vmatprep.subr.mxu0 0.0
      %588 = vmatpush1.msra.mxu0 0.0
      %589 = vmatprep.subr.mxu0 0.0
      %590 = vmatpush1.msra.mxu0 0.0
      %591 = vmatprep.subr.mxu0 0.0
      %592 = vmatpush1.msra.mxu0 0.0
      %593 = vmatprep.subr.mxu0 0.0
      %594 = vmatpush1.msra.mxu0 0.0
      %595 = vmatprep.subr.mxu0 0.0
      %596 = vmatpush1.msra.mxu0 0.0
      %597 = vmatprep.subr.mxu0 0.0
      %598 = vmatpush1.msra.mxu0 0.0
      %599 = vmatprep.subr.mxu0 0.0
      %600 = vmatpush1.msra.mxu0 0.0
      %601 = vmatprep.subr.mxu0 0.0
      %602 = vmatpush1.msra.mxu0 0.0
      %603 = vmatprep.subr.mxu0 0.0
      %604 = vmatpush1.msra.mxu0 0.0
      %605 = vmatprep.subr.mxu0 0.0
      %606 = vmatpush1.msra.mxu0 0.0
      %607 = vmatprep.subr.mxu0 0.0
      %608 = vmatpush1.msra.mxu0 0.0
      %609 = vmatprep.subr.mxu0 0.0
      %610 = vmatpush1.msra.mxu0 0.0
      %611 = vmatprep.subr.mxu0 0.0
      %612 = vmatpush1.msra.mxu0 0.0
      %613 = vmatprep.subr.mxu0 0.0
      %614 = vmatpush1.msra.mxu0 0.0
      %615 = vmatprep.subr.mxu0 0.0
      %616 = vmatpush1.msra.mxu0 0.0
      %617 = vmatprep.subr.mxu0 0.0
      %618 = vmatpush1.msra.mxu0 0.0
      %619 = vmatprep.subr.mxu0 0.0
      %620 = vmatpush1.msra.mxu0 0.0
      %621 = vmatprep.subr.mxu0 0.0
      %622 = vmatpush1.msra.mxu0 0.0
      %623 = vmatprep.subr.mxu0 0.0
      %624 = vmatpush1.msra.mxu0 0.0
      %625 = vmatprep.subr.mxu0 0.0
      %626 = vmatpush1.msra.mxu0 0.0
      %627 = vmatprep.subr.mxu0 0.0
      %628 = vmatpush1.msra.mxu0 0.0
      %629 = vmatprep.subr.mxu0 0.0
      %630 = vmatpush1.msra.mxu0 0.0
      %631 = vmatprep.subr.mxu0 0.0
      %632 = vmatpush1.msra.mxu0 0.0
      %633 = vmatprep.subr.mxu0 0.0
      %634 = vmatpush1.msra.mxu0 0.0
      %635 = vmatprep.subr.mxu0 0.0
      %636 = vmatpush1.msra.mxu0 0.0
      %637 = vmatprep.subr.mxu0 0.0
      %638 = vmatpush1.msra.mxu0 0.0
      %639 = vmatprep.subr.mxu0 0.0
      %640 = vmatpush1.msra.mxu0 0.0
      %641 = vmatprep.mubr.f32.mxu0 0.0
      %642 = vmatmul.mubr.f32.gmra.mrb[0].mxu0 %v572
      %v643 = vpop.f32.mrb[0].mxu0
      %v644 = vadd.f32 0.0, %v643
      %v645 = vpop.f32.mrb[0].mxu0
      %646 = vdwg.mxu0
      %s647 = scalar_lea.vmem %s172, 16
      %648 = vst.msk [vmem:[%s647] sm:$0xff] %vm331, %v644
      %v649 = vld [vmem:[%s0] sm:$0xff]
      %s650 = scalar_lea.vmem %s166, 12
      %v651 = vld [vmem:[%s650] sm:$0xf]
      %v653 = vsel %vm176, %v649, 0
      %v656 = vsel %vm180, %v651, 0
      %658 = vmatprep.subr.mxu0 0.0
      %659 = vmatpush1.msra.mxu0 %v656
      %660 = vmatprep.subr.mxu0 0.0
      %661 = vmatpush1.msra.mxu0 0.0
      %662 = vmatprep.subr.mxu0 0.0
      %663 = vmatpush1.msra.mxu0 0.0
      %664 = vmatprep.subr.mxu0 0.0
      %665 = vmatpush1.msra.mxu0 0.0
      %666 = vmatprep.subr.mxu0 0.0
      %667 = vmatpush1.msra.mxu0 0.0
      %668 = vmatprep.subr.mxu0 0.0
      %669 = vmatpush1.msra.mxu0 0.0
      %670 = vmatprep.subr.mxu0 0.0
      %671 = vmatpush1.msra.mxu0 0.0
      %672 = vmatprep.subr.mxu0 0.0
      %673 = vmatpush1.msra.mxu0 0.0
      %674 = vmatprep.subr.mxu0 0.0
      %675 = vmatpush1.msra.mxu0 0.0
      %676 = vmatprep.subr.mxu0 0.0
      %677 = vmatpush1.msra.mxu0 0.0
      %678 = vmatprep.subr.mxu0 0.0
      %679 = vmatpush1.msra.mxu0 0.0
      %680 = vmatprep.subr.mxu0 0.0
      %681 = vmatpush1.msra.mxu0 0.0
      %682 = vmatprep.subr.mxu0 0.0
      %683 = vmatpush1.msra.mxu0 0.0
      %684 = vmatprep.subr.mxu0 0.0
      %685 = vmatpush1.msra.mxu0 0.0
      %686 = vmatprep.subr.mxu0 0.0
      %687 = vmatpush1.msra.mxu0 0.0
      %688 = vmatprep.subr.mxu0 0.0
      %689 = vmatpush1.msra.mxu0 0.0
      %690 = vmatprep.subr.mxu0 0.0
      %691 = vmatpush1.msra.mxu0 0.0
      %692 = vmatprep.subr.mxu0 0.0
      %693 = vmatpush1.msra.mxu0 0.0
      %694 = vmatprep.subr.mxu0 0.0
      %695 = vmatpush1.msra.mxu0 0.0
      %696 = vmatprep.subr.mxu0 0.0
      %697 = vmatpush1.msra.mxu0 0.0
      %698 = vmatprep.subr.mxu0 0.0
      %699 = vmatpush1.msra.mxu0 0.0
      %700 = vmatprep.subr.mxu0 0.0
      %701 = vmatpush1.msra.mxu0 0.0
      %702 = vmatprep.subr.mxu0 0.0
      %703 = vmatpush1.msra.mxu0 0.0
      %704 = vmatprep.subr.mxu0 0.0
      %705 = vmatpush1.msra.mxu0 0.0
      %706 = vmatprep.subr.mxu0 0.0
      %707 = vmatpush1.msra.mxu0 0.0
      %708 = vmatprep.subr.mxu0 0.0
      %709 = vmatpush1.msra.mxu0 0.0
      %710 = vmatprep.subr.mxu0 0.0
      %711 = vmatpush1.msra.mxu0 0.0
      %712 = vmatprep.subr.mxu0 0.0
      %713 = vmatpush1.msra.mxu0 0.0
      %714 = vmatprep.subr.mxu0 0.0
      %715 = vmatpush1.msra.mxu0 0.0
      %716 = vmatprep.subr.mxu0 0.0
      %717 = vmatpush1.msra.mxu0 0.0
      %718 = vmatprep.subr.mxu0 0.0
      %719 = vmatpush1.msra.mxu0 0.0
      %720 = vmatprep.subr.mxu0 0.0
      %721 = vmatpush1.msra.mxu0 0.0
      %722 = vmatprep.mubr.f32.mxu0 0.0
      %723 = vmatmul.mubr.f32.gmra.mrb[0].mxu0 %v653
      %v724 = vpop.f32.mrb[0].mxu0
      %v725 = vadd.f32 0.0, %v724
      %v726 = vpop.f32.mrb[0].mxu0
      %727 = vdwg.mxu0
      %v728 = vld [vmem:[%s1] sm:$0xf]
      %v730 = vsel %vm176, %v725, 0
      %v733 = vsel %vm180, %v728, 0
      %735 = vmatprep.subr.mxu0 0.0
      %736 = vmatpush1.msra.mxu0 %v733
      %737 = vmatprep.subr.mxu0 0.0
      %738 = vmatpush1.msra.mxu0 0.0
      %739 = vmatprep.subr.mxu0 0.0
      %740 = vmatpush1.msra.mxu0 0.0
      %741 = vmatprep.subr.mxu0 0.0
      %742 = vmatpush1.msra.mxu0 0.0
      %743 = vmatprep.subr.mxu0 0.0
      %744 = vmatpush1.msra.mxu0 0.0
      %745 = vmatprep.subr.mxu0 0.0
      %746 = vmatpush1.msra.mxu0 0.0
      %747 = vmatprep.subr.mxu0 0.0
      %748 = vmatpush1.msra.mxu0 0.0
      %749 = vmatprep.subr.mxu0 0.0
      %750 = vmatpush1.msra.mxu0 0.0
      %751 = vmatprep.subr.mxu0 0.0
      %752 = vmatpush1.msra.mxu0 0.0
      %753 = vmatprep.subr.mxu0 0.0
      %754 = vmatpush1.msra.mxu0 0.0
      %755 = vmatprep.subr.mxu0 0.0
      %756 = vmatpush1.msra.mxu0 0.0
      %757 = vmatprep.subr.mxu0 0.0
      %758 = vmatpush1.msra.mxu0 0.0
      %759 = vmatprep.subr.mxu0 0.0
      %760 = vmatpush1.msra.mxu0 0.0
      %761 = vmatprep.subr.mxu0 0.0
      %762 = vmatpush1.msra.mxu0 0.0
      %763 = vmatprep.subr.mxu0 0.0
      %764 = vmatpush1.msra.mxu0 0.0
      %765 = vmatprep.subr.mxu0 0.0
      %766 = vmatpush1.msra.mxu0 0.0
      %767 = vmatprep.subr.mxu0 0.0
      %768 = vmatpush1.msra.mxu0 0.0
      %769 = vmatprep.subr.mxu0 0.0
      %770 = vmatpush1.msra.mxu0 0.0
      %771 = vmatprep.subr.mxu0 0.0
      %772 = vmatpush1.msra.mxu0 0.0
      %773 = vmatprep.subr.mxu0 0.0
      %774 = vmatpush1.msra.mxu0 0.0
      %775 = vmatprep.subr.mxu0 0.0
      %776 = vmatpush1.msra.mxu0 0.0
      %777 = vmatprep.subr.mxu0 0.0
      %778 = vmatpush1.msra.mxu0 0.0
      %779 = vmatprep.subr.mxu0 0.0
      %780 = vmatpush1.msra.mxu0 0.0
      %781 = vmatprep.subr.mxu0 0.0
      %782 = vmatpush1.msra.mxu0 0.0
      %783 = vmatprep.subr.mxu0 0.0
      %784 = vmatpush1.msra.mxu0 0.0
      %785 = vmatprep.subr.mxu0 0.0
      %786 = vmatpush1.msra.mxu0 0.0
      %787 = vmatprep.subr.mxu0 0.0
      %788 = vmatpush1.msra.mxu0 0.0
      %789 = vmatprep.subr.mxu0 0.0
      %790 = vmatpush1.msra.mxu0 0.0
      %791 = vmatprep.subr.mxu0 0.0
      %792 = vmatpush1.msra.mxu0 0.0
      %793 = vmatprep.subr.mxu0 0.0
      %794 = vmatpush1.msra.mxu0 0.0
      %795 = vmatprep.subr.mxu0 0.0
      %796 = vmatpush1.msra.mxu0 0.0
      %797 = vmatprep.subr.mxu0 0.0
      %798 = vmatpush1.msra.mxu0 0.0
      %799 = vmatprep.mubr.f32.mxu0 0.0
      %800 = vmatmul.mubr.f32.gmra.mrb[0].mxu0 %v730
      %v801 = vpop.f32.mrb[0].mxu0
      %v802 = vadd.f32 0.0, %v801
      %v803 = vpop.f32.mrb[0].mxu0
      %804 = vdwg.mxu0
      %s805 = scalar_lea.vmem %s172, 24
      %806 = vst.msk [vmem:[%s805] sm:$0xff] %vm331, %v802
      %v807 = vld [vmem:[%s0] sm:$0xff]
      %s808 = scalar_lea.vmem %s166, 16
      %v809 = vld [vmem:[%s808] sm:$0xf]
      %v811 = vsel %vm176, %v807, 0
      %v814 = vsel %vm180, %v809, 0
      %816 = vmatprep.subr.mxu0 0.0
      %817 = vmatpush1.msra.mxu0 %v814
      %818 = vmatprep.subr.mxu0 0.0
      %819 = vmatpush1.msra.mxu0 0.0
      %820 = vmatprep.subr.mxu0 0.0
      %821 = vmatpush1.msra.mxu0 0.0
      %822 = vmatprep.subr.mxu0 0.0
      %823 = vmatpush1.msra.mxu0 0.0
      %824 = vmatprep.subr.mxu0 0.0
      %825 = vmatpush1.msra.mxu0 0.0
      %826 = vmatprep.subr.mxu0 0.0
      %827 = vmatpush1.msra.mxu0 0.0
      %828 = vmatprep.subr.mxu0 0.0
      %829 = vmatpush1.msra.mxu0 0.0
      %830 = vmatprep.subr.mxu0 0.0
      %831 = vmatpush1.msra.mxu0 0.0
      %832 = vmatprep.subr.mxu0 0.0
      %833 = vmatpush1.msra.mxu0 0.0
      %834 = vmatprep.subr.mxu0 0.0
      %835 = vmatpush1.msra.mxu0 0.0
      %836 = vmatprep.subr.mxu0 0.0
      %837 = vmatpush1.msra.mxu0 0.0
      %838 = vmatprep.subr.mxu0 0.0
      %839 = vmatpush1.msra.mxu0 0.0
      %840 = vmatprep.subr.mxu0 0.0
      %841 = vmatpush1.msra.mxu0 0.0
      %842 = vmatprep.subr.mxu0 0.0
      %843 = vmatpush1.msra.mxu0 0.0
      %844 = vmatprep.subr.mxu0 0.0
      %845 = vmatpush1.msra.mxu0 0.0
      %846 = vmatprep.subr.mxu0 0.0
      %847 = vmatpush1.msra.mxu0 0.0
      %848 = vmatprep.subr.mxu0 0.0
      %849 = vmatpush1.msra.mxu0 0.0
      %850 = vmatprep.subr.mxu0 0.0
      %851 = vmatpush1.msra.mxu0 0.0
      %852 = vmatprep.subr.mxu0 0.0
      %853 = vmatpush1.msra.mxu0 0.0
      %854 = vmatprep.subr.mxu0 0.0
      %855 = vmatpush1.msra.mxu0 0.0
      %856 = vmatprep.subr.mxu0 0.0
      %857 = vmatpush1.msra.mxu0 0.0
      %858 = vmatprep.subr.mxu0 0.0
      %859 = vmatpush1.msra.mxu0 0.0
      %860 = vmatprep.subr.mxu0 0.0
      %861 = vmatpush1.msra.mxu0 0.0
      %862 = vmatprep.subr.mxu0 0.0
      %863 = vmatpush1.msra.mxu0 0.0
      %864 = vmatprep.subr.mxu0 0.0
      %865 = vmatpush1.msra.mxu0 0.0
      %866 = vmatprep.subr.mxu0 0.0
      %867 = vmatpush1.msra.mxu0 0.0
      %868 = vmatprep.subr.mxu0 0.0
      %869 = vmatpush1.msra.mxu0 0.0
      %870 = vmatprep.subr.mxu0 0.0
      %871 = vmatpush1.msra.mxu0 0.0
      %872 = vmatprep.subr.mxu0 0.0
      %873 = vmatpush1.msra.mxu0 0.0
      %874 = vmatprep.subr.mxu0 0.0
      %875 = vmatpush1.msra.mxu0 0.0
      %876 = vmatprep.subr.mxu0 0.0
      %877 = vmatpush1.msra.mxu0 0.0
      %878 = vmatprep.subr.mxu0 0.0
      %879 = vmatpush1.msra.mxu0 0.0
      %880 = vmatprep.mubr.f32.mxu0 0.0
      %881 = vmatmul.mubr.f32.gmra.mrb[0].mxu0 %v811
      %v882 = vpop.f32.mrb[0].mxu0
      %v883 = vadd.f32 0.0, %v882
      %v884 = vpop.f32.mrb[0].mxu0
      %885 = vdwg.mxu0
      %v886 = vld [vmem:[%s1] sm:$0xf]
      %v888 = vsel %vm176, %v883, 0
      %v891 = vsel %vm180, %v886, 0
      %893 = vmatprep.subr.mxu0 0.0
      %894 = vmatpush1.msra.mxu0 %v891
      %895 = vmatprep.subr.mxu0 0.0
      %896 = vmatpush1.msra.mxu0 0.0
      %897 = vmatprep.subr.mxu0 0.0
      %898 = vmatpush1.msra.mxu0 0.0
      %899 = vmatprep.subr.mxu0 0.0
      %900 = vmatpush1.msra.mxu0 0.0
      %901 = vmatprep.subr.mxu0 0.0
      %902 = vmatpush1.msra.mxu0 0.0
      %903 = vmatprep.subr.mxu0 0.0
      %904 = vmatpush1.msra.mxu0 0.0
      %905 = vmatprep.subr.mxu0 0.0
      %906 = vmatpush1.msra.mxu0 0.0
      %907 = vmatprep.subr.mxu0 0.0
      %908 = vmatpush1.msra.mxu0 0.0
      %909 = vmatprep.subr.mxu0 0.0
      %910 = vmatpush1.msra.mxu0 0.0
      %911 = vmatprep.subr.mxu0 0.0
      %912 = vmatpush1.msra.mxu0 0.0
      %913 = vmatprep.subr.mxu0 0.0
      %914 = vmatpush1.msra.mxu0 0.0
      %915 = vmatprep.subr.mxu0 0.0
      %916 = vmatpush1.msra.mxu0 0.0
      %917 = vmatprep.subr.mxu0 0.0
      %918 = vmatpush1.msra.mxu0 0.0
      %919 = vmatprep.subr.mxu0 0.0
      %920 = vmatpush1.msra.mxu0 0.0
      %921 = vmatprep.subr.mxu0 0.0
      %922 = vmatpush1.msra.mxu0 0.0
      %923 = vmatprep.subr.mxu0 0.0
      %924 = vmatpush1.msra.mxu0 0.0
      %925 = vmatprep.subr.mxu0 0.0
      %926 = vmatpush1.msra.mxu0 0.0
      %927 = vmatprep.subr.mxu0 0.0
      %928 = vmatpush1.msra.mxu0 0.0
      %929 = vmatprep.subr.mxu0 0.0
      %930 = vmatpush1.msra.mxu0 0.0
      %931 = vmatprep.subr.mxu0 0.0
      %932 = vmatpush1.msra.mxu0 0.0
      %933 = vmatprep.subr.mxu0 0.0
      %934 = vmatpush1.msra.mxu0 0.0
      %935 = vmatprep.subr.mxu0 0.0
      %936 = vmatpush1.msra.mxu0 0.0
      %937 = vmatprep.subr.mxu0 0.0
      %938 = vmatpush1.msra.mxu0 0.0
      %939 = vmatprep.subr.mxu0 0.0
      %940 = vmatpush1.msra.mxu0 0.0
      %941 = vmatprep.subr.mxu0 0.0
      %942 = vmatpush1.msra.mxu0 0.0
      %943 = vmatprep.subr.mxu0 0.0
      %944 = vmatpush1.msra.mxu0 0.0
      %945 = vmatprep.subr.mxu0 0.0
      %946 = vmatpush1.msra.mxu0 0.0
      %947 = vmatprep.subr.mxu0 0.0
      %948 = vmatpush1.msra.mxu0 0.0
      %949 = vmatprep.subr.mxu0 0.0
      %950 = vmatpush1.msra.mxu0 0.0
      %951 = vmatprep.subr.mxu0 0.0
      %952 = vmatpush1.msra.mxu0 0.0
      %953 = vmatprep.subr.mxu0 0.0
      %954 = vmatpush1.msra.mxu0 0.0
      %955 = vmatprep.subr.mxu0 0.0
      %956 = vmatpush1.msra.mxu0 0.0
      %957 = vmatprep.mubr.f32.mxu0 0.0
      %958 = vmatmul.mubr.f32.gmra.mrb[0].mxu0 %v888
      %v959 = vpop.f32.mrb[0].mxu0
      %v960 = vadd.f32 0.0, %v959
      %v961 = vpop.f32.mrb[0].mxu0
      %962 = vdwg.mxu0
      %s963 = scalar_lea.vmem %s172, 32
      %964 = vst.msk [vmem:[%s963] sm:$0xff] %vm331, %v960
      %v965 = vld [vmem:[%s0] sm:$0xff]
      %s966 = scalar_lea.vmem %s166, 20
      %v967 = vld [vmem:[%s966] sm:$0xf]
      %v969 = vsel %vm176, %v965, 0
      %v972 = vsel %vm180, %v967, 0
      %974 = vmatprep.subr.mxu0 0.0
      %975 = vmatpush1.msra.mxu0 %v972
      %976 = vmatprep.subr.mxu0 0.0
      %977 = vmatpush1.msra.mxu0 0.0
      %978 = vmatprep.subr.mxu0 0.0
      %979 = vmatpush1.msra.mxu0 0.0
      %980 = vmatprep.subr.mxu0 0.0
      %981 = vmatpush1.msra.mxu0 0.0
      %982 = vmatprep.subr.mxu0 0.0
      %983 = vmatpush1.msra.mxu0 0.0
      %984 = vmatprep.subr.mxu0 0.0
      %985 = vmatpush1.msra.mxu0 0.0
      %986 = vmatprep.subr.mxu0 0.0
      %987 = vmatpush1.msra.mxu0 0.0
      %988 = vmatprep.subr.mxu0 0.0
      %989 = vmatpush1.msra.mxu0 0.0
      %990 = vmatprep.subr.mxu0 0.0
      %991 = vmatpush1.msra.mxu0 0.0
      %992 = vmatprep.subr.mxu0 0.0
      %993 = vmatpush1.msra.mxu0 0.0
      %994 = vmatprep.subr.mxu0 0.0
      %995 = vmatpush1.msra.mxu0 0.0
      %996 = vmatprep.subr.mxu0 0.0
      %997 = vmatpush1.msra.mxu0 0.0
      %998 = vmatprep.subr.mxu0 0.0
      %999 = vmatpush1.msra.mxu0 0.0
      %1000 = vmatprep.subr.mxu0 0.0
      %1001 = vmatpush1.msra.mxu0 0.0
      %1002 = vmatprep.subr.mxu0 0.0
      %1003 = vmatpush1.msra.mxu0 0.0
      %1004 = vmatprep.subr.mxu0 0.0
      %1005 = vmatpush1.msra.mxu0 0.0
      %1006 = vmatprep.subr.mxu0 0.0
      %1007 = vmatpush1.msra.mxu0 0.0
      %1008 = vmatprep.subr.mxu0 0.0
      %1009 = vmatpush1.msra.mxu0 0.0
      %1010 = vmatprep.subr.mxu0 0.0
      %1011 = vmatpush1.msra.mxu0 0.0
      %1012 = vmatprep.subr.mxu0 0.0
      %1013 = vmatpush1.msra.mxu0 0.0
      %1014 = vmatprep.subr.mxu0 0.0
      %1015 = vmatpush1.msra.mxu0 0.0
      %1016 = vmatprep.subr.mxu0 0.0
      %1017 = vmatpush1.msra.mxu0 0.0
      %1018 = vmatprep.subr.mxu0 0.0
      %1019 = vmatpush1.msra.mxu0 0.0
      %1020 = vmatprep.subr.mxu0 0.0
      %1021 = vmatpush1.msra.mxu0 0.0
      %1022 = vmatprep.subr.mxu0 0.0
      %1023 = vmatpush1.msra.mxu0 0.0
      %1024 = vmatprep.subr.mxu0 0.0
      %1025 = vmatpush1.msra.mxu0 0.0
      %1026 = vmatprep.subr.mxu0 0.0
      %1027 = vmatpush1.msra.mxu0 0.0
      %1028 = vmatprep.subr.mxu0 0.0
      %1029 = vmatpush1.msra.mxu0 0.0
      %1030 = vmatprep.subr.mxu0 0.0
      %1031 = vmatpush1.msra.mxu0 0.0
      %1032 = vmatprep.subr.mxu0 0.0
      %1033 = vmatpush1.msra.mxu0 0.0
      %1034 = vmatprep.subr.mxu0 0.0
      %1035 = vmatpush1.msra.mxu0 0.0
      %1036 = vmatprep.subr.mxu0 0.0
      %1037 = vmatpush1.msra.mxu0 0.0
      %1038 = vmatprep.mubr.f32.mxu0 0.0
      %1039 = vmatmul.mubr.f32.gmra.mrb[0].mxu0 %v969
      %v1040 = vpop.f32.mrb[0].mxu0
      %v1041 = vadd.f32 0.0, %v1040
      %v1042 = vpop.f32.mrb[0].mxu0
      %1043 = vdwg.mxu0
      %v1044 = vld [vmem:[%s1] sm:$0xf]
      %v1046 = vsel %vm176, %v1041, 0
      %v1049 = vsel %vm180, %v1044, 0
      %1051 = vmatprep.subr.mxu0 0.0
      %1052 = vmatpush1.msra.mxu0 %v1049
      %1053 = vmatprep.subr.mxu0 0.0
      %1054 = vmatpush1.msra.mxu0 0.0
      %1055 = vmatprep.subr.mxu0 0.0
      %1056 = vmatpush1.msra.mxu0 0.0
      %1057 = vmatprep.subr.mxu0 0.0
      %1058 = vmatpush1.msra.mxu0 0.0
      %1059 = vmatprep.subr.mxu0 0.0
      %1060 = vmatpush1.msra.mxu0 0.0
      %1061 = vmatprep.subr.mxu0 0.0
      %1062 = vmatpush1.msra.mxu0 0.0
      %1063 = vmatprep.subr.mxu0 0.0
      %1064 = vmatpush1.msra.mxu0 0.0
      %1065 = vmatprep.subr.mxu0 0.0
      %1066 = vmatpush1.msra.mxu0 0.0
      %1067 = vmatprep.subr.mxu0 0.0
      %1068 = vmatpush1.msra.mxu0 0.0
      %1069 = vmatprep.subr.mxu0 0.0
      %1070 = vmatpush1.msra.mxu0 0.0
      %1071 = vmatprep.subr.mxu0 0.0
      %1072 = vmatpush1.msra.mxu0 0.0
      %1073 = vmatprep.subr.mxu0 0.0
      %1074 = vmatpush1.msra.mxu0 0.0
      %1075 = vmatprep.subr.mxu0 0.0
      %1076 = vmatpush1.msra.mxu0 0.0
      %1077 = vmatprep.subr.mxu0 0.0
      %1078 = vmatpush1.msra.mxu0 0.0
      %1079 = vmatprep.subr.mxu0 0.0
      %1080 = vmatpush1.msra.mxu0 0.0
      %1081 = vmatprep.subr.mxu0 0.0
      %1082 = vmatpush1.msra.mxu0 0.0
      %1083 = vmatprep.subr.mxu0 0.0
      %1084 = vmatpush1.msra.mxu0 0.0
      %1085 = vmatprep.subr.mxu0 0.0
      %1086 = vmatpush1.msra.mxu0 0.0
      %1087 = vmatprep.subr.mxu0 0.0
      %1088 = vmatpush1.msra.mxu0 0.0
      %1089 = vmatprep.subr.mxu0 0.0
      %1090 = vmatpush1.msra.mxu0 0.0
      %1091 = vmatprep.subr.mxu0 0.0
      %1092 = vmatpush1.msra.mxu0 0.0
      %1093 = vmatprep.subr.mxu0 0.0
      %1094 = vmatpush1.msra.mxu0 0.0
      %1095 = vmatprep.subr.mxu0 0.0
      %1096 = vmatpush1.msra.mxu0 0.0
      %1097 = vmatprep.subr.mxu0 0.0
      %1098 = vmatpush1.msra.mxu0 0.0
      %1099 = vmatprep.subr.mxu0 0.0
      %1100 = vmatpush1.msra.mxu0 0.0
      %1101 = vmatprep.subr.mxu0 0.0
      %1102 = vmatpush1.msra.mxu0 0.0
      %1103 = vmatprep.subr.mxu0 0.0
      %1104 = vmatpush1.msra.mxu0 0.0
      %1105 = vmatprep.subr.mxu0 0.0
      %1106 = vmatpush1.msra.mxu0 0.0
      %1107 = vmatprep.subr.mxu0 0.0
      %1108 = vmatpush1.msra.mxu0 0.0
      %1109 = vmatprep.subr.mxu0 0.0
      %1110 = vmatpush1.msra.mxu0 0.0
      %1111 = vmatprep.subr.mxu0 0.0
      %1112 = vmatpush1.msra.mxu0 0.0
      %1113 = vmatprep.subr.mxu0 0.0
      %1114 = vmatpush1.msra.mxu0 0.0
      %1115 = vmatprep.mubr.f32.mxu0 0.0
      %1116 = vmatmul.mubr.f32.gmra.mrb[0].mxu0 %v1046
      %v1117 = vpop.f32.mrb[0].mxu0
      %v1118 = vadd.f32 0.0, %v1117
      %v1119 = vpop.f32.mrb[0].mxu0
      %1120 = vdwg.mxu0
      %s1121 = scalar_lea.vmem %s172, 40
      %1122 = vst.msk [vmem:[%s1121] sm:$0xff] %vm331, %v1118
      %v1123 = vld [vmem:[%s0] sm:$0xff]
      %s1124 = scalar_lea.vmem %s166, 24
      %v1125 = vld [vmem:[%s1124] sm:$0xf]
      %v1127 = vsel %vm176, %v1123, 0
      %v1130 = vsel %vm180, %v1125, 0
      %1132 = vmatprep.subr.mxu0 0.0
      %1133 = vmatpush1.msra.mxu0 %v1130
      %1134 = vmatprep.subr.mxu0 0.0
      %1135 = vmatpush1.msra.mxu0 0.0
      %1136 = vmatprep.subr.mxu0 0.0
      %1137 = vmatpush1.msra.mxu0 0.0
      %1138 = vmatprep.subr.mxu0 0.0
      %1139 = vmatpush1.msra.mxu0 0.0
      %1140 = vmatprep.subr.mxu0 0.0
      %1141 = vmatpush1.msra.mxu0 0.0
      %1142 = vmatprep.subr.mxu0 0.0
      %1143 = vmatpush1.msra.mxu0 0.0
      %1144 = vmatprep.subr.mxu0 0.0
      %1145 = vmatpush1.msra.mxu0 0.0
      %1146 = vmatprep.subr.mxu0 0.0
      %1147 = vmatpush1.msra.mxu0 0.0
      %1148 = vmatprep.subr.mxu0 0.0
      %1149 = vmatpush1.msra.mxu0 0.0
      %1150 = vmatprep.subr.mxu0 0.0
      %1151 = vmatpush1.msra.mxu0 0.0
      %1152 = vmatprep.subr.mxu0 0.0
      %1153 = vmatpush1.msra.mxu0 0.0
      %1154 = vmatprep.subr.mxu0 0.0
      %1155 = vmatpush1.msra.mxu0 0.0
      %1156 = vmatprep.subr.mxu0 0.0
      %1157 = vmatpush1.msra.mxu0 0.0
      %1158 = vmatprep.subr.mxu0 0.0
      %1159 = vmatpush1.msra.mxu0 0.0
      %1160 = vmatprep.subr.mxu0 0.0
      %1161 = vmatpush1.msra.mxu0 0.0
      %1162 = vmatprep.subr.mxu0 0.0
      %1163 = vmatpush1.msra.mxu0 0.0
      %1164 = vmatprep.subr.mxu0 0.0
      %1165 = vmatpush1.msra.mxu0 0.0
      %1166 = vmatprep.subr.mxu0 0.0
      %1167 = vmatpush1.msra.mxu0 0.0
      %1168 = vmatprep.subr.mxu0 0.0
      %1169 = vmatpush1.msra.mxu0 0.0
      %1170 = vmatprep.subr.mxu0 0.0
      %1171 = vmatpush1.msra.mxu0 0.0
      %1172 = vmatprep.subr.mxu0 0.0
      %1173 = vmatpush1.msra.mxu0 0.0
      %1174 = vmatprep.subr.mxu0 0.0
      %1175 = vmatpush1.msra.mxu0 0.0
      %1176 = vmatprep.subr.mxu0 0.0
      %1177 = vmatpush1.msra.mxu0 0.0
      %1178 = vmatprep.subr.mxu0 0.0
      %1179 = vmatpush1.msra.mxu0 0.0
      %1180 = vmatprep.subr.mxu0 0.0
      %1181 = vmatpush1.msra.mxu0 0.0
      %1182 = vmatprep.subr.mxu0 0.0
      %1183 = vmatpush1.msra.mxu0 0.0
      %1184 = vmatprep.subr.mxu0 0.0
      %1185 = vmatpush1.msra.mxu0 0.0
      %1186 = vmatprep.subr.mxu0 0.0
      %1187 = vmatpush1.msra.mxu0 0.0
      %1188 = vmatprep.subr.mxu0 0.0
      %1189 = vmatpush1.msra.mxu0 0.0
      %1190 = vmatprep.subr.mxu0 0.0
      %1191 = vmatpush1.msra.mxu0 0.0
      %1192 = vmatprep.subr.mxu0 0.0
      %1193 = vmatpush1.msra.mxu0 0.0
      %1194 = vmatprep.subr.mxu0 0.0
      %1195 = vmatpush1.msra.mxu0 0.0
      %1196 = vmatprep.mubr.f32.mxu0 0.0
      %1197 = vmatmul.mubr.f32.gmra.mrb[0].mxu0 %v1127
      %v1198 = vpop.f32.mrb[0].mxu0
      %v1199 = vadd.f32 0.0, %v1198
      %v1200 = vpop.f32.mrb[0].mxu0
      %1201 = vdwg.mxu0
      %v1202 = vld [vmem:[%s1] sm:$0xf]
      %v1204 = vsel %vm176, %v1199, 0
      %v1207 = vsel %vm180, %v1202, 0
      %1209 = vmatprep.subr.mxu0 0.0
      %1210 = vmatpush1.msra.mxu0 %v1207
      %1211 = vmatprep.subr.mxu0 0.0
      %1212 = vmatpush1.msra.mxu0 0.0
      %1213 = vmatprep.subr.mxu0 0.0
      %1214 = vmatpush1.msra.mxu0 0.0
      %1215 = vmatprep.subr.mxu0 0.0
      %1216 = vmatpush1.msra.mxu0 0.0
      %1217 = vmatprep.subr.mxu0 0.0
      %1218 = vmatpush1.msra.mxu0 0.0
      %1219 = vmatprep.subr.mxu0 0.0
      %1220 = vmatpush1.msra.mxu0 0.0
      %1221 = vmatprep.subr.mxu0 0.0
      %1222 = vmatpush1.msra.mxu0 0.0
      %1223 = vmatprep.subr.mxu0 0.0
      %1224 = vmatpush1.msra.mxu0 0.0
      %1225 = vmatprep.subr.mxu0 0.0
      %1226 = vmatpush1.msra.mxu0 0.0
      %1227 = vmatprep.subr.mxu0 0.0
      %1228 = vmatpush1.msra.mxu0 0.0
      %1229 = vmatprep.subr.mxu0 0.0
      %1230 = vmatpush1.msra.mxu0 0.0
      %1231 = vmatprep.subr.mxu0 0.0
      %1232 = vmatpush1.msra.mxu0 0.0
      %1233 = vmatprep.subr.mxu0 0.0
      %1234 = vmatpush1.msra.mxu0 0.0
      %1235 = vmatprep.subr.mxu0 0.0
      %1236 = vmatpush1.msra.mxu0 0.0
      %1237 = vmatprep.subr.mxu0 0.0
      %1238 = vmatpush1.msra.mxu0 0.0
      %1239 = vmatprep.subr.mxu0 0.0
      %1240 = vmatpush1.msra.mxu0 0.0
      %1241 = vmatprep.subr.mxu0 0.0
      %1242 = vmatpush1.msra.mxu0 0.0
      %1243 = vmatprep.subr.mxu0 0.0
      %1244 = vmatpush1.msra.mxu0 0.0
      %1245 = vmatprep.subr.mxu0 0.0
      %1246 = vmatpush1.msra.mxu0 0.0
      %1247 = vmatprep.subr.mxu0 0.0
      %1248 = vmatpush1.msra.mxu0 0.0
      %1249 = vmatprep.subr.mxu0 0.0
      %1250 = vmatpush1.msra.mxu0 0.0
      %1251 = vmatprep.subr.mxu0 0.0
      %1252 = vmatpush1.msra.mxu0 0.0
      %1253 = vmatprep.subr.mxu0 0.0
      %1254 = vmatpush1.msra.mxu0 0.0
      %1255 = vmatprep.subr.mxu0 0.0
      %1256 = vmatpush1.msra.mxu0 0.0
      %1257 = vmatprep.subr.mxu0 0.0
      %1258 = vmatpush1.msra.mxu0 0.0
      %1259 = vmatprep.subr.mxu0 0.0
      %1260 = vmatpush1.msra.mxu0 0.0
      %1261 = vmatprep.subr.mxu0 0.0
      %1262 = vmatpush1.msra.mxu0 0.0
      %1263 = vmatprep.subr.mxu0 0.0
      %1264 = vmatpush1.msra.mxu0 0.0
      %1265 = vmatprep.subr.mxu0 0.0
      %1266 = vmatpush1.msra.mxu0 0.0
      %1267 = vmatprep.subr.mxu0 0.0
      %1268 = vmatpush1.msra.mxu0 0.0
      %1269 = vmatprep.subr.mxu0 0.0
      %1270 = vmatpush1.msra.mxu0 0.0
      %1271 = vmatprep.subr.mxu0 0.0
      %1272 = vmatpush1.msra.mxu0 0.0
      %1273 = vmatprep.mubr.f32.mxu0 0.0
      %1274 = vmatmul.mubr.f32.gmra.mrb[0].mxu0 %v1204
      %v1275 = vpop.f32.mrb[0].mxu0
      %v1276 = vadd.f32 0.0, %v1275
      %v1277 = vpop.f32.mrb[0].mxu0
      %1278 = vdwg.mxu0
      %s1279 = scalar_lea.vmem %s172, 48
      %1280 = vst.msk [vmem:[%s1279] sm:$0xff] %vm331, %v1276
      %v1281 = vld [vmem:[%s0] sm:$0xff]
      %s1282 = scalar_lea.vmem %s166, 28
      %v1283 = vld [vmem:[%s1282] sm:$0xf]
      %v1285 = vsel %vm176, %v1281, 0
      %v1288 = vsel %vm180, %v1283, 0
      %1290 = vmatprep.subr.mxu0 0.0
      %1291 = vmatpush1.msra.mxu0 %v1288
      %1292 = vmatprep.subr.mxu0 0.0
      %1293 = vmatpush1.msra.mxu0 0.0
      %1294 = vmatprep.subr.mxu0 0.0
      %1295 = vmatpush1.msra.mxu0 0.0
      %1296 = vmatprep.subr.mxu0 0.0
      %1297 = vmatpush1.msra.mxu0 0.0
      %1298 = vmatprep.subr.mxu0 0.0
      %1299 = vmatpush1.msra.mxu0 0.0
      %1300 = vmatprep.subr.mxu0 0.0
      %1301 = vmatpush1.msra.mxu0 0.0
      %1302 = vmatprep.subr.mxu0 0.0
      %1303 = vmatpush1.msra.mxu0 0.0
      %1304 = vmatprep.subr.mxu0 0.0
      %1305 = vmatpush1.msra.mxu0 0.0
      %1306 = vmatprep.subr.mxu0 0.0
      %1307 = vmatpush1.msra.mxu0 0.0
      %1308 = vmatprep.subr.mxu0 0.0
      %1309 = vmatpush1.msra.mxu0 0.0
      %1310 = vmatprep.subr.mxu0 0.0
      %1311 = vmatpush1.msra.mxu0 0.0
      %1312 = vmatprep.subr.mxu0 0.0
      %1313 = vmatpush1.msra.mxu0 0.0
      %1314 = vmatprep.subr.mxu0 0.0
      %1315 = vmatpush1.msra.mxu0 0.0
      %1316 = vmatprep.subr.mxu0 0.0
      %1317 = vmatpush1.msra.mxu0 0.0
      %1318 = vmatprep.subr.mxu0 0.0
      %1319 = vmatpush1.msra.mxu0 0.0
      %1320 = vmatprep.subr.mxu0 0.0
      %1321 = vmatpush1.msra.mxu0 0.0
      %1322 = vmatprep.subr.mxu0 0.0
      %1323 = vmatpush1.msra.mxu0 0.0
      %1324 = vmatprep.subr.mxu0 0.0
      %1325 = vmatpush1.msra.mxu0 0.0
      %1326 = vmatprep.subr.mxu0 0.0
      %1327 = vmatpush1.msra.mxu0 0.0
      %1328 = vmatprep.subr.mxu0 0.0
      %1329 = vmatpush1.msra.mxu0 0.0
      %1330 = vmatprep.subr.mxu0 0.0
      %1331 = vmatpush1.msra.mxu0 0.0
      %1332 = vmatprep.subr.mxu0 0.0
      %1333 = vmatpush1.msra.mxu0 0.0
      %1334 = vmatprep.subr.mxu0 0.0
      %1335 = vmatpush1.msra.mxu0 0.0
      %1336 = vmatprep.subr.mxu0 0.0
      %1337 = vmatpush1.msra.mxu0 0.0
      %1338 = vmatprep.subr.mxu0 0.0
      %1339 = vmatpush1.msra.mxu0 0.0
      %1340 = vmatprep.subr.mxu0 0.0
      %1341 = vmatpush1.msra.mxu0 0.0
      %1342 = vmatprep.subr.mxu0 0.0
      %1343 = vmatpush1.msra.mxu0 0.0
      %1344 = vmatprep.subr.mxu0 0.0
      %1345 = vmatpush1.msra.mxu0 0.0
      %1346 = vmatprep.subr.mxu0 0.0
      %1347 = vmatpush1.msra.mxu0 0.0
      %1348 = vmatprep.subr.mxu0 0.0
      %1349 = vmatpush1.msra.mxu0 0.0
      %1350 = vmatprep.subr.mxu0 0.0
      %1351 = vmatpush1.msra.mxu0 0.0
      %1352 = vmatprep.subr.mxu0 0.0
      %1353 = vmatpush1.msra.mxu0 0.0
      %1354 = vmatprep.mubr.f32.mxu0 0.0
      %1355 = vmatmul.mubr.f32.gmra.mrb[0].mxu0 %v1285
      %v1356 = vpop.f32.mrb[0].mxu0
      %v1357 = vadd.f32 0.0, %v1356
      %v1358 = vpop.f32.mrb[0].mxu0
      %1359 = vdwg.mxu0
      %v1360 = vld [vmem:[%s1] sm:$0xf]
      %v1362 = vsel %vm176, %v1357, 0
      %v1365 = vsel %vm180, %v1360, 0
      %1367 = vmatprep.subr.mxu0 0.0
      %1368 = vmatpush1.msra.mxu0 %v1365
      %1369 = vmatprep.subr.mxu0 0.0
      %1370 = vmatpush1.msra.mxu0 0.0
      %1371 = vmatprep.subr.mxu0 0.0
      %1372 = vmatpush1.msra.mxu0 0.0
      %1373 = vmatprep.subr.mxu0 0.0
      %1374 = vmatpush1.msra.mxu0 0.0
      %1375 = vmatprep.subr.mxu0 0.0
      %1376 = vmatpush1.msra.mxu0 0.0
      %1377 = vmatprep.subr.mxu0 0.0
      %1378 = vmatpush1.msra.mxu0 0.0
      %1379 = vmatprep.subr.mxu0 0.0
      %1380 = vmatpush1.msra.mxu0 0.0
      %1381 = vmatprep.subr.mxu0 0.0
      %1382 = vmatpush1.msra.mxu0 0.0
      %1383 = vmatprep.subr.mxu0 0.0
      %1384 = vmatpush1.msra.mxu0 0.0
      %1385 = vmatprep.subr.mxu0 0.0
      %1386 = vmatpush1.msra.mxu0 0.0
      %1387 = vmatprep.subr.mxu0 0.0
      %1388 = vmatpush1.msra.mxu0 0.0
      %1389 = vmatprep.subr.mxu0 0.0
      %1390 = vmatpush1.msra.mxu0 0.0
      %1391 = vmatprep.subr.mxu0 0.0
      %1392 = vmatpush1.msra.mxu0 0.0
      %1393 = vmatprep.subr.mxu0 0.0
      %1394 = vmatpush1.msra.mxu0 0.0
      %1395 = vmatprep.subr.mxu0 0.0
      %1396 = vmatpush1.msra.mxu0 0.0
      %1397 = vmatprep.subr.mxu0 0.0
      %1398 = vmatpush1.msra.mxu0 0.0
      %1399 = vmatprep.subr.mxu0 0.0
      %1400 = vmatpush1.msra.mxu0 0.0
      %1401 = vmatprep.subr.mxu0 0.0
      %1402 = vmatpush1.msra.mxu0 0.0
      %1403 = vmatprep.subr.mxu0 0.0
      %1404 = vmatpush1.msra.mxu0 0.0
      %1405 = vmatprep.subr.mxu0 0.0
      %1406 = vmatpush1.msra.mxu0 0.0
      %1407 = vmatprep.subr.mxu0 0.0
      %1408 = vmatpush1.msra.mxu0 0.0
      %1409 = vmatprep.subr.mxu0 0.0
      %1410 = vmatpush1.msra.mxu0 0.0
      %1411 = vmatprep.subr.mxu0 0.0
      %1412 = vmatpush1.msra.mxu0 0.0
      %1413 = vmatprep.subr.mxu0 0.0
      %1414 = vmatpush1.msra.mxu0 0.0
      %1415 = vmatprep.subr.mxu0 0.0
      %1416 = vmatpush1.msra.mxu0 0.0
      %1417 = vmatprep.subr.mxu0 0.0
      %1418 = vmatpush1.msra.mxu0 0.0
      %1419 = vmatprep.subr.mxu0 0.0
      %1420 = vmatpush1.msra.mxu0 0.0
      %1421 = vmatprep.subr.mxu0 0.0
      %1422 = vmatpush1.msra.mxu0 0.0
      %1423 = vmatprep.subr.mxu0 0.0
      %1424 = vmatpush1.msra.mxu0 0.0
      %1425 = vmatprep.subr.mxu0 0.0
      %1426 = vmatpush1.msra.mxu0 0.0
      %1427 = vmatprep.subr.mxu0 0.0
      %1428 = vmatpush1.msra.mxu0 0.0
      %1429 = vmatprep.subr.mxu0 0.0
      %1430 = vmatpush1.msra.mxu0 0.0
      %1431 = vmatprep.mubr.f32.mxu0 0.0
      %1432 = vmatmul.mubr.f32.gmra.mrb[0].mxu0 %v1362
      %v1433 = vpop.f32.mrb[0].mxu0
      %v1434 = vadd.f32 0.0, %v1433
      %v1435 = vpop.f32.mrb[0].mxu0
      %1436 = vdwg.mxu0
      %s1437 = scalar_lea.vmem %s172, 56
      %1438 = vst.msk [vmem:[%s1437] sm:$0xff] %vm331, %v1434
      %s1439 = smul.u32 8, %s14
      %p1440 = scmp.lt.s32.totalorder %s1439, 127
      %s1441 = scalar_select %p1440, %s1439, 127
      %s1442 = smul.addr %s1441, 8
      %s1443 = scalar_lea.vmem %s3, %s1442
      // Predicated region
      $region33: #{upconv_apply.7} parent=31 // pred_check
        %p1444 = pneg %p100
      $region34: #{upconv_apply.7} parent=31 // pred_check_branch
        %1446 = sbr.rel (%p1444) target = $region36
      $region35: #{upconv_apply.7} parent=31 // pred_region
        %s1447 = smul.u32 8, %s14
      $region36: #{upconv_apply.7} parent=31 // pred_fallthru
        _
    $region32: #{upconv_apply.7} parent=5 // pred_fallthru
      _
    %p1448 = scmp.le.s32.totalorder 2, %s9
    // Predicated region
    $region37: #{upconv_apply.7} parent=5 // pred_check
      %p1449 = pneg %p1448
    $region38: #{upconv_apply.7} parent=5 // pred_check_branch
      %1451 = sbr.rel (%p1449) target = $region40
    $region39: #{upconv_apply.7} parent=5 // pred_region
      %s1452 = ssub.s32 %s9, 2
      // Predicated region
      $region41: #{upconv_apply.7} parent=39 // pred_check
        %p1453 = pneg %p106
      $region42: #{upconv_apply.7} parent=39 // pred_check_branch
        %1455 = sbr.rel (%p1453) target = $region44
      $region43: #{upconv_apply.7} parent=39 // pred_region
        %s1456 = smul.u32 8, %s15
        %p1457 = scmp.lt.s32.totalorder %s1456, 127
        %s1458 = scalar_select %p1457, %s1456, 127
        %s1459 = smul.addr %s1458, 8
        %s1460 = scalar_lea.vmem %s3, %s1459
      $region44: #{upconv_apply.7} parent=39 // pred_fallthru
        _
    $region40: #{upconv_apply.7} parent=5 // pred_fallthru
      _
  $region6: #{upconv_apply.7} parent=0 // loop_footer
    %s13 = sadd.s32 1, %s9
  $region7: #{upconv_apply.7} parent=0 // loop_footer_branch
    %8 = sbr.rel target = $region3
  $region8: #{upconv_apply.7} parent=0 // loop_exit
    _

// kernel: upconv_apply.9
$region0: #{upconv_apply.9}
  #allocation0 [shape = 'u32[]', space=smem, size = 0x4, offset = 0x4, fixed_abs, tag = 'smem constant byte address 0x4 - core index']
  #allocation1 [shape = 'u32[144,128]{1,0:T(1,128)}', space=vmem, size = 0x12000, scoped, tag = 'internal scratch']
  %s0 = inlined_call_operand.vmem [shape: f32[16,64,128], index: 0, kind: input, shape index: {}]
  %s1 = inlined_call_operand.vmem [shape: f32[1,128], index: 1, kind: input, shape index: {}]
  %s2 = inlined_call_operand.vmem [shape: f32[1,128], index: 2, kind: input, shape index: {}]
  %s3 = inlined_call_operand.vmem [shape: bf16[16,64,128], index: 3, kind: output, shape index: {}]
  %s4 = sld [smem:[#allocation0]]
  $region45: #{upconv_apply.9} parent=0
    _
  %s6 = ssub.s32 1, %s4
  %s7 = scalar_select 0, %s6, %s4
  loop: start=0, step=1, limit=18
  $region2: #{upconv_apply.9} parent=0 // loop_pre_header
    _
  $region3: #{upconv_apply.9} parent=0 // loop_header
    %s9 = sphi 0, %s13
    %p10 = scmp.ge.s32.totalorder %s9, 18
    %s19 = sphi 0, %s21
    %s22 = sphi 0, %s19
    %s23 = sphi 0, %s22
    %s39 = sphi 0, %s23
    %s43 = sphi 0, %s43
    %s45 = sphi 0, %s43
    %s46 = sphi 0, %s45
    %s60 = sphi 0, %s46
    %s64 = sphi 0, %s64
    %s66 = sphi 0, %s64
    %s67 = sphi 0, %s66
    %s81 = sphi 0, %s67
    %s87 = sphi 0, %s89
    %s90 = sphi 0, %s87
    %s91 = sphi 0, %s90
    %s107 = sphi 0, %s91
  $region4: #{upconv_apply.9} parent=0 // loop_header_branch
    %12 = sbr.rel (%p10) target = $region8
  $region5: #{upconv_apply.9} parent=0 // loop_body
    %s14 = ssub.s32 %s9, 1
    %s15 = ssub.s32 %s9, 2
    %s16 = sadd.s32 %s9, 1
    %s17 = ssub.s32 %s9, %s16
    %p18 = scmp.eq.s32.totalorder %s17, 0
    %s20 = sadd.s32 %s19, 1
    %s21 = scalar_select %p18, %s19, %s20
    %p24 = pneg %p18
    %p25 = scmp.eq.s32.totalorder %s9, 15
    %p26 = por %p24, %p25
    %p27 = scmp.ne.s32.totalorder %s19, %s22
    %p28 = scmp.eq.s32.totalorder %s9, 0
    %p29 = por %p27, %p28
    %p30 = scmp.ne.s32.totalorder %s19, %s22
    %p31 = scmp.eq.s32.totalorder %s14, 15
    %p32 = por %p30, %p31
    %p33 = scmp.ne.s32.totalorder %s22, %s23
    %p34 = scmp.eq.s32.totalorder %s14, 0
    %p35 = por %p33, %p34
    %p36 = scmp.ne.s32.totalorder %s22, %s23
    %p37 = scmp.eq.s32.totalorder %s15, 15
    %p38 = por %p36, %p37
    %p40 = scmp.ne.s32.totalorder %s23, %s39
    %p41 = scmp.eq.s32.totalorder %s15, 0
    %p42 = por %p40, %p41
    %s44 = sadd.s32 %s43, 1
    %p47 = scmp.eq.s32.totalorder %s9, 15
    %p48 = scmp.ne.s32.totalorder %s43, %s45
    %p49 = scmp.eq.s32.totalorder %s9, 0
    %p50 = por %p48, %p49
    %p51 = scmp.ne.s32.totalorder %s43, %s45
    %p52 = scmp.eq.s32.totalorder %s14, 15
    %p53 = por %p51, %p52
    %p54 = scmp.ne.s32.totalorder %s45, %s46
    %p55 = scmp.eq.s32.totalorder %s14, 0
    %p56 = por %p54, %p55
    %p57 = scmp.ne.s32.totalorder %s45, %s46
    %p58 = scmp.eq.s32.totalorder %s15, 15
    %p59 = por %p57, %p58
    %p61 = scmp.ne.s32.totalorder %s46, %s60
    %p62 = scmp.eq.s32.totalorder %s15, 0
    %p63 = por %p61, %p62
    %s65 = sadd.s32 %s64, 1
    %p68 = scmp.eq.s32.totalorder %s9, 15
    %p69 = scmp.ne.s32.totalorder %s64, %s66
    %p70 = scmp.eq.s32.totalorder %s9, 0
    %p71 = por %p69, %p70
    %p72 = scmp.ne.s32.totalorder %s64, %s66
    %p73 = scmp.eq.s32.totalorder %s14, 15
    %p74 = por %p72, %p73
    %p75 = scmp.ne.s32.totalorder %s66, %s67
    %p76 = scmp.eq.s32.totalorder %s14, 0
    %p77 = por %p75, %p76
    %p78 = scmp.ne.s32.totalorder %s66, %s67
    %p79 = scmp.eq.s32.totalorder %s15, 15
    %p80 = por %p78, %p79
    %p82 = scmp.ne.s32.totalorder %s67, %s81
    %p83 = scmp.eq.s32.totalorder %s15, 0
    %p84 = por %p82, %p83
    %s85 = ssub.s32 %s9, %s16
    %p86 = scmp.eq.s32.totalorder %s85, 0
    %s88 = sadd.s32 %s87, 1
    %s89 = scalar_select %p86, %s87, %s88
    %p92 = pneg %p86
    %p93 = scmp.eq.s32.totalorder %s9, 15
    %p94 = por %p92, %p93
    %p95 = scmp.ne.s32.totalorder %s87, %s90
    %p96 = scmp.eq.s32.totalorder %s9, 0
    %p97 = por %p95, %p96
    %p98 = scmp.ne.s32.totalorder %s87, %s90
    %p99 = scmp.eq.s32.totalorder %s14, 15
    %p100 = por %p98, %p99
    %p101 = scmp.ne.s32.totalorder %s90, %s91
    %p102 = scmp.eq.s32.totalorder %s14, 0
    %p103 = por %p101, %p102
    %p104 = scmp.ne.s32.totalorder %s90, %s91
    %p105 = scmp.eq.s32.totalorder %s15, 15
    %p106 = por %p104, %p105
    %p108 = scmp.ne.s32.totalorder %s91, %s107
    %p109 = scmp.eq.s32.totalorder %s15, 0
    %p110 = por %p108, %p109
    %p111 = scmp.le.s32.totalorder 1, %s9
    %p112 = scmp.lt.s32.totalorder %s9, 17
    %p113 = pnand %p111, %p112
    %p114 = pneg %p113
    // Predicated region
    $region9: #{upconv_apply.9} parent=5 // pred_check
      _
    $region10: #{upconv_apply.9} parent=5 // pred_check_branch
      %116 = sbr.rel (%p113) target = $region12
    $region11: #{upconv_apply.9} parent=5 // pred_region
      %s117 = ssub.s32 %s9, 1
      // Predicated region
      $region13: #{upconv_apply.9} parent=11 // pred_check
        %p118 = pneg %p56
      $region14: #{upconv_apply.9} parent=11 // pred_check_branch
        %120 = sbr.rel (%p118) target = $region16
      $region15: #{upconv_apply.9} parent=11 // pred_region
        _
      $region16: #{upconv_apply.9} parent=11 // pred_fallthru
        _
      // Predicated region
      $region17: #{upconv_apply.9} parent=11 // pred_check
        %p121 = pneg %p77
      $region18: #{upconv_apply.9} parent=11 // pred_check_branch
        %123 = sbr.rel (%p121) target = $region20
      $region19: #{upconv_apply.9} parent=11 // pred_region
        _
      $region20: #{upconv_apply.9} parent=11 // pred_fallthru
        _
    $region12: #{upconv_apply.9} parent=5 // pred_fallthru
      _
    %p124 = scmp.lt.s32.totalorder %s9, 16
    // Predicated region
    $region21: #{upconv_apply.9} parent=5 // pred_check
      %p125 = pneg %p124
    $region22: #{upconv_apply.9} parent=5 // pred_check_branch
      %127 = sbr.rel (%p125) target = $region24
    $region23: #{upconv_apply.9} parent=5 // pred_region
      // Predicated region
      $region25: #{upconv_apply.9} parent=23 // pred_check
        %p128 = pneg %p29
      $region26: #{upconv_apply.9} parent=23 // pred_check_branch
        %130 = sbr.rel (%p128) target = $region28
      $region27: #{upconv_apply.9} parent=23 // pred_region
        %p131 = scmp.lt.s32.totalorder %s9, 15
        %s132 = scalar_select %p131, %s9, 15
        %s133 = smul.addr %s132, 8
        %s134 = smul.addr %s133, 8
        %s135 = scalar_lea.vmem %s0, %s134
      $region28: #{upconv_apply.9} parent=23 // pred_fallthru
        _
    $region24: #{upconv_apply.9} parent=5 // pred_fallthru
      _
    %p136 = scmp.le.s32.totalorder 1, %s9
    %p137 = scmp.lt.s32.totalorder %s9, 17
    %p138 = pnand %p136, %p137
    %p139 = pneg %p138
    // Predicated region
    $region29: #{upconv_apply.9} parent=5 // pred_check
      _
    $region30: #{upconv_apply.9} parent=5 // pred_check_branch
      %141 = sbr.rel (%p138) target = $region32
    $region31: #{upconv_apply.9} parent=5 // pred_region
      %s142 = ssub.s32 %s9, 1
      %p143 = scmp.lt.s32.totalorder %s14, 15
      %s144 = scalar_select %p143, %s14, 15
      %s145 = smul.addr %s144, 8
      %s146 = smul.addr %s145, 8
      %s147 = scalar_lea.vmem %s0, %s146
      %p148 = pneg %p35
      %p149 = pneg %p32
      %p150 = pneg %p56
      %p151 = pneg %p53
      %p152 = pneg %p77
      %p153 = pneg %p74
      %p154 = pneg %p103
      %p155 = pneg %p100
      %p156 = scmp.lt.s32.totalorder %s14, 15
      %s157 = scalar_select %p156, %s14, 15
      %s158 = smul.addr %s157, 8
      %s159 = smul.addr %s158, 4
      %s160 = scalar_lea.vmem %s3, %s159
      %p161 = scmp.lt.s32.totalorder %s14, 15
      %s162 = scalar_select %p161, %s14, 15
      %s163 = smul.addr %s162, 8
      %s164 = smul.addr %s163, 8
      %s165 = scalar_lea.vmem %s0, %s164
      %p166 = scmp.lt.s32.totalorder %s14, 15
      %s167 = scalar_select %p166, %s14, 15
      %s168 = smul.addr %s167, 8
      %s169 = smul.addr %s168, 4
      %s170 = scalar_lea.vmem %s3, %s169
      %v171 = vld [vmem:[%s165] sm:$0xff]
      %v172 = vld [vmem:[%s165 + $0x8] sm:$0xff]
      %v173 = vld [vmem:[%s165 + $0x10] sm:$0xff]
      %v174 = vld [vmem:[%s165 + $0x18] sm:$0xff]
      %v175 = vld [vmem:[%s165 + $0x20] sm:$0xff]
      %v176 = vld [vmem:[%s165 + $0x28] sm:$0xff]
      %v177 = vld [vmem:[%s165 + $0x30] sm:$0xff]
      %v178 = vld [vmem:[%s165 + $0x38] sm:$0xff]
      %v179 = vld [vmem:[%s1] sm:$0x1]
      %v181 = vlaneseq
      %v182 = vshrl.u32 %v181, 7
      %v183 = vsub.s32 0, %v182
      %v184 = vrot.slane %v179, %v183
      %v186 = vmul.f32 %v171, %v184
      %v187 = vmul.f32 %v172, %v184
      %v188 = vmul.f32 %v173, %v184
      %v189 = vmul.f32 %v174, %v184
      %v190 = vmul.f32 %v175, %v184
      %v191 = vmul.f32 %v176, %v184
      %v192 = vmul.f32 %v177, %v184
      %v193 = vmul.f32 %v178, %v184
      %v194 = vld [vmem:[%s2] sm:$0x1]
      %v196 = vlaneseq
      %v197 = vshrl.u32 %v196, 7
      %v198 = vsub.s32 0, %v197
      %v199 = vrot.slane %v194, %v198
      %v201 = vadd.f32 %v186, %v199
      %v202 = vadd.f32 %v187, %v199
      %v203 = vadd.f32 %v188, %v199
      %v204 = vadd.f32 %v189, %v199
      %v205 = vadd.f32 %v190, %v199
      %v206 = vadd.f32 %v191, %v199
      %v207 = vadd.f32 %v192, %v199
      %v208 = vadd.f32 %v193, %v199
      %v209 = vmax.f32 %v201, 0.0
      %v210 = vmax.f32 %v202, 0.0
      %v211 = vmax.f32 %v203, 0.0
      %v212 = vmax.f32 %v204, 0.0
      %v213 = vmax.f32 %v205, 0.0
      %v214 = vmax.f32 %v206, 0.0
      %v215 = vmax.f32 %v207, 0.0
      %v216 = vmax.f32 %v208, 0.0
      %v217 = vpack.c.bf16 %v210, %v209
      %v218 = vpack.c.bf16 %v212, %v211
      %v219 = vpack.c.bf16 %v214, %v213
      %v220 = vpack.c.bf16 %v216, %v215
      %v225 = vunpack.c.l.b16 %v217
      %v226 = vunpack.c.h.b16 %v217
      %v227 = vunpack.c.l.b16 %v218
      %v228 = vunpack.c.h.b16 %v218
      %v229 = vunpack.c.l.b16 %v219
      %v230 = vunpack.c.h.b16 %v219
      %v231 = vunpack.c.l.b16 %v220
      %v232 = vunpack.c.h.b16 %v220
      %v233 = vpack.c.b16 %v225, %v225
      %v234 = vpack.c.b16 %v226, %v226
      %v235 = vpack.c.b16 %v227, %v227
      %v236 = vpack.c.b16 %v228, %v228
      %v237 = vpack.c.b16 %v229, %v229
      %v238 = vpack.c.b16 %v230, %v230
      %v239 = vpack.c.b16 %v231, %v231
      %v240 = vpack.c.b16 %v232, %v232
      %249 = vst [vmem:[%s170] sm:$0xf] %v233
      %250 = vst [vmem:[%s170 + $0x4] sm:$0xf] %v234
      %251 = vst [vmem:[%s170 + $0x8] sm:$0xf] %v235
      %252 = vst [vmem:[%s170 + $0xc] sm:$0xf] %v236
      %253 = vst [vmem:[%s170 + $0x10] sm:$0xf] %v237
      %254 = vst [vmem:[%s170 + $0x14] sm:$0xf] %v238
      %255 = vst [vmem:[%s170 + $0x18] sm:$0xf] %v239
      %256 = vst [vmem:[%s170 + $0x1c] sm:$0xf] %v240
      %p257 = scmp.lt.s32.totalorder %s14, 15
      %s258 = scalar_select %p257, %s14, 15
      %s259 = smul.addr %s258, 8
      %s260 = smul.addr %s259, 4
      %s261 = scalar_lea.vmem %s3, %s260
      // Predicated region
      $region33: #{upconv_apply.9} parent=31 // pred_check
        %p262 = pneg %p100
      $region34: #{upconv_apply.9} parent=31 // pred_check_branch
        %264 = sbr.rel (%p262) target = $region36
      $region35: #{upconv_apply.9} parent=31 // pred_region
        _
      $region36: #{upconv_apply.9} parent=31 // pred_fallthru
        _
    $region32: #{upconv_apply.9} parent=5 // pred_fallthru
      _
    %p265 = scmp.le.s32.totalorder 2, %s9
    // Predicated region
    $region37: #{upconv_apply.9} parent=5 // pred_check
      %p266 = pneg %p265
    $region38: #{upconv_apply.9} parent=5 // pred_check_branch
      %268 = sbr.rel (%p266) target = $region40
    $region39: #{upconv_apply.9} parent=5 // pred_region
      %s269 = ssub.s32 %s9, 2
      // Predicated region
      $region41: #{upconv_apply.9} parent=39 // pred_check
        %p270 = pneg %p106
      $region42: #{upconv_apply.9} parent=39 // pred_check_branch
        %272 = sbr.rel (%p270) target = $region44
      $region43: #{upconv_apply.9} parent=39 // pred_region
        %p273 = scmp.lt.s32.totalorder %s15, 15
        %s274 = scalar_select %p273, %s15, 15
        %s275 = smul.addr %s274, 8
        %s276 = smul.addr %s275, 4
        %s277 = scalar_lea.vmem %s3, %s276
      $region44: #{upconv_apply.9} parent=39 // pred_fallthru
        _
    $region40: #{upconv_apply.9} parent=5 // pred_fallthru
      _
  $region6: #{upconv_apply.9} parent=0 // loop_footer
    %s13 = sadd.s32 1, %s9
  $region7: #{upconv_apply.9} parent=0 // loop_footer_branch
    %8 = sbr.rel target = $region3
  $region8: #{upconv_apply.9} parent=0 // loop_exit
    _

// kernel: upconv_apply.11
$region0: #{upconv_apply.11}
  #allocation0 [shape = 'u32[]', space=smem, size = 0x4, offset = 0x4, fixed_abs, tag = 'smem constant byte address 0x4 - core index']
  #allocation1 [shape = 'u32[144,128]{1,0:T(1,128)}', space=vmem, size = 0x12000, scoped, tag = 'internal scratch']
  %s0 = inlined_call_operand.vmem [shape: f32[16,64,128], index: 0, kind: input, shape index: {}]
  %s1 = inlined_call_operand.vmem [shape: f32[1,128], index: 1, kind: input, shape index: {}]
  %s2 = inlined_call_operand.vmem [shape: f32[1,128], index: 2, kind: input, shape index: {}]
  %s3 = inlined_call_operand.vmem [shape: f32[16,64,128], index: 3, kind: output, shape index: {}]
  %s4 = sld [smem:[#allocation0]]
  $region45: #{upconv_apply.11} parent=0
    _
  %s6 = ssub.s32 1, %s4
  %s7 = scalar_select 0, %s6, %s4
  loop: start=0, step=1, limit=18
  $region2: #{upconv_apply.11} parent=0 // loop_pre_header
    _
  $region3: #{upconv_apply.11} parent=0 // loop_header
    %s9 = sphi 0, %s13
    %p10 = scmp.ge.s32.totalorder %s9, 18
    %s19 = sphi 0, %s21
    %s22 = sphi 0, %s19
    %s23 = sphi 0, %s22
    %s39 = sphi 0, %s23
    %s43 = sphi 0, %s43
    %s45 = sphi 0, %s43
    %s46 = sphi 0, %s45
    %s60 = sphi 0, %s46
    %s64 = sphi 0, %s64
    %s66 = sphi 0, %s64
    %s67 = sphi 0, %s66
    %s81 = sphi 0, %s67
    %s87 = sphi 0, %s89
    %s90 = sphi 0, %s87
    %s91 = sphi 0, %s90
    %s107 = sphi 0, %s91
  $region4: #{upconv_apply.11} parent=0 // loop_header_branch
    %12 = sbr.rel (%p10) target = $region8
  $region5: #{upconv_apply.11} parent=0 // loop_body
    %s14 = ssub.s32 %s9, 1
    %s15 = ssub.s32 %s9, 2
    %s16 = sadd.s32 %s9, 1
    %s17 = ssub.s32 %s9, %s16
    %p18 = scmp.eq.s32.totalorder %s17, 0
    %s20 = sadd.s32 %s19, 1
    %s21 = scalar_select %p18, %s19, %s20
    %p24 = pneg %p18
    %p25 = scmp.eq.s32.totalorder %s9, 15
    %p26 = por %p24, %p25
    %p27 = scmp.ne.s32.totalorder %s19, %s22
    %p28 = scmp.eq.s32.totalorder %s9, 0
    %p29 = por %p27, %p28
    %p30 = scmp.ne.s32.totalorder %s19, %s22
    %p31 = scmp.eq.s32.totalorder %s14, 15
    %p32 = por %p30, %p31
    %p33 = scmp.ne.s32.totalorder %s22, %s23
    %p34 = scmp.eq.s32.totalorder %s14, 0
    %p35 = por %p33, %p34
    %p36 = scmp.ne.s32.totalorder %s22, %s23
    %p37 = scmp.eq.s32.totalorder %s15, 15
    %p38 = por %p36, %p37
    %p40 = scmp.ne.s32.totalorder %s23, %s39
    %p41 = scmp.eq.s32.totalorder %s15, 0
    %p42 = por %p40, %p41
    %s44 = sadd.s32 %s43, 1
    %p47 = scmp.eq.s32.totalorder %s9, 15
    %p48 = scmp.ne.s32.totalorder %s43, %s45
    %p49 = scmp.eq.s32.totalorder %s9, 0
    %p50 = por %p48, %p49
    %p51 = scmp.ne.s32.totalorder %s43, %s45
    %p52 = scmp.eq.s32.totalorder %s14, 15
    %p53 = por %p51, %p52
    %p54 = scmp.ne.s32.totalorder %s45, %s46
    %p55 = scmp.eq.s32.totalorder %s14, 0
    %p56 = por %p54, %p55
    %p57 = scmp.ne.s32.totalorder %s45, %s46
    %p58 = scmp.eq.s32.totalorder %s15, 15
    %p59 = por %p57, %p58
    %p61 = scmp.ne.s32.totalorder %s46, %s60
    %p62 = scmp.eq.s32.totalorder %s15, 0
    %p63 = por %p61, %p62
    %s65 = sadd.s32 %s64, 1
    %p68 = scmp.eq.s32.totalorder %s9, 15
    %p69 = scmp.ne.s32.totalorder %s64, %s66
    %p70 = scmp.eq.s32.totalorder %s9, 0
    %p71 = por %p69, %p70
    %p72 = scmp.ne.s32.totalorder %s64, %s66
    %p73 = scmp.eq.s32.totalorder %s14, 15
    %p74 = por %p72, %p73
    %p75 = scmp.ne.s32.totalorder %s66, %s67
    %p76 = scmp.eq.s32.totalorder %s14, 0
    %p77 = por %p75, %p76
    %p78 = scmp.ne.s32.totalorder %s66, %s67
    %p79 = scmp.eq.s32.totalorder %s15, 15
    %p80 = por %p78, %p79
    %p82 = scmp.ne.s32.totalorder %s67, %s81
    %p83 = scmp.eq.s32.totalorder %s15, 0
    %p84 = por %p82, %p83
    %s85 = ssub.s32 %s9, %s16
    %p86 = scmp.eq.s32.totalorder %s85, 0
    %s88 = sadd.s32 %s87, 1
    %s89 = scalar_select %p86, %s87, %s88
    %p92 = pneg %p86
    %p93 = scmp.eq.s32.totalorder %s9, 15
    %p94 = por %p92, %p93
    %p95 = scmp.ne.s32.totalorder %s87, %s90
    %p96 = scmp.eq.s32.totalorder %s9, 0
    %p97 = por %p95, %p96
    %p98 = scmp.ne.s32.totalorder %s87, %s90
    %p99 = scmp.eq.s32.totalorder %s14, 15
    %p100 = por %p98, %p99
    %p101 = scmp.ne.s32.totalorder %s90, %s91
    %p102 = scmp.eq.s32.totalorder %s14, 0
    %p103 = por %p101, %p102
    %p104 = scmp.ne.s32.totalorder %s90, %s91
    %p105 = scmp.eq.s32.totalorder %s15, 15
    %p106 = por %p104, %p105
    %p108 = scmp.ne.s32.totalorder %s91, %s107
    %p109 = scmp.eq.s32.totalorder %s15, 0
    %p110 = por %p108, %p109
    %p111 = scmp.le.s32.totalorder 1, %s9
    %p112 = scmp.lt.s32.totalorder %s9, 17
    %p113 = pnand %p111, %p112
    %p114 = pneg %p113
    // Predicated region
    $region9: #{upconv_apply.11} parent=5 // pred_check
      _
    $region10: #{upconv_apply.11} parent=5 // pred_check_branch
      %116 = sbr.rel (%p113) target = $region12
    $region11: #{upconv_apply.11} parent=5 // pred_region
      %s117 = ssub.s32 %s9, 1
      // Predicated region
      $region13: #{upconv_apply.11} parent=11 // pred_check
        %p118 = pneg %p56
      $region14: #{upconv_apply.11} parent=11 // pred_check_branch
        %120 = sbr.rel (%p118) target = $region16
      $region15: #{upconv_apply.11} parent=11 // pred_region
        _
      $region16: #{upconv_apply.11} parent=11 // pred_fallthru
        _
      // Predicated region
      $region17: #{upconv_apply.11} parent=11 // pred_check
        %p121 = pneg %p77
      $region18: #{upconv_apply.11} parent=11 // pred_check_branch
        %123 = sbr.rel (%p121) target = $region20
      $region19: #{upconv_apply.11} parent=11 // pred_region
        _
      $region20: #{upconv_apply.11} parent=11 // pred_fallthru
        _
    $region12: #{upconv_apply.11} parent=5 // pred_fallthru
      _
    %p124 = scmp.lt.s32.totalorder %s9, 16
    // Predicated region
    $region21: #{upconv_apply.11} parent=5 // pred_check
      %p125 = pneg %p124
    $region22: #{upconv_apply.11} parent=5 // pred_check_branch
      %127 = sbr.rel (%p125) target = $region24
    $region23: #{upconv_apply.11} parent=5 // pred_region
      // Predicated region
      $region25: #{upconv_apply.11} parent=23 // pred_check
        %p128 = pneg %p29
      $region26: #{upconv_apply.11} parent=23 // pred_check_branch
        %130 = sbr.rel (%p128) target = $region28
      $region27: #{upconv_apply.11} parent=23 // pred_region
        %p131 = scmp.lt.s32.totalorder %s9, 15
        %s132 = scalar_select %p131, %s9, 15
        %s133 = smul.addr %s132, 8
        %s134 = smul.addr %s133, 8
        %s135 = scalar_lea.vmem %s0, %s134
      $region28: #{upconv_apply.11} parent=23 // pred_fallthru
        _
    $region24: #{upconv_apply.11} parent=5 // pred_fallthru
      _
    %p136 = scmp.le.s32.totalorder 1, %s9
    %p137 = scmp.lt.s32.totalorder %s9, 17
    %p138 = pnand %p136, %p137
    %p139 = pneg %p138
    // Predicated region
    $region29: #{upconv_apply.11} parent=5 // pred_check
      _
    $region30: #{upconv_apply.11} parent=5 // pred_check_branch
      %141 = sbr.rel (%p138) target = $region32
    $region31: #{upconv_apply.11} parent=5 // pred_region
      %s142 = ssub.s32 %s9, 1
      %p143 = scmp.lt.s32.totalorder %s14, 15
      %s144 = scalar_select %p143, %s14, 15
      %s145 = smul.addr %s144, 8
      %s146 = smul.addr %s145, 8
      %s147 = scalar_lea.vmem %s0, %s146
      %p148 = pneg %p35
      %p149 = pneg %p32
      %p150 = pneg %p56
      %p151 = pneg %p53
      %p152 = pneg %p77
      %p153 = pneg %p74
      %p154 = pneg %p103
      %p155 = pneg %p100
      %p156 = scmp.lt.s32.totalorder %s14, 15
      %s157 = scalar_select %p156, %s14, 15
      %s158 = smul.addr %s157, 8
      %s159 = smul.addr %s158, 8
      %s160 = scalar_lea.vmem %s3, %s159
      %p161 = scmp.lt.s32.totalorder %s14, 15
      %s162 = scalar_select %p161, %s14, 15
      %s163 = smul.addr %s162, 8
      %s164 = smul.addr %s163, 8
      %s165 = scalar_lea.vmem %s0, %s164
      %p166 = scmp.lt.s32.totalorder %s14, 15
      %s167 = scalar_select %p166, %s14, 15
      %s168 = smul.addr %s167, 8
      %s169 = smul.addr %s168, 8
      %s170 = scalar_lea.vmem %s3, %s169
      %v171 = vld [vmem:[%s165] sm:$0xff]
      %v172 = vld [vmem:[%s165 + $0x8] sm:$0xff]
      %v173 = vld [vmem:[%s165 + $0x10] sm:$0xff]
      %v174 = vld [vmem:[%s165 + $0x18] sm:$0xff]
      %v175 = vld [vmem:[%s165 + $0x20] sm:$0xff]
      %v176 = vld [vmem:[%s165 + $0x28] sm:$0xff]
      %v177 = vld [vmem:[%s165 + $0x30] sm:$0xff]
      %v178 = vld [vmem:[%s165 + $0x38] sm:$0xff]
      %v179 = vld [vmem:[%s1] sm:$0x1]
      %v181 = vlaneseq
      %v182 = vshrl.u32 %v181, 7
      %v183 = vsub.s32 0, %v182
      %v184 = vrot.slane %v179, %v183
      %v186 = vmul.f32 %v171, %v184
      %v187 = vmul.f32 %v172, %v184
      %v188 = vmul.f32 %v173, %v184
      %v189 = vmul.f32 %v174, %v184
      %v190 = vmul.f32 %v175, %v184
      %v191 = vmul.f32 %v176, %v184
      %v192 = vmul.f32 %v177, %v184
      %v193 = vmul.f32 %v178, %v184
      %v194 = vld [vmem:[%s2] sm:$0x1]
      %v196 = vlaneseq
      %v197 = vshrl.u32 %v196, 7
      %v198 = vsub.s32 0, %v197
      %v199 = vrot.slane %v194, %v198
      %v201 = vadd.f32 %v186, %v199
      %v202 = vadd.f32 %v187, %v199
      %v203 = vadd.f32 %v188, %v199
      %v204 = vadd.f32 %v189, %v199
      %v205 = vadd.f32 %v190, %v199
      %v206 = vadd.f32 %v191, %v199
      %v207 = vadd.f32 %v192, %v199
      %v208 = vadd.f32 %v193, %v199
      %v209 = vmax.f32 %v201, 0.0
      %v210 = vmax.f32 %v202, 0.0
      %v211 = vmax.f32 %v203, 0.0
      %v212 = vmax.f32 %v204, 0.0
      %v213 = vmax.f32 %v205, 0.0
      %v214 = vmax.f32 %v206, 0.0
      %v215 = vmax.f32 %v207, 0.0
      %v216 = vmax.f32 %v208, 0.0
      %217 = vst [vmem:[%s170] sm:$0xff] %v209
      %218 = vst [vmem:[%s170 + $0x8] sm:$0xff] %v210
      %219 = vst [vmem:[%s170 + $0x10] sm:$0xff] %v211
      %220 = vst [vmem:[%s170 + $0x18] sm:$0xff] %v212
      %221 = vst [vmem:[%s170 + $0x20] sm:$0xff] %v213
      %222 = vst [vmem:[%s170 + $0x28] sm:$0xff] %v214
      %223 = vst [vmem:[%s170 + $0x30] sm:$0xff] %v215
      %224 = vst [vmem:[%s170 + $0x38] sm:$0xff] %v216
      %p225 = scmp.lt.s32.totalorder %s14, 15
      %s226 = scalar_select %p225, %s14, 15
      %s227 = smul.addr %s226, 8
      %s228 = smul.addr %s227, 8
      %s229 = scalar_lea.vmem %s3, %s228
      // Predicated region
      $region33: #{upconv_apply.11} parent=31 // pred_check
        %p230 = pneg %p100
      $region34: #{upconv_apply.11} parent=31 // pred_check_branch
        %232 = sbr.rel (%p230) target = $region36
      $region35: #{upconv_apply.11} parent=31 // pred_region
        _
      $region36: #{upconv_apply.11} parent=31 // pred_fallthru
        _
    $region32: #{upconv_apply.11} parent=5 // pred_fallthru
      _
    %p233 = scmp.le.s32.totalorder 2, %s9
    // Predicated region
    $region37: #{upconv_apply.11} parent=5 // pred_check
      %p234 = pneg %p233
    $region38: #{upconv_apply.11} parent=5 // pred_check_branch
      %236 = sbr.rel (%p234) target = $region40
    $region39: #{upconv_apply.11} parent=5 // pred_region
      %s237 = ssub.s32 %s9, 2
      // Predicated region
      $region41: #{upconv_apply.11} parent=39 // pred_check
        %p238 = pneg %p106
      $region42: #{upconv_apply.11} parent=39 // pred_check_branch
        %240 = sbr.rel (%p238) target = $region44
      $region43: #{upconv_apply.11} parent=39 // pred_region
        %p241 = scmp.lt.s32.totalorder %s15, 15
        %s242 = scalar_select %p241, %s15, 15
        %s243 = smul.addr %s242, 8
        %s244 = smul.addr %s243, 8
        %s245 = scalar_lea.vmem %s3, %s244
      $region44: #{upconv_apply.11} parent=39 // pred_fallthru
        _
    $region40: #{upconv_apply.11} parent=5 // pred_fallthru
      _
  $region6: #{upconv_apply.11} parent=0 // loop_footer
    %s13 = sadd.s32 1, %s9
  $region7: #{upconv_apply.11} parent=0 // loop_footer_branch
    %8 = sbr.rel target = $region3
  $region8: #{upconv_apply.11} parent=0 // loop_exit
    _

// kernel: upconv_apply.8
$region0: #{upconv_apply.8}
  #allocation0 [shape = 'u32[]', space=smem, size = 0x4, offset = 0x4, fixed_abs, tag = 'smem constant byte address 0x4 - core index']
  #allocation1 [shape = 'u32[144,128]{1,0:T(1,128)}', space=vmem, size = 0x12000, scoped, tag = 'internal scratch']
  %s0 = inlined_call_operand.vmem [shape: bf16[20,10,10,128], index: 0, kind: input, shape index: {}, may-alias: {0,1,2}]
  %s1 = inlined_call_operand.vmem [shape: bf16[20,10,10,128], index: 1, kind: input, shape index: {}, may-alias: {0,1,2}]
  %s2 = inlined_call_operand.vmem [shape: bf16[20,10,10,128], index: 2, kind: input, shape index: {}, may-alias: {0,1,2}]
  %s3 = inlined_call_operand.vmem [shape: bf16[27,128,128], index: 3, kind: input, shape index: {}]
  %s4 = inlined_call_operand.vmem [shape: f32[16,64,128], index: 4, kind: output, shape index: {0}]
  %s5 = inlined_call_operand.vmem [shape: f32[2,2,128], index: 5, kind: output, shape index: {1}]
  %6 = xla_tuple %s4, %s5
  %s7 = sld [smem:[#allocation0]]
  $region61: #{upconv_apply.8} parent=0
    _
  %s9 = ssub.s32 1, %s7
  %s10 = scalar_select 0, %s9, %s7
  loop: start=0, step=1, limit=18
  $region2: #{upconv_apply.8} parent=0 // loop_pre_header
    _
  $region3: #{upconv_apply.8} parent=0 // loop_header
    %s12 = sphi 0, %s16
    %p13 = scmp.ge.s32.totalorder %s12, 18
    %s19 = sphi 0, %s31
    %s20 = sphi 0, %s27
    %s21 = sphi 0, %s19
    %s22 = sphi 0, %s20
    %s23 = sphi 0, %s21
    %s24 = sphi 0, %s22
    %s38 = sphi 0, %s40
    %s41 = sphi 0, %s38
    %s42 = sphi 0, %s41
    %s58 = sphi 0, %s42
    %s70 = sphi 0, %s72
    %s73 = sphi 0, %s70
    %s74 = sphi 0, %s73
    %s90 = sphi 0, %s74
    %s102 = sphi 0, %s104
    %s105 = sphi 0, %s102
    %s106 = sphi 0, %s105
    %s122 = sphi 0, %s106
    %s126 = sphi 0, %s126
    %s128 = sphi 0, %s126
    %s129 = sphi 0, %s128
    %s143 = sphi 0, %s129
    %s153 = sphi 0, %s155
    %s156 = sphi 0, %s153
    %s157 = sphi 0, %s156
    %s173 = sphi 0, %s157
    %s179 = sphi 0, %s181
    %s182 = sphi 0, %s179
    %s183 = sphi 0, %s182
    %s199 = sphi 0, %s183
  $region4: #{upconv_apply.8} parent=0 // loop_header_branch
    %15 = sbr.rel (%p13) target = $region8
  $region5: #{upconv_apply.8} parent=0 // loop_body
    %s17 = ssub.s32 %s12, 1
    %s18 = ssub.s32 %s12, 2
    %s25 = sadd.s32 1, %s20
    %p26 = scmp.ge.s32.totalorder %s25, 8
    %s27 = scalar_select %p26, 0, %s25
    %s28 = sadd.s32 1, %s19
    %s29 = scalar_select %p26, %s28, %s19
    %p30 = scmp.ge.s32.totalorder %s29, 2
    %s31 = scalar_select %p30, 0, %s29
    %s32 = smul.u32 %s19, 10
    %s33 = sadd.s32 %s32, %s20
    %s34 = smul.u32 %s31, 10
    %s35 = sadd.s32 %s34, %s27
    %s36 = ssub.s32 %s33, %s35
    %p37 = scmp.eq.s32.totalorder %s36, 0
    %s39 = sadd.s32 %s38, 1
    %s40 = scalar_select %p37, %s38, %s39
    %p43 = pneg %p37
    %p44 = scmp.eq.s32.totalorder %s12, 15
    %p45 = por %p43, %p44
    %p46 = scmp.ne.s32.totalorder %s38, %s41
    %p47 = scmp.eq.s32.totalorder %s12, 0
    %p48 = por %p46, %p47
    %p49 = scmp.ne.s32.totalorder %s38, %s41
    %p50 = scmp.eq.s32.totalorder %s17, 15
    %p51 = por %p49, %p50
    %p52 = scmp.ne.s32.totalorder %s41, %s42
    %p53 = scmp.eq.s32.totalorder %s17, 0
    %p54 = por %p52, %p53
    %p55 = scmp.ne.s32.totalorder %s41, %s42
    %p56 = scmp.eq.s32.totalorder %s18, 15
    %p57 = por %p55, %p56
    %p59 = scmp.ne.s32.totalorder %s42, %s58
    %p60 = scmp.eq.s32.totalorder %s18, 0
    %p61 = por %p59, %p60
    %s62 = smul.u32 %s19, 10
    %s63 = sadd.s32 %s62, %s20
    %s64 = sadd.s32 %s63, 1
    %s65 = smul.u32 %s31, 10
    %s66 = sadd.s32 %s65, %s27
    %s67 = sadd.s32 %s66, 1
    %s68 = ssub.s32 %s64, %s67
    %p69 = scmp.eq.s32.totalorder %s68, 0
    %s71 = sadd.s32 %s70, 1
    %s72 = scalar_select %p69, %s70, %s71
    %p75 = pneg %p69
    %p76 = scmp.eq.s32.totalorder %s12, 15
    %p77 = por %p75, %p76
    %p78 = scmp.ne.s32.totalorder %s70, %s73
    %p79 = scmp.eq.s32.totalorder %s12, 0
    %p80 = por %p78, %p79
    %p81 = scmp.ne.s32.totalorder %s70, %s73
    %p82 = scmp.eq.s32.totalorder %s17, 15
    %p83 = por %p81, %p82
    %p84 = scmp.ne.s32.totalorder %s73, %s74
    %p85 = scmp.eq.s32.totalorder %s17, 0
    %p86 = por %p84, %p85
    %p87 = scmp.ne.s32.totalorder %s73, %s74
    %p88 = scmp.eq.s32.totalorder %s18, 15
    %p89 = por %p87, %p88
    %p91 = scmp.ne.s32.totalorder %s74, %s90
    %p92 = scmp.eq.s32.totalorder %s18, 0
    %p93 = por %p91, %p92
    %s94 = smul.u32 %s19, 10
    %s95 = sadd.s32 %s94, %s20
    %s96 = sadd.s32 %s95, 2
    %s97 = smul.u32 %s31, 10
    %s98 = sadd.s32 %s97, %s27
    %s99 = sadd.s32 %s98, 2
    %s100 = ssub.s32 %s96, %s99
    %p101 = scmp.eq.s32.totalorder %s100, 0
    %s103 = sadd.s32 %s102, 1
    %s104 = scalar_select %p101, %s102, %s103
    %p107 = pneg %p101
    %p108 = scmp.eq.s32.totalorder %s12, 15
    %p109 = por %p107, %p108
    %p110 = scmp.ne.s32.totalorder %s102, %s105
    %p111 = scmp.eq.s32.totalorder %s12, 0
    %p112 = por %p110, %p111
    %p113 = scmp.ne.s32.totalorder %s102, %s105
    %p114 = scmp.eq.s32.totalorder %s17, 15
    %p115 = por %p113, %p114
    %p116 = scmp.ne.s32.totalorder %s105, %s106
    %p117 = scmp.eq.s32.totalorder %s17, 0
    %p118 = por %p116, %p117
    %p119 = scmp.ne.s32.totalorder %s105, %s106
    %p120 = scmp.eq.s32.totalorder %s18, 15
    %p121 = por %p119, %p120
    %p123 = scmp.ne.s32.totalorder %s106, %s122
    %p124 = scmp.eq.s32.totalorder %s18, 0
    %p125 = por %p123, %p124
    %s127 = sadd.s32 %s126, 1
    %p130 = scmp.eq.s32.totalorder %s12, 15
    %p131 = scmp.ne.s32.totalorder %s126, %s128
    %p132 = scmp.eq.s32.totalorder %s12, 0
    %p133 = por %p131, %p132
    %p134 = scmp.ne.s32.totalorder %s126, %s128
    %p135 = scmp.eq.s32.totalorder %s17, 15
    %p136 = por %p134, %p135
    %p137 = scmp.ne.s32.totalorder %s128, %s129
    %p138 = scmp.eq.s32.totalorder %s17, 0
    %p139 = por %p137, %p138
    %p140 = scmp.ne.s32.totalorder %s128, %s129
    %p141 = scmp.eq.s32.totalorder %s18, 15
    %p142 = por %p140, %p141
    %p144 = scmp.ne.s32.totalorder %s129, %s143
    %p145 = scmp.eq.s32.totalorder %s18, 0
    %p146 = por %p144, %p145
    %s147 = smul.u32 %s19, 8
    %s148 = sadd.s32 %s147, %s20
    %s149 = smul.u32 %s31, 8
    %s150 = sadd.s32 %s149, %s27
    %s151 = ssub.s32 %s148, %s150
    %p152 = scmp.eq.s32.totalorder %s151, 0
    %s154 = sadd.s32 %s153, 1
    %s155 = scalar_select %p152, %s153, %s154
    %p158 = pneg %p152
    %p159 = scmp.eq.s32.totalorder %s12, 15
    %p160 = por %p158, %p159
    %p161 = scmp.ne.s32.totalorder %s153, %s156
    %p162 = scmp.eq.s32.totalorder %s12, 0
    %p163 = por %p161, %p162
    %p164 = scmp.ne.s32.totalorder %s153, %s156
    %p165 = scmp.eq.s32.totalorder %s17, 15
    %p166 = por %p164, %p165
    %p167 = scmp.ne.s32.totalorder %s156, %s157
    %p168 = scmp.eq.s32.totalorder %s17, 0
    %p169 = por %p167, %p168
    %p170 = scmp.ne.s32.totalorder %s156, %s157
    %p171 = scmp.eq.s32.totalorder %s18, 15
    %p172 = por %p170, %p171
    %p174 = scmp.ne.s32.totalorder %s157, %s173
    %p175 = scmp.eq.s32.totalorder %s18, 0
    %p176 = por %p174, %p175
    %s177 = ssub.s32 %s19, %s31
    %p178 = scmp.eq.s32.totalorder %s177, 0
    %s180 = sadd.s32 %s179, 1
    %s181 = scalar_select %p178, %s179, %s180
    %p184 = pneg %p178
    %p185 = scmp.eq.s32.totalorder %s12, 15
    %p186 = por %p184, %p185
    %p187 = scmp.ne.s32.totalorder %s179, %s182
    %p188 = scmp.eq.s32.totalorder %s12, 0
    %p189 = por %p187, %p188
    %p190 = scmp.ne.s32.totalorder %s179, %s182
    %p191 = scmp.eq.s32.totalorder %s17, 15
    %p192 = por %p190, %p191
    %p193 = scmp.ne.s32.totalorder %s182, %s183
    %p194 = scmp.eq.s32.totalorder %s17, 0
    %p195 = por %p193, %p194
    %p196 = scmp.ne.s32.totalorder %s182, %s183
    %p197 = scmp.eq.s32.totalorder %s18, 15
    %p198 = por %p196, %p197
    %p200 = scmp.ne.s32.totalorder %s183, %s199
    %p201 = scmp.eq.s32.totalorder %s18, 0
    %p202 = por %p200, %p201
    %p203 = scmp.le.s32.totalorder 1, %s12
    %p204 = scmp.lt.s32.totalorder %s12, 17
    %p205 = pnand %p203, %p204
    %p206 = pneg %p205
    // Predicated region
    $region9: #{upconv_apply.8} parent=5 // pred_check
      _
    $region10: #{upconv_apply.8} parent=5 // pred_check_branch
      %208 = sbr.rel (%p205) target = $region12
    $region11: #{upconv_apply.8} parent=5 // pred_region
      %s209 = ssub.s32 %s12, 1
      // Predicated region
      $region13: #{upconv_apply.8} parent=11 // pred_check
        %p210 = pneg %p139
      $region14: #{upconv_apply.8} parent=11 // pred_check_branch
        %212 = sbr.rel (%p210) target = $region16
      $region15: #{upconv_apply.8} parent=11 // pred_region
        _
      $region16: #{upconv_apply.8} parent=11 // pred_fallthru
        _
    $region12: #{upconv_apply.8} parent=5 // pred_fallthru
      _
    %p213 = scmp.lt.s32.totalorder %s12, 16
    // Predicated region
    $region17: #{upconv_apply.8} parent=5 // pred_check
      %p214 = pneg %p213
    $region18: #{upconv_apply.8} parent=5 // pred_check_branch
      %216 = sbr.rel (%p214) target = $region20
    $region19: #{upconv_apply.8} parent=5 // pred_region
      // Predicated region
      $region21: #{upconv_apply.8} parent=19 // pred_check
        %p217 = pneg %p48
      $region22: #{upconv_apply.8} parent=19 // pred_check_branch
        %219 = sbr.rel (%p217) target = $region24
      $region23: #{upconv_apply.8} parent=19 // pred_region
        %s220 = smul.u32 %s19, 10
        %s221 = sadd.s32 %s220, %s20
        %p222 = scmp.lt.s32.totalorder %s221, 19
        %s223 = scalar_select %p222, %s221, 19
        %s224 = smul.addr %s223, 20
        %s225 = smul.addr %s224, 4
        %s226 = scalar_lea.vmem %s0, %s225
        %s227 = smul.u32 %s19, 10
        %s228 = sadd.s32 %s227, %s20
      $region24: #{upconv_apply.8} parent=19 // pred_fallthru
        _
      // Predicated region
      $region25: #{upconv_apply.8} parent=19 // pred_check
        %p229 = pneg %p80
      $region26: #{upconv_apply.8} parent=19 // pred_check_branch
        %231 = sbr.rel (%p229) target = $region28
      $region27: #{upconv_apply.8} parent=19 // pred_region
        %s232 = smul.u32 %s19, 10
        %s233 = sadd.s32 %s232, %s20
        %s234 = sadd.s32 %s233, 1
        %p235 = scmp.lt.s32.totalorder %s234, 19
        %s236 = scalar_select %p235, %s234, 19
        %s237 = smul.addr %s236, 20
        %s238 = smul.addr %s237, 4
        %s239 = scalar_lea.vmem %s1, %s238
        %s240 = smul.u32 %s19, 10
        %s241 = sadd.s32 %s240, %s20
        %s242 = sadd.s32 %s241, 1
      $region28: #{upconv_apply.8} parent=19 // pred_fallthru
        _
      // Predicated region
      $region29: #{upconv_apply.8} parent=19 // pred_check
        %p243 = pneg %p112
      $region30: #{upconv_apply.8} parent=19 // pred_check_branch
        %245 = sbr.rel (%p243) target = $region32
      $region31: #{upconv_apply.8} parent=19 // pred_region
        %s246 = smul.u32 %s19, 10
        %s247 = sadd.s32 %s246, %s20
        %s248 = sadd.s32 %s247, 2
        %p249 = scmp.lt.s32.totalorder %s248, 19
        %s250 = scalar_select %p249, %s248, 19
        %s251 = smul.addr %s250, 20
        %s252 = smul.addr %s251, 4
        %s253 = scalar_lea.vmem %s2, %s252
        %s254 = smul.u32 %s19, 10
        %s255 = sadd.s32 %s254, %s20
        %s256 = sadd.s32 %s255, 2
      $region32: #{upconv_apply.8} parent=19 // pred_fallthru
        _
    $region20: #{upconv_apply.8} parent=5 // pred_fallthru
      _
    %p257 = scmp.le.s32.totalorder 1, %s12
    %p258 = scmp.lt.s32.totalorder %s12, 17
    %p259 = pnand %p257, %p258
    %p260 = pneg %p259
    // Predicated region
    $region33: #{upconv_apply.8} parent=5 // pred_check
      _
    $region34: #{upconv_apply.8} parent=5 // pred_check_branch
      %262 = sbr.rel (%p259) target = $region36
    $region35: #{upconv_apply.8} parent=5 // pred_region
      %s263 = ssub.s32 %s12, 1
      %s264 = smul.u32 %s21, 10
      %s265 = sadd.s32 %s264, %s22
      %p266 = scmp.lt.s32.totalorder %s265, 19
      %s267 = scalar_select %p266, %s265, 19
      %s268 = smul.addr %s267, 20
      %s269 = smul.addr %s268, 4
      %s270 = scalar_lea.vmem %s0, %s269
      %p271 = pneg %p54
      %p272 = pneg %p51
      %s273 = smul.u32 %s21, 10
      %s274 = sadd.s32 %s273, %s22
      %s275 = sadd.s32 %s274, 1
      %p276 = scmp.lt.s32.totalorder %s275, 19
      %s277 = scalar_select %p276, %s275, 19
      %s278 = smul.addr %s277, 20
      %s279 = smul.addr %s278, 4
      %s280 = scalar_lea.vmem %s1, %s279
      %p281 = pneg %p86
      %p282 = pneg %p83
      %s283 = smul.u32 %s21, 10
      %s284 = sadd.s32 %s283, %s22
      %s285 = sadd.s32 %s284, 2
      %p286 = scmp.lt.s32.totalorder %s285, 19
      %s287 = scalar_select %p286, %s285, 19
      %s288 = smul.addr %s287, 20
      %s289 = smul.addr %s288, 4
      %s290 = scalar_lea.vmem %s2, %s289
      %p291 = pneg %p118
      %p292 = pneg %p115
      %p293 = pneg %p139
      %p294 = pneg %p136
      %p295 = pneg %p169
      %p296 = pneg %p166
      %s297 = smul.u32 %s21, 8
      %s298 = sadd.s32 %s297, %s22
      %p299 = scmp.lt.s32.totalorder %s298, 15
      %s300 = scalar_select %p299, %s298, 15
      %s301 = smul.addr %s300, 8
      %s302 = smul.addr %s301, 8
      %s303 = scalar_lea.vmem %s4, %s302
      %p304 = pneg %p195
      %p305 = pneg %p192
      %p306 = scmp.lt.s32.totalorder %s21, 1
      %s307 = scalar_select %p306, %s21, 1
      %s308 = smul.addr %s307, 2
      %s309 = scalar_lea.vmem %s5, %s308
      %s310 = smul.u32 %s21, 10
      %s311 = sadd.s32 %s310, %s22
      %p312 = scmp.lt.s32.totalorder %s311, 19
      %s313 = scalar_select %p312, %s311, 19
      %s314 = smul.addr %s313, 20
      %s315 = smul.addr %s314, 4
      %s316 = scalar_lea.vmem %s0, %s315
      %s317 = smul.u32 %s21, 10
      %s318 = sadd.s32 %s317, %s22
      %s319 = smul.u32 %s21, 10
      %s320 = sadd.s32 %s319, %s22
      %s321 = sadd.s32 %s320, 1
      %p322 = scmp.lt.s32.totalorder %s321, 19
      %s323 = scalar_select %p322, %s321, 19
      %s324 = smul.addr %s323, 20
      %s325 = smul.addr %s324, 4
      %s326 = scalar_lea.vmem %s1, %s325
      %s327 = smul.u32 %s21, 10
      %s328 = sadd.s32 %s327, %s22
      %s329 = sadd.s32 %s328, 1
      %s330 = smul.u32 %s21, 10
      %s331 = sadd.s32 %s330, %s22
      %s332 = sadd.s32 %s331, 2
      %p333 = scmp.lt.s32.totalorder %s332, 19
      %s334 = scalar_select %p333, %s332, 19
      %s335 = smul.addr %s334, 20
      %s336 = smul.addr %s335, 4
      %s337 = scalar_lea.vmem %s2, %s336
      %s338 = smul.u32 %s21, 10
      %s339 = sadd.s32 %s338, %s22
      %s340 = sadd.s32 %s339, 2
      %s341 = smul.u32 %s21, 8
      %s342 = sadd.s32 %s341, %s22
      %p343 = scmp.lt.s32.totalorder %s342, 15
      %s344 = scalar_select %p343, %s342, 15
      %s345 = smul.addr %s344, 8
      %s346 = smul.addr %s345, 8
      %s347 = scalar_lea.vmem %s4, %s346
      %s348 = smul.u32 %s21, 8
      %s349 = sadd.s32 %s348, %s22
      %p350 = scmp.lt.s32.totalorder %s21, 1
      %s351 = scalar_select %p350, %s21, 1
      %s352 = smul.addr %s351, 2
      %s353 = scalar_lea.vmem %s5, %s352
      %v355 = vld [vmem:[%s316] sm:$0xf]
      %v356 = vld [vmem:[%s316 + $0x4] sm:$0x1]
      %v357 = vld [vmem:[%s316 + $0x8] sm:$0xf]
      %v358 = vld [vmem:[%s316 + $0xc] sm:$0x1]
      %v359 = vld [vmem:[%s316 + $0x10] sm:$0xf]
      %v360 = vld [vmem:[%s316 + $0x14] sm:$0x1]
      %v361 = vld [vmem:[%s316 + $0x18] sm:$0xf]
      %v362 = vld [vmem:[%s316 + $0x1c] sm:$0x1]
      %v363 = vld [vmem:[%s316 + $0x20] sm:$0xf]
      %v364 = vld [vmem:[%s316 + $0x24] sm:$0x1]
      %v365 = vld [vmem:[%s316 + $0x28] sm:$0xf]
      %v366 = vld [vmem:[%s316 + $0x2c] sm:$0x1]
      %v367 = vld [vmem:[%s316 + $0x30] sm:$0xf]
      %v368 = vld [vmem:[%s316 + $0x34] sm:$0x1]
      %v369 = vld [vmem:[%s316 + $0x38] sm:$0xf]
      %v370 = vld [vmem:[%s316 + $0x3c] sm:$0x1]
      %v371 = vld [vmem:[%s316 + $0x40] sm:$0xf]
      %v372 = vld [vmem:[%s316 + $0x44] sm:$0x1]
      %v373 = vld [vmem:[%s316 + $0x48] sm:$0xf]
      %v374 = vld [vmem:[%s316 + $0x4c] sm:$0x1]
      %v375 = vld [vmem:[%s326] sm:$0xf]
      %v376 = vld [vmem:[%s326 + $0x4] sm:$0x1]
      %v377 = vld [vmem:[%s326 + $0x8] sm:$0xf]
      %v378 = vld [vmem:[%s326 + $0xc] sm:$0x1]
      %v379 = vld [vmem:[%s326 + $0x10] sm:$0xf]
      %v380 = vld [vmem:[%s326 + $0x14] sm:$0x1]
      %v381 = vld [vmem:[%s326 + $0x18] sm:$0xf]
      %v382 = vld [vmem:[%s326 + $0x1c] sm:$0x1]
      %v383 = vld [vmem:[%s326 + $0x20] sm:$0xf]
      %v384 = vld [vmem:[%s326 + $0x24] sm:$0x1]
      %v385 = vld [vmem:[%s326 + $0x28] sm:$0xf]
      %v386 = vld [vmem:[%s326 + $0x2c] sm:$0x1]
      %v387 = vld [vmem:[%s326 + $0x30] sm:$0xf]
      %v388 = vld [vmem:[%s326 + $0x34] sm:$0x1]
      %v389 = vld [vmem:[%s326 + $0x38] sm:$0xf]
      %v390 = vld [vmem:[%s326 + $0x3c] sm:$0x1]
      %v391 = vld [vmem:[%s326 + $0x40] sm:$0xf]
      %v392 = vld [vmem:[%s326 + $0x44] sm:$0x1]
      %v393 = vld [vmem:[%s326 + $0x48] sm:$0xf]
      %v394 = vld [vmem:[%s326 + $0x4c] sm:$0x1]
      %v395 = vld [vmem:[%s337] sm:$0xf]
      %v396 = vld [vmem:[%s337 + $0x4] sm:$0x1]
      %v397 = vld [vmem:[%s337 + $0x8] sm:$0xf]
      %v398 = vld [vmem:[%s337 + $0xc] sm:$0x1]
      %v399 = vld [vmem:[%s337 + $0x10] sm:$0xf]
      %v400 = vld [vmem:[%s337 + $0x14] sm:$0x1]
      %v401 = vld [vmem:[%s337 + $0x18] sm:$0xf]
      %v402 = vld [vmem:[%s337 + $0x1c] sm:$0x1]
      %v403 = vld [vmem:[%s337 + $0x20] sm:$0xf]
      %v404 = vld [vmem:[%s337 + $0x24] sm:$0x1]
      %v405 = vld [vmem:[%s337 + $0x28] sm:$0xf]
      %v406 = vld [vmem:[%s337 + $0x2c] sm:$0x1]
      %v407 = vld [vmem:[%s337 + $0x30] sm:$0xf]
      %v408 = vld [vmem:[%s337 + $0x34] sm:$0x1]
      %v409 = vld [vmem:[%s337 + $0x38] sm:$0xf]
      %v410 = vld [vmem:[%s337 + $0x3c] sm:$0x1]
      %v411 = vld [vmem:[%s337 + $0x40] sm:$0xf]
      %v412 = vld [vmem:[%s337 + $0x44] sm:$0x1]
      %v413 = vld [vmem:[%s337 + $0x48] sm:$0xf]
      %v414 = vld [vmem:[%s337 + $0x4c] sm:$0x1]
      %v415 = vld [vmem:[%s3] sm:$0xf]
      %v416 = vld [vmem:[%s3 + $0x4] sm:$0xf]
      %v417 = vld [vmem:[%s3 + $0x8] sm:$0xf]
      %v418 = vld [vmem:[%s3 + $0xc] sm:$0xf]
      %v419 = vld [vmem:[%s3 + $0x10] sm:$0xf]
      %v420 = vld [vmem:[%s3 + $0x14] sm:$0xf]
      %v421 = vld [vmem:[%s3 + $0x18] sm:$0xf]
      %v422 = vld [vmem:[%s3 + $0x1c] sm:$0xf]
      %v423 = vld [vmem:[%s3 + $0x20] sm:$0xf]
      %v424 = vld [vmem:[%s3 + $0x24] sm:$0xf]
      %v425 = vld [vmem:[%s3 + $0x28] sm:$0xf]
      %v426 = vld [vmem:[%s3 + $0x2c] sm:$0xf]
      %v427 = vld [vmem:[%s3 + $0x30] sm:$0xf]
      %v428 = vld [vmem:[%s3 + $0x34] sm:$0xf]
      %v429 = vld [vmem:[%s3 + $0x38] sm:$0xf]
      %v430 = vld [vmem:[%s3 + $0x3c] sm:$0xf]
      %vm431 = vsmask.f32 3328
      %vm432 = vsmask.f32 7440
      %vm433 = vmor %vm431, %vm432
      %v435 = vshrl.u32 %v355, 16
      %v437 = vrot.slane %v435, 4
      %v438 = vshll.u32 %v355, 16
      %v440 = vrot.slane %v438, 5
      %v441 = vor.u32 %v437, %v440
      %v442 = vrot.slane %v441, 4
      %v444 = vshll.u32 %v356, 16
      %v446 = vrot.slane %v444, 5
      %v447 = vsel %vm433, %v442, %v446
      %v449 = vshrl.u32 %v357, 16
      %v451 = vrot.slane %v449, 4
      %v452 = vshll.u32 %v357, 16
      %v454 = vrot.slane %v452, 5
      %v455 = vor.u32 %v451, %v454
      %v456 = vrot.slane %v455, 4
      %v458 = vshll.u32 %v358, 16
      %v460 = vrot.slane %v458, 5
      %v461 = vsel %vm433, %v456, %v460
      %v463 = vshrl.u32 %v359, 16
      %v465 = vrot.slane %v463, 4
      %v466 = vshll.u32 %v359, 16
      %v468 = vrot.slane %v466, 5
      %v469 = vor.u32 %v465, %v468
      %v470 = vrot.slane %v469, 4
      %v472 = vshll.u32 %v360, 16
      %v474 = vrot.slane %v472, 5
      %v475 = vsel %vm433, %v470, %v474
      %v477 = vshrl.u32 %v361, 16
      %v479 = vrot.slane %v477, 4
      %v480 = vshll.u32 %v361, 16
      %v482 = vrot.slane %v480, 5
      %v483 = vor.u32 %v479, %v482
      %v484 = vrot.slane %v483, 4
      %v486 = vshll.u32 %v362, 16
      %v488 = vrot.slane %v486, 5
      %v489 = vsel %vm433, %v484, %v488
      %v491 = vshrl.u32 %v363, 16
      %v493 = vrot.slane %v491, 4
      %v494 = vshll.u32 %v363, 16
      %v496 = vrot.slane %v494, 5
      %v497 = vor.u32 %v493, %v496
      %v498 = vrot.slane %v497, 4
      %v500 = vshll.u32 %v364, 16
      %v502 = vrot.slane %v500, 5
      %v503 = vsel %vm433, %v498, %v502
      %v505 = vshrl.u32 %v365, 16
      %v507 = vrot.slane %v505, 4
      %v508 = vshll.u32 %v365, 16
      %v510 = vrot.slane %v508, 5
      %v511 = vor.u32 %v507, %v510
      %v512 = vrot.slane %v511, 4
      %v514 = vshll.u32 %v366, 16
      %v516 = vrot.slane %v514, 5
      %v517 = vsel %vm433, %v512, %v516
      %v519 = vshrl.u32 %v367, 16
      %v521 = vrot.slane %v519, 4
      %v522 = vshll.u32 %v367, 16
      %v524 = vrot.slane %v522, 5
      %v525 = vor.u32 %v521, %v524
      %v526 = vrot.slane %v525, 4
      %v528 = vshll.u32 %v368, 16
      %v530 = vrot.slane %v528, 5
      %v531 = vsel %vm433, %v526, %v530
      %v533 = vshrl.u32 %v369, 16
      %v535 = vrot.slane %v533, 4
      %v536 = vshll.u32 %v369, 16
      %v538 = vrot.slane %v536, 5
      %v539 = vor.u32 %v535, %v538
      %v540 = vrot.slane %v539, 4
      %v542 = vshll.u32 %v370, 16
      %v544 = vrot.slane %v542, 5
      %v545 = vsel %vm433, %v540, %v544
      %s546 = scalar_lea.vmem %s3, 64
      %v547 = vld [vmem:[%s546] sm:$0xf]
      %v548 = vld [vmem:[%s546 + $0x4] sm:$0xf]
      %v549 = vld [vmem:[%s546 + $0x8] sm:$0xf]
      %v550 = vld [vmem:[%s546 + $0xc] sm:$0xf]
      %v551 = vld [vmem:[%s546 + $0x10] sm:$0xf]
      %v552 = vld [vmem:[%s546 + $0x14] sm:$0xf]
      %v553 = vld [vmem:[%s546 + $0x18] sm:$0xf]
      %v554 = vld [vmem:[%s546 + $0x1c] sm:$0xf]
      %v555 = vld [vmem:[%s546 + $0x20] sm:$0xf]
      %v556 = vld [vmem:[%s546 + $0x24] sm:$0xf]
      %v557 = vld [vmem:[%s546 + $0x28] sm:$0xf]
      %v558 = vld [vmem:[%s546 + $0x2c] sm:$0xf]
      %v559 = vld [vmem:[%s546 + $0x30] sm:$0xf]
      %v560 = vld [vmem:[%s546 + $0x34] sm:$0xf]
      %v561 = vld [vmem:[%s546 + $0x38] sm:$0xf]
      %v562 = vld [vmem:[%s546 + $0x3c] sm:$0xf]
      %v563 = vunpack.c.l.b16 %v447
      %v564 = vunpack.c.l.b16 %v461
      %v565 = vunpack.c.l.b16 %v475
      %v566 = vunpack.c.l.b16 %v489
      %v567 = vunpack.c.l.b16 %v503
      %v568 = vunpack.c.l.b16 %v517
      %v569 = vunpack.c.l.b16 %v531
      %v570 = vunpack.c.l.b16 %v545
      %v571 = vpack.c.b16 %v564, %v563
      %v572 = vpack.c.b16 %v566, %v565
      %v573 = vpack.c.b16 %v568, %v567
      %v574 = vpack.c.b16 %v570, %v569
      %v595 = vunpack.c.l.b16 %v547
      %v596 = vunpack.c.l.b16 %v548
      %v597 = vunpack.c.l.b16 %v549
      %v598 = vunpack.c.l.b16 %v550
      %v599 = vunpack.c.l.b16 %v551
      %v600 = vunpack.c.l.b16 %v552
      %v601 = vunpack.c.l.b16 %v553
      %v602 = vunpack.c.l.b16 %v554
      %v603 = vunpack.c.l.b16 %v555
      %v604 = vunpack.c.l.b16 %v556
      %v605 = vunpack.c.l.b16 %v557
      %v606 = vunpack.c.l.b16 %v558
      %v607 = vunpack.c.l.b16 %v559
      %v608 = vunpack.c.l.b16 %v560
      %v609 = vunpack.c.l.b16 %v561
      %v610 = vunpack.c.l.b16 %v562
      %v611 = vpack.c.b16 %v596, %v595
      %v612 = vpack.c.b16 %v598, %v597
      %v613 = vpack.c.b16 %v600, %v599
      %v614 = vpack.c.b16 %v602, %v601
      %v615 = vpack.c.b16 %v604, %v603
      %v616 = vpack.c.b16 %v606, %v605
      %v617 = vpack.c.b16 %v608, %v607
      %v618 = vpack.c.b16 %v610, %v609
      %627 = vmatprep.subr.bf16.mxu0 0
      %628 = vmatpush1.bf16.msra.mxu0 %v611
      %629 = vmatprep.subr.bf16.mxu0 0
      %630 = vmatpush1.bf16.msra.mxu0 %v612
      %631 = vmatprep.subr.bf16.mxu0 0
      %632 = vmatpush1.bf16.msra.mxu0 %v613
      %633 = vmatprep.subr.bf16.mxu0 0
      %634 = vmatpush1.bf16.msra.mxu0 %v614
      %635 = vmatprep.subr.bf16.mxu0 0
      %636 = vmatpush1.bf16.msra.mxu0 %v615
      %637 = vmatprep.subr.bf16.mxu0 0
      %638 = vmatpush1.bf16.msra.mxu0 %v616
      %639 = vmatprep.subr.bf16.mxu0 0
      %640 = vmatpush1.bf16.msra.mxu0 %v617
      %641 = vmatprep.subr.bf16.mxu0 0
      %642 = vmatpush1.bf16.msra.mxu0 %v618
      %643 = vmatprep.subr.bf16.mxu0 0
      %644 = vmatpush1.bf16.msra.mxu0 0
      %645 = vmatprep.subr.bf16.mxu0 0
      %646 = vmatpush1.bf16.msra.mxu0 0
      %647 = vmatprep.subr.bf16.mxu0 0
      %648 = vmatpush1.bf16.msra.mxu0 0
      %649 = vmatprep.subr.bf16.mxu0 0
      %650 = vmatpush1.bf16.msra.mxu0 0
      %651 = vmatprep.subr.bf16.mxu0 0
      %652 = vmatpush1.bf16.msra.mxu0 0
      %653 = vmatprep.subr.bf16.mxu0 0
      %654 = vmatpush1.bf16.msra.mxu0 0
      %655 = vmatprep.subr.bf16.mxu0 0
      %656 = vmatpush1.bf16.msra.mxu0 0
      %657 = vmatprep.subr.bf16.mxu0 0
      %658 = vmatpush1.bf16.msra.mxu0 0
      %659 = vmatprep.mubr.bf16.mxu0 0
      %660 = vmatmul.mubr.bf16.gmra.mrb[0].mxu0 %v571
      %v661 = vpop.f32.mrb[0].mxu0
      %v662 = vadd.f32 0.0, %v661
      %v663 = vpop.f32.mrb[0].mxu0
      %v664 = vpop.f32.mrb[0].mxu0
      %v665 = vadd.f32 0.0, %v664
      %v666 = vpop.f32.mrb[0].mxu0
      %667 = vmatprep.mubr.bf16.mxu0 0
      %668 = vmatmul.mubr.bf16.gmra.mrb[0].mxu0 %v572
      %v669 = vpop.f32.mrb[0].mxu0
      %v670 = vadd.f32 0.0, %v669
      %v671 = vpop.f32.mrb[0].mxu0
      %v672 = vpop.f32.mrb[0].mxu0
      %v673 = vadd.f32 0.0, %v672
      %v674 = vpop.f32.mrb[0].mxu0
      %675 = vmatprep.mubr.bf16.mxu0 0
      %676 = vmatmul.mubr.bf16.gmra.mrb[0].mxu0 %v573
      %v677 = vpop.f32.mrb[0].mxu0
      %v678 = vadd.f32 0.0, %v677
      %v679 = vpop.f32.mrb[0].mxu0
      %v680 = vpop.f32.mrb[0].mxu0
      %v681 = vadd.f32 0.0, %v680
      %v682 = vpop.f32.mrb[0].mxu0
      %683 = vmatprep.mubr.bf16.mxu0 0
      %684 = vmatmul.mubr.bf16.gmra.mrb[0].mxu0 %v574
      %v685 = vpop.f32.mrb[0].mxu0
      %v686 = vadd.f32 0.0, %v685
      %v687 = vpop.f32.mrb[0].mxu0
      %v688 = vpop.f32.mrb[0].mxu0
      %v689 = vadd.f32 0.0, %v688
      %v690 = vpop.f32.mrb[0].mxu0
      %691 = vdwg.mxu0
      %v700 = vunpack.c.l.b16 %v355
      %v701 = vunpack.c.l.b16 %v357
      %v702 = vunpack.c.l.b16 %v359
      %v703 = vunpack.c.l.b16 %v361
      %v704 = vunpack.c.l.b16 %v363
      %v705 = vunpack.c.l.b16 %v365
      %v706 = vunpack.c.l.b16 %v367
      %v707 = vunpack.c.l.b16 %v369
      %v708 = vpack.c.b16 %v701, %v700
      %v709 = vpack.c.b16 %v703, %v702
      %v710 = vpack.c.b16 %v705, %v704
      %v711 = vpack.c.b16 %v707, %v706
      %v732 = vunpack.c.l.b16 %v415
      %v733 = vunpack.c.l.b16 %v416
      %v734 = vunpack.c.l.b16 %v417
      %v735 = vunpack.c.l.b16 %v418
      %v736 = vunpack.c.l.b16 %v419
      %v737 = vunpack.c.l.b16 %v420
      %v738 = vunpack.c.l.b16 %v421
      %v739 = vunpack.c.l.b16 %v422
      %v740 = vunpack.c.l.b16 %v423
      %v741 = vunpack.c.l.b16 %v424
      %v742 = vunpack.c.l.b16 %v425
      %v743 = vunpack.c.l.b16 %v426
      %v744 = vunpack.c.l.b16 %v427
      %v745 = vunpack.c.l.b16 %v428
      %v746 = vunpack.c.l.b16 %v429
      %v747 = vunpack.c.l.b16 %v430
      %v748 = vpack.c.b16 %v733, %v732
      %v749 = vpack.c.b16 %v735, %v734
      %v750 = vpack.c.b16 %v737, %v736
      %v751 = vpack.c.b16 %v739, %v738
      %v752 = vpack.c.b16 %v741, %v740
      %v753 = vpack.c.b16 %v743, %v742
      %v754 = vpack.c.b16 %v745, %v744
      %v755 = vpack.c.b16 %v747, %v746
      %764 = vmatprep.subr.bf16.mxu0 0
      %765 = vmatpush1.bf16.msra.mxu0 %v748
      %766 = vmatprep.subr.bf16.mxu0 0
      %767 = vmatpush1.bf16.msra.mxu0 %v749
      %768 = vmatprep.subr.bf16.mxu0 0
      %769 = vmatpush1.bf16.msra.mxu0 %v750
      %770 = vmatprep.subr.bf16.mxu0 0
      %771 = vmatpush1.bf16.msra.mxu0 %v751
      %772 = vmatprep.subr.bf16.mxu0 0
      %773 = vmatpush1.bf16.msra.mxu0 %v752
      %774 = vmatprep.subr.bf16.mxu0 0
      %775 = vmatpush1.bf16.msra.mxu0 %v753
      %776 = vmatprep.subr.bf16.mxu0 0
      %777 = vmatpush1.bf16.msra.mxu0 %v754
      %778 = vmatprep.subr.bf16.mxu0 0
      %779 = vmatpush1.bf16.msra.mxu0 %v755
      %780 = vmatprep.subr.bf16.mxu0 0
      %781 = vmatpush1.bf16.msra.mxu0 0
      %782 = vmatprep.subr.bf16.mxu0 0
      %783 = vmatpush1.bf16.msra.mxu0 0
      %784 = vmatprep.subr.bf16.mxu0 0
      %785 = vmatpush1.bf16.msra.mxu0 0
      %786 = vmatprep.subr.bf16.mxu0 0
      %787 = vmatpush1.bf16.msra.mxu0 0
      %788 = vmatprep.subr.bf16.mxu0 0
      %789 = vmatpush1.bf16.msra.mxu0 0
      %790 = vmatprep.subr.bf16.mxu0 0
      %791 = vmatpush1.bf16.msra.mxu0 0
      %792 = vmatprep.subr.bf16.mxu0 0
      %793 = vmatpush1.bf16.msra.mxu0 0
      %794 = vmatprep.subr.bf16.mxu0 0
      %795 = vmatpush1.bf16.msra.mxu0 0
      %796 = vmatprep.mubr.bf16.mxu0 0
      %797 = vmatmul.mubr.bf16.gmra.mrb[0].mxu0 %v708
      %v798 = vpop.f32.mrb[0].mxu0
      %v799 = vadd.f32 %v662, %v798
      %v800 = vpop.f32.mrb[0].mxu0
      %v801 = vpop.f32.mrb[0].mxu0
      %v802 = vadd.f32 %v665, %v801
      %v803 = vpop.f32.mrb[0].mxu0
      %804 = vmatprep.mubr.bf16.mxu0 0
      %805 = vmatmul.mubr.bf16.gmra.mrb[0].mxu0 %v709
      %v806 = vpop.f32.mrb[0].mxu0
      %v807 = vadd.f32 %v670, %v806
      %v808 = vpop.f32.mrb[0].mxu0
      %v809 = vpop.f32.mrb[0].mxu0
      %v810 = vadd.f32 %v673, %v809
      %v811 = vpop.f32.mrb[0].mxu0
      %812 = vmatprep.mubr.bf16.mxu0 0
      %813 = vmatmul.mubr.bf16.gmra.mrb[0].mxu0 %v710
      %v814 = vpop.f32.mrb[0].mxu0
      %v815 = vadd.f32 %v678, %v814
      %v816 = vpop.f32.mrb[0].mxu0
      %v817 = vpop.f32.mrb[0].mxu0
      %v818 = vadd.f32 %v681, %v817
      %v819 = vpop.f32.mrb[0].mxu0
      %820 = vmatprep.mubr.bf16.mxu0 0
      %821 = vmatmul.mubr.bf16.gmra.mrb[0].mxu0 %v711
      %v822 = vpop.f32.mrb[0].mxu0
      %v823 = vadd.f32 %v686, %v822
      %v824 = vpop.f32.mrb[0].mxu0
      %v825 = vpop.f32.mrb[0].mxu0
      %v826 = vadd.f32 %v689, %v825
      %v827 = vpop.f32.mrb[0].mxu0
      %828 = vdwg.mxu0
      %vm837 = vcmask 1042432
      %vm838 = vcmask 1046532
      %vm839 = vmor %vm837, %vm838
      %v840 = vrot.slane %v355, 5
      %v841 = vrot.slane %v840, 4
      %v842 = vrot.slane %v356, 5
      %v843 = vsel %vm839, %v841, %v842
      %v844 = vrot.slane %v357, 5
      %v845 = vrot.slane %v844, 4
      %v846 = vrot.slane %v358, 5
      %v847 = vsel %vm839, %v845, %v846
      %v848 = vrot.slane %v359, 5
      %v849 = vrot.slane %v848, 4
      %v850 = vrot.slane %v360, 5
      %v851 = vsel %vm839, %v849, %v850
      %v852 = vrot.slane %v361, 5
      %v853 = vrot.slane %v852, 4
      %v854 = vrot.slane %v362, 5
      %v855 = vsel %vm839, %v853, %v854
      %v856 = vrot.slane %v363, 5
      %v857 = vrot.slane %v856, 4
      %v858 = vrot.slane %v364, 5
      %v859 = vsel %vm839, %v857, %v858
      %v860 = vrot.slane %v365, 5
      %v861 = vrot.slane %v860, 4
      %v862 = vrot.slane %v366, 5
      %v863 = vsel %vm839, %v861, %v862
      %v864 = vrot.slane %v367, 5
      %v865 = vrot.slane %v864, 4
      %v866 = vrot.slane %v368, 5
      %v867 = vsel %vm839, %v865, %v866
      %v868 = vrot.slane %v369, 5
      %v869 = vrot.slane %v868, 4
      %v870 = vrot.slane %v370, 5
      %v871 = vsel %vm839, %v869, %v870
      %s872 = scalar_lea.vmem %s3, 128
      %v873 = vld [vmem:[%s872] sm:$0xf]
      %v874 = vld [vmem:[%s872 + $0x4] sm:$0xf]
      %v875 = vld [vmem:[%s872 + $0x8] sm:$0xf]
      %v876 = vld [vmem:[%s872 + $0xc] sm:$0xf]
      %v877 = vld [vmem:[%s872 + $0x10] sm:$0xf]
      %v878 = vld [vmem:[%s872 + $0x14] sm:$0xf]
      %v879 = vld [vmem:[%s872 + $0x18] sm:$0xf]
      %v880 = vld [vmem:[%s872 + $0x1c] sm:$0xf]
      %v881 = vld [vmem:[%s872 + $0x20] sm:$0xf]
      %v882 = vld [vmem:[%s872 + $0x24] sm:$0xf]
      %v883 = vld [vmem:[%s872 + $0x28] sm:$0xf]
      %v884 = vld [vmem:[%s872 + $0x2c] sm:$0xf]
      %v885 = vld [vmem:[%s872 + $0x30] sm:$0xf]
      %v886 = vld [vmem:[%s872 + $0x34] sm:$0xf]
      %v887 = vld [vmem:[%s872 + $0x38] sm:$0xf]
      %v888 = vld [vmem:[%s872 + $0x3c] sm:$0xf]
      %v889 = vunpack.c.l.b16 %v843
      %v890 = vunpack.c.l.b16 %v847
      %v891 = vunpack.c.l.b16 %v851
      %v892 = vunpack.c.l.b16 %v855
      %v893 = vunpack.c.l.b16 %v859
      %v894 = vunpack.c.l.b16 %v863
      %v895 = vunpack.c.l.b16 %v867
      %v896 = vunpack.c.l.b16 %v871
      %v897 = vpack.c.b16 %v890, %v889
      %v898 = vpack.c.b16 %v892, %v891
      %v899 = vpack.c.b16 %v894, %v893
      %v900 = vpack.c.b16 %v896, %v895
      %v921 = vunpack.c.l.b16 %v873
      %v922 = vunpack.c.l.b16 %v874
      %v923 = vunpack.c.l.b16 %v875
      %v924 = vunpack.c.l.b16 %v876
      %v925 = vunpack.c.l.b16 %v877
      %v926 = vunpack.c.l.b16 %v878
      %v927 = vunpack.c.l.b16 %v879
      %v928 = vunpack.c.l.b16 %v880
      %v929 = vunpack.c.l.b16 %v881
      %v930 = vunpack.c.l.b16 %v882
      %v931 = vunpack.c.l.b16 %v883
      %v932 = vunpack.c.l.b16 %v884
      %v933 = vunpack.c.l.b16 %v885
      %v934 = vunpack.c.l.b16 %v886
      %v935 = vunpack.c.l.b16 %v887
      %v936 = vunpack.c.l.b16 %v888
      %v937 = vpack.c.b16 %v922, %v921
      %v938 = vpack.c.b16 %v924, %v923
      %v939 = vpack.c.b16 %v926, %v925
      %v940 = vpack.c.b16 %v928, %v927
      %v941 = vpack.c.b16 %v930, %v929
      %v942 = vpack.c.b16 %v932, %v931
      %v943 = vpack.c.b16 %v934, %v933
      %v944 = vpack.c.b16 %v936, %v935
      %953 = vmatprep.subr.bf16.mxu0 0
      %954 = vmatpush1.bf16.msra.mxu0 %v937
      %955 = vmatprep.subr.bf16.mxu0 0
      %956 = vmatpush1.bf16.msra.mxu0 %v938
      %957 = vmatprep.subr.bf16.mxu0 0
      %958 = vmatpush1.bf16.msra.mxu0 %v939
      %959 = vmatprep.subr.bf16.mxu0 0
      %960 = vmatpush1.bf16.msra.mxu0 %v940
      %961 = vmatprep.subr.bf16.mxu0 0
      %962 = vmatpush1.bf16.msra.mxu0 %v941
      %963 = vmatprep.subr.bf16.mxu0 0
      %964 = vmatpush1.bf16.msra.mxu0 %v942
      %965 = vmatprep.subr.bf16.mxu0 0
      %966 = vmatpush1.bf16.msra.mxu0 %v943
      %967 = vmatprep.subr.bf16.mxu0 0
      %968 = vmatpush1.bf16.msra.mxu0 %v944
      %969 = vmatprep.subr.bf16.mxu0 0
      %970 = vmatpush1.bf16.msra.mxu0 0
      %971 = vmatprep.subr.bf16.mxu0 0
      %972 = vmatpush1.bf16.msra.mxu0 0
      %973 = vmatprep.subr.bf16.mxu0 0
      %974 = vmatpush1.bf16.msra.mxu0 0
      %975 = vmatprep.subr.bf16.mxu0 0
      %976 = vmatpush1.bf16.msra.mxu0 0
      %977 = vmatprep.subr.bf16.mxu0 0
      %978 = vmatpush1.bf16.msra.mxu0 0
      %979 = vmatprep.subr.bf16.mxu0 0
      %980 = vmatpush1.bf16.msra.mxu0 0
      %981 = vmatprep.subr.bf16.mxu0 0
      %982 = vmatpush1.bf16.msra.mxu0 0
      %983 = vmatprep.subr.bf16.mxu0 0
      %984 = vmatpush1.bf16.msra.mxu0 0
      %985 = vmatprep.mubr.bf16.mxu0 0
      %986 = vmatmul.mubr.bf16.gmra.mrb[0].mxu0 %v897
      %v987 = vpop.f32.mrb[0].mxu0
      %v988 = vadd.f32 0.0, %v987
      %v989 = vpop.f32.mrb[0].mxu0
      %v990 = vpop.f32.mrb[0].mxu0
      %v991 = vadd.f32 0.0, %v990
      %v992 = vpop.f32.mrb[0].mxu0
      %993 = vmatprep.mubr.bf16.mxu0 0
      %994 = vmatmul.mubr.bf16.gmra.mrb[0].mxu0 %v898
      %v995 = vpop.f32.mrb[0].mxu0
      %v996 = vadd.f32 0.0, %v995
      %v997 = vpop.f32.mrb[0].mxu0
      %v998 = vpop.f32.mrb[0].mxu0
      %v999 = vadd.f32 0.0, %v998
      %v1000 = vpop.f32.mrb[0].mxu0
      %1001 = vmatprep.mubr.bf16.mxu0 0
      %1002 = vmatmul.mubr.bf16.gmra.mrb[0].mxu0 %v899
      %v1003 = vpop.f32.mrb[0].mxu0
      %v1004 = vadd.f32 0.0, %v1003
      %v1005 = vpop.f32.mrb[0].mxu0
      %v1006 = vpop.f32.mrb[0].mxu0
      %v1007 = vadd.f32 0.0, %v1006
      %v1008 = vpop.f32.mrb[0].mxu0
      %1009 = vmatprep.mubr.bf16.mxu0 0
      %1010 = vmatmul.mubr.bf16.gmra.mrb[0].mxu0 %v900
      %v1011 = vpop.f32.mrb[0].mxu0
      %v1012 = vadd.f32 0.0, %v1011
      %v1013 = vpop.f32.mrb[0].mxu0
      %v1014 = vpop.f32.mrb[0].mxu0
      %v1015 = vadd.f32 0.0, %v1014
      %v1016 = vpop.f32.mrb[0].mxu0
      %1017 = vdwg.mxu0
      %v1018 = vadd.f32 %v799, %v988
      %v1019 = vadd.f32 %v802, %v991
      %v1020 = vadd.f32 %v807, %v996
      %v1021 = vadd.f32 %v810, %v999
      %v1022 = vadd.f32 %v815, %v1004
      %v1023 = vadd.f32 %v818, %v1007
      %v1024 = vadd.f32 %v823, %v1012
      %v1025 = vadd.f32 %v826, %v1015
      %s1026 = scalar_lea.vmem %s3, 192
      %v1027 = vld [vmem:[%s1026] sm:$0xf]
      %v1028 = vld [vmem:[%s1026 + $0x4] sm:$0xf]
      %v1029 = vld [vmem:[%s1026 + $0x8] sm:$0xf]
      %v1030 = vld [vmem:[%s1026 + $0xc] sm:$0xf]
      %v1031 = vld [vmem:[%s1026 + $0x10] sm:$0xf]
      %v1032 = vld [vmem:[%s1026 + $0x14] sm:$0xf]
      %v1033 = vld [vmem:[%s1026 + $0x18] sm:$0xf]
      %v1034 = vld [vmem:[%s1026 + $0x1c] sm:$0xf]
      %v1035 = vld [vmem:[%s1026 + $0x20] sm:$0xf]
      %v1036 = vld [vmem:[%s1026 + $0x24] sm:$0xf]
      %v1037 = vld [vmem:[%s1026 + $0x28] sm:$0xf]
      %v1038 = vld [vmem:[%s1026 + $0x2c] sm:$0xf]
      %v1039 = vld [vmem:[%s1026 + $0x30] sm:$0xf]
      %v1040 = vld [vmem:[%s1026 + $0x34] sm:$0xf]
      %v1041 = vld [vmem:[%s1026 + $0x38] sm:$0xf]
      %v1042 = vld [vmem:[%s1026 + $0x3c] sm:$0xf]
      %v1044 = vunpack.c.l.b16 %v371
      %v1045 = vpack.c.b16 %v702, %v701
      %v1046 = vpack.c.b16 %v704, %v703
      %v1047 = vpack.c.b16 %v706, %v705
      %v1048 = vpack.c.b16 %v1044, %v707
      %v1069 = vunpack.c.l.b16 %v1027
      %v1070 = vunpack.c.l.b16 %v1028
      %v1071 = vunpack.c.l.b16 %v1029
      %v1072 = vunpack.c.l.b16 %v1030
      %v1073 = vunpack.c.l.b16 %v1031
      %v1074 = vunpack.c.l.b16 %v1032
      %v1075 = vunpack.c.l.b16 %v1033
      %v1076 = vunpack.c.l.b16 %v1034
      %v1077 = vunpack.c.l.b16 %v1035
      %v1078 = vunpack.c.l.b16 %v1036
      %v1079 = vunpack.c.l.b16 %v1037
      %v1080 = vunpack.c.l.b16 %v1038
      %v1081 = vunpack.c.l.b16 %v1039
      %v1082 = vunpack.c.l.b16 %v1040
      %v1083 = vunpack.c.l.b16 %v1041
      %v1084 = vunpack.c.l.b16 %v1042
      %v1085 = vpack.c.b16 %v1070, %v1069
      %v1086 = vpack.c.b16 %v1072, %v1071
      %v1087 = vpack.c.b16 %v1074, %v1073
      %v1088 = vpack.c.b16 %v1076, %v1075
      %v1089 = vpack.c.b16 %v1078, %v1077
      %v1090 = vpack.c.b16 %v1080, %v1079
      %v1091 = vpack.c.b16 %v1082, %v1081
      %v1092 = vpack.c.b16 %v1084, %v1083
      %1101 = vmatprep.subr.bf16.mxu0 0
      %1102 = vmatpush1.bf16.msra.mxu0 %v1085
      %1103 = vmatprep.subr.bf16.mxu0 0
      %1104 = vmatpush1.bf16.msra.mxu0 %v1086
      %1105 = vmatprep.subr.bf16.mxu0 0
      %1106 = vmatpush1.bf16.msra.mxu0 %v1087
      %1107 = vmatprep.subr.bf16.mxu0 0
      %1108 = vmatpush1.bf16.msra.mxu0 %v1088
      %1109 = vmatprep.subr.bf16.mxu0 0
      %1110 = vmatpush1.bf16.msra.mxu0 %v1089
      %1111 = vmatprep.subr.bf16.mxu0 0
      %1112 = vmatpush1.bf16.msra.mxu0 %v1090
      %1113 = vmatprep.subr.bf16.mxu0 0
      %1114 = vmatpush1.bf16.msra.mxu0 %v1091
      %1115 = vmatprep.subr.bf16.mxu0 0
      %1116 = vmatpush1.bf16.msra.mxu0 %v1092
      %1117 = vmatprep.subr.bf16.mxu0 0
      %1118 = vmatpush1.bf16.msra.mxu0 0
      %1119 = vmatprep.subr.bf16.mxu0 0
      %1120 = vmatpush1.bf16.msra.mxu0 0
      %1121 = vmatprep.subr.bf16.mxu0 0
      %1122 = vmatpush1.bf16.msra.mxu0 0
      %1123 = vmatprep.subr.bf16.mxu0 0
      %1124 = vmatpush1.bf16.msra.mxu0 0
      %1125 = vmatprep.subr.bf16.mxu0 0
      %1126 = vmatpush1.bf16.msra.mxu0 0
      %1127 = vmatprep.subr.bf16.mxu0 0
      %1128 = vmatpush1.bf16.msra.mxu0 0
      %1129 = vmatprep.subr.bf16.mxu0 0
      %1130 = vmatpush1.bf16.msra.mxu0 0
      %1131 = vmatprep.subr.bf16.mxu0 0
      %1132 = vmatpush1.bf16.msra.mxu0 0
      %1133 = vmatprep.mubr.bf16.mxu0 0
      %1134 = vmatmul.mubr.bf16.gmra.mrb[0].mxu0 %v1045
      %v1135 = vpop.f32.mrb[0].mxu0
      %v1136 = vadd.f32 0.0, %v1135
      %v1137 = vpop.f32.mrb[0].mxu0
      %v1138 = vpop.f32.mrb[0].mxu0
      %v1139 = vadd.f32 0.0, %v1138
      %v1140 = vpop.f32.mrb[0].mxu0
      %1141 = vmatprep.mubr.bf16.mxu0 0
      %1142 = vmatmul.mubr.bf16.gmra.mrb[0].mxu0 %v1046
      %v1143 = vpop.f32.mrb[0].mxu0
      %v1144 = vadd.f32 0.0, %v1143
      %v1145 = vpop.f32.mrb[0].mxu0
      %v1146 = vpop.f32.mrb[0].mxu0
      %v1147 = vadd.f32 0.0, %v1146
      %v1148 = vpop.f32.mrb[0].mxu0
      %1149 = vmatprep.mubr.bf16.mxu0 0
      %1150 = vmatmul.mubr.bf16.gmra.mrb[0].mxu0 %v1047
      %v1151 = vpop.f32.mrb[0].mxu0
      %v1152 = vadd.f32 0.0, %v1151
      %v1153 = vpop.f32.mrb[0].mxu0
      %v1154 = vpop.f32.mrb[0].mxu0
      %v1155 = vadd.f32 0.0, %v1154
      %v1156 = vpop.f32.mrb[0].mxu0
      %1157 = vmatprep.mubr.bf16.mxu0 0
      %1158 = vmatmul.mubr.bf16.gmra.mrb[0].mxu0 %v1048
      %v1159 = vpop.f32.mrb[0].mxu0
      %v1160 = vadd.f32 0.0, %v1159
      %v1161 = vpop.f32.mrb[0].mxu0
      %v1162 = vpop.f32.mrb[0].mxu0
      %v1163 = vadd.f32 0.0, %v1162
      %v1164 = vpop.f32.mrb[0].mxu0
      %1165 = vdwg.mxu0
      %v1166 = vadd.f32 %v1018, %v1136
      %v1167 = vadd.f32 %v1019, %v1139
      %v1168 = vadd.f32 %v1020, %v1144
      %v1169 = vadd.f32 %v1021, %v1147
      %v1170 = vadd.f32 %v1022, %v1152
      %v1171 = vadd.f32 %v1023, %v1155
      %v1172 = vadd.f32 %v1024, %v1160
      %v1173 = vadd.f32 %v1025, %v1163
      %v1175 = vshrl.u32 %v371, 16
      %v1177 = vrot.slane %v1175, 4
      %v1178 = vshll.u32 %v371, 16
      %v1180 = vrot.slane %v1178, 5
      %v1181 = vor.u32 %v1177, %v1180
      %v1182 = vrot.slane %v1181, 4
      %v1184 = vshll.u32 %v372, 16
      %v1186 = vrot.slane %v1184, 5
      %v1187 = vsel %vm433, %v1182, %v1186
      %s1188 = scalar_lea.vmem %s3, 256
      %v1189 = vld [vmem:[%s1188] sm:$0xf]
      %v1190 = vld [vmem:[%s1188 + $0x4] sm:$0xf]
      %v1191 = vld [vmem:[%s1188 + $0x8] sm:$0xf]
      %v1192 = vld [vmem:[%s1188 + $0xc] sm:$0xf]
      %v1193 = vld [vmem:[%s1188 + $0x10] sm:$0xf]
      %v1194 = vld [vmem:[%s1188 + $0x14] sm:$0xf]
      %v1195 = vld [vmem:[%s1188 + $0x18] sm:$0xf]
      %v1196 = vld [vmem:[%s1188 + $0x1c] sm:$0xf]
      %v1197 = vld [vmem:[%s1188 + $0x20] sm:$0xf]
      %v1198 = vld [vmem:[%s1188 + $0x24] sm:$0xf]
      %v1199 = vld [vmem:[%s1188 + $0x28] sm:$0xf]
      %v1200 = vld [vmem:[%s1188 + $0x2c] sm:$0xf]
      %v1201 = vld [vmem:[%s1188 + $0x30] sm:$0xf]
      %v1202 = vld [vmem:[%s1188 + $0x34] sm:$0xf]
      %v1203 = vld [vmem:[%s1188 + $0x38] sm:$0xf]
      %v1204 = vld [vmem:[%s1188 + $0x3c] sm:$0xf]
      %v1205 = vunpack.c.l.b16 %v1187
      %v1206 = vpack.c.b16 %v565, %v564
      %v1207 = vpack.c.b16 %v567, %v566
      %v1208 = vpack.c.b16 %v569, %v568
      %v1209 = vpack.c.b16 %v1205, %v570
      %v1230 = vunpack.c.l.b16 %v1189
      %v1231 = vunpack.c.l.b16 %v1190
      %v1232 = vunpack.c.l.b16 %v1191
      %v1233 = vunpack.c.l.b16 %v1192
      %v1234 = vunpack.c.l.b16 %v1193
      %v1235 = vunpack.c.l.b16 %v1194
      %v1236 = vunpack.c.l.b16 %v1195
      %v1237 = vunpack.c.l.b16 %v1196
      %v1238 = vunpack.c.l.b16 %v1197
      %v1239 = vunpack.c.l.b16 %v1198
      %v1240 = vunpack.c.l.b16 %v1199
      %v1241 = vunpack.c.l.b16 %v1200
      %v1242 = vunpack.c.l.b16 %v1201
      %v1243 = vunpack.c.l.b16 %v1202
      %v1244 = vunpack.c.l.b16 %v1203
      %v1245 = vunpack.c.l.b16 %v1204
      %v1246 = vpack.c.b16 %v1231, %v1230
      %v1247 = vpack.c.b16 %v1233, %v1232
      %v1248 = vpack.c.b16 %v1235, %v1234
      %v1249 = vpack.c.b16 %v1237, %v1236
      %v1250 = vpack.c.b16 %v1239, %v1238
      %v1251 = vpack.c.b16 %v1241, %v1240
      %v1252 = vpack.c.b16 %v1243, %v1242
      %v1253 = vpack.c.b16 %v1245, %v1244
      %1262 = vmatprep.subr.bf16.mxu0 0
      %1263 = vmatpush1.bf16.msra.mxu0 %v1246
      %1264 = vmatprep.subr.bf16.mxu0 0
      %1265 = vmatpush1.bf16.msra.mxu0 %v1247
      %1266 = vmatprep.subr.bf16.mxu0 0
      %1267 = vmatpush1.bf16.msra.mxu0 %v1248
      %1268 = vmatprep.subr.bf16.mxu0 0
      %1269 = vmatpush1.bf16.msra.mxu0 %v1249
      %1270 = vmatprep.subr.bf16.mxu0 0
      %1271 = vmatpush1.bf16.msra.mxu0 %v1250
      %1272 = vmatprep.subr.bf16.mxu0 0
      %1273 = vmatpush1.bf16.msra.mxu0 %v1251
      %1274 = vmatprep.subr.bf16.mxu0 0
      %1275 = vmatpush1.bf16.msra.mxu0 %v1252
      %1276 = vmatprep.subr.bf16.mxu0 0
      %1277 = vmatpush1.bf16.msra.mxu0 %v1253
      %1278 = vmatprep.subr.bf16.mxu0 0
      %1279 = vmatpush1.bf16.msra.mxu0 0
      %1280 = vmatprep.subr.bf16.mxu0 0
      %1281 = vmatpush1.bf16.msra.mxu0 0
      %1282 = vmatprep.subr.bf16.mxu0 0
      %1283 = vmatpush1.bf16.msra.mxu0 0
      %1284 = vmatprep.subr.bf16.mxu0 0
      %1285 = vmatpush1.bf16.msra.mxu0 0
      %1286 = vmatprep.subr.bf16.mxu0 0
      %1287 = vmatpush1.bf16.msra.mxu0 0
      %1288 = vmatprep.subr.bf16.mxu0 0
      %1289 = vmatpush1.bf16.msra.mxu0 0
      %1290 = vmatprep.subr.bf16.mxu0 0
      %1291 = vmatpush1.bf16.msra.mxu0 0
      %1292 = vmatprep.subr.bf16.mxu0 0
      %1293 = vmatpush1.bf16.msra.mxu0 0
      %1294 = vmatprep.mubr.bf16.mxu0 0
      %1295 = vmatmul.mubr.bf16.gmra.mrb[0].mxu0 %v1206
      %v1296 = vpop.f32.mrb[0].mxu0
      %v1297 = vadd.f32 0.0, %v1296
      %v1298 = vpop.f32.mrb[0].mxu0
      %v1299 = vpop.f32.mrb[0].mxu0
      %v1300 = vadd.f32 0.0, %v1299
      %v1301 = vpop.f32.mrb[0].mxu0
      %1302 = vmatprep.mubr.bf16.mxu0 0
      %1303 = vmatmul.mubr.bf16.gmra.mrb[0].mxu0 %v1207
      %v1304 = vpop.f32.mrb[0].mxu0
      %v1305 = vadd.f32 0.0, %v1304
      %v1306 = vpop.f32.mrb[0].mxu0
      %v1307 = vpop.f32.mrb[0].mxu0
      %v1308 = vadd.f32 0.0, %v1307
      %v1309 = vpop.f32.mrb[0].mxu0
      %1310 = vmatprep.mubr.bf16.mxu0 0
      %1311 = vmatmul.mubr.bf16.gmra.mrb[0].mxu0 %v1208
      %v1312 = vpop.f32.mrb[0].mxu0
      %v1313 = vadd.f32 0.0, %v1312
      %v1314 = vpop.f32.mrb[0].mxu0
      %v1315 = vpop.f32.mrb[0].mxu0
      %v1316 = vadd.f32 0.0, %v1315
      %v1317 = vpop.f32.mrb[0].mxu0
      %1318 = vmatprep.mubr.bf16.mxu0 0
      %1319 = vmatmul.mubr.bf16.gmra.mrb[0].mxu0 %v1209
      %v1320 = vpop.f32.mrb[0].mxu0
      %v1321 = vadd.f32 0.0, %v1320
      %v1322 = vpop.f32.mrb[0].mxu0
      %v1323 = vpop.f32.mrb[0].mxu0
      %v1324 = vadd.f32 0.0, %v1323
      %v1325 = vpop.f32.mrb[0].mxu0
      %1326 = vdwg.mxu0
      %v1327 = vadd.f32 %v1166, %v1297
      %v1328 = vadd.f32 %v1167, %v1300
      %v1329 = vadd.f32 %v1168, %v1305
      %v1330 = vadd.f32 %v1169, %v1308
      %v1331 = vadd.f32 %v1170, %v1313
      %v1332 = vadd.f32 %v1171, %v1316
      %v1333 = vadd.f32 %v1172, %v1321
      %v1334 = vadd.f32 %v1173, %v1324
      %v1336 = vrot.slane %v371, 5
      %v1337 = vrot.slane %v1336, 4
      %v1338 = vrot.slane %v372, 5
      %v1339 = vsel %vm839, %v1337, %v1338
      %s1340 = scalar_lea.vmem %s3, 320
      %v1341 = vld [vmem:[%s1340] sm:$0xf]
      %v1342 = vld [vmem:[%s1340 + $0x4] sm:$0xf]
      %v1343 = vld [vmem:[%s1340 + $0x8] sm:$0xf]
      %v1344 = vld [vmem:[%s1340 + $0xc] sm:$0xf]
      %v1345 = vld [vmem:[%s1340 + $0x10] sm:$0xf]
      %v1346 = vld [vmem:[%s1340 + $0x14] sm:$0xf]
      %v1347 = vld [vmem:[%s1340 + $0x18] sm:$0xf]
      %v1348 = vld [vmem:[%s1340 + $0x1c] sm:$0xf]
      %v1349 = vld [vmem:[%s1340 + $0x20] sm:$0xf]
      %v1350 = vld [vmem:[%s1340 + $0x24] sm:$0xf]
      %v1351 = vld [vmem:[%s1340 + $0x28] sm:$0xf]
      %v1352 = vld [vmem:[%s1340 + $0x2c] sm:$0xf]
      %v1353 = vld [vmem:[%s1340 + $0x30] sm:$0xf]
      %v1354 = vld [vmem:[%s1340 + $0x34] sm:$0xf]
      %v1355 = vld [vmem:[%s1340 + $0x38] sm:$0xf]
      %v1356 = vld [vmem:[%s1340 + $0x3c] sm:$0xf]
      %v1357 = vunpack.c.l.b16 %v1339
      %v1358 = vpack.c.b16 %v891, %v890
      %v1359 = vpack.c.b16 %v893, %v892
      %v1360 = vpack.c.b16 %v895, %v894
      %v1361 = vpack.c.b16 %v1357, %v896
      %v1382 = vunpack.c.l.b16 %v1341
      %v1383 = vunpack.c.l.b16 %v1342
      %v1384 = vunpack.c.l.b16 %v1343
      %v1385 = vunpack.c.l.b16 %v1344
      %v1386 = vunpack.c.l.b16 %v1345
      %v1387 = vunpack.c.l.b16 %v1346
      %v1388 = vunpack.c.l.b16 %v1347
      %v1389 = vunpack.c.l.b16 %v1348
      %v1390 = vunpack.c.l.b16 %v1349
      %v1391 = vunpack.c.l.b16 %v1350
      %v1392 = vunpack.c.l.b16 %v1351
      %v1393 = vunpack.c.l.b16 %v1352
      %v1394 = vunpack.c.l.b16 %v1353
      %v1395 = vunpack.c.l.b16 %v1354
      %v1396 = vunpack.c.l.b16 %v1355
      %v1397 = vunpack.c.l.b16 %v1356
      %v1398 = vpack.c.b16 %v1383, %v1382
      %v1399 = vpack.c.b16 %v1385, %v1384
      %v1400 = vpack.c.b16 %v1387, %v1386
      %v1401 = vpack.c.b16 %v1389, %v1388
      %v1402 = vpack.c.b16 %v1391, %v1390
      %v1403 = vpack.c.b16 %v1393, %v1392
      %v1404 = vpack.c.b16 %v1395, %v1394
      %v1405 = vpack.c.b16 %v1397, %v1396
      %1414 = vmatprep.subr.bf16.mxu0 0
      %1415 = vmatpush1.bf16.msra.mxu0 %v1398
      %1416 = vmatprep.subr.bf16.mxu0 0
      %1417 = vmatpush1.bf16.msra.mxu0 %v1399
      %1418 = vmatprep.subr.bf16.mxu0 0
      %1419 = vmatpush1.bf16.msra.mxu0 %v1400
      %1420 = vmatprep.subr.bf16.mxu0 0
      %1421 = vmatpush1.bf16.msra.mxu0 %v1401
      %1422 = vmatprep.subr.bf16.mxu0 0
      %1423 = vmatpush1.bf16.msra.mxu0 %v1402
      %1424 = vmatprep.subr.bf16.mxu0 0
      %1425 = vmatpush1.bf16.msra.mxu0 %v1403
      %1426 = vmatprep.subr.bf16.mxu0 0
      %1427 = vmatpush1.bf16.msra.mxu0 %v1404
      %1428 = vmatprep.subr.bf16.mxu0 0
      %1429 = vmatpush1.bf16.msra.mxu0 %v1405
      %1430 = vmatprep.subr.bf16.mxu0 0
      %1431 = vmatpush1.bf16.msra.mxu0 0
      %1432 = vmatprep.subr.bf16.mxu0 0
      %1433 = vmatpush1.bf16.msra.mxu0 0
      %1434 = vmatprep.subr.bf16.mxu0 0
      %1435 = vmatpush1.bf16.msra.mxu0 0
      %1436 = vmatprep.subr.bf16.mxu0 0
      %1437 = vmatpush1.bf16.msra.mxu0 0
      %1438 = vmatprep.subr.bf16.mxu0 0
      %1439 = vmatpush1.bf16.msra.mxu0 0
      %1440 = vmatprep.subr.bf16.mxu0 0
      %1441 = vmatpush1.bf16.msra.mxu0 0
      %1442 = vmatprep.subr.bf16.mxu0 0
      %1443 = vmatpush1.bf16.msra.mxu0 0
      %1444 = vmatprep.subr.bf16.mxu0 0
      %1445 = vmatpush1.bf16.msra.mxu0 0
      %1446 = vmatprep.mubr.bf16.mxu0 0
      %1447 = vmatmul.mubr.bf16.gmra.mrb[0].mxu0 %v1358
      %v1448 = vpop.f32.mrb[0].mxu0
      %v1449 = vadd.f32 0.0, %v1448
      %v1450 = vpop.f32.mrb[0].mxu0
      %v1451 = vpop.f32.mrb[0].mxu0
      %v1452 = vadd.f32 0.0, %v1451
      %v1453 = vpop.f32.mrb[0].mxu0
      %1454 = vmatprep.mubr.bf16.mxu0 0
      %1455 = vmatmul.mubr.bf16.gmra.mrb[0].mxu0 %v1359
      %v1456 = vpop.f32.mrb[0].mxu0
      %v1457 = vadd.f32 0.0, %v1456
      %v1458 = vpop.f32.mrb[0].mxu0
      %v1459 = vpop.f32.mrb[0].mxu0
      %v1460 = vadd.f32 0.0, %v1459
      %v1461 = vpop.f32.mrb[0].mxu0
      %1462 = vmatprep.mubr.bf16.mxu0 0
      %1463 = vmatmul.mubr.bf16.gmra.mrb[0].mxu0 %v1360
      %v1464 = vpop.f32.mrb[0].mxu0
      %v1465 = vadd.f32 0.0, %v1464
      %v1466 = vpop.f32.mrb[0].mxu0
      %v1467 = vpop.f32.mrb[0].mxu0
      %v1468 = vadd.f32 0.0, %v1467
      %v1469 = vpop.f32.mrb[0].mxu0
      %1470 = vmatprep.mubr.bf16.mxu0 0
      %1471 = vmatmul.mubr.bf16.gmra.mrb[0].mxu0 %v1361
      %v1472 = vpop.f32.mrb[0].mxu0
      %v1473 = vadd.f32 0.0, %v1472
      %v1474 = vpop.f32.mrb[0].mxu0
      %v1475 = vpop.f32.mrb[0].mxu0
      %v1476 = vadd.f32 0.0, %v1475
      %v1477 = vpop.f32.mrb[0].mxu0
      %1478 = vdwg.mxu0
      %v1479 = vadd.f32 %v1327, %v1449
      %v1480 = vadd.f32 %v1328, %v1452
      %v1481 = vadd.f32 %v1329, %v1457
      %v1482 = vadd.f32 %v1330, %v1460
      %v1483 = vadd.f32 %v1331, %v1465
      %v1484 = vadd.f32 %v1332, %v1468
      %v1485 = vadd.f32 %v1333, %v1473
      %v1486 = vadd.f32 %v1334, %v1476
      %s1487 = scalar_lea.vmem %s3, 384
      %v1488 = vld [vmem:[%s1487] sm:$0xf]
      %v1489 = vld [vmem:[%s1487 + $0x4] sm:$0xf]
      %v1490 = vld [vmem:[%s1487 + $0x8] sm:$0xf]
      %v1491 = vld [vmem:[%s1487 + $0xc] sm:$0xf]
      %v1492 = vld [vmem:[%s1487 + $0x10] sm:$0xf]
      %v1493 = vld [vmem:[%s1487 + $0x14] sm:$0xf]
      %v1494 = vld [vmem:[%s1487 + $0x18] sm:$0xf]
      %v1495 = vld [vmem:[%s1487 + $0x1c] sm:$0xf]
      %v1496 = vld [vmem:[%s1487 + $0x20] sm:$0xf]
      %v1497 = vld [vmem:[%s1487 + $0x24] sm:$0xf]
      %v1498 = vld [vmem:[%s1487 + $0x28] sm:$0xf]
      %v1499 = vld [vmem:[%s1487 + $0x2c] sm:$0xf]
      %v1500 = vld [vmem:[%s1487 + $0x30] sm:$0xf]
      %v1501 = vld [vmem:[%s1487 + $0x34] sm:$0xf]
      %v1502 = vld [vmem:[%s1487 + $0x38] sm:$0xf]
      %v1503 = vld [vmem:[%s1487 + $0x3c] sm:$0xf]
      %v1505 = vunpack.c.l.b16 %v373
      %v1506 = vpack.c.b16 %v1505, %v1044
      %v1524 = vunpack.c.l.b16 %v1488
      %v1525 = vunpack.c.l.b16 %v1489
      %v1526 = vunpack.c.l.b16 %v1490
      %v1527 = vunpack.c.l.b16 %v1491
      %v1528 = vunpack.c.l.b16 %v1492
      %v1529 = vunpack.c.l.b16 %v1493
      %v1530 = vunpack.c.l.b16 %v1494
      %v1531 = vunpack.c.l.b16 %v1495
      %v1532 = vunpack.c.l.b16 %v1496
      %v1533 = vunpack.c.l.b16 %v1497
      %v1534 = vunpack.c.l.b16 %v1498
      %v1535 = vunpack.c.l.b16 %v1499
      %v1536 = vunpack.c.l.b16 %v1500
      %v1537 = vunpack.c.l.b16 %v1501
      %v1538 = vunpack.c.l.b16 %v1502
      %v1539 = vunpack.c.l.b16 %v1503
      %v1540 = vpack.c.b16 %v1525, %v1524
      %v1541 = vpack.c.b16 %v1527, %v1526
      %v1542 = vpack.c.b16 %v1529, %v1528
      %v1543 = vpack.c.b16 %v1531, %v1530
      %v1544 = vpack.c.b16 %v1533, %v1532
      %v1545 = vpack.c.b16 %v1535, %v1534
      %v1546 = vpack.c.b16 %v1537, %v1536
      %v1547 = vpack.c.b16 %v1539, %v1538
      %1556 = vmatprep.subr.bf16.mxu0 0
      %1557 = vmatpush1.bf16.msra.mxu0 %v1540
      %1558 = vmatprep.subr.bf16.mxu0 0
      %1559 = vmatpush1.bf16.msra.mxu0 %v1541
      %1560 = vmatprep.subr.bf16.mxu0 0
      %1561 = vmatpush1.bf16.msra.mxu0 %v1542
      %1562 = vmatprep.subr.bf16.mxu0 0
      %1563 = vmatpush1.bf16.msra.mxu0 %v1543
      %1564 = vmatprep.subr.bf16.mxu0 0
      %1565 = vmatpush1.bf16.msra.mxu0 %v1544
      %1566 = vmatprep.subr.bf16.mxu0 0
      %1567 = vmatpush1.bf16.msra.mxu0 %v1545
      %1568 = vmatprep.subr.bf16.mxu0 0
      %1569 = vmatpush1.bf16.msra.mxu0 %v1546
      %1570 = vmatprep.subr.bf16.mxu0 0
      %1571 = vmatpush1.bf16.msra.mxu0 %v1547
      %1572 = vmatprep.subr.bf16.mxu0 0
      %1573 = vmatpush1.bf16.msra.mxu0 0
      %1574 = vmatprep.subr.bf16.mxu0 0
      %1575 = vmatpush1.bf16.msra.mxu0 0
      %1576 = vmatprep.subr.bf16.mxu0 0
      %1577 = vmatpush1.bf16.msra.mxu0 0
      %1578 = vmatprep.subr.bf16.mxu0 0
      %1579 = vmatpush1.bf16.msra.mxu0 0
      %1580 = vmatprep.subr.bf16.mxu0 0
      %1581 = vmatpush1.bf16.msra.mxu0 0
      %1582 = vmatprep.subr.bf16.mxu0 0
      %1583 = vmatpush1.bf16.msra.mxu0 0
      %1584 = vmatprep.subr.bf16.mxu0 0
      %1585 = vmatpush1.bf16.msra.mxu0 0
      %1586 = vmatprep.subr.bf16.mxu0 0
      %1587 = vmatpush1.bf16.msra.mxu0 0
      %1588 = vmatprep.mubr.bf16.mxu0 0
      %1589 = vmatmul.mubr.bf16.gmra.mrb[0].mxu0 %v709
      %v1590 = vpop.f32.mrb[0].mxu0
      %v1591 = vadd.f32 0.0, %v1590
      %v1592 = vpop.f32.mrb[0].mxu0
      %v1593 = vpop.f32.mrb[0].mxu0
      %v1594 = vadd.f32 0.0, %v1593
      %v1595 = vpop.f32.mrb[0].mxu0
      %1596 = vmatprep.mubr.bf16.mxu0 0
      %1597 = vmatmul.mubr.bf16.gmra.mrb[0].mxu0 %v710
      %v1598 = vpop.f32.mrb[0].mxu0
      %v1599 = vadd.f32 0.0, %v1598
      %v1600 = vpop.f32.mrb[0].mxu0
      %v1601 = vpop.f32.mrb[0].mxu0
      %v1602 = vadd.f32 0.0, %v1601
      %v1603 = vpop.f32.mrb[0].mxu0
      %1604 = vmatprep.mubr.bf16.mxu0 0
      %1605 = vmatmul.mubr.bf16.gmra.mrb[0].mxu0 %v711
      %v1606 = vpop.f32.mrb[0].mxu0
      %v1607 = vadd.f32 0.0, %v1606
      %v1608 = vpop.f32.mrb[0].mxu0
      %v1609 = vpop.f32.mrb[0].mxu0
      %v1610 = vadd.f32 0.0, %v1609
      %v1611 = vpop.f32.mrb[0].mxu0
      %1612 = vmatprep.mubr.bf16.mxu0 0
      %1613 = vmatmul.mubr.bf16.gmra.mrb[0].mxu0 %v1506
      %v1614 = vpop.f32.mrb[0].mxu0
      %v1615 = vadd.f32 0.0, %v1614
      %v1616 = vpop.f32.mrb[0].mxu0
      %v1617 = vpop.f32.mrb[0].mxu0
      %v1618 = vadd.f32 0.0, %v1617
      %v1619 = vpop.f32.mrb[0].mxu0
      %1620 = vdwg.mxu0
      %v1621 = vadd.f32 %v1479, %v1591
      %v1622 = vadd.f32 %v1480, %v1594
      %v1623 = vadd.f32 %v1481, %v1599
      %v1624 = vadd.f32 %v1482, %v1602
      %v1625 = vadd.f32 %v1483, %v1607
      %v1626 = vadd.f32 %v1484, %v1610
      %v1627 = vadd.f32 %v1485, %v1615
      %v1628 = vadd.f32 %v1486, %v1618
      %v1630 = vshrl.u32 %v373, 16
      %v1632 = vrot.slane %v1630, 4
      %v1633 = vshll.u32 %v373, 16
      %v1635 = vrot.slane %v1633, 5
      %v1636 = vor.u32 %v1632, %v1635
      %v1637 = vrot.slane %v1636, 4
      %v1639 = vshll.u32 %v374, 16
      %v1641 = vrot.slane %v1639, 5
      %v1642 = vsel %vm433, %v1637, %v1641
      %s1643 = scalar_lea.vmem %s3, 448
      %v1644 = vld [vmem:[%s1643] sm:$0xf]
      %v1645 = vld [vmem:[%s1643 + $0x4] sm:$0xf]
      %v1646 = vld [vmem:[%s1643 + $0x8] sm:$0xf]
      %v1647 = vld [vmem:[%s1643 + $0xc] sm:$0xf]
      %v1648 = vld [vmem:[%s1643 + $0x10] sm:$0xf]
      %v1649 = vld [vmem:[%s1643 + $0x14] sm:$0xf]
      %v1650 = vld [vmem:[%s1643 + $0x18] sm:$0xf]
      %v1651 = vld [vmem:[%s1643 + $0x1c] sm:$0xf]
      %v1652 = vld [vmem:[%s1643 + $0x20] sm:$0xf]
      %v1653 = vld [vmem:[%s1643 + $0x24] sm:$0xf]
      %v1654 = vld [vmem:[%s1643 + $0x28] sm:$0xf]
      %v1655 = vld [vmem:[%s1643 + $0x2c] sm:$0xf]
      %v1656 = vld [vmem:[%s1643 + $0x30] sm:$0xf]
      %v1657 = vld [vmem:[%s1643 + $0x34] sm:$0xf]
      %v1658 = vld [vmem:[%s1643 + $0x38] sm:$0xf]
      %v1659 = vld [vmem:[%s1643 + $0x3c] sm:$0xf]
      %v1660 = vunpack.c.l.b16 %v1642
      %v1661 = vpack.c.b16 %v1660, %v1205
      %v1679 = vunpack.c.l.b16 %v1644
      %v1680 = vunpack.c.l.b16 %v1645
      %v1681 = vunpack.c.l.b16 %v1646
      %v1682 = vunpack.c.l.b16 %v1647
      %v1683 = vunpack.c.l.b16 %v1648
      %v1684 = vunpack.c.l.b16 %v1649
      %v1685 = vunpack.c.l.b16 %v1650
      %v1686 = vunpack.c.l.b16 %v1651
      %v1687 = vunpack.c.l.b16 %v1652
      %v1688 = vunpack.c.l.b16 %v1653
      %v1689 = vunpack.c.l.b16 %v1654
      %v1690 = vunpack.c.l.b16 %v1655
      %v1691 = vunpack.c.l.b16 %v1656
      %v1692 = vunpack.c.l.b16 %v1657
      %v1693 = vunpack.c.l.b16 %v1658
      %v1694 = vunpack.c.l.b16 %v1659
      %v1695 = vpack.c.b16 %v1680, %v1679
      %v1696 = vpack.c.b16 %v1682, %v1681
      %v1697 = vpack.c.b16 %v1684, %v1683
      %v1698 = vpack.c.b16 %v1686, %v1685
      %v1699 = vpack.c.b16 %v1688, %v1687
      %v1700 = vpack.c.b16 %v1690, %v1689
      %v1701 = vpack.c.b16 %v1692, %v1691
      %v1702 = vpack.c.b16 %v1694, %v1693
      %1711 = vmatprep.subr.bf16.mxu0 0
      %1712 = vmatpush1.bf16.msra.mxu0 %v1695
      %1713 = vmatprep.subr.bf16.mxu0 0
      %1714 = vmatpush1.bf16.msra.mxu0 %v1696
      %1715 = vmatprep.subr.bf16.mxu0 0
      %1716 = vmatpush1.bf16.msra.mxu0 %v1697
      %1717 = vmatprep.subr.bf16.mxu0 0
      %1718 = vmatpush1.bf16.msra.mxu0 %v1698
      %1719 = vmatprep.subr.bf16.mxu0 0
      %1720 = vmatpush1.bf16.msra.mxu0 %v1699
      %1721 = vmatprep.subr.bf16.mxu0 0
      %1722 = vmatpush1.bf16.msra.mxu0 %v1700
      %1723 = vmatprep.subr.bf16.mxu0 0
      %1724 = vmatpush1.bf16.msra.mxu0 %v1701
      %1725 = vmatprep.subr.bf16.mxu0 0
      %1726 = vmatpush1.bf16.msra.mxu0 %v1702
      %1727 = vmatprep.subr.bf16.mxu0 0
      %1728 = vmatpush1.bf16.msra.mxu0 0
      %1729 = vmatprep.subr.bf16.mxu0 0
      %1730 = vmatpush1.bf16.msra.mxu0 0
      %1731 = vmatprep.subr.bf16.mxu0 0
      %1732 = vmatpush1.bf16.msra.mxu0 0
      %1733 = vmatprep.subr.bf16.mxu0 0
      %1734 = vmatpush1.bf16.msra.mxu0 0
      %1735 = vmatprep.subr.bf16.mxu0 0
      %1736 = vmatpush1.bf16.msra.mxu0 0
      %1737 = vmatprep.subr.bf16.mxu0 0
      %1738 = vmatpush1.bf16.msra.mxu0 0
      %1739 = vmatprep.subr.bf16.mxu0 0
      %1740 = vmatpush1.bf16.msra.mxu0 0
      %1741 = vmatprep.subr.bf16.mxu0 0
      %1742 = vmatpush1.bf16.msra.mxu0 0
      %1743 = vmatprep.mubr.bf16.mxu0 0
      %1744 = vmatmul.mubr.bf16.gmra.mrb[0].mxu0 %v572
      %v1745 = vpop.f32.mrb[0].mxu0
      %v1746 = vadd.f32 0.0, %v1745
      %v1747 = vpop.f32.mrb[0].mxu0
      %v1748 = vpop.f32.mrb[0].mxu0
      %v1749 = vadd.f32 0.0, %v1748
      %v1750 = vpop.f32.mrb[0].mxu0
      %1751 = vmatprep.mubr.bf16.mxu0 0
      %1752 = vmatmul.mubr.bf16.gmra.mrb[0].mxu0 %v573
      %v1753 = vpop.f32.mrb[0].mxu0
      %v1754 = vadd.f32 0.0, %v1753
      %v1755 = vpop.f32.mrb[0].mxu0
      %v1756 = vpop.f32.mrb[0].mxu0
      %v1757 = vadd.f32 0.0, %v1756
      %v1758 = vpop.f32.mrb[0].mxu0
      %1759 = vmatprep.mubr.bf16.mxu0 0
      %1760 = vmatmul.mubr.bf16.gmra.mrb[0].mxu0 %v574
      %v1761 = vpop.f32.mrb[0].mxu0
      %v1762 = vadd.f32 0.0, %v1761
      %v1763 = vpop.f32.mrb[0].mxu0
      %v1764 = vpop.f32.mrb[0].mxu0
      %v1765 = vadd.f32 0.0, %v1764
      %v1766 = vpop.f32.mrb[0].mxu0
      %1767 = vmatprep.mubr.bf16.mxu0 0
      %1768 = vmatmul.mubr.bf16.gmra.mrb[0].mxu0 %v1661
      %v1769 = vpop.f32.mrb[0].mxu0
      %v1770 = vadd.f32 0.0, %v1769
      %v1771 = vpop.f32.mrb[0].mxu0
      %v1772 = vpop.f32.mrb[0].mxu0
      %v1773 = vadd.f32 0.0, %v1772
      %v1774 = vpop.f32.mrb[0].mxu0
      %1775 = vdwg.mxu0
      %v1776 = vadd.f32 %v1621, %v1746
      %v1777 = vadd.f32 %v1622, %v1749
      %v1778 = vadd.f32 %v1623, %v1754
      %v1779 = vadd.f32 %v1624, %v1757
      %v1780 = vadd.f32 %v1625, %v1762
      %v1781 = vadd.f32 %v1626, %v1765
      %v1782 = vadd.f32 %v1627, %v1770
      %v1783 = vadd.f32 %v1628, %v1773
      %v1785 = vrot.slane %v373, 5
      %v1786 = vrot.slane %v1785, 4
      %v1787 = vrot.slane %v374, 5
      %v1788 = vsel %vm839, %v1786, %v1787
      %s1789 = scalar_lea.vmem %s3, 512
      %v1790 = vld [vmem:[%s1789] sm:$0xf]
      %v1791 = vld [vmem:[%s1789 + $0x4] sm:$0xf]
      %v1792 = vld [vmem:[%s1789 + $0x8] sm:$0xf]
      %v1793 = vld [vmem:[%s1789 + $0xc] sm:$0xf]
      %v1794 = vld [vmem:[%s1789 + $0x10] sm:$0xf]
      %v1795 = vld [vmem:[%s1789 + $0x14] sm:$0xf]
      %v1796 = vld [vmem:[%s1789 + $0x18] sm:$0xf]
      %v1797 = vld [vmem:[%s1789 + $0x1c] sm:$0xf]
      %v1798 = vld [vmem:[%s1789 + $0x20] sm:$0xf]
      %v1799 = vld [vmem:[%s1789 + $0x24] sm:$0xf]
      %v1800 = vld [vmem:[%s1789 + $0x28] sm:$0xf]
      %v1801 = vld [vmem:[%s1789 + $0x2c] sm:$0xf]
      %v1802 = vld [vmem:[%s1789 + $0x30] sm:$0xf]
      %v1803 = vld [vmem:[%s1789 + $0x34] sm:$0xf]
      %v1804 = vld [vmem:[%s1789 + $0x38] sm:$0xf]
      %v1805 = vld [vmem:[%s1789 + $0x3c] sm:$0xf]
      %v1806 = vunpack.c.l.b16 %v1788
      %v1807 = vpack.c.b16 %v1806, %v1357
      %v1825 = vunpack.c.l.b16 %v1790
      %v1826 = vunpack.c.l.b16 %v1791
      %v1827 = vunpack.c.l.b16 %v1792
      %v1828 = vunpack.c.l.b16 %v1793
      %v1829 = vunpack.c.l.b16 %v1794
      %v1830 = vunpack.c.l.b16 %v1795
      %v1831 = vunpack.c.l.b16 %v1796
      %v1832 = vunpack.c.l.b16 %v1797
      %v1833 = vunpack.c.l.b16 %v1798
      %v1834 = vunpack.c.l.b16 %v1799
      %v1835 = vunpack.c.l.b16 %v1800
      %v1836 = vunpack.c.l.b16 %v1801
      %v1837 = vunpack.c.l.b16 %v1802
      %v1838 = vunpack.c.l.b16 %v1803
      %v1839 = vunpack.c.l.b16 %v1804
      %v1840 = vunpack.c.l.b16 %v1805
      %v1841 = vpack.c.b16 %v1826, %v1825
      %v1842 = vpack.c.b16 %v1828, %v1827
      %v1843 = vpack.c.b16 %v1830, %v1829
      %v1844 = vpack.c.b16 %v1832, %v1831
      %v1845 = vpack.c.b16 %v1834, %v1833
      %v1846 = vpack.c.b16 %v1836, %v1835
      %v1847 = vpack.c.b16 %v1838, %v1837
      %v1848 = vpack.c.b16 %v1840, %v1839
      %1857 = vmatprep.subr.bf16.mxu0 0
      %1858 = vmatpush1.bf16.msra.mxu0 %v1841
      %1859 = vmatprep.subr.bf16.mxu0 0
      %1860 = vmatpush1.bf16.msra.mxu0 %v1842
      %1861 = vmatprep.subr.bf16.mxu0 0
      %1862 = vmatpush1.bf16.msra.mxu0 %v1843
      %1863 = vmatprep.subr.bf16.mxu0 0
      %1864 = vmatpush1.bf16.msra.mxu0 %v1844
      %1865 = vmatprep.subr.bf16.mxu0 0
      %1866 = vmatpush1.bf16.msra.mxu0 %v1845
      %1867 = vmatprep.subr.bf16.mxu0 0
      %1868 = vmatpush1.bf16.msra.mxu0 %v1846
      %1869 = vmatprep.subr.bf16.mxu0 0
      %1870 = vmatpush1.bf16.msra.mxu0 %v1847
      %1871 = vmatprep.subr.bf16.mxu0 0
      %1872 = vmatpush1.bf16.msra.mxu0 %v1848
      %1873 = vmatprep.subr.bf16.mxu0 0
      %1874 = vmatpush1.bf16.msra.mxu0 0
      %1875 = vmatprep.subr.bf16.mxu0 0
      %1876 = vmatpush1.bf16.msra.mxu0 0
      %1877 = vmatprep.subr.bf16.mxu0 0
      %1878 = vmatpush1.bf16.msra.mxu0 0
      %1879 = vmatprep.subr.bf16.mxu0 0
      %1880 = vmatpush1.bf16.msra.mxu0 0
      %1881 = vmatprep.subr.bf16.mxu0 0
      %1882 = vmatpush1.bf16.msra.mxu0 0
      %1883 = vmatprep.subr.bf16.mxu0 0
      %1884 = vmatpush1.bf16.msra.mxu0 0
      %1885 = vmatprep.subr.bf16.mxu0 0
      %1886 = vmatpush1.bf16.msra.mxu0 0
      %1887 = vmatprep.subr.bf16.mxu0 0
      %1888 = vmatpush1.bf16.msra.mxu0 0
      %1889 = vmatprep.mubr.bf16.mxu0 0
      %1890 = vmatmul.mubr.bf16.gmra.mrb[0].mxu0 %v898
      %v1891 = vpop.f32.mrb[0].mxu0
      %v1892 = vadd.f32 0.0, %v1891
      %v1893 = vpop.f32.mrb[0].mxu0
      %v1894 = vpop.f32.mrb[0].mxu0
      %v1895 = vadd.f32 0.0, %v1894
      %v1896 = vpop.f32.mrb[0].mxu0
      %1897 = vmatprep.mubr.bf16.mxu0 0
      %1898 = vmatmul.mubr.bf16.gmra.mrb[0].mxu0 %v899
      %v1899 = vpop.f32.mrb[0].mxu0
      %v1900 = vadd.f32 0.0, %v1899
      %v1901 = vpop.f32.mrb[0].mxu0
      %v1902 = vpop.f32.mrb[0].mxu0
      %v1903 = vadd.f32 0.0, %v1902
      %v1904 = vpop.f32.mrb[0].mxu0
      %1905 = vmatprep.mubr.bf16.mxu0 0
      %1906 = vmatmul.mubr.bf16.gmra.mrb[0].mxu0 %v900
      %v1907 = vpop.f32.mrb[0].mxu0
      %v1908 = vadd.f32 0.0, %v1907
      %v1909 = vpop.f32.mrb[0].mxu0
      %v1910 = vpop.f32.mrb[0].mxu0
      %v1911 = vadd.f32 0.0, %v1910
      %v1912 = vpop.f32.mrb[0].mxu0
      %1913 = vmatprep.mubr.bf16.mxu0 0
      %1914 = vmatmul.mubr.bf16.gmra.mrb[0].mxu0 %v1807
      %v1915 = vpop.f32.mrb[0].mxu0
      %v1916 = vadd.f32 0.0, %v1915
      %v1917 = vpop.f32.mrb[0].mxu0
      %v1918 = vpop.f32.mrb[0].mxu0
      %v1919 = vadd.f32 0.0, %v1918
      %v1920 = vpop.f32.mrb[0].mxu0
      %1921 = vdwg.mxu0
      %v1922 = vadd.f32 %v1776, %v1892
      %v1923 = vadd.f32 %v1777, %v1895
      %v1924 = vadd.f32 %v1778, %v1900
      %v1925 = vadd.f32 %v1779, %v1903
      %v1926 = vadd.f32 %v1780, %v1908
      %v1927 = vadd.f32 %v1781, %v1911
      %v1928 = vadd.f32 %v1782, %v1916
      %v1929 = vadd.f32 %v1783, %v1919
      %s1930 = scalar_lea.vmem %s3, 576
      %v1931 = vld [vmem:[%s1930] sm:$0xf]
      %v1932 = vld [vmem:[%s1930 + $0x4] sm:$0xf]
      %v1933 = vld [vmem:[%s1930 + $0x8] sm:$0xf]
      %v1934 = vld [vmem:[%s1930 + $0xc] sm:$0xf]
      %v1935 = vld [vmem:[%s1930 + $0x10] sm:$0xf]
      %v1936 = vld [vmem:[%s1930 + $0x14] sm:$0xf]
      %v1937 = vld [vmem:[%s1930 + $0x18] sm:$0xf]
      %v1938 = vld [vmem:[%s1930 + $0x1c] sm:$0xf]
      %v1939 = vld [vmem:[%s1930 + $0x20] sm:$0xf]
      %v1940 = vld [vmem:[%s1930 + $0x24] sm:$0xf]
      %v1941 = vld [vmem:[%s1930 + $0x28] sm:$0xf]
      %v1942 = vld [vmem:[%s1930 + $0x2c] sm:$0xf]
      %v1943 = vld [vmem:[%s1930 + $0x30] sm:$0xf]
      %v1944 = vld [vmem:[%s1930 + $0x34] sm:$0xf]
      %v1945 = vld [vmem:[%s1930 + $0x38] sm:$0xf]
      %v1946 = vld [vmem:[%s1930 + $0x3c] sm:$0xf]
      %v1955 = vunpack.c.l.b16 %v375
      %v1956 = vunpack.c.l.b16 %v377
      %v1957 = vunpack.c.l.b16 %v379
      %v1958 = vunpack.c.l.b16 %v381
      %v1959 = vunpack.c.l.b16 %v383
      %v1960 = vunpack.c.l.b16 %v385
      %v1961 = vunpack.c.l.b16 %v387
      %v1962 = vunpack.c.l.b16 %v389
      %v1963 = vpack.c.b16 %v1956, %v1955
      %v1964 = vpack.c.b16 %v1958, %v1957
      %v1965 = vpack.c.b16 %v1960, %v1959
      %v1966 = vpack.c.b16 %v1962, %v1961
      %v1987 = vunpack.c.l.b16 %v1931
      %v1988 = vunpack.c.l.b16 %v1932
      %v1989 = vunpack.c.l.b16 %v1933
      %v1990 = vunpack.c.l.b16 %v1934
      %v1991 = vunpack.c.l.b16 %v1935
      %v1992 = vunpack.c.l.b16 %v1936
      %v1993 = vunpack.c.l.b16 %v1937
      %v1994 = vunpack.c.l.b16 %v1938
      %v1995 = vunpack.c.l.b16 %v1939
      %v1996 = vunpack.c.l.b16 %v1940
      %v1997 = vunpack.c.l.b16 %v1941
      %v1998 = vunpack.c.l.b16 %v1942
      %v1999 = vunpack.c.l.b16 %v1943
      %v2000 = vunpack.c.l.b16 %v1944
      %v2001 = vunpack.c.l.b16 %v1945
      %v2002 = vunpack.c.l.b16 %v1946
      %v2003 = vpack.c.b16 %v1988, %v1987
      %v2004 = vpack.c.b16 %v1990, %v1989
      %v2005 = vpack.c.b16 %v1992, %v1991
      %v2006 = vpack.c.b16 %v1994, %v1993
      %v2007 = vpack.c.b16 %v1996, %v1995
      %v2008 = vpack.c.b16 %v1998, %v1997
      %v2009 = vpack.c.b16 %v2000, %v1999
      %v2010 = vpack.c.b16 %v2002, %v2001
      %2019 = vmatprep.subr.bf16.mxu0 0
      %2020 = vmatpush1.bf16.msra.mxu0 %v2003
      %2021 = vmatprep.subr.bf16.mxu0 0
      %2022 = vmatpush1.bf16.msra.mxu0 %v2004
      %2023 = vmatprep.subr.bf16.mxu0 0
      %2024 = vmatpush1.bf16.msra.mxu0 %v2005
      %2025 = vmatprep.subr.bf16.mxu0 0
      %2026 = vmatpush1.bf16.msra.mxu0 %v2006
      %2027 = vmatprep.subr.bf16.mxu0 0
      %2028 = vmatpush1.bf16.msra.mxu0 %v2007
      %2029 = vmatprep.subr.bf16.mxu0 0
      %2030 = vmatpush1.bf16.msra.mxu0 %v2008
      %2031 = vmatprep.subr.bf16.mxu0 0
      %2032 = vmatpush1.bf16.msra.mxu0 %v2009
      %2033 = vmatprep.subr.bf16.mxu0 0
      %2034 = vmatpush1.bf16.msra.mxu0 %v2010
      %2035 = vmatprep.subr.bf16.mxu0 0
      %2036 = vmatpush1.bf16.msra.mxu0 0
      %2037 = vmatprep.subr.bf16.mxu0 0
      %2038 = vmatpush1.bf16.msra.mxu0 0
      %2039 = vmatprep.subr.bf16.mxu0 0
      %2040 = vmatpush1.bf16.msra.mxu0 0
      %2041 = vmatprep.subr.bf16.mxu0 0
      %2042 = vmatpush1.bf16.msra.mxu0 0
      %2043 = vmatprep.subr.bf16.mxu0 0
      %2044 = vmatpush1.bf16.msra.mxu0 0
      %2045 = vmatprep.subr.bf16.mxu0 0
      %2046 = vmatpush1.bf16.msra.mxu0 0
      %2047 = vmatprep.subr.bf16.mxu0 0
      %2048 = vmatpush1.bf16.msra.mxu0 0
      %2049 = vmatprep.subr.bf16.mxu0 0
      %2050 = vmatpush1.bf16.msra.mxu0 0
      %2051 = vmatprep.mubr.bf16.mxu0 0
      %2052 = vmatmul.mubr.bf16.gmra.mrb[0].mxu0 %v1963
      %v2053 = vpop.f32.mrb[0].mxu0
      %v2054 = vadd.f32 0.0, %v2053
      %v2055 = vpop.f32.mrb[0].mxu0
      %v2056 = vpop.f32.mrb[0].mxu0
      %v2057 = vadd.f32 0.0, %v2056
      %v2058 = vpop.f32.mrb[0].mxu0
      %2059 = vmatprep.mubr.bf16.mxu0 0
      %2060 = vmatmul.mubr.bf16.gmra.mrb[0].mxu0 %v1964
      %v2061 = vpop.f32.mrb[0].mxu0
      %v2062 = vadd.f32 0.0, %v2061
      %v2063 = vpop.f32.mrb[0].mxu0
      %v2064 = vpop.f32.mrb[0].mxu0
      %v2065 = vadd.f32 0.0, %v2064
      %v2066 = vpop.f32.mrb[0].mxu0
      %2067 = vmatprep.mubr.bf16.mxu0 0
      %2068 = vmatmul.mubr.bf16.gmra.mrb[0].mxu0 %v1965
      %v2069 = vpop.f32.mrb[0].mxu0
      %v2070 = vadd.f32 0.0, %v2069
      %v2071 = vpop.f32.mrb[0].mxu0
      %v2072 = vpop.f32.mrb[0].mxu0
      %v2073 = vadd.f32 0.0, %v2072
      %v2074 = vpop.f32.mrb[0].mxu0
      %2075 = vmatprep.mubr.bf16.mxu0 0
      %2076 = vmatmul.mubr.bf16.gmra.mrb[0].mxu0 %v1966
      %v2077 = vpop.f32.mrb[0].mxu0
      %v2078 = vadd.f32 0.0, %v2077
      %v2079 = vpop.f32.mrb[0].mxu0
      %v2080 = vpop.f32.mrb[0].mxu0
      %v2081 = vadd.f32 0.0, %v2080
      %v2082 = vpop.f32.mrb[0].mxu0
      %2083 = vdwg.mxu0
      %v2084 = vadd.f32 %v1922, %v2054
      %v2085 = vadd.f32 %v1923, %v2057
      %v2086 = vadd.f32 %v1924, %v2062
      %v2087 = vadd.f32 %v1925, %v2065
      %v2088 = vadd.f32 %v1926, %v2070
      %v2089 = vadd.f32 %v1927, %v2073
      %v2090 = vadd.f32 %v1928, %v2078
      %v2091 = vadd.f32 %v1929, %v2081
      %v2093 = vshrl.u32 %v375, 16
      %v2095 = vrot.slane %v2093, 4
      %v2096 = vshll.u32 %v375, 16
      %v2098 = vrot.slane %v2096, 5
      %v2099 = vor.u32 %v2095, %v2098
      %v2100 = vrot.slane %v2099, 4
      %v2102 = vshll.u32 %v376, 16
      %v2104 = vrot.slane %v2102, 5
      %v2105 = vsel %vm433, %v2100, %v2104
      %v2107 = vshrl.u32 %v377, 16
      %v2109 = vrot.slane %v2107, 4
      %v2110 = vshll.u32 %v377, 16
      %v2112 = vrot.slane %v2110, 5
      %v2113 = vor.u32 %v2109, %v2112
      %v2114 = vrot.slane %v2113, 4
      %v2116 = vshll.u32 %v378, 16
      %v2118 = vrot.slane %v2116, 5
      %v2119 = vsel %vm433, %v2114, %v2118
      %v2121 = vshrl.u32 %v379, 16
      %v2123 = vrot.slane %v2121, 4
      %v2124 = vshll.u32 %v379, 16
      %v2126 = vrot.slane %v2124, 5
      %v2127 = vor.u32 %v2123, %v2126
      %v2128 = vrot.slane %v2127, 4
      %v2130 = vshll.u32 %v380, 16
      %v2132 = vrot.slane %v2130, 5
      %v2133 = vsel %vm433, %v2128, %v2132
      %v2135 = vshrl.u32 %v381, 16
      %v2137 = vrot.slane %v2135, 4
      %v2138 = vshll.u32 %v381, 16
      %v2140 = vrot.slane %v2138, 5
      %v2141 = vor.u32 %v2137, %v2140
      %v2142 = vrot.slane %v2141, 4
      %v2144 = vshll.u32 %v382, 16
      %v2146 = vrot.slane %v2144, 5
      %v2147 = vsel %vm433, %v2142, %v2146
      %v2149 = vshrl.u32 %v383, 16
      %v2151 = vrot.slane %v2149, 4
      %v2152 = vshll.u32 %v383, 16
      %v2154 = vrot.slane %v2152, 5
      %v2155 = vor.u32 %v2151, %v2154
      %v2156 = vrot.slane %v2155, 4
      %v2158 = vshll.u32 %v384, 16
      %v2160 = vrot.slane %v2158, 5
      %v2161 = vsel %vm433, %v2156, %v2160
      %v2163 = vshrl.u32 %v385, 16
      %v2165 = vrot.slane %v2163, 4
      %v2166 = vshll.u32 %v385, 16
      %v2168 = vrot.slane %v2166, 5
      %v2169 = vor.u32 %v2165, %v2168
      %v2170 = vrot.slane %v2169, 4
      %v2172 = vshll.u32 %v386, 16
      %v2174 = vrot.slane %v2172, 5
      %v2175 = vsel %vm433, %v2170, %v2174
      %v2177 = vshrl.u32 %v387, 16
      %v2179 = vrot.slane %v2177, 4
      %v2180 = vshll.u32 %v387, 16
      %v2182 = vrot.slane %v2180, 5
      %v2183 = vor.u32 %v2179, %v2182
      %v2184 = vrot.slane %v2183, 4
      %v2186 = vshll.u32 %v388, 16
      %v2188 = vrot.slane %v2186, 5
      %v2189 = vsel %vm433, %v2184, %v2188
      %v2191 = vshrl.u32 %v389, 16
      %v2193 = vrot.slane %v2191, 4
      %v2194 = vshll.u32 %v389, 16
      %v2196 = vrot.slane %v2194, 5
      %v2197 = vor.u32 %v2193, %v2196
      %v2198 = vrot.slane %v2197, 4
      %v2200 = vshll.u32 %v390, 16
      %v2202 = vrot.slane %v2200, 5
      %v2203 = vsel %vm433, %v2198, %v2202
      %s2204 = scalar_lea.vmem %s3, 640
      %v2205 = vld [vmem:[%s2204] sm:$0xf]
      %v2206 = vld [vmem:[%s2204 + $0x4] sm:$0xf]
      %v2207 = vld [vmem:[%s2204 + $0x8] sm:$0xf]
      %v2208 = vld [vmem:[%s2204 + $0xc] sm:$0xf]
      %v2209 = vld [vmem:[%s2204 + $0x10] sm:$0xf]
      %v2210 = vld [vmem:[%s2204 + $0x14] sm:$0xf]
      %v2211 = vld [vmem:[%s2204 + $0x18] sm:$0xf]
      %v2212 = vld [vmem:[%s2204 + $0x1c] sm:$0xf]
      %v2213 = vld [vmem:[%s2204 + $0x20] sm:$0xf]
      %v2214 = vld [vmem:[%s2204 + $0x24] sm:$0xf]
      %v2215 = vld [vmem:[%s2204 + $0x28] sm:$0xf]
      %v2216 = vld [vmem:[%s2204 + $0x2c] sm:$0xf]
      %v2217 = vld [vmem:[%s2204 + $0x30] sm:$0xf]
      %v2218 = vld [vmem:[%s2204 + $0x34] sm:$0xf]
      %v2219 = vld [vmem:[%s2204 + $0x38] sm:$0xf]
      %v2220 = vld [vmem:[%s2204 + $0x3c] sm:$0xf]
      %v2221 = vunpack.c.l.b16 %v2105
      %v2222 = vunpack.c.l.b16 %v2119
      %v2223 = vunpack.c.l.b16 %v2133
      %v2224 = vunpack.c.l.b16 %v2147
      %v2225 = vunpack.c.l.b16 %v2161
      %v2226 = vunpack.c.l.b16 %v2175
      %v2227 = vunpack.c.l.b16 %v2189
      %v2228 = vunpack.c.l.b16 %v2203
      %v2229 = vpack.c.b16 %v2222, %v2221
      %v2230 = vpack.c.b16 %v2224, %v2223
      %v2231 = vpack.c.b16 %v2226, %v2225
      %v2232 = vpack.c.b16 %v2228, %v2227
      %v2253 = vunpack.c.l.b16 %v2205
      %v2254 = vunpack.c.l.b16 %v2206
      %v2255 = vunpack.c.l.b16 %v2207
      %v2256 = vunpack.c.l.b16 %v2208
      %v2257 = vunpack.c.l.b16 %v2209
      %v2258 = vunpack.c.l.b16 %v2210
      %v2259 = vunpack.c.l.b16 %v2211
      %v2260 = vunpack.c.l.b16 %v2212
      %v2261 = vunpack.c.l.b16 %v2213
      %v2262 = vunpack.c.l.b16 %v2214
      %v2263 = vunpack.c.l.b16 %v2215
      %v2264 = vunpack.c.l.b16 %v2216
      %v2265 = vunpack.c.l.b16 %v2217
      %v2266 = vunpack.c.l.b16 %v2218
      %v2267 = vunpack.c.l.b16 %v2219
      %v2268 = vunpack.c.l.b16 %v2220
      %v2269 = vpack.c.b16 %v2254, %v2253
      %v2270 = vpack.c.b16 %v2256, %v2255
      %v2271 = vpack.c.b16 %v2258, %v2257
      %v2272 = vpack.c.b16 %v2260, %v2259
      %v2273 = vpack.c.b16 %v2262, %v2261
      %v2274 = vpack.c.b16 %v2264, %v2263
      %v2275 = vpack.c.b16 %v2266, %v2265
      %v2276 = vpack.c.b16 %v2268, %v2267
      %2285 = vmatprep.subr.bf16.mxu0 0
      %2286 = vmatpush1.bf16.msra.mxu0 %v2269
      %2287 = vmatprep.subr.bf16.mxu0 0
      %2288 = vmatpush1.bf16.msra.mxu0 %v2270
      %2289 = vmatprep.subr.bf16.mxu0 0
      %2290 = vmatpush1.bf16.msra.mxu0 %v2271
      %2291 = vmatprep.subr.bf16.mxu0 0
      %2292 = vmatpush1.bf16.msra.mxu0 %v2272
      %2293 = vmatprep.subr.bf16.mxu0 0
      %2294 = vmatpush1.bf16.msra.mxu0 %v2273
      %2295 = vmatprep.subr.bf16.mxu0 0
      %2296 = vmatpush1.bf16.msra.mxu0 %v2274
      %2297 = vmatprep.subr.bf16.mxu0 0
      %2298 = vmatpush1.bf16.msra.mxu0 %v2275
      %2299 = vmatprep.subr.bf16.mxu0 0
      %2300 = vmatpush1.bf16.msra.mxu0 %v2276
      %2301 = vmatprep.subr.bf16.mxu0 0
      %2302 = vmatpush1.bf16.msra.mxu0 0
      %2303 = vmatprep.subr.bf16.mxu0 0
      %2304 = vmatpush1.bf16.msra.mxu0 0
      %2305 = vmatprep.subr.bf16.mxu0 0
      %2306 = vmatpush1.bf16.msra.mxu0 0
      %2307 = vmatprep.subr.bf16.mxu0 0
      %2308 = vmatpush1.bf16.msra.mxu0 0
      %2309 = vmatprep.subr.bf16.mxu0 0
      %2310 = vmatpush1.bf16.msra.mxu0 0
      %2311 = vmatprep.subr.bf16.mxu0 0
      %2312 = vmatpush1.bf16.msra.mxu0 0
      %2313 = vmatprep.subr.bf16.mxu0 0
      %2314 = vmatpush1.bf16.msra.mxu0 0
      %2315 = vmatprep.subr.bf16.mxu0 0
      %2316 = vmatpush1.bf16.msra.mxu0 0
      %2317 = vmatprep.mubr.bf16.mxu0 0
      %2318 = vmatmul.mubr.bf16.gmra.mrb[0].mxu0 %v2229
      %v2319 = vpop.f32.mrb[0].mxu0
      %v2320 = vadd.f32 0.0, %v2319
      %v2321 = vpop.f32.mrb[0].mxu0
      %v2322 = vpop.f32.mrb[0].mxu0
      %v2323 = vadd.f32 0.0, %v2322
      %v2324 = vpop.f32.mrb[0].mxu0
      %2325 = vmatprep.mubr.bf16.mxu0 0
      %2326 = vmatmul.mubr.bf16.gmra.mrb[0].mxu0 %v2230
      %v2327 = vpop.f32.mrb[0].mxu0
      %v2328 = vadd.f32 0.0, %v2327
      %v2329 = vpop.f32.mrb[0].mxu0
      %v2330 = vpop.f32.mrb[0].mxu0
      %v2331 = vadd.f32 0.0, %v2330
      %v2332 = vpop.f32.mrb[0].mxu0
      %2333 = vmatprep.mubr.bf16.mxu0 0
      %2334 = vmatmul.mubr.bf16.gmra.mrb[0].mxu0 %v2231
      %v2335 = vpop.f32.mrb[0].mxu0
      %v2336 = vadd.f32 0.0, %v2335
      %v2337 = vpop.f32.mrb[0].mxu0
      %v2338 = vpop.f32.mrb[0].mxu0
      %v2339 = vadd.f32 0.0, %v2338
      %v2340 = vpop.f32.mrb[0].mxu0
      %2341 = vmatprep.mubr.bf16.mxu0 0
      %2342 = vmatmul.mubr.bf16.gmra.mrb[0].mxu0 %v2232
      %v2343 = vpop.f32.mrb[0].mxu0
      %v2344 = vadd.f32 0.0, %v2343
      %v2345 = vpop.f32.mrb[0].mxu0
      %v2346 = vpop.f32.mrb[0].mxu0
      %v2347 = vadd.f32 0.0, %v2346
      %v2348 = vpop.f32.mrb[0].mxu0
      %2349 = vdwg.mxu0
      %v2350 = vadd.f32 %v2084, %v2320
      %v2351 = vadd.f32 %v2085, %v2323
      %v2352 = vadd.f32 %v2086, %v2328
      %v2353 = vadd.f32 %v2087, %v2331
      %v2354 = vadd.f32 %v2088, %v2336
      %v2355 = vadd.f32 %v2089, %v2339
      %v2356 = vadd.f32 %v2090, %v2344
      %v2357 = vadd.f32 %v2091, %v2347
      %v2366 = vrot.slane %v375, 5
      %v2367 = vrot.slane %v2366, 4
      %v2368 = vrot.slane %v376, 5
      %v2369 = vsel %vm839, %v2367, %v2368
      %v2370 = vrot.slane %v377, 5
      %v2371 = vrot.slane %v2370, 4
      %v2372 = vrot.slane %v378, 5
      %v2373 = vsel %vm839, %v2371, %v2372
      %v2374 = vrot.slane %v379, 5
      %v2375 = vrot.slane %v2374, 4
      %v2376 = vrot.slane %v380, 5
      %v2377 = vsel %vm839, %v2375, %v2376
      %v2378 = vrot.slane %v381, 5
      %v2379 = vrot.slane %v2378, 4
      %v2380 = vrot.slane %v382, 5
      %v2381 = vsel %vm839, %v2379, %v2380
      %v2382 = vrot.slane %v383, 5
      %v2383 = vrot.slane %v2382, 4
      %v2384 = vrot.slane %v384, 5
      %v2385 = vsel %vm839, %v2383, %v2384
      %v2386 = vrot.slane %v385, 5
      %v2387 = vrot.slane %v2386, 4
      %v2388 = vrot.slane %v386, 5
      %v2389 = vsel %vm839, %v2387, %v2388
      %v2390 = vrot.slane %v387, 5
      %v2391 = vrot.slane %v2390, 4
      %v2392 = vrot.slane %v388, 5
      %v2393 = vsel %vm839, %v2391, %v2392
      %v2394 = vrot.slane %v389, 5
      %v2395 = vrot.slane %v2394, 4
      %v2396 = vrot.slane %v390, 5
      %v2397 = vsel %vm839, %v2395, %v2396
      %s2398 = scalar_lea.vmem %s3, 704
      %v2399 = vld [vmem:[%s2398] sm:$0xf]
      %v2400 = vld [vmem:[%s2398 + $0x4] sm:$0xf]
      %v2401 = vld [vmem:[%s2398 + $0x8] sm:$0xf]
      %v2402 = vld [vmem:[%s2398 + $0xc] sm:$0xf]
      %v2403 = vld [vmem:[%s2398 + $0x10] sm:$0xf]
      %v2404 = vld [vmem:[%s2398 + $0x14] sm:$0xf]
      %v2405 = vld [vmem:[%s2398 + $0x18] sm:$0xf]
      %v2406 = vld [vmem:[%s2398 + $0x1c] sm:$0xf]
      %v2407 = vld [vmem:[%s2398 + $0x20] sm:$0xf]
      %v2408 = vld [vmem:[%s2398 + $0x24] sm:$0xf]
      %v2409 = vld [vmem:[%s2398 + $0x28] sm:$0xf]
      %v2410 = vld [vmem:[%s2398 + $0x2c] sm:$0xf]
      %v2411 = vld [vmem:[%s2398 + $0x30] sm:$0xf]
      %v2412 = vld [vmem:[%s2398 + $0x34] sm:$0xf]
      %v2413 = vld [vmem:[%s2398 + $0x38] sm:$0xf]
      %v2414 = vld [vmem:[%s2398 + $0x3c] sm:$0xf]
      %v2415 = vunpack.c.l.b16 %v2369
      %v2416 = vunpack.c.l.b16 %v2373
      %v2417 = vunpack.c.l.b16 %v2377
      %v2418 = vunpack.c.l.b16 %v2381
      %v2419 = vunpack.c.l.b16 %v2385
      %v2420 = vunpack.c.l.b16 %v2389
      %v2421 = vunpack.c.l.b16 %v2393
      %v2422 = vunpack.c.l.b16 %v2397
      %v2423 = vpack.c.b16 %v2416, %v2415
      %v2424 = vpack.c.b16 %v2418, %v2417
      %v2425 = vpack.c.b16 %v2420, %v2419
      %v2426 = vpack.c.b16 %v2422, %v2421
      %v2447 = vunpack.c.l.b16 %v2399
      %v2448 = vunpack.c.l.b16 %v2400
      %v2449 = vunpack.c.l.b16 %v2401
      %v2450 = vunpack.c.l.b16 %v2402
      %v2451 = vunpack.c.l.b16 %v2403
      %v2452 = vunpack.c.l.b16 %v2404
      %v2453 = vunpack.c.l.b16 %v2405
      %v2454 = vunpack.c.l.b16 %v2406
      %v2455 = vunpack.c.l.b16 %v2407
      %v2456 = vunpack.c.l.b16 %v2408
      %v2457 = vunpack.c.l.b16 %v2409
      %v2458 = vunpack.c.l.b16 %v2410
      %v2459 = vunpack.c.l.b16 %v2411
      %v2460 = vunpack.c.l.b16 %v2412
      %v2461 = vunpack.c.l.b16 %v2413
      %v2462 = vunpack.c.l.b16 %v2414
      %v2463 = vpack.c.b16 %v2448, %v2447
      %v2464 = vpack.c.b16 %v2450, %v2449
      %v2465 = vpack.c.b16 %v2452, %v2451
      %v2466 = vpack.c.b16 %v2454, %v2453
      %v2467 = vpack.c.b16 %v2456, %v2455
      %v2468 = vpack.c.b16 %v2458, %v2457
      %v2469 = vpack.c.b16 %v2460, %v2459
      %v2470 = vpack.c.b16 %v2462, %v2461
      %2479 = vmatprep.subr.bf16.mxu0 0
      %2480 = vmatpush1.bf16.msra.mxu0 %v2463
      %2481 = vmatprep.subr.bf16.mxu0 0
      %2482 = vmatpush1.bf16.msra.mxu0 %v2464
      %2483 = vmatprep.subr.bf16.mxu0 0
      %2484 = vmatpush1.bf16.msra.mxu0 %v2465
      %2485 = vmatprep.subr.bf16.mxu0 0
      %2486 = vmatpush1.bf16.msra.mxu0 %v2466
      %2487 = vmatprep.subr.bf16.mxu0 0
      %2488 = vmatpush1.bf16.msra.mxu0 %v2467
      %2489 = vmatprep.subr.bf16.mxu0 0
      %2490 = vmatpush1.bf16.msra.mxu0 %v2468
      %2491 = vmatprep.subr.bf16.mxu0 0
      %2492 = vmatpush1.bf16.msra.mxu0 %v2469
      %2493 = vmatprep.subr.bf16.mxu0 0
      %2494 = vmatpush1.bf16.msra.mxu0 %v2470
      %2495 = vmatprep.subr.bf16.mxu0 0
      %2496 = vmatpush1.bf16.msra.mxu0 0
      %2497 = vmatprep.subr.bf16.mxu0 0
      %2498 = vmatpush1.bf16.msra.mxu0 0
      %2499 = vmatprep.subr.bf16.mxu0 0
      %2500 = vmatpush1.bf16.msra.mxu0 0
      %2501 = vmatprep.subr.bf16.mxu0 0
      %2502 = vmatpush1.bf16.msra.mxu0 0
      %2503 = vmatprep.subr.bf16.mxu0 0
      %2504 = vmatpush1.bf16.msra.mxu0 0
      %2505 = vmatprep.subr.bf16.mxu0 0
      %2506 = vmatpush1.bf16.msra.mxu0 0
      %2507 = vmatprep.subr.bf16.mxu0 0
      %2508 = vmatpush1.bf16.msra.mxu0 0
      %2509 = vmatprep.subr.bf16.mxu0 0
      %2510 = vmatpush1.bf16.msra.mxu0 0
      %2511 = vmatprep.mubr.bf16.mxu0 0
      %2512 = vmatmul.mubr.bf16.gmra.mrb[0].mxu0 %v2423
      %v2513 = vpop.f32.mrb[0].mxu0
      %v2514 = vadd.f32 0.0, %v2513
      %v2515 = vpop.f32.mrb[0].mxu0
      %v2516 = vpop.f32.mrb[0].mxu0
      %v2517 = vadd.f32 0.0, %v2516
      %v2518 = vpop.f32.mrb[0].mxu0
      %2519 = vmatprep.mubr.bf16.mxu0 0
      %2520 = vmatmul.mubr.bf16.gmra.mrb[0].mxu0 %v2424
      %v2521 = vpop.f32.mrb[0].mxu0
      %v2522 = vadd.f32 0.0, %v2521
      %v2523 = vpop.f32.mrb[0].mxu0
      %v2524 = vpop.f32.mrb[0].mxu0
      %v2525 = vadd.f32 0.0, %v2524
      %v2526 = vpop.f32.mrb[0].mxu0
      %2527 = vmatprep.mubr.bf16.mxu0 0
      %2528 = vmatmul.mubr.bf16.gmra.mrb[0].mxu0 %v2425
      %v2529 = vpop.f32.mrb[0].mxu0
      %v2530 = vadd.f32 0.0, %v2529
      %v2531 = vpop.f32.mrb[0].mxu0
      %v2532 = vpop.f32.mrb[0].mxu0
      %v2533 = vadd.f32 0.0, %v2532
      %v2534 = vpop.f32.mrb[0].mxu0
      %2535 = vmatprep.mubr.bf16.mxu0 0
      %2536 = vmatmul.mubr.bf16.gmra.mrb[0].mxu0 %v2426
      %v2537 = vpop.f32.mrb[0].mxu0
      %v2538 = vadd.f32 0.0, %v2537
      %v2539 = vpop.f32.mrb[0].mxu0
      %v2540 = vpop.f32.mrb[0].mxu0
      %v2541 = vadd.f32 0.0, %v2540
      %v2542 = vpop.f32.mrb[0].mxu0
      %2543 = vdwg.mxu0
      %v2544 = vadd.f32 %v2350, %v2514
      %v2545 = vadd.f32 %v2351, %v2517
      %v2546 = vadd.f32 %v2352, %v2522
      %v2547 = vadd.f32 %v2353, %v2525
      %v2548 = vadd.f32 %v2354, %v2530
      %v2549 = vadd.f32 %v2355, %v2533
      %v2550 = vadd.f32 %v2356, %v2538
      %v2551 = vadd.f32 %v2357, %v2541
      %s2552 = scalar_lea.vmem %s3, 768
      %v2553 = vld [vmem:[%s2552] sm:$0xf]
      %v2554 = vld [vmem:[%s2552 + $0x4] sm:$0xf]
      %v2555 = vld [vmem:[%s2552 + $0x8] sm:$0xf]
      %v2556 = vld [vmem:[%s2552 + $0xc] sm:$0xf]
      %v2557 = vld [vmem:[%s2552 + $0x10] sm:$0xf]
      %v2558 = vld [vmem:[%s2552 + $0x14] sm:$0xf]
      %v2559 = vld [vmem:[%s2552 + $0x18] sm:$0xf]
      %v2560 = vld [vmem:[%s2552 + $0x1c] sm:$0xf]
      %v2561 = vld [vmem:[%s2552 + $0x20] sm:$0xf]
      %v2562 = vld [vmem:[%s2552 + $0x24] sm:$0xf]
      %v2563 = vld [vmem:[%s2552 + $0x28] sm:$0xf]
      %v2564 = vld [vmem:[%s2552 + $0x2c] sm:$0xf]
      %v2565 = vld [vmem:[%s2552 + $0x30] sm:$0xf]
      %v2566 = vld [vmem:[%s2552 + $0x34] sm:$0xf]
      %v2567 = vld [vmem:[%s2552 + $0x38] sm:$0xf]
      %v2568 = vld [vmem:[%s2552 + $0x3c] sm:$0xf]
      %v2570 = vunpack.c.l.b16 %v391
      %v2571 = vpack.c.b16 %v1957, %v1956
      %v2572 = vpack.c.b16 %v1959, %v1958
      %v2573 = vpack.c.b16 %v1961, %v1960
      %v2574 = vpack.c.b16 %v2570, %v1962
      %v2595 = vunpack.c.l.b16 %v2553
      %v2596 = vunpack.c.l.b16 %v2554
      %v2597 = vunpack.c.l.b16 %v2555
      %v2598 = vunpack.c.l.b16 %v2556
      %v2599 = vunpack.c.l.b16 %v2557
      %v2600 = vunpack.c.l.b16 %v2558
      %v2601 = vunpack.c.l.b16 %v2559
      %v2602 = vunpack.c.l.b16 %v2560
      %v2603 = vunpack.c.l.b16 %v2561
      %v2604 = vunpack.c.l.b16 %v2562
      %v2605 = vunpack.c.l.b16 %v2563
      %v2606 = vunpack.c.l.b16 %v2564
      %v2607 = vunpack.c.l.b16 %v2565
      %v2608 = vunpack.c.l.b16 %v2566
      %v2609 = vunpack.c.l.b16 %v2567
      %v2610 = vunpack.c.l.b16 %v2568
      %v2611 = vpack.c.b16 %v2596, %v2595
      %v2612 = vpack.c.b16 %v2598, %v2597
      %v2613 = vpack.c.b16 %v2600, %v2599
      %v2614 = vpack.c.b16 %v2602, %v2601
      %v2615 = vpack.c.b16 %v2604, %v2603
      %v2616 = vpack.c.b16 %v2606, %v2605
      %v2617 = vpack.c.b16 %v2608, %v2607
      %v2618 = vpack.c.b16 %v2610, %v2609
      %2627 = vmatprep.subr.bf16.mxu0 0
      %2628 = vmatpush1.bf16.msra.mxu0 %v2611
      %2629 = vmatprep.subr.bf16.mxu0 0
      %2630 = vmatpush1.bf16.msra.mxu0 %v2612
      %2631 = vmatprep.subr.bf16.mxu0 0
      %2632 = vmatpush1.bf16.msra.mxu0 %v2613
      %2633 = vmatprep.subr.bf16.mxu0 0
      %2634 = vmatpush1.bf16.msra.mxu0 %v2614
      %2635 = vmatprep.subr.bf16.mxu0 0
      %2636 = vmatpush1.bf16.msra.mxu0 %v2615
      %2637 = vmatprep.subr.bf16.mxu0 0
      %2638 = vmatpush1.bf16.msra.mxu0 %v2616
      %2639 = vmatprep.subr.bf16.mxu0 0
      %2640 = vmatpush1.bf16.msra.mxu0 %v2617
      %2641 = vmatprep.subr.bf16.mxu0 0
      %2642 = vmatpush1.bf16.msra.mxu0 %v2618
      %2643 = vmatprep.subr.bf16.mxu0 0
      %2644 = vmatpush1.bf16.msra.mxu0 0
      %2645 = vmatprep.subr.bf16.mxu0 0
      %2646 = vmatpush1.bf16.msra.mxu0 0
      %2647 = vmatprep.subr.bf16.mxu0 0
      %2648 = vmatpush1.bf16.msra.mxu0 0
      %2649 = vmatprep.subr.bf16.mxu0 0
      %2650 = vmatpush1.bf16.msra.mxu0 0
      %2651 = vmatprep.subr.bf16.mxu0 0
      %2652 = vmatpush1.bf16.msra.mxu0 0
      %2653 = vmatprep.subr.bf16.mxu0 0
      %2654 = vmatpush1.bf16.msra.mxu0 0
      %2655 = vmatprep.subr.bf16.mxu0 0
      %2656 = vmatpush1.bf16.msra.mxu0 0
      %2657 = vmatprep.subr.bf16.mxu0 0
      %2658 = vmatpush1.bf16.msra.mxu0 0
      %2659 = vmatprep.mubr.bf16.mxu0 0
      %2660 = vmatmul.mubr.bf16.gmra.mrb[0].mxu0 %v2571
      %v2661 = vpop.f32.mrb[0].mxu0
      %v2662 = vadd.f32 0.0, %v2661
      %v2663 = vpop.f32.mrb[0].mxu0
      %v2664 = vpop.f32.mrb[0].mxu0
      %v2665 = vadd.f32 0.0, %v2664
      %v2666 = vpop.f32.mrb[0].mxu0
      %2667 = vmatprep.mubr.bf16.mxu0 0
      %2668 = vmatmul.mubr.bf16.gmra.mrb[0].mxu0 %v2572
      %v2669 = vpop.f32.mrb[0].mxu0
      %v2670 = vadd.f32 0.0, %v2669
      %v2671 = vpop.f32.mrb[0].mxu0
      %v2672 = vpop.f32.mrb[0].mxu0
      %v2673 = vadd.f32 0.0, %v2672
      %v2674 = vpop.f32.mrb[0].mxu0
      %2675 = vmatprep.mubr.bf16.mxu0 0
      %2676 = vmatmul.mubr.bf16.gmra.mrb[0].mxu0 %v2573
      %v2677 = vpop.f32.mrb[0].mxu0
      %v2678 = vadd.f32 0.0, %v2677
      %v2679 = vpop.f32.mrb[0].mxu0
      %v2680 = vpop.f32.mrb[0].mxu0
      %v2681 = vadd.f32 0.0, %v2680
      %v2682 = vpop.f32.mrb[0].mxu0
      %2683 = vmatprep.mubr.bf16.mxu0 0
      %2684 = vmatmul.mubr.bf16.gmra.mrb[0].mxu0 %v2574
      %v2685 = vpop.f32.mrb[0].mxu0
      %v2686 = vadd.f32 0.0, %v2685
      %v2687 = vpop.f32.mrb[0].mxu0
      %v2688 = vpop.f32.mrb[0].mxu0
      %v2689 = vadd.f32 0.0, %v2688
      %v2690 = vpop.f32.mrb[0].mxu0
      %2691 = vdwg.mxu0
      %v2692 = vadd.f32 %v2544, %v2662
      %v2693 = vadd.f32 %v2545, %v2665
      %v2694 = vadd.f32 %v2546, %v2670
      %v2695 = vadd.f32 %v2547, %v2673
      %v2696 = vadd.f32 %v2548, %v2678
      %v2697 = vadd.f32 %v2549, %v2681
      %v2698 = vadd.f32 %v2550, %v2686
      %v2699 = vadd.f32 %v2551, %v2689
      %v2701 = vshrl.u32 %v391, 16
      %v2703 = vrot.slane %v2701, 4
      %v2704 = vshll.u32 %v391, 16
      %v2706 = vrot.slane %v2704, 5
      %v2707 = vor.u32 %v2703, %v2706
      %v2708 = vrot.slane %v2707, 4
      %v2710 = vshll.u32 %v392, 16
      %v2712 = vrot.slane %v2710, 5
      %v2713 = vsel %vm433, %v2708, %v2712
      %s2714 = scalar_lea.vmem %s3, 832
      %v2715 = vld [vmem:[%s2714] sm:$0xf]
      %v2716 = vld [vmem:[%s2714 + $0x4] sm:$0xf]
      %v2717 = vld [vmem:[%s2714 + $0x8] sm:$0xf]
      %v2718 = vld [vmem:[%s2714 + $0xc] sm:$0xf]
      %v2719 = vld [vmem:[%s2714 + $0x10] sm:$0xf]
      %v2720 = vld [vmem:[%s2714 + $0x14] sm:$0xf]
      %v2721 = vld [vmem:[%s2714 + $0x18] sm:$0xf]
      %v2722 = vld [vmem:[%s2714 + $0x1c] sm:$0xf]
      %v2723 = vld [vmem:[%s2714 + $0x20] sm:$0xf]
      %v2724 = vld [vmem:[%s2714 + $0x24] sm:$0xf]
      %v2725 = vld [vmem:[%s2714 + $0x28] sm:$0xf]
      %v2726 = vld [vmem:[%s2714 + $0x2c] sm:$0xf]
      %v2727 = vld [vmem:[%s2714 + $0x30] sm:$0xf]
      %v2728 = vld [vmem:[%s2714 + $0x34] sm:$0xf]
      %v2729 = vld [vmem:[%s2714 + $0x38] sm:$0xf]
      %v2730 = vld [vmem:[%s2714 + $0x3c] sm:$0xf]
      %v2731 = vunpack.c.l.b16 %v2713
      %v2732 = vpack.c.b16 %v2223, %v2222
      %v2733 = vpack.c.b16 %v2225, %v2224
      %v2734 = vpack.c.b16 %v2227, %v2226
      %v2735 = vpack.c.b16 %v2731, %v2228
      %v2756 = vunpack.c.l.b16 %v2715
      %v2757 = vunpack.c.l.b16 %v2716
      %v2758 = vunpack.c.l.b16 %v2717
      %v2759 = vunpack.c.l.b16 %v2718
      %v2760 = vunpack.c.l.b16 %v2719
      %v2761 = vunpack.c.l.b16 %v2720
      %v2762 = vunpack.c.l.b16 %v2721
      %v2763 = vunpack.c.l.b16 %v2722
      %v2764 = vunpack.c.l.b16 %v2723
      %v2765 = vunpack.c.l.b16 %v2724
      %v2766 = vunpack.c.l.b16 %v2725
      %v2767 = vunpack.c.l.b16 %v2726
      %v2768 = vunpack.c.l.b16 %v2727
      %v2769 = vunpack.c.l.b16 %v2728
      %v2770 = vunpack.c.l.b16 %v2729
      %v2771 = vunpack.c.l.b16 %v2730
      %v2772 = vpack.c.b16 %v2757, %v2756
      %v2773 = vpack.c.b16 %v2759, %v2758
      %v2774 = vpack.c.b16 %v2761, %v2760
      %v2775 = vpack.c.b16 %v2763, %v2762
      %v2776 = vpack.c.b16 %v2765, %v2764
      %v2777 = vpack.c.b16 %v2767, %v2766
      %v2778 = vpack.c.b16 %v2769, %v2768
      %v2779 = vpack.c.b16 %v2771, %v2770
      %2788 = vmatprep.subr.bf16.mxu0 0
      %2789 = vmatpush1.bf16.msra.mxu0 %v2772
      %2790 = vmatprep.subr.bf16.mxu0 0
      %2791 = vmatpush1.bf16.msra.mxu0 %v2773
      %2792 = vmatprep.subr.bf16.mxu0 0
      %2793 = vmatpush1.bf16.msra.mxu0 %v2774
      %2794 = vmatprep.subr.bf16.mxu0 0
      %2795 = vmatpush1.bf16.msra.mxu0 %v2775
      %2796 = vmatprep.subr.bf16.mxu0 0
      %2797 = vmatpush1.bf16.msra.mxu0 %v2776
      %2798 = vmatprep.subr.bf16.mxu0 0
      %2799 = vmatpush1.bf16.msra.mxu0 %v2777
      %2800 = vmatprep.subr.bf16.mxu0 0
      %2801 = vmatpush1.bf16.msra.mxu0 %v2778
      %2802 = vmatprep.subr.bf16.mxu0 0
      %2803 = vmatpush1.bf16.msra.mxu0 %v2779
      %2804 = vmatprep.subr.bf16.mxu0 0
      %2805 = vmatpush1.bf16.msra.mxu0 0
      %2806 = vmatprep.subr.bf16.mxu0 0
      %2807 = vmatpush1.bf16.msra.mxu0 0
      %2808 = vmatprep.subr.bf16.mxu0 0
      %2809 = vmatpush1.bf16.msra.mxu0 0
      %2810 = vmatprep.subr.bf16.mxu0 0
      %2811 = vmatpush1.bf16.msra.mxu0 0
      %2812 = vmatprep.subr.bf16.mxu0 0
      %2813 = vmatpush1.bf16.msra.mxu0 0
      %2814 = vmatprep.subr.bf16.mxu0 0
      %2815 = vmatpush1.bf16.msra.mxu0 0
      %2816 = vmatprep.subr.bf16.mxu0 0
      %2817 = vmatpush1.bf16.msra.mxu0 0
      %2818 = vmatprep.subr.bf16.mxu0 0
      %2819 = vmatpush1.bf16.msra.mxu0 0
      %2820 = vmatprep.mubr.bf16.mxu0 0
      %2821 = vmatmul.mubr.bf16.gmra.mrb[0].mxu0 %v2732
      %v2822 = vpop.f32.mrb[0].mxu0
      %v2823 = vadd.f32 0.0, %v2822
      %v2824 = vpop.f32.mrb[0].mxu0
      %v2825 = vpop.f32.mrb[0].mxu0
      %v2826 = vadd.f32 0.0, %v2825
      %v2827 = vpop.f32.mrb[0].mxu0
      %2828 = vmatprep.mubr.bf16.mxu0 0
      %2829 = vmatmul.mubr.bf16.gmra.mrb[0].mxu0 %v2733
      %v2830 = vpop.f32.mrb[0].mxu0
      %v2831 = vadd.f32 0.0, %v2830
      %v2832 = vpop.f32.mrb[0].mxu0
      %v2833 = vpop.f32.mrb[0].mxu0
      %v2834 = vadd.f32 0.0, %v2833
      %v2835 = vpop.f32.mrb[0].mxu0
      %2836 = vmatprep.mubr.bf16.mxu0 0
      %2837 = vmatmul.mubr.bf16.gmra.mrb[0].mxu0 %v2734
      %v2838 = vpop.f32.mrb[0].mxu0
      %v2839 = vadd.f32 0.0, %v2838
      %v2840 = vpop.f32.mrb[0].mxu0
      %v2841 = vpop.f32.mrb[0].mxu0
      %v2842 = vadd.f32 0.0, %v2841
      %v2843 = vpop.f32.mrb[0].mxu0
      %2844 = vmatprep.mubr.bf16.mxu0 0
      %2845 = vmatmul.mubr.bf16.gmra.mrb[0].mxu0 %v2735
      %v2846 = vpop.f32.mrb[0].mxu0
      %v2847 = vadd.f32 0.0, %v2846
      %v2848 = vpop.f32.mrb[0].mxu0
      %v2849 = vpop.f32.mrb[0].mxu0
      %v2850 = vadd.f32 0.0, %v2849
      %v2851 = vpop.f32.mrb[0].mxu0
      %2852 = vdwg.mxu0
      %v2853 = vadd.f32 %v2692, %v2823
      %v2854 = vadd.f32 %v2693, %v2826
      %v2855 = vadd.f32 %v2694, %v2831
      %v2856 = vadd.f32 %v2695, %v2834
      %v2857 = vadd.f32 %v2696, %v2839
      %v2858 = vadd.f32 %v2697, %v2842
      %v2859 = vadd.f32 %v2698, %v2847
      %v2860 = vadd.f32 %v2699, %v2850
      %v2862 = vrot.slane %v391, 5
      %v2863 = vrot.slane %v2862, 4
      %v2864 = vrot.slane %v392, 5
      %v2865 = vsel %vm839, %v2863, %v2864
      %s2866 = scalar_lea.vmem %s3, 896
      %v2867 = vld [vmem:[%s2866] sm:$0xf]
      %v2868 = vld [vmem:[%s2866 + $0x4] sm:$0xf]
      %v2869 = vld [vmem:[%s2866 + $0x8] sm:$0xf]
      %v2870 = vld [vmem:[%s2866 + $0xc] sm:$0xf]
      %v2871 = vld [vmem:[%s2866 + $0x10] sm:$0xf]
      %v2872 = vld [vmem:[%s2866 + $0x14] sm:$0xf]
      %v2873 = vld [vmem:[%s2866 + $0x18] sm:$0xf]
      %v2874 = vld [vmem:[%s2866 + $0x1c] sm:$0xf]
      %v2875 = vld [vmem:[%s2866 + $0x20] sm:$0xf]
      %v2876 = vld [vmem:[%s2866 + $0x24] sm:$0xf]
      %v2877 = vld [vmem:[%s2866 + $0x28] sm:$0xf]
      %v2878 = vld [vmem:[%s2866 + $0x2c] sm:$0xf]
      %v2879 = vld [vmem:[%s2866 + $0x30] sm:$0xf]
      %v2880 = vld [vmem:[%s2866 + $0x34] sm:$0xf]
      %v2881 = vld [vmem:[%s2866 + $0x38] sm:$0xf]
      %v2882 = vld [vmem:[%s2866 + $0x3c] sm:$0xf]
      %v2883 = vunpack.c.l.b16 %v2865
      %v2884 = vpack.c.b16 %v2417, %v2416
      %v2885 = vpack.c.b16 %v2419, %v2418
      %v2886 = vpack.c.b16 %v2421, %v2420
      %v2887 = vpack.c.b16 %v2883, %v2422
      %v2908 = vunpack.c.l.b16 %v2867
      %v2909 = vunpack.c.l.b16 %v2868
      %v2910 = vunpack.c.l.b16 %v2869
      %v2911 = vunpack.c.l.b16 %v2870
      %v2912 = vunpack.c.l.b16 %v2871
      %v2913 = vunpack.c.l.b16 %v2872
      %v2914 = vunpack.c.l.b16 %v2873
      %v2915 = vunpack.c.l.b16 %v2874
      %v2916 = vunpack.c.l.b16 %v2875
      %v2917 = vunpack.c.l.b16 %v2876
      %v2918 = vunpack.c.l.b16 %v2877
      %v2919 = vunpack.c.l.b16 %v2878
      %v2920 = vunpack.c.l.b16 %v2879
      %v2921 = vunpack.c.l.b16 %v2880
      %v2922 = vunpack.c.l.b16 %v2881
      %v2923 = vunpack.c.l.b16 %v2882
      %v2924 = vpack.c.b16 %v2909, %v2908
      %v2925 = vpack.c.b16 %v2911, %v2910
      %v2926 = vpack.c.b16 %v2913, %v2912
      %v2927 = vpack.c.b16 %v2915, %v2914
      %v2928 = vpack.c.b16 %v2917, %v2916
      %v2929 = vpack.c.b16 %v2919, %v2918
      %v2930 = vpack.c.b16 %v2921, %v2920
      %v2931 = vpack.c.b16 %v2923, %v2922
      %2940 = vmatprep.subr.bf16.mxu0 0
      %2941 = vmatpush1.bf16.msra.mxu0 %v2924
      %2942 = vmatprep.subr.bf16.mxu0 0
      %2943 = vmatpush1.bf16.msra.mxu0 %v2925
      %2944 = vmatprep.subr.bf16.mxu0 0
      %2945 = vmatpush1.bf16.msra.mxu0 %v2926
      %2946 = vmatprep.subr.bf16.mxu0 0
      %2947 = vmatpush1.bf16.msra.mxu0 %v2927
      %2948 = vmatprep.subr.bf16.mxu0 0
      %2949 = vmatpush1.bf16.msra.mxu0 %v2928
      %2950 = vmatprep.subr.bf16.mxu0 0
      %2951 = vmatpush1.bf16.msra.mxu0 %v2929
      %2952 = vmatprep.subr.bf16.mxu0 0
      %2953 = vmatpush1.bf16.msra.mxu0 %v2930
      %2954 = vmatprep.subr.bf16.mxu0 0
      %2955 = vmatpush1.bf16.msra.mxu0 %v2931
      %2956 = vmatprep.subr.bf16.mxu0 0
      %2957 = vmatpush1.bf16.msra.mxu0 0
      %2958 = vmatprep.subr.bf16.mxu0 0
      %2959 = vmatpush1.bf16.msra.mxu0 0
      %2960 = vmatprep.subr.bf16.mxu0 0
      %2961 = vmatpush1.bf16.msra.mxu0 0
      %2962 = vmatprep.subr.bf16.mxu0 0
      %2963 = vmatpush1.bf16.msra.mxu0 0
      %2964 = vmatprep.subr.bf16.mxu0 0
      %2965 = vmatpush1.bf16.msra.mxu0 0
      %2966 = vmatprep.subr.bf16.mxu0 0
      %2967 = vmatpush1.bf16.msra.mxu0 0
      %2968 = vmatprep.subr.bf16.mxu0 0
      %2969 = vmatpush1.bf16.msra.mxu0 0
      %2970 = vmatprep.subr.bf16.mxu0 0
      %2971 = vmatpush1.bf16.msra.mxu0 0
      %2972 = vmatprep.mubr.bf16.mxu0 0
      %2973 = vmatmul.mubr.bf16.gmra.mrb[0].mxu0 %v2884
      %v2974 = vpop.f32.mrb[0].mxu0
      %v2975 = vadd.f32 0.0, %v2974
      %v2976 = vpop.f32.mrb[0].mxu0
      %v2977 = vpop.f32.mrb[0].mxu0
      %v2978 = vadd.f32 0.0, %v2977
      %v2979 = vpop.f32.mrb[0].mxu0
      %2980 = vmatprep.mubr.bf16.mxu0 0
      %2981 = vmatmul.mubr.bf16.gmra.mrb[0].mxu0 %v2885
      %v2982 = vpop.f32.mrb[0].mxu0
      %v2983 = vadd.f32 0.0, %v2982
      %v2984 = vpop.f32.mrb[0].mxu0
      %v2985 = vpop.f32.mrb[0].mxu0
      %v2986 = vadd.f32 0.0, %v2985
      %v2987 = vpop.f32.mrb[0].mxu0
      %2988 = vmatprep.mubr.bf16.mxu0 0
      %2989 = vmatmul.mubr.bf16.gmra.mrb[0].mxu0 %v2886
      %v2990 = vpop.f32.mrb[0].mxu0
      %v2991 = vadd.f32 0.0, %v2990
      %v2992 = vpop.f32.mrb[0].mxu0
      %v2993 = vpop.f32.mrb[0].mxu0
      %v2994 = vadd.f32 0.0, %v2993
      %v2995 = vpop.f32.mrb[0].mxu0
      %2996 = vmatprep.mubr.bf16.mxu0 0
      %2997 = vmatmul.mubr.bf16.gmra.mrb[0].mxu0 %v2887
      %v2998 = vpop.f32.mrb[0].mxu0
      %v2999 = vadd.f32 0.0, %v2998
      %v3000 = vpop.f32.mrb[0].mxu0
      %v3001 = vpop.f32.mrb[0].mxu0
      %v3002 = vadd.f32 0.0, %v3001
      %v3003 = vpop.f32.mrb[0].mxu0
      %3004 = vdwg.mxu0
      %v3005 = vadd.f32 %v2853, %v2975
      %v3006 = vadd.f32 %v2854, %v2978
      %v3007 = vadd.f32 %v2855, %v2983
      %v3008 = vadd.f32 %v2856, %v2986
      %v3009 = vadd.f32 %v2857, %v2991
      %v3010 = vadd.f32 %v2858, %v2994
      %v3011 = vadd.f32 %v2859, %v2999
      %v3012 = vadd.f32 %v2860, %v3002
      %s3013 = scalar_lea.vmem %s3, 960
      %v3014 = vld [vmem:[%s3013] sm:$0xf]
      %v3015 = vld [vmem:[%s3013 + $0x4] sm:$0xf]
      %v3016 = vld [vmem:[%s3013 + $0x8] sm:$0xf]
      %v3017 = vld [vmem:[%s3013 + $0xc] sm:$0xf]
      %v3018 = vld [vmem:[%s3013 + $0x10] sm:$0xf]
      %v3019 = vld [vmem:[%s3013 + $0x14] sm:$0xf]
      %v3020 = vld [vmem:[%s3013 + $0x18] sm:$0xf]
      %v3021 = vld [vmem:[%s3013 + $0x1c] sm:$0xf]
      %v3022 = vld [vmem:[%s3013 + $0x20] sm:$0xf]
      %v3023 = vld [vmem:[%s3013 + $0x24] sm:$0xf]
      %v3024 = vld [vmem:[%s3013 + $0x28] sm:$0xf]
      %v3025 = vld [vmem:[%s3013 + $0x2c] sm:$0xf]
      %v3026 = vld [vmem:[%s3013 + $0x30] sm:$0xf]
      %v3027 = vld [vmem:[%s3013 + $0x34] sm:$0xf]
      %v3028 = vld [vmem:[%s3013 + $0x38] sm:$0xf]
      %v3029 = vld [vmem:[%s3013 + $0x3c] sm:$0xf]
      %v3031 = vunpack.c.l.b16 %v393
      %v3032 = vpack.c.b16 %v3031, %v2570
      %v3050 = vunpack.c.l.b16 %v3014
      %v3051 = vunpack.c.l.b16 %v3015
      %v3052 = vunpack.c.l.b16 %v3016
      %v3053 = vunpack.c.l.b16 %v3017
      %v3054 = vunpack.c.l.b16 %v3018
      %v3055 = vunpack.c.l.b16 %v3019
      %v3056 = vunpack.c.l.b16 %v3020
      %v3057 = vunpack.c.l.b16 %v3021
      %v3058 = vunpack.c.l.b16 %v3022
      %v3059 = vunpack.c.l.b16 %v3023
      %v3060 = vunpack.c.l.b16 %v3024
      %v3061 = vunpack.c.l.b16 %v3025
      %v3062 = vunpack.c.l.b16 %v3026
      %v3063 = vunpack.c.l.b16 %v3027
      %v3064 = vunpack.c.l.b16 %v3028
      %v3065 = vunpack.c.l.b16 %v3029
      %v3066 = vpack.c.b16 %v3051, %v3050
      %v3067 = vpack.c.b16 %v3053, %v3052
      %v3068 = vpack.c.b16 %v3055, %v3054
      %v3069 = vpack.c.b16 %v3057, %v3056
      %v3070 = vpack.c.b16 %v3059, %v3058
      %v3071 = vpack.c.b16 %v3061, %v3060
      %v3072 = vpack.c.b16 %v3063, %v3062
      %v3073 = vpack.c.b16 %v3065, %v3064
      %3082 = vmatprep.subr.bf16.mxu0 0
      %3083 = vmatpush1.bf16.msra.mxu0 %v3066
      %3084 = vmatprep.subr.bf16.mxu0 0
      %3085 = vmatpush1.bf16.msra.mxu0 %v3067
      %3086 = vmatprep.subr.bf16.mxu0 0
      %3087 = vmatpush1.bf16.msra.mxu0 %v3068
      %3088 = vmatprep.subr.bf16.mxu0 0
      %3089 = vmatpush1.bf16.msra.mxu0 %v3069
      %3090 = vmatprep.subr.bf16.mxu0 0
      %3091 = vmatpush1.bf16.msra.mxu0 %v3070
      %3092 = vmatprep.subr.bf16.mxu0 0
      %3093 = vmatpush1.bf16.msra.mxu0 %v3071
      %3094 = vmatprep.subr.bf16.mxu0 0
      %3095 = vmatpush1.bf16.msra.mxu0 %v3072
      %3096 = vmatprep.subr.bf16.mxu0 0
      %3097 = vmatpush1.bf16.msra.mxu0 %v3073
      %3098 = vmatprep.subr.bf16.mxu0 0
      %3099 = vmatpush1.bf16.msra.mxu0 0
      %3100 = vmatprep.subr.bf16.mxu0 0
      %3101 = vmatpush1.bf16.msra.mxu0 0
      %3102 = vmatprep.subr.bf16.mxu0 0
      %3103 = vmatpush1.bf16.msra.mxu0 0
      %3104 = vmatprep.subr.bf16.mxu0 0
      %3105 = vmatpush1.bf16.msra.mxu0 0
      %3106 = vmatprep.subr.bf16.mxu0 0
      %3107 = vmatpush1.bf16.msra.mxu0 0
      %3108 = vmatprep.subr.bf16.mxu0 0
      %3109 = vmatpush1.bf16.msra.mxu0 0
      %3110 = vmatprep.subr.bf16.mxu0 0
      %3111 = vmatpush1.bf16.msra.mxu0 0
      %3112 = vmatprep.subr.bf16.mxu0 0
      %3113 = vmatpush1.bf16.msra.mxu0 0
      %3114 = vmatprep.mubr.bf16.mxu0 0
      %3115 = vmatmul.mubr.bf16.gmra.mrb[0].mxu0 %v1964
      %v3116 = vpop.f32.mrb[0].mxu0
      %v3117 = vadd.f32 0.0, %v3116
      %v3118 = vpop.f32.mrb[0].mxu0
      %v3119 = vpop.f32.mrb[0].mxu0
      %v3120 = vadd.f32 0.0, %v3119
      %v3121 = vpop.f32.mrb[0].mxu0
      %3122 = vmatprep.mubr.bf16.mxu0 0
      %3123 = vmatmul.mubr.bf16.gmra.mrb[0].mxu0 %v1965
      %v3124 = vpop.f32.mrb[0].mxu0
      %v3125 = vadd.f32 0.0, %v3124
      %v3126 = vpop.f32.mrb[0].mxu0
      %v3127 = vpop.f32.mrb[0].mxu0
      %v3128 = vadd.f32 0.0, %v3127
      %v3129 = vpop.f32.mrb[0].mxu0
      %3130 = vmatprep.mubr.bf16.mxu0 0
      %3131 = vmatmul.mubr.bf16.gmra.mrb[0].mxu0 %v1966
      %v3132 = vpop.f32.mrb[0].mxu0
      %v3133 = vadd.f32 0.0, %v3132
      %v3134 = vpop.f32.mrb[0].mxu0
      %v3135 = vpop.f32.mrb[0].mxu0
      %v3136 = vadd.f32 0.0, %v3135
      %v3137 = vpop.f32.mrb[0].mxu0
      %3138 = vmatprep.mubr.bf16.mxu0 0
      %3139 = vmatmul.mubr.bf16.gmra.mrb[0].mxu0 %v3032
      %v3140 = vpop.f32.mrb[0].mxu0
      %v3141 = vadd.f32 0.0, %v3140
      %v3142 = vpop.f32.mrb[0].mxu0
      %v3143 = vpop.f32.mrb[0].mxu0
      %v3144 = vadd.f32 0.0, %v3143
      %v3145 = vpop.f32.mrb[0].mxu0
      %3146 = vdwg.mxu0
      %v3147 = vadd.f32 %v3005, %v3117
      %v3148 = vadd.f32 %v3006, %v3120
      %v3149 = vadd.f32 %v3007, %v3125
      %v3150 = vadd.f32 %v3008, %v3128
      %v3151 = vadd.f32 %v3009, %v3133
      %v3152 = vadd.f32 %v3010, %v3136
      %v3153 = vadd.f32 %v3011, %v3141
      %v3154 = vadd.f32 %v3012, %v3144
      %v3156 = vshrl.u32 %v393, 16
      %v3158 = vrot.slane %v3156, 4
      %v3159 = vshll.u32 %v393, 16
      %v3161 = vrot.slane %v3159, 5
      %v3162 = vor.u32 %v3158, %v3161
      %v3163 = vrot.slane %v3162, 4
      %v3165 = vshll.u32 %v394, 16
      %v3167 = vrot.slane %v3165, 5
      %v3168 = vsel %vm433, %v3163, %v3167
      %s3169 = scalar_lea.vmem %s3, 1024
      %v3170 = vld [vmem:[%s3169] sm:$0xf]
      %v3171 = vld [vmem:[%s3169 + $0x4] sm:$0xf]
      %v3172 = vld [vmem:[%s3169 + $0x8] sm:$0xf]
      %v3173 = vld [vmem:[%s3169 + $0xc] sm:$0xf]
      %v3174 = vld [vmem:[%s3169 + $0x10] sm:$0xf]
      %v3175 = vld [vmem:[%s3169 + $0x14] sm:$0xf]
      %v3176 = vld [vmem:[%s3169 + $0x18] sm:$0xf]
      %v3177 = vld [vmem:[%s3169 + $0x1c] sm:$0xf]
      %v3178 = vld [vmem:[%s3169 + $0x20] sm:$0xf]
      %v3179 = vld [vmem:[%s3169 + $0x24] sm:$0xf]
      %v3180 = vld [vmem:[%s3169 + $0x28] sm:$0xf]
      %v3181 = vld [vmem:[%s3169 + $0x2c] sm:$0xf]
      %v3182 = vld [vmem:[%s3169 + $0x30] sm:$0xf]
      %v3183 = vld [vmem:[%s3169 + $0x34] sm:$0xf]
      %v3184 = vld [vmem:[%s3169 + $0x38] sm:$0xf]
      %v3185 = vld [vmem:[%s3169 + $0x3c] sm:$0xf]
      %v3186 = vunpack.c.l.b16 %v3168
      %v3187 = vpack.c.b16 %v3186, %v2731
      %v3205 = vunpack.c.l.b16 %v3170
      %v3206 = vunpack.c.l.b16 %v3171
      %v3207 = vunpack.c.l.b16 %v3172
      %v3208 = vunpack.c.l.b16 %v3173
      %v3209 = vunpack.c.l.b16 %v3174
      %v3210 = vunpack.c.l.b16 %v3175
      %v3211 = vunpack.c.l.b16 %v3176
      %v3212 = vunpack.c.l.b16 %v3177
      %v3213 = vunpack.c.l.b16 %v3178
      %v3214 = vunpack.c.l.b16 %v3179
      %v3215 = vunpack.c.l.b16 %v3180
      %v3216 = vunpack.c.l.b16 %v3181
      %v3217 = vunpack.c.l.b16 %v3182
      %v3218 = vunpack.c.l.b16 %v3183
      %v3219 = vunpack.c.l.b16 %v3184
      %v3220 = vunpack.c.l.b16 %v3185
      %v3221 = vpack.c.b16 %v3206, %v3205
      %v3222 = vpack.c.b16 %v3208, %v3207
      %v3223 = vpack.c.b16 %v3210, %v3209
      %v3224 = vpack.c.b16 %v3212, %v3211
      %v3225 = vpack.c.b16 %v3214, %v3213
      %v3226 = vpack.c.b16 %v3216, %v3215
      %v3227 = vpack.c.b16 %v3218, %v3217
      %v3228 = vpack.c.b16 %v3220, %v3219
      %3237 = vmatprep.subr.bf16.mxu0 0
      %3238 = vmatpush1.bf16.msra.mxu0 %v3221
      %3239 = vmatprep.subr.bf16.mxu0 0
      %3240 = vmatpush1.bf16.msra.mxu0 %v3222
      %3241 = vmatprep.subr.bf16.mxu0 0
      %3242 = vmatpush1.bf16.msra.mxu0 %v3223
      %3243 = vmatprep.subr.bf16.mxu0 0
      %3244 = vmatpush1.bf16.msra.mxu0 %v3224
      %3245 = vmatprep.subr.bf16.mxu0 0
      %3246 = vmatpush1.bf16.msra.mxu0 %v3225
      %3247 = vmatprep.subr.bf16.mxu0 0
      %3248 = vmatpush1.bf16.msra.mxu0 %v3226
      %3249 = vmatprep.subr.bf16.mxu0 0
      %3250 = vmatpush1.bf16.msra.mxu0 %v3227
      %3251 = vmatprep.subr.bf16.mxu0 0
      %3252 = vmatpush1.bf16.msra.mxu0 %v3228
      %3253 = vmatprep.subr.bf16.mxu0 0
      %3254 = vmatpush1.bf16.msra.mxu0 0
      %3255 = vmatprep.subr.bf16.mxu0 0
      %3256 = vmatpush1.bf16.msra.mxu0 0
      %3257 = vmatprep.subr.bf16.mxu0 0
      %3258 = vmatpush1.bf16.msra.mxu0 0
      %3259 = vmatprep.subr.bf16.mxu0 0
      %3260 = vmatpush1.bf16.msra.mxu0 0
      %3261 = vmatprep.subr.bf16.mxu0 0
      %3262 = vmatpush1.bf16.msra.mxu0 0
      %3263 = vmatprep.subr.bf16.mxu0 0
      %3264 = vmatpush1.bf16.msra.mxu0 0
      %3265 = vmatprep.subr.bf16.mxu0 0
      %3266 = vmatpush1.bf16.msra.mxu0 0
      %3267 = vmatprep.subr.bf16.mxu0 0
      %3268 = vmatpush1.bf16.msra.mxu0 0
      %3269 = vmatprep.mubr.bf16.mxu0 0
      %3270 = vmatmul.mubr.bf16.gmra.mrb[0].mxu0 %v2230
      %v3271 = vpop.f32.mrb[0].mxu0
      %v3272 = vadd.f32 0.0, %v3271
      %v3273 = vpop.f32.mrb[0].mxu0
      %v3274 = vpop.f32.mrb[0].mxu0
      %v3275 = vadd.f32 0.0, %v3274
      %v3276 = vpop.f32.mrb[0].mxu0
      %3277 = vmatprep.mubr.bf16.mxu0 0
      %3278 = vmatmul.mubr.bf16.gmra.mrb[0].mxu0 %v2231
      %v3279 = vpop.f32.mrb[0].mxu0
      %v3280 = vadd.f32 0.0, %v3279
      %v3281 = vpop.f32.mrb[0].mxu0
      %v3282 = vpop.f32.mrb[0].mxu0
      %v3283 = vadd.f32 0.0, %v3282
      %v3284 = vpop.f32.mrb[0].mxu0
      %3285 = vmatprep.mubr.bf16.mxu0 0
      %3286 = vmatmul.mubr.bf16.gmra.mrb[0].mxu0 %v2232
      %v3287 = vpop.f32.mrb[0].mxu0
      %v3288 = vadd.f32 0.0, %v3287
      %v3289 = vpop.f32.mrb[0].mxu0
      %v3290 = vpop.f32.mrb[0].mxu0
      %v3291 = vadd.f32 0.0, %v3290
      %v3292 = vpop.f32.mrb[0].mxu0
      %3293 = vmatprep.mubr.bf16.mxu0 0
      %3294 = vmatmul.mubr.bf16.gmra.mrb[0].mxu0 %v3187
      %v3295 = vpop.f32.mrb[0].mxu0
      %v3296 = vadd.f32 0.0, %v3295
      %v3297 = vpop.f32.mrb[0].mxu0
      %v3298 = vpop.f32.mrb[0].mxu0
      %v3299 = vadd.f32 0.0, %v3298
      %v3300 = vpop.f32.mrb[0].mxu0
      %3301 = vdwg.mxu0
      %v3302 = vadd.f32 %v3147, %v3272
      %v3303 = vadd.f32 %v3148, %v3275
      %v3304 = vadd.f32 %v3149, %v3280
      %v3305 = vadd.f32 %v3150, %v3283
      %v3306 = vadd.f32 %v3151, %v3288
      %v3307 = vadd.f32 %v3152, %v3291
      %v3308 = vadd.f32 %v3153, %v3296
      %v3309 = vadd.f32 %v3154, %v3299
      %v3311 = vrot.slane %v393, 5
      %v3312 = vrot.slane %v3311, 4
      %v3313 = vrot.slane %v394, 5
      %v3314 = vsel %vm839, %v3312, %v3313
      %s3315 = scalar_lea.vmem %s3, 1088
      %v3316 = vld [vmem:[%s3315] sm:$0xf]
      %v3317 = vld [vmem:[%s3315 + $0x4] sm:$0xf]
      %v3318 = vld [vmem:[%s3315 + $0x8] sm:$0xf]
      %v3319 = vld [vmem:[%s3315 + $0xc] sm:$0xf]
      %v3320 = vld [vmem:[%s3315 + $0x10] sm:$0xf]
      %v3321 = vld [vmem:[%s3315 + $0x14] sm:$0xf]
      %v3322 = vld [vmem:[%s3315 + $0x18] sm:$0xf]
      %v3323 = vld [vmem:[%s3315 + $0x1c] sm:$0xf]
      %v3324 = vld [vmem:[%s3315 + $0x20] sm:$0xf]
      %v3325 = vld [vmem:[%s3315 + $0x24] sm:$0xf]
      %v3326 = vld [vmem:[%s3315 + $0x28] sm:$0xf]
      %v3327 = vld [vmem:[%s3315 + $0x2c] sm:$0xf]
      %v3328 = vld [vmem:[%s3315 + $0x30] sm:$0xf]
      %v3329 = vld [vmem:[%s3315 + $0x34] sm:$0xf]
      %v3330 = vld [vmem:[%s3315 + $0x38] sm:$0xf]
      %v3331 = vld [vmem:[%s3315 + $0x3c] sm:$0xf]
      %v3332 = vunpack.c.l.b16 %v3314
      %v3333 = vpack.c.b16 %v3332, %v2883
      %v3351 = vunpack.c.l.b16 %v3316
      %v3352 = vunpack.c.l.b16 %v3317
      %v3353 = vunpack.c.l.b16 %v3318
      %v3354 = vunpack.c.l.b16 %v3319
      %v3355 = vunpack.c.l.b16 %v3320
      %v3356 = vunpack.c.l.b16 %v3321
      %v3357 = vunpack.c.l.b16 %v3322
      %v3358 = vunpack.c.l.b16 %v3323
      %v3359 = vunpack.c.l.b16 %v3324
      %v3360 = vunpack.c.l.b16 %v3325
      %v3361 = vunpack.c.l.b16 %v3326
      %v3362 = vunpack.c.l.b16 %v3327
      %v3363 = vunpack.c.l.b16 %v3328
      %v3364 = vunpack.c.l.b16 %v3329
      %v3365 = vunpack.c.l.b16 %v3330
      %v3366 = vunpack.c.l.b16 %v3331
      %v3367 = vpack.c.b16 %v3352, %v3351
      %v3368 = vpack.c.b16 %v3354, %v3353
      %v3369 = vpack.c.b16 %v3356, %v3355
      %v3370 = vpack.c.b16 %v3358, %v3357
      %v3371 = vpack.c.b16 %v3360, %v3359
      %v3372 = vpack.c.b16 %v3362, %v3361
      %v3373 = vpack.c.b16 %v3364, %v3363
      %v3374 = vpack.c.b16 %v3366, %v3365
      %3383 = vmatprep.subr.bf16.mxu0 0
      %3384 = vmatpush1.bf16.msra.mxu0 %v3367
      %3385 = vmatprep.subr.bf16.mxu0 0
      %3386 = vmatpush1.bf16.msra.mxu0 %v3368
      %3387 = vmatprep.subr.bf16.mxu0 0
      %3388 = vmatpush1.bf16.msra.mxu0 %v3369
      %3389 = vmatprep.subr.bf16.mxu0 0
      %3390 = vmatpush1.bf16.msra.mxu0 %v3370
      %3391 = vmatprep.subr.bf16.mxu0 0
      %3392 = vmatpush1.bf16.msra.mxu0 %v3371
      %3393 = vmatprep.subr.bf16.mxu0 0
      %3394 = vmatpush1.bf16.msra.mxu0 %v3372
      %3395 = vmatprep.subr.bf16.mxu0 0
      %3396 = vmatpush1.bf16.msra.mxu0 %v3373
      %3397 = vmatprep.subr.bf16.mxu0 0
      %3398 = vmatpush1.bf16.msra.mxu0 %v3374
      %3399 = vmatprep.subr.bf16.mxu0 0
      %3400 = vmatpush1.bf16.msra.mxu0 0
      %3401 = vmatprep.subr.bf16.mxu0 0
      %3402 = vmatpush1.bf16.msra.mxu0 0
      %3403 = vmatprep.subr.bf16.mxu0 0
      %3404 = vmatpush1.bf16.msra.mxu0 0
      %3405 = vmatprep.subr.bf16.mxu0 0
      %3406 = vmatpush1.bf16.msra.mxu0 0
      %3407 = vmatprep.subr.bf16.mxu0 0
      %3408 = vmatpush1.bf16.msra.mxu0 0
      %3409 = vmatprep.subr.bf16.mxu0 0
      %3410 = vmatpush1.bf16.msra.mxu0 0
      %3411 = vmatprep.subr.bf16.mxu0 0
      %3412 = vmatpush1.bf16.msra.mxu0 0
      %3413 = vmatprep.subr.bf16.mxu0 0
      %3414 = vmatpush1.bf16.msra.mxu0 0
      %3415 = vmatprep.mubr.bf16.mxu0 0
      %3416 = vmatmul.mubr.bf16.gmra.mrb[0].mxu0 %v2424
      %v3417 = vpop.f32.mrb[0].mxu0
      %v3418 = vadd.f32 0.0, %v3417
      %v3419 = vpop.f32.mrb[0].mxu0
      %v3420 = vpop.f32.mrb[0].mxu0
      %v3421 = vadd.f32 0.0, %v3420
      %v3422 = vpop.f32.mrb[0].mxu0
      %3423 = vmatprep.mubr.bf16.mxu0 0
      %3424 = vmatmul.mubr.bf16.gmra.mrb[0].mxu0 %v2425
      %v3425 = vpop.f32.mrb[0].mxu0
      %v3426 = vadd.f32 0.0, %v3425
      %v3427 = vpop.f32.mrb[0].mxu0
      %v3428 = vpop.f32.mrb[0].mxu0
      %v3429 = vadd.f32 0.0, %v3428
      %v3430 = vpop.f32.mrb[0].mxu0
      %3431 = vmatprep.mubr.bf16.mxu0 0
      %3432 = vmatmul.mubr.bf16.gmra.mrb[0].mxu0 %v2426
      %v3433 = vpop.f32.mrb[0].mxu0
      %v3434 = vadd.f32 0.0, %v3433
      %v3435 = vpop.f32.mrb[0].mxu0
      %v3436 = vpop.f32.mrb[0].mxu0
      %v3437 = vadd.f32 0.0, %v3436
      %v3438 = vpop.f32.mrb[0].mxu0
      %3439 = vmatprep.mubr.bf16.mxu0 0
      %3440 = vmatmul.mubr.bf16.gmra.mrb[0].mxu0 %v3333
      %v3441 = vpop.f32.mrb[0].mxu0
      %v3442 = vadd.f32 0.0, %v3441
      %v3443 = vpop.f32.mrb[0].mxu0
      %v3444 = vpop.f32.mrb[0].mxu0
      %v3445 = vadd.f32 0.0, %v3444
      %v3446 = vpop.f32.mrb[0].mxu0
      %3447 = vdwg.mxu0
      %v3448 = vadd.f32 %v3302, %v3418
      %v3449 = vadd.f32 %v3303, %v3421
      %v3450 = vadd.f32 %v3304, %v3426
      %v3451 = vadd.f32 %v3305, %v3429
      %v3452 = vadd.f32 %v3306, %v3434
      %v3453 = vadd.f32 %v3307, %v3437
      %v3454 = vadd.f32 %v3308, %v3442
      %v3455 = vadd.f32 %v3309, %v3445
      %s3456 = scalar_lea.vmem %s3, 1152
      %v3457 = vld [vmem:[%s3456] sm:$0xf]
      %v3458 = vld [vmem:[%s3456 + $0x4] sm:$0xf]
      %v3459 = vld [vmem:[%s3456 + $0x8] sm:$0xf]
      %v3460 = vld [vmem:[%s3456 + $0xc] sm:$0xf]
      %v3461 = vld [vmem:[%s3456 + $0x10] sm:$0xf]
      %v3462 = vld [vmem:[%s3456 + $0x14] sm:$0xf]
      %v3463 = vld [vmem:[%s3456 + $0x18] sm:$0xf]
      %v3464 = vld [vmem:[%s3456 + $0x1c] sm:$0xf]
      %v3465 = vld [vmem:[%s3456 + $0x20] sm:$0xf]
      %v3466 = vld [vmem:[%s3456 + $0x24] sm:$0xf]
      %v3467 = vld [vmem:[%s3456 + $0x28] sm:$0xf]
      %v3468 = vld [vmem:[%s3456 + $0x2c] sm:$0xf]
      %v3469 = vld [vmem:[%s3456 + $0x30] sm:$0xf]
      %v3470 = vld [vmem:[%s3456 + $0x34] sm:$0xf]
      %v3471 = vld [vmem:[%s3456 + $0x38] sm:$0xf]
      %v3472 = vld [vmem:[%s3456 + $0x3c] sm:$0xf]
      %v3481 = vunpack.c.l.b16 %v395
      %v3482 = vunpack.c.l.b16 %v397
      %v3483 = vunpack.c.l.b16 %v399
      %v3484 = vunpack.c.l.b16 %v401
      %v3485 = vunpack.c.l.b16 %v403
      %v3486 = vunpack.c.l.b16 %v405
      %v3487 = vunpack.c.l.b16 %v407
      %v3488 = vunpack.c.l.b16 %v409
      %v3489 = vpack.c.b16 %v3482, %v3481
      %v3490 = vpack.c.b16 %v3484, %v3483
      %v3491 = vpack.c.b16 %v3486, %v3485
      %v3492 = vpack.c.b16 %v3488, %v3487
      %v3513 = vunpack.c.l.b16 %v3457
      %v3514 = vunpack.c.l.b16 %v3458
      %v3515 = vunpack.c.l.b16 %v3459
      %v3516 = vunpack.c.l.b16 %v3460
      %v3517 = vunpack.c.l.b16 %v3461
      %v3518 = vunpack.c.l.b16 %v3462
      %v3519 = vunpack.c.l.b16 %v3463
      %v3520 = vunpack.c.l.b16 %v3464
      %v3521 = vunpack.c.l.b16 %v3465
      %v3522 = vunpack.c.l.b16 %v3466
      %v3523 = vunpack.c.l.b16 %v3467
      %v3524 = vunpack.c.l.b16 %v3468
      %v3525 = vunpack.c.l.b16 %v3469
      %v3526 = vunpack.c.l.b16 %v3470
      %v3527 = vunpack.c.l.b16 %v3471
      %v3528 = vunpack.c.l.b16 %v3472
      %v3529 = vpack.c.b16 %v3514, %v3513
      %v3530 = vpack.c.b16 %v3516, %v3515
      %v3531 = vpack.c.b16 %v3518, %v3517
      %v3532 = vpack.c.b16 %v3520, %v3519
      %v3533 = vpack.c.b16 %v3522, %v3521
      %v3534 = vpack.c.b16 %v3524, %v3523
      %v3535 = vpack.c.b16 %v3526, %v3525
      %v3536 = vpack.c.b16 %v3528, %v3527
      %3545 = vmatprep.subr.bf16.mxu0 0
      %3546 = vmatpush1.bf16.msra.mxu0 %v3529
      %3547 = vmatprep.subr.bf16.mxu0 0
      %3548 = vmatpush1.bf16.msra.mxu0 %v3530
      %3549 = vmatprep.subr.bf16.mxu0 0
      %3550 = vmatpush1.bf16.msra.mxu0 %v3531
      %3551 = vmatprep.subr.bf16.mxu0 0
      %3552 = vmatpush1.bf16.msra.mxu0 %v3532
      %3553 = vmatprep.subr.bf16.mxu0 0
      %3554 = vmatpush1.bf16.msra.mxu0 %v3533
      %3555 = vmatprep.subr.bf16.mxu0 0
      %3556 = vmatpush1.bf16.msra.mxu0 %v3534
      %3557 = vmatprep.subr.bf16.mxu0 0
      %3558 = vmatpush1.bf16.msra.mxu0 %v3535
      %3559 = vmatprep.subr.bf16.mxu0 0
      %3560 = vmatpush1.bf16.msra.mxu0 %v3536
      %3561 = vmatprep.subr.bf16.mxu0 0
      %3562 = vmatpush1.bf16.msra.mxu0 0
      %3563 = vmatprep.subr.bf16.mxu0 0
      %3564 = vmatpush1.bf16.msra.mxu0 0
      %3565 = vmatprep.subr.bf16.mxu0 0
      %3566 = vmatpush1.bf16.msra.mxu0 0
      %3567 = vmatprep.subr.bf16.mxu0 0
      %3568 = vmatpush1.bf16.msra.mxu0 0
      %3569 = vmatprep.subr.bf16.mxu0 0
      %3570 = vmatpush1.bf16.msra.mxu0 0
      %3571 = vmatprep.subr.bf16.mxu0 0
      %3572 = vmatpush1.bf16.msra.mxu0 0
      %3573 = vmatprep.subr.bf16.mxu0 0
      %3574 = vmatpush1.bf16.msra.mxu0 0
      %3575 = vmatprep.subr.bf16.mxu0 0
      %3576 = vmatpush1.bf16.msra.mxu0 0
      %3577 = vmatprep.mubr.bf16.mxu0 0
      %3578 = vmatmul.mubr.bf16.gmra.mrb[0].mxu0 %v3489
      %v3579 = vpop.f32.mrb[0].mxu0
      %v3580 = vadd.f32 0.0, %v3579
      %v3581 = vpop.f32.mrb[0].mxu0
      %v3582 = vpop.f32.mrb[0].mxu0
      %v3583 = vadd.f32 0.0, %v3582
      %v3584 = vpop.f32.mrb[0].mxu0
      %3585 = vmatprep.mubr.bf16.mxu0 0
      %3586 = vmatmul.mubr.bf16.gmra.mrb[0].mxu0 %v3490
      %v3587 = vpop.f32.mrb[0].mxu0
      %v3588 = vadd.f32 0.0, %v3587
      %v3589 = vpop.f32.mrb[0].mxu0
      %v3590 = vpop.f32.mrb[0].mxu0
      %v3591 = vadd.f32 0.0, %v3590
      %v3592 = vpop.f32.mrb[0].mxu0
      %3593 = vmatprep.mubr.bf16.mxu0 0
      %3594 = vmatmul.mubr.bf16.gmra.mrb[0].mxu0 %v3491
      %v3595 = vpop.f32.mrb[0].mxu0
      %v3596 = vadd.f32 0.0, %v3595
      %v3597 = vpop.f32.mrb[0].mxu0
      %v3598 = vpop.f32.mrb[0].mxu0
      %v3599 = vadd.f32 0.0, %v3598
      %v3600 = vpop.f32.mrb[0].mxu0
      %3601 = vmatprep.mubr.bf16.mxu0 0
      %3602 = vmatmul.mubr.bf16.gmra.mrb[0].mxu0 %v3492
      %v3603 = vpop.f32.mrb[0].mxu0
      %v3604 = vadd.f32 0.0, %v3603
      %v3605 = vpop.f32.mrb[0].mxu0
      %v3606 = vpop.f32.mrb[0].mxu0
      %v3607 = vadd.f32 0.0, %v3606
      %v3608 = vpop.f32.mrb[0].mxu0
      %3609 = vdwg.mxu0
      %v3610 = vadd.f32 %v3448, %v3580
      %v3611 = vadd.f32 %v3449, %v3583
      %v3612 = vadd.f32 %v3450, %v3588
      %v3613 = vadd.f32 %v3451, %v3591
      %v3614 = vadd.f32 %v3452, %v3596
      %v3615 = vadd.f32 %v3453, %v3599
      %v3616 = vadd.f32 %v3454, %v3604
      %v3617 = vadd.f32 %v3455, %v3607
      %v3619 = vshrl.u32 %v395, 16
      %v3621 = vrot.slane %v3619, 4
      %v3622 = vshll.u32 %v395, 16
      %v3624 = vrot.slane %v3622, 5
      %v3625 = vor.u32 %v3621, %v3624
      %v3626 = vrot.slane %v3625, 4
      %v3628 = vshll.u32 %v396, 16
      %v3630 = vrot.slane %v3628, 5
      %v3631 = vsel %vm433, %v3626, %v3630
      %v3633 = vshrl.u32 %v397, 16
      %v3635 = vrot.slane %v3633, 4
      %v3636 = vshll.u32 %v397, 16
      %v3638 = vrot.slane %v3636, 5
      %v3639 = vor.u32 %v3635, %v3638
      %v3640 = vrot.slane %v3639, 4
      %v3642 = vshll.u32 %v398, 16
      %v3644 = vrot.slane %v3642, 5
      %v3645 = vsel %vm433, %v3640, %v3644
      %v3647 = vshrl.u32 %v399, 16
      %v3649 = vrot.slane %v3647, 4
      %v3650 = vshll.u32 %v399, 16
      %v3652 = vrot.slane %v3650, 5
      %v3653 = vor.u32 %v3649, %v3652
      %v3654 = vrot.slane %v3653, 4
      %v3656 = vshll.u32 %v400, 16
      %v3658 = vrot.slane %v3656, 5
      %v3659 = vsel %vm433, %v3654, %v3658
      %v3661 = vshrl.u32 %v401, 16
      %v3663 = vrot.slane %v3661, 4
      %v3664 = vshll.u32 %v401, 16
      %v3666 = vrot.slane %v3664, 5
      %v3667 = vor.u32 %v3663, %v3666
      %v3668 = vrot.slane %v3667, 4
      %v3670 = vshll.u32 %v402, 16
      %v3672 = vrot.slane %v3670, 5
      %v3673 = vsel %vm433, %v3668, %v3672
      %v3675 = vshrl.u32 %v403, 16
      %v3677 = vrot.slane %v3675, 4
      %v3678 = vshll.u32 %v403, 16
      %v3680 = vrot.slane %v3678, 5
      %v3681 = vor.u32 %v3677, %v3680
      %v3682 = vrot.slane %v3681, 4
      %v3684 = vshll.u32 %v404, 16
      %v3686 = vrot.slane %v3684, 5
      %v3687 = vsel %vm433, %v3682, %v3686
      %v3689 = vshrl.u32 %v405, 16
      %v3691 = vrot.slane %v3689, 4
      %v3692 = vshll.u32 %v405, 16
      %v3694 = vrot.slane %v3692, 5
      %v3695 = vor.u32 %v3691, %v3694
      %v3696 = vrot.slane %v3695, 4
      %v3698 = vshll.u32 %v406, 16
      %v3700 = vrot.slane %v3698, 5
      %v3701 = vsel %vm433, %v3696, %v3700
      %v3703 = vshrl.u32 %v407, 16
      %v3705 = vrot.slane %v3703, 4
      %v3706 = vshll.u32 %v407, 16
      %v3708 = vrot.slane %v3706, 5
      %v3709 = vor.u32 %v3705, %v3708
      %v3710 = vrot.slane %v3709, 4
      %v3712 = vshll.u32 %v408, 16
      %v3714 = vrot.slane %v3712, 5
      %v3715 = vsel %vm433, %v3710, %v3714
      %v3717 = vshrl.u32 %v409, 16
      %v3719 = vrot.slane %v3717, 4
      %v3720 = vshll.u32 %v409, 16
      %v3722 = vrot.slane %v3720, 5
      %v3723 = vor.u32 %v3719, %v3722
      %v3724 = vrot.slane %v3723, 4
      %v3726 = vshll.u32 %v410, 16
      %v3728 = vrot.slane %v3726, 5
      %v3729 = vsel %vm433, %v3724, %v3728
      %s3730 = scalar_lea.vmem %s3, 1216
      %v3731 = vld [vmem:[%s3730] sm:$0xf]
      %v3732 = vld [vmem:[%s3730 + $0x4] sm:$0xf]
      %v3733 = vld [vmem:[%s3730 + $0x8] sm:$0xf]
      %v3734 = vld [vmem:[%s3730 + $0xc] sm:$0xf]
      %v3735 = vld [vmem:[%s3730 + $0x10] sm:$0xf]
      %v3736 = vld [vmem:[%s3730 + $0x14] sm:$0xf]
      %v3737 = vld [vmem:[%s3730 + $0x18] sm:$0xf]
      %v3738 = vld [vmem:[%s3730 + $0x1c] sm:$0xf]
      %v3739 = vld [vmem:[%s3730 + $0x20] sm:$0xf]
      %v3740 = vld [vmem:[%s3730 + $0x24] sm:$0xf]
      %v3741 = vld [vmem:[%s3730 + $0x28] sm:$0xf]
      %v3742 = vld [vmem:[%s3730 + $0x2c] sm:$0xf]
      %v3743 = vld [vmem:[%s3730 + $0x30] sm:$0xf]
      %v3744 = vld [vmem:[%s3730 + $0x34] sm:$0xf]
      %v3745 = vld [vmem:[%s3730 + $0x38] sm:$0xf]
      %v3746 = vld [vmem:[%s3730 + $0x3c] sm:$0xf]
      %v3747 = vunpack.c.l.b16 %v3631
      %v3748 = vunpack.c.l.b16 %v3645
      %v3749 = vunpack.c.l.b16 %v3659
      %v3750 = vunpack.c.l.b16 %v3673
      %v3751 = vunpack.c.l.b16 %v3687
      %v3752 = vunpack.c.l.b16 %v3701
      %v3753 = vunpack.c.l.b16 %v3715
      %v3754 = vunpack.c.l.b16 %v3729
      %v3755 = vpack.c.b16 %v3748, %v3747
      %v3756 = vpack.c.b16 %v3750, %v3749
      %v3757 = vpack.c.b16 %v3752, %v3751
      %v3758 = vpack.c.b16 %v3754, %v3753
      %v3779 = vunpack.c.l.b16 %v3731
      %v3780 = vunpack.c.l.b16 %v3732
      %v3781 = vunpack.c.l.b16 %v3733
      %v3782 = vunpack.c.l.b16 %v3734
      %v3783 = vunpack.c.l.b16 %v3735
      %v3784 = vunpack.c.l.b16 %v3736
      %v3785 = vunpack.c.l.b16 %v3737
      %v3786 = vunpack.c.l.b16 %v3738
      %v3787 = vunpack.c.l.b16 %v3739
      %v3788 = vunpack.c.l.b16 %v3740
      %v3789 = vunpack.c.l.b16 %v3741
      %v3790 = vunpack.c.l.b16 %v3742
      %v3791 = vunpack.c.l.b16 %v3743
      %v3792 = vunpack.c.l.b16 %v3744
      %v3793 = vunpack.c.l.b16 %v3745
      %v3794 = vunpack.c.l.b16 %v3746
      %v3795 = vpack.c.b16 %v3780, %v3779
      %v3796 = vpack.c.b16 %v3782, %v3781
      %v3797 = vpack.c.b16 %v3784, %v3783
      %v3798 = vpack.c.b16 %v3786, %v3785
      %v3799 = vpack.c.b16 %v3788, %v3787
      %v3800 = vpack.c.b16 %v3790, %v3789
      %v3801 = vpack.c.b16 %v3792, %v3791
      %v3802 = vpack.c.b16 %v3794, %v3793
      %3811 = vmatprep.subr.bf16.mxu0 0
      %3812 = vmatpush1.bf16.msra.mxu0 %v3795
      %3813 = vmatprep.subr.bf16.mxu0 0
      %3814 = vmatpush1.bf16.msra.mxu0 %v3796
      %3815 = vmatprep.subr.bf16.mxu0 0
      %3816 = vmatpush1.bf16.msra.mxu0 %v3797
      %3817 = vmatprep.subr.bf16.mxu0 0
      %3818 = vmatpush1.bf16.msra.mxu0 %v3798
      %3819 = vmatprep.subr.bf16.mxu0 0
      %3820 = vmatpush1.bf16.msra.mxu0 %v3799
      %3821 = vmatprep.subr.bf16.mxu0 0
      %3822 = vmatpush1.bf16.msra.mxu0 %v3800
      %3823 = vmatprep.subr.bf16.mxu0 0
      %3824 = vmatpush1.bf16.msra.mxu0 %v3801
      %3825 = vmatprep.subr.bf16.mxu0 0
      %3826 = vmatpush1.bf16.msra.mxu0 %v3802
      %3827 = vmatprep.subr.bf16.mxu0 0
      %3828 = vmatpush1.bf16.msra.mxu0 0
      %3829 = vmatprep.subr.bf16.mxu0 0
      %3830 = vmatpush1.bf16.msra.mxu0 0
      %3831 = vmatprep.subr.bf16.mxu0 0
      %3832 = vmatpush1.bf16.msra.mxu0 0
      %3833 = vmatprep.subr.bf16.mxu0 0
      %3834 = vmatpush1.bf16.msra.mxu0 0
      %3835 = vmatprep.subr.bf16.mxu0 0
      %3836 = vmatpush1.bf16.msra.mxu0 0
      %3837 = vmatprep.subr.bf16.mxu0 0
      %3838 = vmatpush1.bf16.msra.mxu0 0
      %3839 = vmatprep.subr.bf16.mxu0 0
      %3840 = vmatpush1.bf16.msra.mxu0 0
      %3841 = vmatprep.subr.bf16.mxu0 0
      %3842 = vmatpush1.bf16.msra.mxu0 0
      %3843 = vmatprep.mubr.bf16.mxu0 0
      %3844 = vmatmul.mubr.bf16.gmra.mrb[0].mxu0 %v3755
      %v3845 = vpop.f32.mrb[0].mxu0
      %v3846 = vadd.f32 0.0, %v3845
      %v3847 = vpop.f32.mrb[0].mxu0
      %v3848 = vpop.f32.mrb[0].mxu0
      %v3849 = vadd.f32 0.0, %v3848
      %v3850 = vpop.f32.mrb[0].mxu0
      %3851 = vmatprep.mubr.bf16.mxu0 0
      %3852 = vmatmul.mubr.bf16.gmra.mrb[0].mxu0 %v3756
      %v3853 = vpop.f32.mrb[0].mxu0
      %v3854 = vadd.f32 0.0, %v3853
      %v3855 = vpop.f32.mrb[0].mxu0
      %v3856 = vpop.f32.mrb[0].mxu0
      %v3857 = vadd.f32 0.0, %v3856
      %v3858 = vpop.f32.mrb[0].mxu0
      %3859 = vmatprep.mubr.bf16.mxu0 0
      %3860 = vmatmul.mubr.bf16.gmra.mrb[0].mxu0 %v3757
      %v3861 = vpop.f32.mrb[0].mxu0
      %v3862 = vadd.f32 0.0, %v3861
      %v3863 = vpop.f32.mrb[0].mxu0
      %v3864 = vpop.f32.mrb[0].mxu0
      %v3865 = vadd.f32 0.0, %v3864
      %v3866 = vpop.f32.mrb[0].mxu0
      %3867 = vmatprep.mubr.bf16.mxu0 0
      %3868 = vmatmul.mubr.bf16.gmra.mrb[0].mxu0 %v3758
      %v3869 = vpop.f32.mrb[0].mxu0
      %v3870 = vadd.f32 0.0, %v3869
      %v3871 = vpop.f32.mrb[0].mxu0
      %v3872 = vpop.f32.mrb[0].mxu0
      %v3873 = vadd.f32 0.0, %v3872
      %v3874 = vpop.f32.mrb[0].mxu0
      %3875 = vdwg.mxu0
      %v3876 = vadd.f32 %v3610, %v3846
      %v3877 = vadd.f32 %v3611, %v3849
      %v3878 = vadd.f32 %v3612, %v3854
      %v3879 = vadd.f32 %v3613, %v3857
      %v3880 = vadd.f32 %v3614, %v3862
      %v3881 = vadd.f32 %v3615, %v3865
      %v3882 = vadd.f32 %v3616, %v3870
      %v3883 = vadd.f32 %v3617, %v3873
      %v3892 = vrot.slane %v395, 5
      %v3893 = vrot.slane %v3892, 4
      %v3894 = vrot.slane %v396, 5
      %v3895 = vsel %vm839, %v3893, %v3894
      %v3896 = vrot.slane %v397, 5
      %v3897 = vrot.slane %v3896, 4
      %v3898 = vrot.slane %v398, 5
      %v3899 = vsel %vm839, %v3897, %v3898
      %v3900 = vrot.slane %v399, 5
      %v3901 = vrot.slane %v3900, 4
      %v3902 = vrot.slane %v400, 5
      %v3903 = vsel %vm839, %v3901, %v3902
      %v3904 = vrot.slane %v401, 5
      %v3905 = vrot.slane %v3904, 4
      %v3906 = vrot.slane %v402, 5
      %v3907 = vsel %vm839, %v3905, %v3906
      %v3908 = vrot.slane %v403, 5
      %v3909 = vrot.slane %v3908, 4
      %v3910 = vrot.slane %v404, 5
      %v3911 = vsel %vm839, %v3909, %v3910
      %v3912 = vrot.slane %v405, 5
      %v3913 = vrot.slane %v3912, 4
      %v3914 = vrot.slane %v406, 5
      %v3915 = vsel %vm839, %v3913, %v3914
      %v3916 = vrot.slane %v407, 5
      %v3917 = vrot.slane %v3916, 4
      %v3918 = vrot.slane %v408, 5
      %v3919 = vsel %vm839, %v3917, %v3918
      %v3920 = vrot.slane %v409, 5
      %v3921 = vrot.slane %v3920, 4
      %v3922 = vrot.slane %v410, 5
      %v3923 = vsel %vm839, %v3921, %v3922
      %s3924 = scalar_lea.vmem %s3, 1280
      %v3925 = vld [vmem:[%s3924] sm:$0xf]
      %v3926 = vld [vmem:[%s3924 + $0x4] sm:$0xf]
      %v3927 = vld [vmem:[%s3924 + $0x8] sm:$0xf]
      %v3928 = vld [vmem:[%s3924 + $0xc] sm:$0xf]
      %v3929 = vld [vmem:[%s3924 + $0x10] sm:$0xf]
      %v3930 = vld [vmem:[%s3924 + $0x14] sm:$0xf]
      %v3931 = vld [vmem:[%s3924 + $0x18] sm:$0xf]
      %v3932 = vld [vmem:[%s3924 + $0x1c] sm:$0xf]
      %v3933 = vld [vmem:[%s3924 + $0x20] sm:$0xf]
      %v3934 = vld [vmem:[%s3924 + $0x24] sm:$0xf]
      %v3935 = vld [vmem:[%s3924 + $0x28] sm:$0xf]
      %v3936 = vld [vmem:[%s3924 + $0x2c] sm:$0xf]
      %v3937 = vld [vmem:[%s3924 + $0x30] sm:$0xf]
      %v3938 = vld [vmem:[%s3924 + $0x34] sm:$0xf]
      %v3939 = vld [vmem:[%s3924 + $0x38] sm:$0xf]
      %v3940 = vld [vmem:[%s3924 + $0x3c] sm:$0xf]
      %v3941 = vunpack.c.l.b16 %v3895
      %v3942 = vunpack.c.l.b16 %v3899
      %v3943 = vunpack.c.l.b16 %v3903
      %v3944 = vunpack.c.l.b16 %v3907
      %v3945 = vunpack.c.l.b16 %v3911
      %v3946 = vunpack.c.l.b16 %v3915
      %v3947 = vunpack.c.l.b16 %v3919
      %v3948 = vunpack.c.l.b16 %v3923
      %v3949 = vpack.c.b16 %v3942, %v3941
      %v3950 = vpack.c.b16 %v3944, %v3943
      %v3951 = vpack.c.b16 %v3946, %v3945
      %v3952 = vpack.c.b16 %v3948, %v3947
      %v3973 = vunpack.c.l.b16 %v3925
      %v3974 = vunpack.c.l.b16 %v3926
      %v3975 = vunpack.c.l.b16 %v3927
      %v3976 = vunpack.c.l.b16 %v3928
      %v3977 = vunpack.c.l.b16 %v3929
      %v3978 = vunpack.c.l.b16 %v3930
      %v3979 = vunpack.c.l.b16 %v3931
      %v3980 = vunpack.c.l.b16 %v3932
      %v3981 = vunpack.c.l.b16 %v3933
      %v3982 = vunpack.c.l.b16 %v3934
      %v3983 = vunpack.c.l.b16 %v3935
      %v3984 = vunpack.c.l.b16 %v3936
      %v3985 = vunpack.c.l.b16 %v3937
      %v3986 = vunpack.c.l.b16 %v3938
      %v3987 = vunpack.c.l.b16 %v3939
      %v3988 = vunpack.c.l.b16 %v3940
      %v3989 = vpack.c.b16 %v3974, %v3973
      %v3990 = vpack.c.b16 %v3976, %v3975
      %v3991 = vpack.c.b16 %v3978, %v3977
      %v3992 = vpack.c.b16 %v3980, %v3979
      %v3993 = vpack.c.b16 %v3982, %v3981
      %v3994 = vpack.c.b16 %v3984, %v3983
      %v3995 = vpack.c.b16 %v3986, %v3985
      %v3996 = vpack.c.b16 %v3988, %v3987
      %4005 = vmatprep.subr.bf16.mxu0 0
      %4006 = vmatpush1.bf16.msra.mxu0 %v3989
      %4007 = vmatprep.subr.bf16.mxu0 0
      %4008 = vmatpush1.bf16.msra.mxu0 %v3990
      %4009 = vmatprep.subr.bf16.mxu0 0
      %4010 = vmatpush1.bf16.msra.mxu0 %v3991
      %4011 = vmatprep.subr.bf16.mxu0 0
      %4012 = vmatpush1.bf16.msra.mxu0 %v3992
      %4013 = vmatprep.subr.bf16.mxu0 0
      %4014 = vmatpush1.bf16.msra.mxu0 %v3993
      %4015 = vmatprep.subr.bf16.mxu0 0
      %4016 = vmatpush1.bf16.msra.mxu0 %v3994
      %4017 = vmatprep.subr.bf16.mxu0 0
      %4018 = vmatpush1.bf16.msra.mxu0 %v3995
      %4019 = vmatprep.subr.bf16.mxu0 0
      %4020 = vmatpush1.bf16.msra.mxu0 %v3996
      %4021 = vmatprep.subr.bf16.mxu0 0
      %4022 = vmatpush1.bf16.msra.mxu0 0
      %4023 = vmatprep.subr.bf16.mxu0 0
      %4024 = vmatpush1.bf16.msra.mxu0 0
      %4025 = vmatprep.subr.bf16.mxu0 0
      %4026 = vmatpush1.bf16.msra.mxu0 0
      %4027 = vmatprep.subr.bf16.mxu0 0
      %4028 = vmatpush1.bf16.msra.mxu0 0
      %4029 = vmatprep.subr.bf16.mxu0 0
      %4030 = vmatpush1.bf16.msra.mxu0 0
      %4031 = vmatprep.subr.bf16.mxu0 0
      %4032 = vmatpush1.bf16.msra.mxu0 0
      %4033 = vmatprep.subr.bf16.mxu0 0
      %4034 = vmatpush1.bf16.msra.mxu0 0
      %4035 = vmatprep.subr.bf16.mxu0 0
      %4036 = vmatpush1.bf16.msra.mxu0 0
      %4037 = vmatprep.mubr.bf16.mxu0 0
      %4038 = vmatmul.mubr.bf16.gmra.mrb[0].mxu0 %v3949
      %v4039 = vpop.f32.mrb[0].mxu0
      %v4040 = vadd.f32 0.0, %v4039
      %v4041 = vpop.f32.mrb[0].mxu0
      %v4042 = vpop.f32.mrb[0].mxu0
      %v4043 = vadd.f32 0.0, %v4042
      %v4044 = vpop.f32.mrb[0].mxu0
      %4045 = vmatprep.mubr.bf16.mxu0 0
      %4046 = vmatmul.mubr.bf16.gmra.mrb[0].mxu0 %v3950
      %v4047 = vpop.f32.mrb[0].mxu0
      %v4048 = vadd.f32 0.0, %v4047
      %v4049 = vpop.f32.mrb[0].mxu0
      %v4050 = vpop.f32.mrb[0].mxu0
      %v4051 = vadd.f32 0.0, %v4050
      %v4052 = vpop.f32.mrb[0].mxu0
      %4053 = vmatprep.mubr.bf16.mxu0 0
      %4054 = vmatmul.mubr.bf16.gmra.mrb[0].mxu0 %v3951
      %v4055 = vpop.f32.mrb[0].mxu0
      %v4056 = vadd.f32 0.0, %v4055
      %v4057 = vpop.f32.mrb[0].mxu0
      %v4058 = vpop.f32.mrb[0].mxu0
      %v4059 = vadd.f32 0.0, %v4058
      %v4060 = vpop.f32.mrb[0].mxu0
      %4061 = vmatprep.mubr.bf16.mxu0 0
      %4062 = vmatmul.mubr.bf16.gmra.mrb[0].mxu0 %v3952
      %v4063 = vpop.f32.mrb[0].mxu0
      %v4064 = vadd.f32 0.0, %v4063
      %v4065 = vpop.f32.mrb[0].mxu0
      %v4066 = vpop.f32.mrb[0].mxu0
      %v4067 = vadd.f32 0.0, %v4066
      %v4068 = vpop.f32.mrb[0].mxu0
      %4069 = vdwg.mxu0
      %v4070 = vadd.f32 %v3876, %v4040
      %v4071 = vadd.f32 %v3877, %v4043
      %v4072 = vadd.f32 %v3878, %v4048
      %v4073 = vadd.f32 %v3879, %v4051
      %v4074 = vadd.f32 %v3880, %v4056
      %v4075 = vadd.f32 %v3881, %v4059
      %v4076 = vadd.f32 %v3882, %v4064
      %v4077 = vadd.f32 %v3883, %v4067
      %s4078 = scalar_lea.vmem %s3, 1344
      %v4079 = vld [vmem:[%s4078] sm:$0xf]
      %v4080 = vld [vmem:[%s4078 + $0x4] sm:$0xf]
      %v4081 = vld [vmem:[%s4078 + $0x8] sm:$0xf]
      %v4082 = vld [vmem:[%s4078 + $0xc] sm:$0xf]
      %v4083 = vld [vmem:[%s4078 + $0x10] sm:$0xf]
      %v4084 = vld [vmem:[%s4078 + $0x14] sm:$0xf]
      %v4085 = vld [vmem:[%s4078 + $0x18] sm:$0xf]
      %v4086 = vld [vmem:[%s4078 + $0x1c] sm:$0xf]
      %v4087 = vld [vmem:[%s4078 + $0x20] sm:$0xf]
      %v4088 = vld [vmem:[%s4078 + $0x24] sm:$0xf]
      %v4089 = vld [vmem:[%s4078 + $0x28] sm:$0xf]
      %v4090 = vld [vmem:[%s4078 + $0x2c] sm:$0xf]
      %v4091 = vld [vmem:[%s4078 + $0x30] sm:$0xf]
      %v4092 = vld [vmem:[%s4078 + $0x34] sm:$0xf]
      %v4093 = vld [vmem:[%s4078 + $0x38] sm:$0xf]
      %v4094 = vld [vmem:[%s4078 + $0x3c] sm:$0xf]
      %v4096 = vunpack.c.l.b16 %v411
      %v4097 = vpack.c.b16 %v3483, %v3482
      %v4098 = vpack.c.b16 %v3485, %v3484
      %v4099 = vpack.c.b16 %v3487, %v3486
      %v4100 = vpack.c.b16 %v4096, %v3488
      %v4121 = vunpack.c.l.b16 %v4079
      %v4122 = vunpack.c.l.b16 %v4080
      %v4123 = vunpack.c.l.b16 %v4081
      %v4124 = vunpack.c.l.b16 %v4082
      %v4125 = vunpack.c.l.b16 %v4083
      %v4126 = vunpack.c.l.b16 %v4084
      %v4127 = vunpack.c.l.b16 %v4085
      %v4128 = vunpack.c.l.b16 %v4086
      %v4129 = vunpack.c.l.b16 %v4087
      %v4130 = vunpack.c.l.b16 %v4088
      %v4131 = vunpack.c.l.b16 %v4089
      %v4132 = vunpack.c.l.b16 %v4090
      %v4133 = vunpack.c.l.b16 %v4091
      %v4134 = vunpack.c.l.b16 %v4092
      %v4135 = vunpack.c.l.b16 %v4093
      %v4136 = vunpack.c.l.b16 %v4094
      %v4137 = vpack.c.b16 %v4122, %v4121
      %v4138 = vpack.c.b16 %v4124, %v4123
      %v4139 = vpack.c.b16 %v4126, %v4125
      %v4140 = vpack.c.b16 %v4128, %v4127
      %v4141 = vpack.c.b16 %v4130, %v4129
      %v4142 = vpack.c.b16 %v4132, %v4131
      %v4143 = vpack.c.b16 %v4134, %v4133
      %v4144 = vpack.c.b16 %v4136, %v4135
      %4153 = vmatprep.subr.bf16.mxu0 0
      %4154 = vmatpush1.bf16.msra.mxu0 %v4137
      %4155 = vmatprep.subr.bf16.mxu0 0
      %4156 = vmatpush1.bf16.msra.mxu0 %v4138
      %4157 = vmatprep.subr.bf16.mxu0 0
      %4158 = vmatpush1.bf16.msra.mxu0 %v4139
      %4159 = vmatprep.subr.bf16.mxu0 0
      %4160 = vmatpush1.bf16.msra.mxu0 %v4140
      %4161 = vmatprep.subr.bf16.mxu0 0
      %4162 = vmatpush1.bf16.msra.mxu0 %v4141
      %4163 = vmatprep.subr.bf16.mxu0 0
      %4164 = vmatpush1.bf16.msra.mxu0 %v4142
      %4165 = vmatprep.subr.bf16.mxu0 0
      %4166 = vmatpush1.bf16.msra.mxu0 %v4143
      %4167 = vmatprep.subr.bf16.mxu0 0
      %4168 = vmatpush1.bf16.msra.mxu0 %v4144
      %4169 = vmatprep.subr.bf16.mxu0 0
      %4170 = vmatpush1.bf16.msra.mxu0 0
      %4171 = vmatprep.subr.bf16.mxu0 0
      %4172 = vmatpush1.bf16.msra.mxu0 0
      %4173 = vmatprep.subr.bf16.mxu0 0
      %4174 = vmatpush1.bf16.msra.mxu0 0
      %4175 = vmatprep.subr.bf16.mxu0 0
      %4176 = vmatpush1.bf16.msra.mxu0 0
      %4177 = vmatprep.subr.bf16.mxu0 0
      %4178 = vmatpush1.bf16.msra.mxu0 0
      %4179 = vmatprep.subr.bf16.mxu0 0
      %4180 = vmatpush1.bf16.msra.mxu0 0
      %4181 = vmatprep.subr.bf16.mxu0 0
      %4182 = vmatpush1.bf16.msra.mxu0 0
      %4183 = vmatprep.subr.bf16.mxu0 0
      %4184 = vmatpush1.bf16.msra.mxu0 0
      %4185 = vmatprep.mubr.bf16.mxu0 0
      %4186 = vmatmul.mubr.bf16.gmra.mrb[0].mxu0 %v4097
      %v4187 = vpop.f32.mrb[0].mxu0
      %v4188 = vadd.f32 0.0, %v4187
      %v4189 = vpop.f32.mrb[0].mxu0
      %v4190 = vpop.f32.mrb[0].mxu0
      %v4191 = vadd.f32 0.0, %v4190
      %v4192 = vpop.f32.mrb[0].mxu0
      %4193 = vmatprep.mubr.bf16.mxu0 0
      %4194 = vmatmul.mubr.bf16.gmra.mrb[0].mxu0 %v4098
      %v4195 = vpop.f32.mrb[0].mxu0
      %v4196 = vadd.f32 0.0, %v4195
      %v4197 = vpop.f32.mrb[0].mxu0
      %v4198 = vpop.f32.mrb[0].mxu0
      %v4199 = vadd.f32 0.0, %v4198
      %v4200 = vpop.f32.mrb[0].mxu0
      %4201 = vmatprep.mubr.bf16.mxu0 0
      %4202 = vmatmul.mubr.bf16.gmra.mrb[0].mxu0 %v4099
      %v4203 = vpop.f32.mrb[0].mxu0
      %v4204 = vadd.f32 0.0, %v4203
      %v4205 = vpop.f32.mrb[0].mxu0
      %v4206 = vpop.f32.mrb[0].mxu0
      %v4207 = vadd.f32 0.0, %v4206
      %v4208 = vpop.f32.mrb[0].mxu0
      %4209 = vmatprep.mubr.bf16.mxu0 0
      %4210 = vmatmul.mubr.bf16.gmra.mrb[0].mxu0 %v4100
      %v4211 = vpop.f32.mrb[0].mxu0
      %v4212 = vadd.f32 0.0, %v4211
      %v4213 = vpop.f32.mrb[0].mxu0
      %v4214 = vpop.f32.mrb[0].mxu0
      %v4215 = vadd.f32 0.0, %v4214
      %v4216 = vpop.f32.mrb[0].mxu0
      %4217 = vdwg.mxu0
      %v4218 = vadd.f32 %v4070, %v4188
      %v4219 = vadd.f32 %v4071, %v4191
      %v4220 = vadd.f32 %v4072, %v4196
      %v4221 = vadd.f32 %v4073, %v4199
      %v4222 = vadd.f32 %v4074, %v4204
      %v4223 = vadd.f32 %v4075, %v4207
      %v4224 = vadd.f32 %v4076, %v4212
      %v4225 = vadd.f32 %v4077, %v4215
      %v4227 = vshrl.u32 %v411, 16
      %v4229 = vrot.slane %v4227, 4
      %v4230 = vshll.u32 %v411, 16
      %v4232 = vrot.slane %v4230, 5
      %v4233 = vor.u32 %v4229, %v4232
      %v4234 = vrot.slane %v4233, 4
      %v4236 = vshll.u32 %v412, 16
      %v4238 = vrot.slane %v4236, 5
      %v4239 = vsel %vm433, %v4234, %v4238
      %s4240 = scalar_lea.vmem %s3, 1408
      %v4241 = vld [vmem:[%s4240] sm:$0xf]
      %v4242 = vld [vmem:[%s4240 + $0x4] sm:$0xf]
      %v4243 = vld [vmem:[%s4240 + $0x8] sm:$0xf]
      %v4244 = vld [vmem:[%s4240 + $0xc] sm:$0xf]
      %v4245 = vld [vmem:[%s4240 + $0x10] sm:$0xf]
      %v4246 = vld [vmem:[%s4240 + $0x14] sm:$0xf]
      %v4247 = vld [vmem:[%s4240 + $0x18] sm:$0xf]
      %v4248 = vld [vmem:[%s4240 + $0x1c] sm:$0xf]
      %v4249 = vld [vmem:[%s4240 + $0x20] sm:$0xf]
      %v4250 = vld [vmem:[%s4240 + $0x24] sm:$0xf]
      %v4251 = vld [vmem:[%s4240 + $0x28] sm:$0xf]
      %v4252 = vld [vmem:[%s4240 + $0x2c] sm:$0xf]
      %v4253 = vld [vmem:[%s4240 + $0x30] sm:$0xf]
      %v4254 = vld [vmem:[%s4240 + $0x34] sm:$0xf]
      %v4255 = vld [vmem:[%s4240 + $0x38] sm:$0xf]
      %v4256 = vld [vmem:[%s4240 + $0x3c] sm:$0xf]
      %v4257 = vunpack.c.l.b16 %v4239
      %v4258 = vpack.c.b16 %v3749, %v3748
      %v4259 = vpack.c.b16 %v3751, %v3750
      %v4260 = vpack.c.b16 %v3753, %v3752
      %v4261 = vpack.c.b16 %v4257, %v3754
      %v4282 = vunpack.c.l.b16 %v4241
      %v4283 = vunpack.c.l.b16 %v4242
      %v4284 = vunpack.c.l.b16 %v4243
      %v4285 = vunpack.c.l.b16 %v4244
      %v4286 = vunpack.c.l.b16 %v4245
      %v4287 = vunpack.c.l.b16 %v4246
      %v4288 = vunpack.c.l.b16 %v4247
      %v4289 = vunpack.c.l.b16 %v4248
      %v4290 = vunpack.c.l.b16 %v4249
      %v4291 = vunpack.c.l.b16 %v4250
      %v4292 = vunpack.c.l.b16 %v4251
      %v4293 = vunpack.c.l.b16 %v4252
      %v4294 = vunpack.c.l.b16 %v4253
      %v4295 = vunpack.c.l.b16 %v4254
      %v4296 = vunpack.c.l.b16 %v4255
      %v4297 = vunpack.c.l.b16 %v4256
      %v4298 = vpack.c.b16 %v4283, %v4282
      %v4299 = vpack.c.b16 %v4285, %v4284
      %v4300 = vpack.c.b16 %v4287, %v4286
      %v4301 = vpack.c.b16 %v4289, %v4288
      %v4302 = vpack.c.b16 %v4291, %v4290
      %v4303 = vpack.c.b16 %v4293, %v4292
      %v4304 = vpack.c.b16 %v4295, %v4294
      %v4305 = vpack.c.b16 %v4297, %v4296
      %4314 = vmatprep.subr.bf16.mxu0 0
      %4315 = vmatpush1.bf16.msra.mxu0 %v4298
      %4316 = vmatprep.subr.bf16.mxu0 0
      %4317 = vmatpush1.bf16.msra.mxu0 %v4299
      %4318 = vmatprep.subr.bf16.mxu0 0
      %4319 = vmatpush1.bf16.msra.mxu0 %v4300
      %4320 = vmatprep.subr.bf16.mxu0 0
      %4321 = vmatpush1.bf16.msra.mxu0 %v4301
      %4322 = vmatprep.subr.bf16.mxu0 0
      %4323 = vmatpush1.bf16.msra.mxu0 %v4302
      %4324 = vmatprep.subr.bf16.mxu0 0
      %4325 = vmatpush1.bf16.msra.mxu0 %v4303
      %4326 = vmatprep.subr.bf16.mxu0 0
      %4327 = vmatpush1.bf16.msra.mxu0 %v4304
      %4328 = vmatprep.subr.bf16.mxu0 0
      %4329 = vmatpush1.bf16.msra.mxu0 %v4305
      %4330 = vmatprep.subr.bf16.mxu0 0
      %4331 = vmatpush1.bf16.msra.mxu0 0
      %4332 = vmatprep.subr.bf16.mxu0 0
      %4333 = vmatpush1.bf16.msra.mxu0 0
      %4334 = vmatprep.subr.bf16.mxu0 0
      %4335 = vmatpush1.bf16.msra.mxu0 0
      %4336 = vmatprep.subr.bf16.mxu0 0
      %4337 = vmatpush1.bf16.msra.mxu0 0
      %4338 = vmatprep.subr.bf16.mxu0 0
      %4339 = vmatpush1.bf16.msra.mxu0 0
      %4340 = vmatprep.subr.bf16.mxu0 0
      %4341 = vmatpush1.bf16.msra.mxu0 0
      %4342 = vmatprep.subr.bf16.mxu0 0
      %4343 = vmatpush1.bf16.msra.mxu0 0
      %4344 = vmatprep.subr.bf16.mxu0 0
      %4345 = vmatpush1.bf16.msra.mxu0 0
      %4346 = vmatprep.mubr.bf16.mxu0 0
      %4347 = vmatmul.mubr.bf16.gmra.mrb[0].mxu0 %v4258
      %v4348 = vpop.f32.mrb[0].mxu0
      %v4349 = vadd.f32 0.0, %v4348
      %v4350 = vpop.f32.mrb[0].mxu0
      %v4351 = vpop.f32.mrb[0].mxu0
      %v4352 = vadd.f32 0.0, %v4351
      %v4353 = vpop.f32.mrb[0].mxu0
      %4354 = vmatprep.mubr.bf16.mxu0 0
      %4355 = vmatmul.mubr.bf16.gmra.mrb[0].mxu0 %v4259
      %v4356 = vpop.f32.mrb[0].mxu0
      %v4357 = vadd.f32 0.0, %v4356
      %v4358 = vpop.f32.mrb[0].mxu0
      %v4359 = vpop.f32.mrb[0].mxu0
      %v4360 = vadd.f32 0.0, %v4359
      %v4361 = vpop.f32.mrb[0].mxu0
      %4362 = vmatprep.mubr.bf16.mxu0 0
      %4363 = vmatmul.mubr.bf16.gmra.mrb[0].mxu0 %v4260
      %v4364 = vpop.f32.mrb[0].mxu0
      %v4365 = vadd.f32 0.0, %v4364
      %v4366 = vpop.f32.mrb[0].mxu0
      %v4367 = vpop.f32.mrb[0].mxu0
      %v4368 = vadd.f32 0.0, %v4367
      %v4369 = vpop.f32.mrb[0].mxu0
      %4370 = vmatprep.mubr.bf16.mxu0 0
      %4371 = vmatmul.mubr.bf16.gmra.mrb[0].mxu0 %v4261
      %v4372 = vpop.f32.mrb[0].mxu0
      %v4373 = vadd.f32 0.0, %v4372
      %v4374 = vpop.f32.mrb[0].mxu0
      %v4375 = vpop.f32.mrb[0].mxu0
      %v4376 = vadd.f32 0.0, %v4375
      %v4377 = vpop.f32.mrb[0].mxu0
      %4378 = vdwg.mxu0
      %v4379 = vadd.f32 %v4218, %v4349
      %v4380 = vadd.f32 %v4219, %v4352
      %v4381 = vadd.f32 %v4220, %v4357
      %v4382 = vadd.f32 %v4221, %v4360
      %v4383 = vadd.f32 %v4222, %v4365
      %v4384 = vadd.f32 %v4223, %v4368
      %v4385 = vadd.f32 %v4224, %v4373
      %v4386 = vadd.f32 %v4225, %v4376
      %v4388 = vrot.slane %v411, 5
      %v4389 = vrot.slane %v4388, 4
      %v4390 = vrot.slane %v412, 5
      %v4391 = vsel %vm839, %v4389, %v4390
      %s4392 = scalar_lea.vmem %s3, 1472
      %v4393 = vld [vmem:[%s4392] sm:$0xf]
      %v4394 = vld [vmem:[%s4392 + $0x4] sm:$0xf]
      %v4395 = vld [vmem:[%s4392 + $0x8] sm:$0xf]
      %v4396 = vld [vmem:[%s4392 + $0xc] sm:$0xf]
      %v4397 = vld [vmem:[%s4392 + $0x10] sm:$0xf]
      %v4398 = vld [vmem:[%s4392 + $0x14] sm:$0xf]
      %v4399 = vld [vmem:[%s4392 + $0x18] sm:$0xf]
      %v4400 = vld [vmem:[%s4392 + $0x1c] sm:$0xf]
      %v4401 = vld [vmem:[%s4392 + $0x20] sm:$0xf]
      %v4402 = vld [vmem:[%s4392 + $0x24] sm:$0xf]
      %v4403 = vld [vmem:[%s4392 + $0x28] sm:$0xf]
      %v4404 = vld [vmem:[%s4392 + $0x2c] sm:$0xf]
      %v4405 = vld [vmem:[%s4392 + $0x30] sm:$0xf]
      %v4406 = vld [vmem:[%s4392 + $0x34] sm:$0xf]
      %v4407 = vld [vmem:[%s4392 + $0x38] sm:$0xf]
      %v4408 = vld [vmem:[%s4392 + $0x3c] sm:$0xf]
      %v4409 = vunpack.c.l.b16 %v4391
      %v4410 = vpack.c.b16 %v3943, %v3942
      %v4411 = vpack.c.b16 %v3945, %v3944
      %v4412 = vpack.c.b16 %v3947, %v3946
      %v4413 = vpack.c.b16 %v4409, %v3948
      %v4434 = vunpack.c.l.b16 %v4393
      %v4435 = vunpack.c.l.b16 %v4394
      %v4436 = vunpack.c.l.b16 %v4395
      %v4437 = vunpack.c.l.b16 %v4396
      %v4438 = vunpack.c.l.b16 %v4397
      %v4439 = vunpack.c.l.b16 %v4398
      %v4440 = vunpack.c.l.b16 %v4399
      %v4441 = vunpack.c.l.b16 %v4400
      %v4442 = vunpack.c.l.b16 %v4401
      %v4443 = vunpack.c.l.b16 %v4402
      %v4444 = vunpack.c.l.b16 %v4403
      %v4445 = vunpack.c.l.b16 %v4404
      %v4446 = vunpack.c.l.b16 %v4405
      %v4447 = vunpack.c.l.b16 %v4406
      %v4448 = vunpack.c.l.b16 %v4407
      %v4449 = vunpack.c.l.b16 %v4408
      %v4450 = vpack.c.b16 %v4435, %v4434
      %v4451 = vpack.c.b16 %v4437, %v4436
      %v4452 = vpack.c.b16 %v4439, %v4438
      %v4453 = vpack.c.b16 %v4441, %v4440
      %v4454 = vpack.c.b16 %v4443, %v4442
      %v4455 = vpack.c.b16 %v4445, %v4444
      %v4456 = vpack.c.b16 %v4447, %v4446
      %v4457 = vpack.c.b16 %v4449, %v4448
      %4466 = vmatprep.subr.bf16.mxu0 0
      %4467 = vmatpush1.bf16.msra.mxu0 %v4450
      %4468 = vmatprep.subr.bf16.mxu0 0
      %4469 = vmatpush1.bf16.msra.mxu0 %v4451
      %4470 = vmatprep.subr.bf16.mxu0 0
      %4471 = vmatpush1.bf16.msra.mxu0 %v4452
      %4472 = vmatprep.subr.bf16.mxu0 0
      %4473 = vmatpush1.bf16.msra.mxu0 %v4453
      %4474 = vmatprep.subr.bf16.mxu0 0
      %4475 = vmatpush1.bf16.msra.mxu0 %v4454
      %4476 = vmatprep.subr.bf16.mxu0 0
      %4477 = vmatpush1.bf16.msra.mxu0 %v4455
      %4478 = vmatprep.subr.bf16.mxu0 0
      %4479 = vmatpush1.bf16.msra.mxu0 %v4456
      %4480 = vmatprep.subr.bf16.mxu0 0
      %4481 = vmatpush1.bf16.msra.mxu0 %v4457
      %4482 = vmatprep.subr.bf16.mxu0 0
      %4483 = vmatpush1.bf16.msra.mxu0 0
      %4484 = vmatprep.subr.bf16.mxu0 0
      %4485 = vmatpush1.bf16.msra.mxu0 0
      %4486 = vmatprep.subr.bf16.mxu0 0
      %4487 = vmatpush1.bf16.msra.mxu0 0
      %4488 = vmatprep.subr.bf16.mxu0 0
      %4489 = vmatpush1.bf16.msra.mxu0 0
      %4490 = vmatprep.subr.bf16.mxu0 0
      %4491 = vmatpush1.bf16.msra.mxu0 0
      %4492 = vmatprep.subr.bf16.mxu0 0
      %4493 = vmatpush1.bf16.msra.mxu0 0
      %4494 = vmatprep.subr.bf16.mxu0 0
      %4495 = vmatpush1.bf16.msra.mxu0 0
      %4496 = vmatprep.subr.bf16.mxu0 0
      %4497 = vmatpush1.bf16.msra.mxu0 0
      %4498 = vmatprep.mubr.bf16.mxu0 0
      %4499 = vmatmul.mubr.bf16.gmra.mrb[0].mxu0 %v4410
      %v4500 = vpop.f32.mrb[0].mxu0
      %v4501 = vadd.f32 0.0, %v4500
      %v4502 = vpop.f32.mrb[0].mxu0
      %v4503 = vpop.f32.mrb[0].mxu0
      %v4504 = vadd.f32 0.0, %v4503
      %v4505 = vpop.f32.mrb[0].mxu0
      %4506 = vmatprep.mubr.bf16.mxu0 0
      %4507 = vmatmul.mubr.bf16.gmra.mrb[0].mxu0 %v4411
      %v4508 = vpop.f32.mrb[0].mxu0
      %v4509 = vadd.f32 0.0, %v4508
      %v4510 = vpop.f32.mrb[0].mxu0
      %v4511 = vpop.f32.mrb[0].mxu0
      %v4512 = vadd.f32 0.0, %v4511
      %v4513 = vpop.f32.mrb[0].mxu0
      %4514 = vmatprep.mubr.bf16.mxu0 0
      %4515 = vmatmul.mubr.bf16.gmra.mrb[0].mxu0 %v4412
      %v4516 = vpop.f32.mrb[0].mxu0
      %v4517 = vadd.f32 0.0, %v4516
      %v4518 = vpop.f32.mrb[0].mxu0
      %v4519 = vpop.f32.mrb[0].mxu0
      %v4520 = vadd.f32 0.0, %v4519
      %v4521 = vpop.f32.mrb[0].mxu0
      %4522 = vmatprep.mubr.bf16.mxu0 0
      %4523 = vmatmul.mubr.bf16.gmra.mrb[0].mxu0 %v4413
      %v4524 = vpop.f32.mrb[0].mxu0
      %v4525 = vadd.f32 0.0, %v4524
      %v4526 = vpop.f32.mrb[0].mxu0
      %v4527 = vpop.f32.mrb[0].mxu0
      %v4528 = vadd.f32 0.0, %v4527
      %v4529 = vpop.f32.mrb[0].mxu0
      %4530 = vdwg.mxu0
      %v4531 = vadd.f32 %v4379, %v4501
      %v4532 = vadd.f32 %v4380, %v4504
      %v4533 = vadd.f32 %v4381, %v4509
      %v4534 = vadd.f32 %v4382, %v4512
      %v4535 = vadd.f32 %v4383, %v4517
      %v4536 = vadd.f32 %v4384, %v4520
      %v4537 = vadd.f32 %v4385, %v4525
      %v4538 = vadd.f32 %v4386, %v4528
      %s4539 = scalar_lea.vmem %s3, 1536
      %v4540 = vld [vmem:[%s4539] sm:$0xf]
      %v4541 = vld [vmem:[%s4539 + $0x4] sm:$0xf]
      %v4542 = vld [vmem:[%s4539 + $0x8] sm:$0xf]
      %v4543 = vld [vmem:[%s4539 + $0xc] sm:$0xf]
      %v4544 = vld [vmem:[%s4539 + $0x10] sm:$0xf]
      %v4545 = vld [vmem:[%s4539 + $0x14] sm:$0xf]
      %v4546 = vld [vmem:[%s4539 + $0x18] sm:$0xf]
      %v4547 = vld [vmem:[%s4539 + $0x1c] sm:$0xf]
      %v4548 = vld [vmem:[%s4539 + $0x20] sm:$0xf]
      %v4549 = vld [vmem:[%s4539 + $0x24] sm:$0xf]
      %v4550 = vld [vmem:[%s4539 + $0x28] sm:$0xf]
      %v4551 = vld [vmem:[%s4539 + $0x2c] sm:$0xf]
      %v4552 = vld [vmem:[%s4539 + $0x30] sm:$0xf]
      %v4553 = vld [vmem:[%s4539 + $0x34] sm:$0xf]
      %v4554 = vld [vmem:[%s4539 + $0x38] sm:$0xf]
      %v4555 = vld [vmem:[%s4539 + $0x3c] sm:$0xf]
      %v4557 = vunpack.c.l.b16 %v413
      %v4558 = vpack.c.b16 %v4557, %v4096
      %v4576 = vunpack.c.l.b16 %v4540
      %v4577 = vunpack.c.l.b16 %v4541
      %v4578 = vunpack.c.l.b16 %v4542
      %v4579 = vunpack.c.l.b16 %v4543
      %v4580 = vunpack.c.l.b16 %v4544
      %v4581 = vunpack.c.l.b16 %v4545
      %v4582 = vunpack.c.l.b16 %v4546
      %v4583 = vunpack.c.l.b16 %v4547
      %v4584 = vunpack.c.l.b16 %v4548
      %v4585 = vunpack.c.l.b16 %v4549
      %v4586 = vunpack.c.l.b16 %v4550
      %v4587 = vunpack.c.l.b16 %v4551
      %v4588 = vunpack.c.l.b16 %v4552
      %v4589 = vunpack.c.l.b16 %v4553
      %v4590 = vunpack.c.l.b16 %v4554
      %v4591 = vunpack.c.l.b16 %v4555
      %v4592 = vpack.c.b16 %v4577, %v4576
      %v4593 = vpack.c.b16 %v4579, %v4578
      %v4594 = vpack.c.b16 %v4581, %v4580
      %v4595 = vpack.c.b16 %v4583, %v4582
      %v4596 = vpack.c.b16 %v4585, %v4584
      %v4597 = vpack.c.b16 %v4587, %v4586
      %v4598 = vpack.c.b16 %v4589, %v4588
      %v4599 = vpack.c.b16 %v4591, %v4590
      %4608 = vmatprep.subr.bf16.mxu0 0
      %4609 = vmatpush1.bf16.msra.mxu0 %v4592
      %4610 = vmatprep.subr.bf16.mxu0 0
      %4611 = vmatpush1.bf16.msra.mxu0 %v4593
      %4612 = vmatprep.subr.bf16.mxu0 0
      %4613 = vmatpush1.bf16.msra.mxu0 %v4594
      %4614 = vmatprep.subr.bf16.mxu0 0
      %4615 = vmatpush1.bf16.msra.mxu0 %v4595
      %4616 = vmatprep.subr.bf16.mxu0 0
      %4617 = vmatpush1.bf16.msra.mxu0 %v4596
      %4618 = vmatprep.subr.bf16.mxu0 0
      %4619 = vmatpush1.bf16.msra.mxu0 %v4597
      %4620 = vmatprep.subr.bf16.mxu0 0
      %4621 = vmatpush1.bf16.msra.mxu0 %v4598
      %4622 = vmatprep.subr.bf16.mxu0 0
      %4623 = vmatpush1.bf16.msra.mxu0 %v4599
      %4624 = vmatprep.subr.bf16.mxu0 0
      %4625 = vmatpush1.bf16.msra.mxu0 0
      %4626 = vmatprep.subr.bf16.mxu0 0
      %4627 = vmatpush1.bf16.msra.mxu0 0
      %4628 = vmatprep.subr.bf16.mxu0 0
      %4629 = vmatpush1.bf16.msra.mxu0 0
      %4630 = vmatprep.subr.bf16.mxu0 0
      %4631 = vmatpush1.bf16.msra.mxu0 0
      %4632 = vmatprep.subr.bf16.mxu0 0
      %4633 = vmatpush1.bf16.msra.mxu0 0
      %4634 = vmatprep.subr.bf16.mxu0 0
      %4635 = vmatpush1.bf16.msra.mxu0 0
      %4636 = vmatprep.subr.bf16.mxu0 0
      %4637 = vmatpush1.bf16.msra.mxu0 0
      %4638 = vmatprep.subr.bf16.mxu0 0
      %4639 = vmatpush1.bf16.msra.mxu0 0
      %4640 = vmatprep.mubr.bf16.mxu0 0
      %4641 = vmatmul.mubr.bf16.gmra.mrb[0].mxu0 %v3490
      %v4642 = vpop.f32.mrb[0].mxu0
      %v4643 = vadd.f32 0.0, %v4642
      %v4644 = vpop.f32.mrb[0].mxu0
      %v4645 = vpop.f32.mrb[0].mxu0
      %v4646 = vadd.f32 0.0, %v4645
      %v4647 = vpop.f32.mrb[0].mxu0
      %4648 = vmatprep.mubr.bf16.mxu0 0
      %4649 = vmatmul.mubr.bf16.gmra.mrb[0].mxu0 %v3491
      %v4650 = vpop.f32.mrb[0].mxu0
      %v4651 = vadd.f32 0.0, %v4650
      %v4652 = vpop.f32.mrb[0].mxu0
      %v4653 = vpop.f32.mrb[0].mxu0
      %v4654 = vadd.f32 0.0, %v4653
      %v4655 = vpop.f32.mrb[0].mxu0
      %4656 = vmatprep.mubr.bf16.mxu0 0
      %4657 = vmatmul.mubr.bf16.gmra.mrb[0].mxu0 %v3492
      %v4658 = vpop.f32.mrb[0].mxu0
      %v4659 = vadd.f32 0.0, %v4658
      %v4660 = vpop.f32.mrb[0].mxu0
      %v4661 = vpop.f32.mrb[0].mxu0
      %v4662 = vadd.f32 0.0, %v4661
      %v4663 = vpop.f32.mrb[0].mxu0
      %4664 = vmatprep.mubr.bf16.mxu0 0
      %4665 = vmatmul.mubr.bf16.gmra.mrb[0].mxu0 %v4558
      %v4666 = vpop.f32.mrb[0].mxu0
      %v4667 = vadd.f32 0.0, %v4666
      %v4668 = vpop.f32.mrb[0].mxu0
      %v4669 = vpop.f32.mrb[0].mxu0
      %v4670 = vadd.f32 0.0, %v4669
      %v4671 = vpop.f32.mrb[0].mxu0
      %4672 = vdwg.mxu0
      %v4673 = vadd.f32 %v4531, %v4643
      %v4674 = vadd.f32 %v4532, %v4646
      %v4675 = vadd.f32 %v4533, %v4651
      %v4676 = vadd.f32 %v4534, %v4654
      %v4677 = vadd.f32 %v4535, %v4659
      %v4678 = vadd.f32 %v4536, %v4662
      %v4679 = vadd.f32 %v4537, %v4667
      %v4680 = vadd.f32 %v4538, %v4670
      %v4682 = vshrl.u32 %v413, 16
      %v4684 = vrot.slane %v4682, 4
      %v4685 = vshll.u32 %v413, 16
      %v4687 = vrot.slane %v4685, 5
      %v4688 = vor.u32 %v4684, %v4687
      %v4689 = vrot.slane %v4688, 4
      %v4691 = vshll.u32 %v414, 16
      %v4693 = vrot.slane %v4691, 5
      %v4694 = vsel %vm433, %v4689, %v4693
      %s4695 = scalar_lea.vmem %s3, 1600
      %v4696 = vld [vmem:[%s4695] sm:$0xf]
      %v4697 = vld [vmem:[%s4695 + $0x4] sm:$0xf]
      %v4698 = vld [vmem:[%s4695 + $0x8] sm:$0xf]
      %v4699 = vld [vmem:[%s4695 + $0xc] sm:$0xf]
      %v4700 = vld [vmem:[%s4695 + $0x10] sm:$0xf]
      %v4701 = vld [vmem:[%s4695 + $0x14] sm:$0xf]
      %v4702 = vld [vmem:[%s4695 + $0x18] sm:$0xf]
      %v4703 = vld [vmem:[%s4695 + $0x1c] sm:$0xf]
      %v4704 = vld [vmem:[%s4695 + $0x20] sm:$0xf]
      %v4705 = vld [vmem:[%s4695 + $0x24] sm:$0xf]
      %v4706 = vld [vmem:[%s4695 + $0x28] sm:$0xf]
      %v4707 = vld [vmem:[%s4695 + $0x2c] sm:$0xf]
      %v4708 = vld [vmem:[%s4695 + $0x30] sm:$0xf]
      %v4709 = vld [vmem:[%s4695 + $0x34] sm:$0xf]
      %v4710 = vld [vmem:[%s4695 + $0x38] sm:$0xf]
      %v4711 = vld [vmem:[%s4695 + $0x3c] sm:$0xf]
      %v4712 = vunpack.c.l.b16 %v4694
      %v4713 = vpack.c.b16 %v4712, %v4257
      %v4731 = vunpack.c.l.b16 %v4696
      %v4732 = vunpack.c.l.b16 %v4697
      %v4733 = vunpack.c.l.b16 %v4698
      %v4734 = vunpack.c.l.b16 %v4699
      %v4735 = vunpack.c.l.b16 %v4700
      %v4736 = vunpack.c.l.b16 %v4701
      %v4737 = vunpack.c.l.b16 %v4702
      %v4738 = vunpack.c.l.b16 %v4703
      %v4739 = vunpack.c.l.b16 %v4704
      %v4740 = vunpack.c.l.b16 %v4705
      %v4741 = vunpack.c.l.b16 %v4706
      %v4742 = vunpack.c.l.b16 %v4707
      %v4743 = vunpack.c.l.b16 %v4708
      %v4744 = vunpack.c.l.b16 %v4709
      %v4745 = vunpack.c.l.b16 %v4710
      %v4746 = vunpack.c.l.b16 %v4711
      %v4747 = vpack.c.b16 %v4732, %v4731
      %v4748 = vpack.c.b16 %v4734, %v4733
      %v4749 = vpack.c.b16 %v4736, %v4735
      %v4750 = vpack.c.b16 %v4738, %v4737
      %v4751 = vpack.c.b16 %v4740, %v4739
      %v4752 = vpack.c.b16 %v4742, %v4741
      %v4753 = vpack.c.b16 %v4744, %v4743
      %v4754 = vpack.c.b16 %v4746, %v4745
      %4763 = vmatprep.subr.bf16.mxu0 0
      %4764 = vmatpush1.bf16.msra.mxu0 %v4747
      %4765 = vmatprep.subr.bf16.mxu0 0
      %4766 = vmatpush1.bf16.msra.mxu0 %v4748
      %4767 = vmatprep.subr.bf16.mxu0 0
      %4768 = vmatpush1.bf16.msra.mxu0 %v4749
      %4769 = vmatprep.subr.bf16.mxu0 0
      %4770 = vmatpush1.bf16.msra.mxu0 %v4750
      %4771 = vmatprep.subr.bf16.mxu0 0
      %4772 = vmatpush1.bf16.msra.mxu0 %v4751
      %4773 = vmatprep.subr.bf16.mxu0 0
      %4774 = vmatpush1.bf16.msra.mxu0 %v4752
      %4775 = vmatprep.subr.bf16.mxu0 0
      %4776 = vmatpush1.bf16.msra.mxu0 %v4753
      %4777 = vmatprep.subr.bf16.mxu0 0
      %4778 = vmatpush1.bf16.msra.mxu0 %v4754
      %4779 = vmatprep.subr.bf16.mxu0 0
      %4780 = vmatpush1.bf16.msra.mxu0 0
      %4781 = vmatprep.subr.bf16.mxu0 0
      %4782 = vmatpush1.bf16.msra.mxu0 0
      %4783 = vmatprep.subr.bf16.mxu0 0
      %4784 = vmatpush1.bf16.msra.mxu0 0
      %4785 = vmatprep.subr.bf16.mxu0 0
      %4786 = vmatpush1.bf16.msra.mxu0 0
      %4787 = vmatprep.subr.bf16.mxu0 0
      %4788 = vmatpush1.bf16.msra.mxu0 0
      %4789 = vmatprep.subr.bf16.mxu0 0
      %4790 = vmatpush1.bf16.msra.mxu0 0
      %4791 = vmatprep.subr.bf16.mxu0 0
      %4792 = vmatpush1.bf16.msra.mxu0 0
      %4793 = vmatprep.subr.bf16.mxu0 0
      %4794 = vmatpush1.bf16.msra.mxu0 0
      %4795 = vmatprep.mubr.bf16.mxu0 0
      %4796 = vmatmul.mubr.bf16.gmra.mrb[0].mxu0 %v3756
      %v4797 = vpop.f32.mrb[0].mxu0
      %v4798 = vadd.f32 0.0, %v4797
      %v4799 = vpop.f32.mrb[0].mxu0
      %v4800 = vpop.f32.mrb[0].mxu0
      %v4801 = vadd.f32 0.0, %v4800
      %v4802 = vpop.f32.mrb[0].mxu0
      %4803 = vmatprep.mubr.bf16.mxu0 0
      %4804 = vmatmul.mubr.bf16.gmra.mrb[0].mxu0 %v3757
      %v4805 = vpop.f32.mrb[0].mxu0
      %v4806 = vadd.f32 0.0, %v4805
      %v4807 = vpop.f32.mrb[0].mxu0
      %v4808 = vpop.f32.mrb[0].mxu0
      %v4809 = vadd.f32 0.0, %v4808
      %v4810 = vpop.f32.mrb[0].mxu0
      %4811 = vmatprep.mubr.bf16.mxu0 0
      %4812 = vmatmul.mubr.bf16.gmra.mrb[0].mxu0 %v3758
      %v4813 = vpop.f32.mrb[0].mxu0
      %v4814 = vadd.f32 0.0, %v4813
      %v4815 = vpop.f32.mrb[0].mxu0
      %v4816 = vpop.f32.mrb[0].mxu0
      %v4817 = vadd.f32 0.0, %v4816
      %v4818 = vpop.f32.mrb[0].mxu0
      %4819 = vmatprep.mubr.bf16.mxu0 0
      %4820 = vmatmul.mubr.bf16.gmra.mrb[0].mxu0 %v4713
      %v4821 = vpop.f32.mrb[0].mxu0
      %v4822 = vadd.f32 0.0, %v4821
      %v4823 = vpop.f32.mrb[0].mxu0
      %v4824 = vpop.f32.mrb[0].mxu0
      %v4825 = vadd.f32 0.0, %v4824
      %v4826 = vpop.f32.mrb[0].mxu0
      %4827 = vdwg.mxu0
      %v4828 = vadd.f32 %v4673, %v4798
      %v4829 = vadd.f32 %v4674, %v4801
      %v4830 = vadd.f32 %v4675, %v4806
      %v4831 = vadd.f32 %v4676, %v4809
      %v4832 = vadd.f32 %v4677, %v4814
      %v4833 = vadd.f32 %v4678, %v4817
      %v4834 = vadd.f32 %v4679, %v4822
      %v4835 = vadd.f32 %v4680, %v4825
      %v4837 = vrot.slane %v413, 5
      %v4838 = vrot.slane %v4837, 4
      %v4839 = vrot.slane %v414, 5
      %v4840 = vsel %vm839, %v4838, %v4839
      %s4841 = scalar_lea.vmem %s3, 1664
      %v4842 = vld [vmem:[%s4841] sm:$0xf]
      %v4843 = vld [vmem:[%s4841 + $0x4] sm:$0xf]
      %v4844 = vld [vmem:[%s4841 + $0x8] sm:$0xf]
      %v4845 = vld [vmem:[%s4841 + $0xc] sm:$0xf]
      %v4846 = vld [vmem:[%s4841 + $0x10] sm:$0xf]
      %v4847 = vld [vmem:[%s4841 + $0x14] sm:$0xf]
      %v4848 = vld [vmem:[%s4841 + $0x18] sm:$0xf]
      %v4849 = vld [vmem:[%s4841 + $0x1c] sm:$0xf]
      %v4850 = vld [vmem:[%s4841 + $0x20] sm:$0xf]
      %v4851 = vld [vmem:[%s4841 + $0x24] sm:$0xf]
      %v4852 = vld [vmem:[%s4841 + $0x28] sm:$0xf]
      %v4853 = vld [vmem:[%s4841 + $0x2c] sm:$0xf]
      %v4854 = vld [vmem:[%s4841 + $0x30] sm:$0xf]
      %v4855 = vld [vmem:[%s4841 + $0x34] sm:$0xf]
      %v4856 = vld [vmem:[%s4841 + $0x38] sm:$0xf]
      %v4857 = vld [vmem:[%s4841 + $0x3c] sm:$0xf]
      %v4858 = vunpack.c.l.b16 %v4840
      %v4859 = vpack.c.b16 %v4858, %v4409
      %v4877 = vunpack.c.l.b16 %v4842
      %v4878 = vunpack.c.l.b16 %v4843
      %v4879 = vunpack.c.l.b16 %v4844
      %v4880 = vunpack.c.l.b16 %v4845
      %v4881 = vunpack.c.l.b16 %v4846
      %v4882 = vunpack.c.l.b16 %v4847
      %v4883 = vunpack.c.l.b16 %v4848
      %v4884 = vunpack.c.l.b16 %v4849
      %v4885 = vunpack.c.l.b16 %v4850
      %v4886 = vunpack.c.l.b16 %v4851
      %v4887 = vunpack.c.l.b16 %v4852
      %v4888 = vunpack.c.l.b16 %v4853
      %v4889 = vunpack.c.l.b16 %v4854
      %v4890 = vunpack.c.l.b16 %v4855
      %v4891 = vunpack.c.l.b16 %v4856
      %v4892 = vunpack.c.l.b16 %v4857
      %v4893 = vpack.c.b16 %v4878, %v4877
      %v4894 = vpack.c.b16 %v4880, %v4879
      %v4895 = vpack.c.b16 %v4882, %v4881
      %v4896 = vpack.c.b16 %v4884, %v4883
      %v4897 = vpack.c.b16 %v4886, %v4885
      %v4898 = vpack.c.b16 %v4888, %v4887
      %v4899 = vpack.c.b16 %v4890, %v4889
      %v4900 = vpack.c.b16 %v4892, %v4891
      %4909 = vmatprep.subr.bf16.mxu0 0
      %4910 = vmatpush1.bf16.msra.mxu0 %v4893
      %4911 = vmatprep.subr.bf16.mxu0 0
      %4912 = vmatpush1.bf16.msra.mxu0 %v4894
      %4913 = vmatprep.subr.bf16.mxu0 0
      %4914 = vmatpush1.bf16.msra.mxu0 %v4895
      %4915 = vmatprep.subr.bf16.mxu0 0
      %4916 = vmatpush1.bf16.msra.mxu0 %v4896
      %4917 = vmatprep.subr.bf16.mxu0 0
      %4918 = vmatpush1.bf16.msra.mxu0 %v4897
      %4919 = vmatprep.subr.bf16.mxu0 0
      %4920 = vmatpush1.bf16.msra.mxu0 %v4898
      %4921 = vmatprep.subr.bf16.mxu0 0
      %4922 = vmatpush1.bf16.msra.mxu0 %v4899
      %4923 = vmatprep.subr.bf16.mxu0 0
      %4924 = vmatpush1.bf16.msra.mxu0 %v4900
      %4925 = vmatprep.subr.bf16.mxu0 0
      %4926 = vmatpush1.bf16.msra.mxu0 0
      %4927 = vmatprep.subr.bf16.mxu0 0
      %4928 = vmatpush1.bf16.msra.mxu0 0
      %4929 = vmatprep.subr.bf16.mxu0 0
      %4930 = vmatpush1.bf16.msra.mxu0 0
      %4931 = vmatprep.subr.bf16.mxu0 0
      %4932 = vmatpush1.bf16.msra.mxu0 0
      %4933 = vmatprep.subr.bf16.mxu0 0
      %4934 = vmatpush1.bf16.msra.mxu0 0
      %4935 = vmatprep.subr.bf16.mxu0 0
      %4936 = vmatpush1.bf16.msra.mxu0 0
      %4937 = vmatprep.subr.bf16.mxu0 0
      %4938 = vmatpush1.bf16.msra.mxu0 0
      %4939 = vmatprep.subr.bf16.mxu0 0
      %4940 = vmatpush1.bf16.msra.mxu0 0
      %4941 = vmatprep.mubr.bf16.mxu0 0
      %4942 = vmatmul.mubr.bf16.gmra.mrb[0].mxu0 %v3950
      %v4943 = vpop.f32.mrb[0].mxu0
      %v4944 = vadd.f32 0.0, %v4943
      %v4945 = vpop.f32.mrb[0].mxu0
      %v4946 = vpop.f32.mrb[0].mxu0
      %v4947 = vadd.f32 0.0, %v4946
      %v4948 = vpop.f32.mrb[0].mxu0
      %4949 = vmatprep.mubr.bf16.mxu0 0
      %4950 = vmatmul.mubr.bf16.gmra.mrb[0].mxu0 %v3951
      %v4951 = vpop.f32.mrb[0].mxu0
      %v4952 = vadd.f32 0.0, %v4951
      %v4953 = vpop.f32.mrb[0].mxu0
      %v4954 = vpop.f32.mrb[0].mxu0
      %v4955 = vadd.f32 0.0, %v4954
      %v4956 = vpop.f32.mrb[0].mxu0
      %4957 = vmatprep.mubr.bf16.mxu0 0
      %4958 = vmatmul.mubr.bf16.gmra.mrb[0].mxu0 %v3952
      %v4959 = vpop.f32.mrb[0].mxu0
      %v4960 = vadd.f32 0.0, %v4959
      %v4961 = vpop.f32.mrb[0].mxu0
      %v4962 = vpop.f32.mrb[0].mxu0
      %v4963 = vadd.f32 0.0, %v4962
      %v4964 = vpop.f32.mrb[0].mxu0
      %4965 = vmatprep.mubr.bf16.mxu0 0
      %4966 = vmatmul.mubr.bf16.gmra.mrb[0].mxu0 %v4859
      %v4967 = vpop.f32.mrb[0].mxu0
      %v4968 = vadd.f32 0.0, %v4967
      %v4969 = vpop.f32.mrb[0].mxu0
      %v4970 = vpop.f32.mrb[0].mxu0
      %v4971 = vadd.f32 0.0, %v4970
      %v4972 = vpop.f32.mrb[0].mxu0
      %4973 = vdwg.mxu0
      %v4974 = vadd.f32 %v4828, %v4944
      %v4975 = vadd.f32 %v4829, %v4947
      %v4976 = vadd.f32 %v4830, %v4952
      %v4977 = vadd.f32 %v4831, %v4955
      %v4978 = vadd.f32 %v4832, %v4960
      %v4979 = vadd.f32 %v4833, %v4963
      %v4980 = vadd.f32 %v4834, %v4968
      %v4981 = vadd.f32 %v4835, %v4971
      %4982 = vst [vmem:[%s347] sm:$0xff] %v4974
      %4983 = vst [vmem:[%s347 + $0x8] sm:$0xff] %v4975
      %4984 = vst [vmem:[%s347 + $0x10] sm:$0xff] %v4976
      %4985 = vst [vmem:[%s347 + $0x18] sm:$0xff] %v4977
      %4986 = vst [vmem:[%s347 + $0x20] sm:$0xff] %v4978
      %4987 = vst [vmem:[%s347 + $0x28] sm:$0xff] %v4979
      %4988 = vst [vmem:[%s347 + $0x30] sm:$0xff] %v4980
      %4989 = vst [vmem:[%s347 + $0x38] sm:$0xff] %v4981
      %v4990 = vadd.f32 %v4974, %v4975
      %v4991 = vadd.f32 %v4990, %v4976
      %v4992 = vadd.f32 %v4991, %v4977
      %v4993 = vadd.f32 %v4992, %v4978
      %v4994 = vadd.f32 %v4993, %v4979
      %v4995 = vadd.f32 %v4994, %v4980
      %v4996 = vadd.f32 %v4995, %v4981
      %v4997 = vrot.slane %v4996, 4
      %v4998 = vadd.f32 %v4996, %v4997
      %v4999 = vrot.slane %v4998, 2
      %v5000 = vadd.f32 %v4998, %v4999
      %v5001 = vrot.slane %v5000, 1
      %v5002 = vadd.f32 %v5000, %v5001
      %v5003 = vmul.f32 %v4974, %v4974
      %v5004 = vmul.f32 %v4975, %v4975
      %v5005 = vmul.f32 %v4976, %v4976
      %v5006 = vmul.f32 %v4977, %v4977
      %v5007 = vmul.f32 %v4978, %v4978
      %v5008 = vmul.f32 %v4979, %v4979
      %v5009 = vmul.f32 %v4980, %v4980
      %v5010 = vmul.f32 %v4981, %v4981
      %v5011 = vadd.f32 %v5003, %v5004
      %v5012 = vadd.f32 %v5011, %v5005
      %v5013 = vadd.f32 %v5012, %v5006
      %v5014 = vadd.f32 %v5013, %v5007
      %v5015 = vadd.f32 %v5014, %v5008
      %v5016 = vadd.f32 %v5015, %v5009
      %v5017 = vadd.f32 %v5016, %v5010
      %v5018 = vrot.slane %v5017, 4
      %v5019 = vadd.f32 %v5017, %v5018
      %v5020 = vrot.slane %v5019, 2
      %v5021 = vadd.f32 %v5019, %v5020
      %v5022 = vrot.slane %v5021, 1
      %v5023 = vadd.f32 %v5021, %v5022
      %p5024 = scmp.eq.s32.totalorder %s22, 0
      // Predicated region
      $region37: #{upconv_apply.8} parent=35 // pred_check
        %p5025 = pneg %p5024
      $region38: #{upconv_apply.8} parent=35 // pred_check_branch
        %5027 = sbr.rel (%p5025) target = $region40
      $region39: #{upconv_apply.8} parent=35 // pred_region
        %5028 = vst [vmem:[%s353] sm:$0x3] 0.0
      $region40: #{upconv_apply.8} parent=35 // pred_fallthru
        _
      %v5029 = vld [vmem:[%s353] sm:$0x3]
      %vm5030 = vcmask 1040384
      %v5031 = vsel %vm5030, %v5002, %v5023
      %v5032 = vadd.f32 %v5029, %v5031
      %5033 = vst [vmem:[%s353] sm:$0x3] %v5032
      %s5034 = smul.u32 %s21, 8
      %s5035 = sadd.s32 %s5034, %s22
      %p5036 = scmp.lt.s32.totalorder %s5035, 15
      %s5037 = scalar_select %p5036, %s5035, 15
      %s5038 = smul.addr %s5037, 8
      %s5039 = smul.addr %s5038, 8
      %s5040 = scalar_lea.vmem %s4, %s5039
      %p5041 = scmp.lt.s32.totalorder %s21, 1
      %s5042 = scalar_select %p5041, %s21, 1
      %s5043 = smul.addr %s5042, 2
      %s5044 = scalar_lea.vmem %s5, %s5043
      // Predicated region
      $region41: #{upconv_apply.8} parent=35 // pred_check
        %p5045 = pneg %p166
      $region42: #{upconv_apply.8} parent=35 // pred_check_branch
        %5047 = sbr.rel (%p5045) target = $region44
      $region43: #{upconv_apply.8} parent=35 // pred_region
        %s5048 = smul.u32 %s21, 8
        %s5049 = sadd.s32 %s5048, %s22
      $region44: #{upconv_apply.8} parent=35 // pred_fallthru
        _
      // Predicated region
      $region45: #{upconv_apply.8} parent=35 // pred_check
        %p5050 = pneg %p192
      $region46: #{upconv_apply.8} parent=35 // pred_check_branch
        %5052 = sbr.rel (%p5050) target = $region48
      $region47: #{upconv_apply.8} parent=35 // pred_region
        _
      $region48: #{upconv_apply.8} parent=35 // pred_fallthru
        _
    $region36: #{upconv_apply.8} parent=5 // pred_fallthru
      _
    %p5053 = scmp.le.s32.totalorder 2, %s12
    // Predicated region
    $region49: #{upconv_apply.8} parent=5 // pred_check
      %p5054 = pneg %p5053
    $region50: #{upconv_apply.8} parent=5 // pred_check_branch
      %5056 = sbr.rel (%p5054) target = $region52
    $region51: #{upconv_apply.8} parent=5 // pred_region
      %s5057 = ssub.s32 %s12, 2
      // Predicated region
      $region53: #{upconv_apply.8} parent=51 // pred_check
        %p5058 = pneg %p172
      $region54: #{upconv_apply.8} parent=51 // pred_check_branch
        %5060 = sbr.rel (%p5058) target = $region56
      $region55: #{upconv_apply.8} parent=51 // pred_region
        %s5061 = smul.u32 %s23, 8
        %s5062 = sadd.s32 %s5061, %s24
        %p5063 = scmp.lt.s32.totalorder %s5062, 15
        %s5064 = scalar_select %p5063, %s5062, 15
        %s5065 = smul.addr %s5064, 8
        %s5066 = smul.addr %s5065, 8
        %s5067 = scalar_lea.vmem %s4, %s5066
      $region56: #{upconv_apply.8} parent=51 // pred_fallthru
        _
      // Predicated region
      $region57: #{upconv_apply.8} parent=51 // pred_check
        %p5068 = pneg %p198
      $region58: #{upconv_apply.8} parent=51 // pred_check_branch
        %5070 = sbr.rel (%p5068) target = $region60
      $region59: #{upconv_apply.8} parent=51 // pred_region
        %p5071 = scmp.lt.s32.totalorder %s23, 1
        %s5072 = scalar_select %p5071, %s23, 1
        %s5073 = smul.addr %s5072, 2
        %s5074 = scalar_lea.vmem %s5, %s5073
      $region60: #{upconv_apply.8} parent=51 // pred_fallthru
        _
    $region52: #{upconv_apply.8} parent=5 // pred_fallthru
      _
  $region6: #{upconv_apply.8} parent=0 // loop_footer
    %s16 = sadd.s32 1, %s12
  $region7: #{upconv_apply.8} parent=0 // loop_footer_branch
    %11 = sbr.rel target = $region3
  $region8: #{upconv_apply.8} parent=0 // loop_exit
    _

</llo_original>
